<compile_context>
chip_gen: v5e
topology: v5e:2x2
jax: 0.10.0
libtpu: 0.0.40
codegen_flags: <defaults>
</compile_context>

<pallas_src>
import functools

import jax
import jax.numpy as jnp
from jax import lax
from jax.experimental import pallas as pl
from jax.experimental.pallas import tpu as pltpu

EPS = 1e-5                      # torch.nn.InstanceNorm1d default eps
DILATION_RATES = (1, 2, 4, 8, 16, 32)

_PARALLEL = pltpu.CompilerParams(dimension_semantics=("parallel",))


# ------------------------------ in-kernel helpers ----------------------------

def _sigmoid(v):
    # logistic via EUP exp + approximate reciprocal (both off the VALU slot)
    return pl.reciprocal(1.0 + jnp.exp(-v), approx=True)


def _inorm(v):
    """InstanceNorm1d (affine=False): normalize each channel over time."""
    m = jnp.mean(v, axis=-1, keepdims=True)
    c = v - m
    var = jnp.mean(c * c, axis=-1, keepdims=True)
    return c * lax.rsqrt(var + EPS)


def _stage(pad_ref, x, pad):
    """Stage x (Cin, T) into the middle of pad_ref; zero ONLY the halo columns."""
    Cin, T = x.shape
    z = jnp.zeros((Cin, pad), pad_ref.dtype)
    pad_ref[:, :pad] = z
    pad_ref[:, pad + T:2 * pad + T] = z
    pad_ref[:, pad:pad + T] = x.astype(pad_ref.dtype)


def _conv_taps(pad_ref, w, *, K, T, d=1, off=0):
    """'same' 1-D conv as K accumulating MXU matmuls over shifted pad_ref slices.

    w is the flattened (Cout, K*Cin) weight (tap-major columns); no bias added.
    """
    Cout = w.shape[0]
    Cin = w.shape[1] // K
    acc = jnp.zeros((Cout, T), jnp.float32)
    for k in range(K):
        s = off + k * d
        acc = acc + jnp.dot(w[:, k * Cin:(k + 1) * Cin], pad_ref[:, s:s + T],
                            preferred_element_type=jnp.float32)
    return acc


def _cond_column(cw, cb, cond):
    """ReLU(1x1 conv) of the time-invariant conditioning -> (Cout, 1) column."""
    col = jnp.dot(cw, cond.astype(cw.dtype),
                  preferred_element_type=jnp.float32) + cb
    return jnp.maximum(col, 0.0)


# ---------------------------------- kernels ----------------------------------

def _input_stage_kernel(x_ref, cond_ref, inw_ref, inb_ref, cw_ref, cb_ref,
                        fw_ref, fb_ref, h_ref, pad1, pad2):
    H, T = h_ref.shape
    # ConvNorm(I -> 2H, k=5, pad=2) + InstanceNorm + GLU
    _stage(pad1, x_ref[...], 2)
    a = _inorm(_conv_taps(pad1, inw_ref[...], K=5, T=T) + inb_ref[...])
    glu = a[:H, :] * _sigmoid(a[H:, :])
    # time-invariant cond path: ReLU(1x1) computed once as a broadcast column
    z = glu + _cond_column(cw_ref[...], cb_ref[...], cond_ref[...])
    # ConvNorm(H -> H, k=3, pad=1)
    _stage(pad2, z, 1)
    h = _conv_taps(pad2, fw_ref[...], K=3, T=T) + fb_ref[...]
    h_ref[...] = h.astype(h_ref.dtype)


def _upsample_kernel(h_ref, cond_ref, we_ref, wo_ref, b_ref,
                     even_ref, odd_ref, padx):
    H, T = h_ref.shape
    C = cond_ref.shape[0]
    HC = H + C
    # stage [h ; broadcast(cond)] with a 2-zero halo (exact ConvTranspose edges)
    z2 = jnp.zeros((HC, 2), padx.dtype)
    padx[:, :2] = z2
    padx[:, 2 + T:4 + T] = z2
    padx[0:H, 2:2 + T] = h_ref[...].astype(padx.dtype)
    padx[H:HC, 2:2 + T] = jnp.broadcast_to(cond_ref[...], (C, T)).astype(padx.dtype)
    b = b_ref[...]
    # polyphase ConvTranspose1d(k=8, stride=2, pad=3):
    #   even outputs use taps {7,5,3,1} (windows 0..3); odd use {6,4,2,0} (windows 1..4)
    oe = _conv_taps(padx, we_ref[...], K=4, T=T, off=0) + b
    oo = _conv_taps(padx, wo_ref[...], K=4, T=T, off=1) + b
    # InstanceNorm over the interleaved length-2T sequence (joint phase stats)
    n = 2.0 * T
    m = (jnp.sum(oe, axis=-1, keepdims=True)
         + jnp.sum(oo, axis=-1, keepdims=True)) / n
    ce = oe - m
    co = oo - m
    var = (jnp.sum(ce * ce, axis=-1, keepdims=True)
           + jnp.sum(co * co, axis=-1, keepdims=True)) / n
    inv = lax.rsqrt(var + EPS)
    ne = ce * inv
    no = co * inv
    even_ref[...] = (ne[:H, :] * _sigmoid(ne[H:, :])).astype(even_ref.dtype)
    odd_ref[...] = (no[:H, :] * _sigmoid(no[H:, :])).astype(odd_ref.dtype)


def _cgau_stack_kernel(h_ref, cond_ref, inw_ref, inb_ref, cw_ref, cb_ref,
                       fw_ref, fb_ref, ow_ref, ob_ref, skip_ref,
                       h_sc, a_sc, pad1, pad2, *, dilations, d_max):
    """One grid step = one CGAU layer of one batch row; h/skip stay in VMEM."""
    l = pl.program_id(1)
    H, T = h_sc.shape
    P1 = 2 * d_max
    nd = len(dilations)

    @pl.when(l == 0)
    def _init():
        # load h, reset the skip accumulator, zero the (persistent) halo columns
        h_sc[...] = h_ref[...].astype(jnp.float32)
        skip_ref[...] = jnp.zeros_like(skip_ref)
        zh = jnp.zeros((H, P1), pad1.dtype)
        pad1[:, :P1] = zh
        pad1[:, P1 + T:2 * P1 + T] = zh
        z1 = jnp.zeros((H, 1), pad2.dtype)
        pad2[:, :1] = z1
        pad2[:, 1 + T:2 + T] = z1

    h = h_sc[...]
    pad1[:, P1:P1 + T] = h.astype(pad1.dtype)

    # in_layer: dilated ConvNorm(H -> 2H, k=5, pad=2*d); dilation picked by layer
    # index with static tap offsets per branch (only one branch runs per step)
    inw = inw_ref[...]
    for j, d in enumerate(dilations):
        @pl.when(l % nd == j)
        def _branch(d=d):
            a_sc[...] = _conv_taps(pad1, inw, K=5, T=T, d=d, off=P1 - 2 * d)

    a = _inorm(a_sc[...] + inb_ref[...])
    # cond_layer (time-invariant): ReLU(1x1) as a broadcast column
    z = a + _cond_column(cw_ref[...], cb_ref[...], cond_ref[...])
    zb = z.astype(pad1.dtype)
    # conv_fuse: 1x1, groups=2, followed by gated-tanh
    fw = fw_ref[...]
    fb = fb_ref[...]
    acts0 = jnp.dot(fw[:H, :], zb[:H, :],
                    preferred_element_type=jnp.float32) + fb[:H, :]
    acts1 = jnp.dot(fw[H:, :], zb[H:, :],
                    preferred_element_type=jnp.float32) + fb[H:, :]
    gated = jnp.tanh(acts0) * _sigmoid(acts1)
    # out_layer: ConvNorm(H -> H, k=3, pad=1) + InstanceNorm
    pad2[:, 1:1 + T] = gated.astype(pad2.dtype)
    s = _inorm(_conv_taps(pad2, ow_ref[...], K=3, T=T) + ob_ref[...])
    h_sc[...] = h + s                               # residual carried in VMEM
    skip_ref[...] = skip_ref[...] + s               # skip sum (resident output)


def _output_stage_kernel(s_ref, w1_ref, b1_ref, w2_ref, b2_ref, o_ref,
                         pad1, pad2):
    O, T = o_ref.shape
    _stage(pad1, s_ref[...], 2)
    a = _inorm(_conv_taps(pad1, w1_ref[...], K=5, T=T) + b1_ref[...])
    g = a[:O, :] * _sigmoid(a[O:, :])
    _stage(pad2, g, 7)
    o = _conv_taps(pad2, w2_ref[...], K=15, T=T) + b2_ref[...]
    o_ref[...] = o.astype(o_ref.dtype)


# --------------------------------- wrappers ----------------------------------

def _full_spec(a):
    nd = a.ndim
    return pl.BlockSpec(a.shape, lambda i, _nd=nd: (0,) * _nd)


def input_stage(x, cond, inw, inb, cw, cb, fw, fb):
    B, I, T = x.shape
    C = cond.shape[1]
    H = fb.shape[0]
    return pl.pallas_call(
        _input_stage_kernel,
        grid=(B,),
        in_specs=[pl.BlockSpec((None, I, T), lambda i: (i, 0, 0)),
                  pl.BlockSpec((None, C, 1), lambda i: (i, 0, 0)),
                  _full_spec(inw), _full_spec(inb),
                  _full_spec(cw), _full_spec(cb),
                  _full_spec(fw), _full_spec(fb)],
        out_specs=pl.BlockSpec((None, H, T), lambda i: (i, 0, 0)),
        out_shape=jax.ShapeDtypeStruct((B, H, T), jnp.float32),
        scratch_shapes=[pltpu.VMEM((I, T + 4), jnp.bfloat16),
                        pltpu.VMEM((H, T + 2), jnp.bfloat16)],
        compiler_params=_PARALLEL,
    )(x, cond, inw, inb, cw, cb, fw, fb)


def upsample_stage(h, cond, we, wo, b):
    B, H, T = h.shape
    C = cond.shape[1]
    osd = jax.ShapeDtypeStruct((B, H, T), jnp.float32)
    return pl.pallas_call(
        _upsample_kernel,
        grid=(B,),
        in_specs=[pl.BlockSpec((None, H, T), lambda i: (i, 0, 0)),
                  pl.BlockSpec((None, C, 1), lambda i: (i, 0, 0)),
                  _full_spec(we), _full_spec(wo), _full_spec(b)],
        out_specs=(pl.BlockSpec((None, H, T), lambda i: (i, 0, 0)),
                   pl.BlockSpec((None, H, T), lambda i: (i, 0, 0))),
        out_shape=(osd, osd),
        scratch_shapes=[pltpu.VMEM((H + C, T + 4), jnp.bfloat16)],
        compiler_params=_PARALLEL,
    )(h, cond, we, wo, b)


def cgau_stack(h, cond, sp):
    """All 6*n_stage CondGateActivationUnit layers in ONE pallas_call."""
    B, H, T = h.shape
    C = cond.shape[1]
    L = sp["in_w"].shape[0]
    d_max = max(DILATION_RATES)
    kern = functools.partial(_cgau_stack_kernel,
                             dilations=DILATION_RATES, d_max=d_max)

    def act(c, t):
        return pl.BlockSpec((None, c, t), lambda b, l: (b, 0, 0))

    def wgt(a):
        return pl.BlockSpec((None,) + a.shape[1:], lambda b, l: (l, 0, 0))

    return pl.pallas_call(
        kern,
        grid=(B, L),
        in_specs=[act(H, T), act(C, 1),
                  wgt(sp["in_w"]), wgt(sp["in_b"]),
                  wgt(sp["cond_w"]), wgt(sp["cond_b"]),
                  wgt(sp["fuse_w"]), wgt(sp["fuse_b"]),
                  wgt(sp["out_w"]), wgt(sp["out_b"])],
        out_specs=act(H, T),
        out_shape=jax.ShapeDtypeStruct((B, H, T), jnp.float32),
        scratch_shapes=[pltpu.VMEM((H, T), jnp.float32),            # resident h
                        pltpu.VMEM((2 * H, T), jnp.float32),        # in_layer acc
                        pltpu.VMEM((H, T + 4 * d_max), jnp.bfloat16),
                        pltpu.VMEM((H, T + 2), jnp.bfloat16)],
        compiler_params=pltpu.CompilerParams(
            dimension_semantics=("parallel", "arbitrary")),
    )(h, cond, sp["in_w"], sp["in_b"], sp["cond_w"], sp["cond_b"],
      sp["fuse_w"], sp["fuse_b"], sp["out_w"], sp["out_b"])


def output_stage(s, w1, b1, w2, b2):
    B, H, T = s.shape
    O = b2.shape[0]
    return pl.pallas_call(
        _output_stage_kernel,
        grid=(B,),
        in_specs=[pl.BlockSpec((None, H, T), lambda i: (i, 0, 0)),
                  _full_spec(w1), _full_spec(b1),
                  _full_spec(w2), _full_spec(b2)],
        out_specs=pl.BlockSpec((None, O, T), lambda i: (i, 0, 0)),
        out_shape=jax.ShapeDtypeStruct((B, O, T), jnp.float32),
        scratch_shapes=[pltpu.VMEM((H, T + 4), jnp.bfloat16),
                        pltpu.VMEM((O, T + 14), jnp.bfloat16)],
        compiler_params=_PARALLEL,
    )(s, w1, b1, w2, b2)


# ------------------------- parameter initialization --------------------------

def init_params(key, input_dim, hidden_dim, output_dim, cond_dim, n_stage,
                n_upsample_factor=2):
    H, I, O, C = hidden_dim, input_dim, output_dim, cond_dim
    L = n_stage * len(DILATION_RATES)
    keys = iter(jax.random.split(key, 32 + 8 * L + 2 * n_upsample_factor))
    WDT = jnp.bfloat16   # MXU weight dtype; accumulation stays f32

    def conv_w(cout, cin, k):   # xavier_uniform-style, deterministic
        fan_in, fan_out = cin * k, cout * k
        lim = (6.0 / (fan_in + fan_out)) ** 0.5
        return jax.random.uniform(next(keys), (cout, cin, k), jnp.float32,
                                  -lim, lim)

    def bias(c):
        return jax.random.uniform(next(keys), (c, 1), jnp.float32, -0.05, 0.05)

    def flat(w):
        # (Cout, Cin, K) -> (Cout, K*Cin), matching the in-kernel tap slicing
        cout, cin, k = w.shape
        return jnp.transpose(w, (0, 2, 1)).reshape(cout, k * cin).astype(WDT)

    params = {
        "in_w": flat(conv_w(2 * H, I, 5)), "in_b": bias(2 * H),
        "cond_w": conv_w(H, C, 1)[:, :, 0].astype(WDT), "cond_b": bias(H),
        "fuse_w": flat(conv_w(H, H, 3)), "fuse_b": bias(H),
        "upsample": [],
    }
    for _ in range(n_upsample_factor // 2):
        # ConvTranspose1d weight layout (Cin=H+C, Cout=2H, K=8) -> polyphase mats
        wt = conv_w(H + C, 2 * H, 8)
        we = jnp.concatenate([wt[:, :, 7 - 2 * i].T for i in range(4)], axis=1)
        wo = jnp.concatenate([wt[:, :, 6 - 2 * i].T for i in range(4)], axis=1)
        params["upsample"].append({"we": we.astype(WDT), "wo": wo.astype(WDT),
                                   "b": bias(2 * H)})

    inw, inb, cw, cb, fw, fb, ow, ob = ([] for _ in range(8))
    for _ in range(L):
        inw.append(flat(conv_w(2 * H, H, 5)))
        inb.append(bias(2 * H))
        cw.append(conv_w(2 * H, C, 1)[:, :, 0].astype(WDT))
        cb.append(bias(2 * H))
        # grouped 1x1 (groups=2): rows [0:H] act on z[:H], rows [H:] on z[H:]
        fw.append(conv_w(2 * H, H, 1)[:, :, 0].astype(WDT))
        fb.append(bias(2 * H))
        ow.append(flat(conv_w(H, H, 3)))
        ob.append(bias(H))
    params["cgau"] = {
        "in_w": jnp.stack(inw), "in_b": jnp.stack(inb),
        "cond_w": jnp.stack(cw), "cond_b": jnp.stack(cb),
        "fuse_w": jnp.stack(fw), "fuse_b": jnp.stack(fb),
        "out_w": jnp.stack(ow), "out_b": jnp.stack(ob),
    }

    params["out1_w"] = flat(conv_w(2 * O, H, 5))
    params["out1_b"] = bias(2 * O)
    params["out2_w"] = flat(conv_w(O, O, 15))
    params["out2_b"] = bias(O)
    return params


# -------------------------------- forward pass --------------------------------

def _decoder_forward_impl(params, x, cond):
    """x: (B, input_dim, T); cond: (B, cond_dim, 1) -> (B, output_dim, T*up)."""
    B = x.shape[0]
    H = params["fuse_b"].shape[0]

    h = input_stage(x, cond, params["in_w"], params["in_b"],
                    params["cond_w"], params["cond_b"],
                    params["fuse_w"], params["fuse_b"])              # (B, H, T)

    for up in params["upsample"]:
        Th = h.shape[-1]
        even, odd = upsample_stage(h, cond, up["we"], up["wo"], up["b"])
        # interleave the two polyphase outputs -> (B, H, 2*Th)
        h = jnp.stack([even, odd], axis=-1).reshape(B, H, 2 * Th)

    skip = cgau_stack(h, cond, params["cgau"])                       # (B, H, Tn)

    return output_stage(skip, params["out1_w"], params["out1_b"],
                        params["out2_w"], params["out2_b"])


decoder_forward = jax.jit(_decoder_forward_impl)


# ------------------------------------ main ------------------------------------

if __name__ == "__main__":
    B = 2
    input_dim = 8
    hidden_dim = 16
    output_dim = 8
    cond_dim = 8
    n_stage = 1
    n_upsample_factor = 2
    T = 16

    key = jax.random.PRNGKey(0)
    kp, kx, kc = jax.random.split(key, 3)
    params = init_params(kp, input_dim, hidden_dim, output_dim, cond_dim,
                         n_stage, n_upsample_factor)

    x = jax.random.normal(kx, (B, input_dim, T), jnp.float32)
    cond = jax.random.normal(kc, (B, cond_dim, 1), jnp.float32)

    out = decoder_forward(params, x, cond)
    out = jax.block_until_ready(out)
    assert out.shape == (B, output_dim, T * n_upsample_factor), out.shape
    print("KERNEL_OK")
</pallas_src>

<mosaic_0001>
module attributes {stable_mosaic.version = 11 : i64} {
  func.func @_upsample_kernel(%arg0: i32, %arg1: memref<1x16x16xf32, #tpu.memory_space<vmem>>, %arg2: memref<1x8x1xf32, #tpu.memory_space<vmem>>, %arg3: memref<32x96xbf16, #tpu.memory_space<vmem>>, %arg4: memref<32x96xbf16, #tpu.memory_space<vmem>>, %arg5: memref<32x1xf32, #tpu.memory_space<vmem>>, %arg6: memref<1x16x16xf32, #tpu.memory_space<vmem>>, %arg7: memref<1x16x16xf32, #tpu.memory_space<vmem>>, %arg8: memref<24x20xbf16, #tpu.memory_space<vmem>>) attributes {dimension_semantics = [#tpu.dimension_semantics<parallel>], iteration_bounds = array<i64: 2>, scalar_prefetch = 0 : i64, scratch_operands = 1 : i64, tpu.core_type = #tpu.core_type<tc>, window_params = [{transform_indices = @transform_0, window_bounds = array<i64: 1, 16, 16>}, {transform_indices = @transform_1, window_bounds = array<i64: 1, 8, 1>}, {pipeline_mode = #tpu.pipeline_mode<synchronous>, transform_indices = @transform_2, window_bounds = array<i64: 32, 96>}, {pipeline_mode = #tpu.pipeline_mode<synchronous>, transform_indices = @transform_3, window_bounds = array<i64: 32, 96>}, {pipeline_mode = #tpu.pipeline_mode<synchronous>, transform_indices = @transform_4, window_bounds = array<i64: 32, 1>}, {transform_indices = @transform_5, window_bounds = array<i64: 1, 16, 16>}, {transform_indices = @transform_6, window_bounds = array<i64: 1, 16, 16>}]} {
    %cst = arith.constant 0.000000e+00 : bf16
    %0 = vector.broadcast %cst : bf16 to vector<24x2xbf16>
    %c0 = arith.constant 0 : index
    %c0_0 = arith.constant 0 : index
    %1 = vector.load %arg8[%c0, %c0_0] : memref<24x20xbf16, #tpu.memory_space<vmem>>, vector<24x2xbf16>
    tpu.vector_store %arg8[%c0, %c0_0], %0 {strides = array<i32>} : memref<24x20xbf16, #tpu.memory_space<vmem>>, vector<24x2xbf16>,
    %c0_1 = arith.constant 0 : index
    %c18 = arith.constant 18 : index
    %2 = vector.load %arg8[%c0_1, %c18] : memref<24x20xbf16, #tpu.memory_space<vmem>>, vector<24x2xbf16>
    tpu.vector_store %arg8[%c0_1, %c18], %0 {strides = array<i32>} : memref<24x20xbf16, #tpu.memory_space<vmem>>, vector<24x2xbf16>,
    %c0_2 = arith.constant 0 : index
    %c0_3 = arith.constant 0 : index
    %c0_4 = arith.constant 0 : index
    %3 = vector.load %arg1[%c0_2, %c0_3, %c0_4] : memref<1x16x16xf32, #tpu.memory_space<vmem>>, vector<1x16x16xf32>
    %4 = vector.shape_cast %3 : vector<1x16x16xf32> to vector<16x16xf32>
    %5 = arith.truncf %4 : vector<16x16xf32> to vector<16x16xbf16>
    %c0_5 = arith.constant 0 : index
    %c2 = arith.constant 2 : index
    %6 = vector.load %arg8[%c0_5, %c2] : memref<24x20xbf16, #tpu.memory_space<vmem>>, vector<16x16xbf16>
    tpu.vector_store %arg8[%c0_5, %c2], %5 {strides = array<i32>} : memref<24x20xbf16, #tpu.memory_space<vmem>>, vector<16x16xbf16>,
    %c0_6 = arith.constant 0 : index
    %c0_7 = arith.constant 0 : index
    %c0_8 = arith.constant 0 : index
    %7 = vector.load %arg2[%c0_6, %c0_7, %c0_8] : memref<1x8x1xf32, #tpu.memory_space<vmem>>, vector<1x8x1xf32>
    %8 = vector.shape_cast %7 : vector<1x8x1xf32> to vector<8x1xf32>
    %9 = vector.shape_cast %8 : vector<8x1xf32> to vector<8x1xf32>
    %10 = vector.broadcast %9 : vector<8x1xf32> to vector<8x16xf32>
    %11 = arith.truncf %10 : vector<8x16xf32> to vector<8x16xbf16>
    %c16 = arith.constant 16 : index
    %c2_9 = arith.constant 2 : index
    %12 = vector.load %arg8[%c16, %c2_9] : memref<24x20xbf16, #tpu.memory_space<vmem>>, vector<8x16xbf16>
    tpu.vector_store %arg8[%c16, %c2_9], %11 {strides = array<i32>} : memref<24x20xbf16, #tpu.memory_space<vmem>>, vector<8x16xbf16>,
    %c0_10 = arith.constant 0 : index
    %c0_11 = arith.constant 0 : index
    %13 = vector.load %arg5[%c0_10, %c0_11] : memref<32x1xf32, #tpu.memory_space<vmem>>, vector<32x1xf32>
    %c0_12 = arith.constant 0 : index
    %c0_13 = arith.constant 0 : index
    %14 = vector.load %arg3[%c0_12, %c0_13] : memref<32x96xbf16, #tpu.memory_space<vmem>>, vector<32x96xbf16>
    %cst_14 = arith.constant 0.000000e+00 : f32
    %15 = vector.broadcast %cst_14 : f32 to vector<32x16xf32>
    %16 = vector.extract_strided_slice %14 {offsets = [0, 0], sizes = [32, 24], strides = [1, 1]} : vector<32x96xbf16> to vector<32x24xbf16>
    %c0_15 = arith.constant 0 : index
    %c0_16 = arith.constant 0 : index
    %17 = vector.load %arg8[%c0_15, %c0_16] : memref<24x20xbf16, #tpu.memory_space<vmem>>, vector<24x16xbf16>
    %cst_17 = arith.constant dense<0.000000e+00> : vector<32x16xf32>
    %18 = tpu.matmul %16, %17, %cst_17 {dimension_numbers = #tpu.dot_dimension_numbers<[1], [0], [0], [1], [0, 0, 1, 1], [], []>} : vector<32x24xbf16>, vector<24x16xbf16>, vector<32x16xf32> -> vector<32x16xf32>
    %19 = arith.addf %15, %18 : vector<32x16xf32>
    %20 = vector.extract_strided_slice %14 {offsets = [0, 24], sizes = [32, 24], strides = [1, 1]} : vector<32x96xbf16> to vector<32x24xbf16>
    %c0_18 = arith.constant 0 : index
    %c1 = arith.constant 1 : index
    %21 = vector.load %arg8[%c0_18, %c1] : memref<24x20xbf16, #tpu.memory_space<vmem>>, vector<24x16xbf16>
    %cst_19 = arith.constant dense<0.000000e+00> : vector<32x16xf32>
    %22 = tpu.matmul %20, %21, %cst_19 {dimension_numbers = #tpu.dot_dimension_numbers<[1], [0], [0], [1], [0, 0, 1, 1], [], []>} : vector<32x24xbf16>, vector<24x16xbf16>, vector<32x16xf32> -> vector<32x16xf32>
    %23 = arith.addf %19, %22 : vector<32x16xf32>
    %24 = vector.extract_strided_slice %14 {offsets = [0, 48], sizes = [32, 24], strides = [1, 1]} : vector<32x96xbf16> to vector<32x24xbf16>
    %c0_20 = arith.constant 0 : index
    %c2_21 = arith.constant 2 : index
    %25 = vector.load %arg8[%c0_20, %c2_21] : memref<24x20xbf16, #tpu.memory_space<vmem>>, vector<24x16xbf16>
    %cst_22 = arith.constant dense<0.000000e+00> : vector<32x16xf32>
    %26 = tpu.matmul %24, %25, %cst_22 {dimension_numbers = #tpu.dot_dimension_numbers<[1], [0], [0], [1], [0, 0, 1, 1], [], []>} : vector<32x24xbf16>, vector<24x16xbf16>, vector<32x16xf32> -> vector<32x16xf32>
    %27 = arith.addf %23, %26 : vector<32x16xf32>
    %28 = vector.extract_strided_slice %14 {offsets = [0, 72], sizes = [32, 24], strides = [1, 1]} : vector<32x96xbf16> to vector<32x24xbf16>
    %c0_23 = arith.constant 0 : index
    %c3 = arith.constant 3 : index
    %29 = vector.load %arg8[%c0_23, %c3] : memref<24x20xbf16, #tpu.memory_space<vmem>>, vector<24x16xbf16>
    %cst_24 = arith.constant dense<0.000000e+00> : vector<32x16xf32>
    %30 = tpu.matmul %28, %29, %cst_24 {dimension_numbers = #tpu.dot_dimension_numbers<[1], [0], [0], [1], [0, 0, 1, 1], [], []>} : vector<32x24xbf16>, vector<24x16xbf16>, vector<32x16xf32> -> vector<32x16xf32>
    %31 = arith.addf %27, %30 : vector<32x16xf32>
    %32 = vector.broadcast %13 : vector<32x1xf32> to vector<32x16xf32>
    %33 = arith.addf %31, %32 : vector<32x16xf32>
    %c0_25 = arith.constant 0 : index
    %c0_26 = arith.constant 0 : index
    %34 = vector.load %arg4[%c0_25, %c0_26] : memref<32x96xbf16, #tpu.memory_space<vmem>>, vector<32x96xbf16>
    %cst_27 = arith.constant 0.000000e+00 : f32
    %35 = vector.broadcast %cst_27 : f32 to vector<32x16xf32>
    %36 = vector.extract_strided_slice %34 {offsets = [0, 0], sizes = [32, 24], strides = [1, 1]} : vector<32x96xbf16> to vector<32x24xbf16>
    %c0_28 = arith.constant 0 : index
    %c1_29 = arith.constant 1 : index
    %37 = vector.load %arg8[%c0_28, %c1_29] : memref<24x20xbf16, #tpu.memory_space<vmem>>, vector<24x16xbf16>
    %cst_30 = arith.constant dense<0.000000e+00> : vector<32x16xf32>
    %38 = tpu.matmul %36, %37, %cst_30 {dimension_numbers = #tpu.dot_dimension_numbers<[1], [0], [0], [1], [0, 0, 1, 1], [], []>} : vector<32x24xbf16>, vector<24x16xbf16>, vector<32x16xf32> -> vector<32x16xf32>
    %39 = arith.addf %35, %38 : vector<32x16xf32>
    %40 = vector.extract_strided_slice %34 {offsets = [0, 24], sizes = [32, 24], strides = [1, 1]} : vector<32x96xbf16> to vector<32x24xbf16>
    %c0_31 = arith.constant 0 : index
    %c2_32 = arith.constant 2 : index
    %41 = vector.load %arg8[%c0_31, %c2_32] : memref<24x20xbf16, #tpu.memory_space<vmem>>, vector<24x16xbf16>
    %cst_33 = arith.constant dense<0.000000e+00> : vector<32x16xf32>
    %42 = tpu.matmul %40, %41, %cst_33 {dimension_numbers = #tpu.dot_dimension_numbers<[1], [0], [0], [1], [0, 0, 1, 1], [], []>} : vector<32x24xbf16>, vector<24x16xbf16>, vector<32x16xf32> -> vector<32x16xf32>
    %43 = arith.addf %39, %42 : vector<32x16xf32>
    %44 = vector.extract_strided_slice %34 {offsets = [0, 48], sizes = [32, 24], strides = [1, 1]} : vector<32x96xbf16> to vector<32x24xbf16>
    %c0_34 = arith.constant 0 : index
    %c3_35 = arith.constant 3 : index
    %45 = vector.load %arg8[%c0_34, %c3_35] : memref<24x20xbf16, #tpu.memory_space<vmem>>, vector<24x16xbf16>
    %cst_36 = arith.constant dense<0.000000e+00> : vector<32x16xf32>
    %46 = tpu.matmul %44, %45, %cst_36 {dimension_numbers = #tpu.dot_dimension_numbers<[1], [0], [0], [1], [0, 0, 1, 1], [], []>} : vector<32x24xbf16>, vector<24x16xbf16>, vector<32x16xf32> -> vector<32x16xf32>
    %47 = arith.addf %43, %46 : vector<32x16xf32>
    %48 = vector.extract_strided_slice %34 {offsets = [0, 72], sizes = [32, 24], strides = [1, 1]} : vector<32x96xbf16> to vector<32x24xbf16>
    %c0_37 = arith.constant 0 : index
    %c4 = arith.constant 4 : index
    %49 = vector.load %arg8[%c0_37, %c4] : memref<24x20xbf16, #tpu.memory_space<vmem>>, vector<24x16xbf16>
    %cst_38 = arith.constant dense<0.000000e+00> : vector<32x16xf32>
    %50 = tpu.matmul %48, %49, %cst_38 {dimension_numbers = #tpu.dot_dimension_numbers<[1], [0], [0], [1], [0, 0, 1, 1], [], []>} : vector<32x24xbf16>, vector<24x16xbf16>, vector<32x16xf32> -> vector<32x16xf32>
    %51 = arith.addf %47, %50 : vector<32x16xf32>
    %52 = vector.broadcast %13 : vector<32x1xf32> to vector<32x16xf32>
    %53 = arith.addf %51, %52 : vector<32x16xf32>
    %cst_39 = arith.constant dense<0.000000e+00> : vector<32xf32>
    %54 = vector.multi_reduction <add>, %33, %cst_39 [1] : vector<32x16xf32> to vector<32xf32>
    %55 = vector.shape_cast %54 : vector<32xf32> to vector<32x1xf32>
    %cst_40 = arith.constant dense<0.000000e+00> : vector<32xf32>
    %56 = vector.multi_reduction <add>, %53, %cst_40 [1] : vector<32x16xf32> to vector<32xf32>
    %57 = vector.shape_cast %56 : vector<32xf32> to vector<32x1xf32>
    %58 = arith.addf %55, %57 : vector<32x1xf32>
    %cst_41 = arith.constant 3.200000e+01 : f32
    %59 = vector.broadcast %cst_41 : f32 to vector<32x1xf32>
    %60 = arith.divf %58, %59 : vector<32x1xf32>
    %61 = vector.broadcast %60 : vector<32x1xf32> to vector<32x16xf32>
    %62 = arith.subf %33, %61 : vector<32x16xf32>
    %63 = vector.broadcast %60 : vector<32x1xf32> to vector<32x16xf32>
    %64 = arith.subf %53, %63 : vector<32x16xf32>
    %65 = arith.mulf %62, %62 : vector<32x16xf32>
    %cst_42 = arith.constant dense<0.000000e+00> : vector<32xf32>
    %66 = vector.multi_reduction <add>, %65, %cst_42 [1] : vector<32x16xf32> to vector<32xf32>
    %67 = vector.shape_cast %66 : vector<32xf32> to vector<32x1xf32>
    %68 = arith.mulf %64, %64 : vector<32x16xf32>
    %cst_43 = arith.constant dense<0.000000e+00> : vector<32xf32>
    %69 = vector.multi_reduction <add>, %68, %cst_43 [1] : vector<32x16xf32> to vector<32xf32>
    %70 = vector.shape_cast %69 : vector<32xf32> to vector<32x1xf32>
    %71 = arith.addf %67, %70 : vector<32x1xf32>
    %cst_44 = arith.constant 3.200000e+01 : f32
    %72 = vector.broadcast %cst_44 : f32 to vector<32x1xf32>
    %73 = arith.divf %71, %72 : vector<32x1xf32>
    %cst_45 = arith.constant 9.99999974E-6 : f32
    %74 = vector.broadcast %cst_45 : f32 to vector<32x1xf32>
    %75 = arith.addf %73, %74 : vector<32x1xf32>
    %76 = math.rsqrt %75 : vector<32x1xf32>
    %77 = vector.broadcast %76 : vector<32x1xf32> to vector<32x16xf32>
    %78 = arith.mulf %62, %77 : vector<32x16xf32>
    %79 = vector.broadcast %76 : vector<32x1xf32> to vector<32x16xf32>
    %80 = arith.mulf %64, %79 : vector<32x16xf32>
    %81 = vector.extract_strided_slice %78 {offsets = [0, 0], sizes = [16, 16], strides = [1, 1]} : vector<32x16xf32> to vector<16x16xf32>
    %82 = vector.extract_strided_slice %78 {offsets = [16, 0], sizes = [16, 16], strides = [1, 1]} : vector<32x16xf32> to vector<16x16xf32>
    %cst_46 = arith.constant 0.000000e+00 : f32
    %83 = vector.broadcast %cst_46 : f32 to vector<16x16xf32>
    %84 = arith.subf %83, %82 : vector<16x16xf32>
    %85 = math.exp %84 : vector<16x16xf32>
    %cst_47 = arith.constant 1.000000e+00 : f32
    %86 = vector.broadcast %cst_47 : f32 to vector<16x16xf32>
    %87 = arith.addf %86, %85 : vector<16x16xf32>
    %88 = tpu.reciprocal %87 {approx = true} : vector<16x16xf32> -> vector<16x16xf32>
    %89 = arith.mulf %81, %88 : vector<16x16xf32>
    %c0_48 = arith.constant 0 : index
    %c0_49 = arith.constant 0 : index
    %c0_50 = arith.constant 0 : index
    %90 = vector.load %arg6[%c0_48, %c0_49, %c0_50] : memref<1x16x16xf32, #tpu.memory_space<vmem>>, vector<1x16x16xf32>
    %91 = vector.shape_cast %90 : vector<1x16x16xf32> to vector<16x16xf32>
    %92 = vector.shape_cast %89 : vector<16x16xf32> to vector<1x16x16xf32>
    tpu.vector_store %arg6[%c0_48, %c0_49, %c0_50], %92 {strides = array<i32>} : memref<1x16x16xf32, #tpu.memory_space<vmem>>, vector<1x16x16xf32>,
    %93 = vector.extract_strided_slice %80 {offsets = [0, 0], sizes = [16, 16], strides = [1, 1]} : vector<32x16xf32> to vector<16x16xf32>
    %94 = vector.extract_strided_slice %80 {offsets = [16, 0], sizes = [16, 16], strides = [1, 1]} : vector<32x16xf32> to vector<16x16xf32>
    %cst_51 = arith.constant 0.000000e+00 : f32
    %95 = vector.broadcast %cst_51 : f32 to vector<16x16xf32>
    %96 = arith.subf %95, %94 : vector<16x16xf32>
    %97 = math.exp %96 : vector<16x16xf32>
    %cst_52 = arith.constant 1.000000e+00 : f32
    %98 = vector.broadcast %cst_52 : f32 to vector<16x16xf32>
    %99 = arith.addf %98, %97 : vector<16x16xf32>
    %100 = tpu.reciprocal %99 {approx = true} : vector<16x16xf32> -> vector<16x16xf32>
    %101 = arith.mulf %93, %100 : vector<16x16xf32>
    %c0_53 = arith.constant 0 : index
    %c0_54 = arith.constant 0 : index
    %c0_55 = arith.constant 0 : index
    %102 = vector.load %arg7[%c0_53, %c0_54, %c0_55] : memref<1x16x16xf32, #tpu.memory_space<vmem>>, vector<1x16x16xf32>
    %103 = vector.shape_cast %102 : vector<1x16x16xf32> to vector<16x16xf32>
    %104 = vector.shape_cast %101 : vector<16x16xf32> to vector<1x16x16xf32>
    tpu.vector_store %arg7[%c0_53, %c0_54, %c0_55], %104 {strides = array<i32>} : memref<1x16x16xf32, #tpu.memory_space<vmem>>, vector<1x16x16xf32>,
    return
  }
  func.func @transform_0(%arg0: i32) -> (i32, i32, i32) {
    %c0_i32 = arith.constant 0 : i32
    %c0_i32_0 = arith.constant 0 : i32
    %c0_i32_1 = arith.constant 0 : i32
    return %arg0, %c0_i32, %c0_i32_0 : i32, i32, i32
  }
  func.func @transform_1(%arg0: i32) -> (i32, i32, i32) {
    %c0_i32 = arith.constant 0 : i32
    %c0_i32_0 = arith.constant 0 : i32
    %c0_i32_1 = arith.constant 0 : i32
    return %arg0, %c0_i32, %c0_i32_0 : i32, i32, i32
  }
  func.func @transform_2(%arg0: i32) -> (i32, i32) {
    %c0_i32 = arith.constant 0 : i32
    %c0_i32_0 = arith.constant 0 : i32
    %c0_i32_1 = arith.constant 0 : i32
    return %c0_i32, %c0_i32_0 : i32, i32
  }
  func.func @transform_3(%arg0: i32) -> (i32, i32) {
    %c0_i32 = arith.constant 0 : i32
    %c0_i32_0 = arith.constant 0 : i32
    %c0_i32_1 = arith.constant 0 : i32
    return %c0_i32, %c0_i32_0 : i32, i32
  }
  func.func @transform_4(%arg0: i32) -> (i32, i32) {
    %c0_i32 = arith.constant 0 : i32
    %c0_i32_0 = arith.constant 0 : i32
    %c0_i32_1 = arith.constant 0 : i32
    return %c0_i32, %c0_i32_0 : i32, i32
  }
  func.func @transform_5(%arg0: i32) -> (i32, i32, i32) {
    %c0_i32 = arith.constant 0 : i32
    %c0_i32_0 = arith.constant 0 : i32
    %c0_i32_1 = arith.constant 0 : i32
    return %arg0, %c0_i32, %c0_i32_0 : i32, i32, i32
  }
  func.func @transform_6(%arg0: i32) -> (i32, i32, i32) {
    %c0_i32 = arith.constant 0 : i32
    %c0_i32_0 = arith.constant 0 : i32
    %c0_i32_1 = arith.constant 0 : i32
    return %arg0, %c0_i32, %c0_i32_0 : i32, i32, i32
  }
}

module attributes {stable_mosaic.version = 11 : i64} {
  func.func @_input_stage_kernel(%arg0: i32, %arg1: memref<1x8x16xf32, #tpu.memory_space<vmem>>, %arg2: memref<1x8x1xf32, #tpu.memory_space<vmem>>, %arg3: memref<32x40xbf16, #tpu.memory_space<vmem>>, %arg4: memref<32x1xf32, #tpu.memory_space<vmem>>, %arg5: memref<16x8xbf16, #tpu.memory_space<vmem>>, %arg6: memref<16x1xf32, #tpu.memory_space<vmem>>, %arg7: memref<16x48xbf16, #tpu.memory_space<vmem>>, %arg8: memref<16x1xf32, #tpu.memory_space<vmem>>, %arg9: memref<1x16x16xf32, #tpu.memory_space<vmem>>, %arg10: memref<8x20xbf16, #tpu.memory_space<vmem>>, %arg11: memref<16x18xbf16, #tpu.memory_space<vmem>>) attributes {dimension_semantics = [#tpu.dimension_semantics<parallel>], iteration_bounds = array<i64: 2>, scalar_prefetch = 0 : i64, scratch_operands = 2 : i64, tpu.core_type = #tpu.core_type<tc>, window_params = [{transform_indices = @transform_0, window_bounds = array<i64: 1, 8, 16>}, {transform_indices = @transform_1, window_bounds = array<i64: 1, 8, 1>}, {pipeline_mode = #tpu.pipeline_mode<synchronous>, transform_indices = @transform_2, window_bounds = array<i64: 32, 40>}, {pipeline_mode = #tpu.pipeline_mode<synchronous>, transform_indices = @transform_3, window_bounds = array<i64: 32, 1>}, {pipeline_mode = #tpu.pipeline_mode<synchronous>, transform_indices = @transform_4, window_bounds = array<i64: 16, 8>}, {pipeline_mode = #tpu.pipeline_mode<synchronous>, transform_indices = @transform_5, window_bounds = array<i64: 16, 1>}, {pipeline_mode = #tpu.pipeline_mode<synchronous>, transform_indices = @transform_6, window_bounds = array<i64: 16, 48>}, {pipeline_mode = #tpu.pipeline_mode<synchronous>, transform_indices = @transform_7, window_bounds = array<i64: 16, 1>}, {transform_indices = @transform_8, window_bounds = array<i64: 1, 16, 16>}]} {
    %c0 = arith.constant 0 : index
    %c0_0 = arith.constant 0 : index
    %c0_1 = arith.constant 0 : index
    %0 = vector.load %arg1[%c0, %c0_0, %c0_1] : memref<1x8x16xf32, #tpu.memory_space<vmem>>, vector<1x8x16xf32>
    %1 = vector.shape_cast %0 : vector<1x8x16xf32> to vector<8x16xf32>
    %cst = arith.constant 0.000000e+00 : bf16
    %2 = vector.broadcast %cst : bf16 to vector<8x2xbf16>
    %c0_2 = arith.constant 0 : index
    %c0_3 = arith.constant 0 : index
    %3 = vector.load %arg10[%c0_2, %c0_3] : memref<8x20xbf16, #tpu.memory_space<vmem>>, vector<8x2xbf16>
    tpu.vector_store %arg10[%c0_2, %c0_3], %2 {strides = array<i32>} : memref<8x20xbf16, #tpu.memory_space<vmem>>, vector<8x2xbf16>,
    %c0_4 = arith.constant 0 : index
    %c18 = arith.constant 18 : index
    %4 = vector.load %arg10[%c0_4, %c18] : memref<8x20xbf16, #tpu.memory_space<vmem>>, vector<8x2xbf16>
    tpu.vector_store %arg10[%c0_4, %c18], %2 {strides = array<i32>} : memref<8x20xbf16, #tpu.memory_space<vmem>>, vector<8x2xbf16>,
    %5 = arith.truncf %1 : vector<8x16xf32> to vector<8x16xbf16>
    %c0_5 = arith.constant 0 : index
    %c2 = arith.constant 2 : index
    %6 = vector.load %arg10[%c0_5, %c2] : memref<8x20xbf16, #tpu.memory_space<vmem>>, vector<8x16xbf16>
    tpu.vector_store %arg10[%c0_5, %c2], %5 {strides = array<i32>} : memref<8x20xbf16, #tpu.memory_space<vmem>>, vector<8x16xbf16>,
    %c0_6 = arith.constant 0 : index
    %c0_7 = arith.constant 0 : index
    %7 = vector.load %arg3[%c0_6, %c0_7] : memref<32x40xbf16, #tpu.memory_space<vmem>>, vector<32x40xbf16>
    %cst_8 = arith.constant 0.000000e+00 : f32
    %8 = vector.broadcast %cst_8 : f32 to vector<32x16xf32>
    %9 = vector.extract_strided_slice %7 {offsets = [0, 0], sizes = [32, 8], strides = [1, 1]} : vector<32x40xbf16> to vector<32x8xbf16>
    %c0_9 = arith.constant 0 : index
    %c0_10 = arith.constant 0 : index
    %10 = vector.load %arg10[%c0_9, %c0_10] : memref<8x20xbf16, #tpu.memory_space<vmem>>, vector<8x16xbf16>
    %cst_11 = arith.constant dense<0.000000e+00> : vector<32x16xf32>
    %11 = tpu.matmul %9, %10, %cst_11 {dimension_numbers = #tpu.dot_dimension_numbers<[1], [0], [0], [1], [0, 0, 1, 1], [], []>} : vector<32x8xbf16>, vector<8x16xbf16>, vector<32x16xf32> -> vector<32x16xf32>
    %12 = arith.addf %8, %11 : vector<32x16xf32>
    %13 = vector.extract_strided_slice %7 {offsets = [0, 8], sizes = [32, 8], strides = [1, 1]} : vector<32x40xbf16> to vector<32x8xbf16>
    %c0_12 = arith.constant 0 : index
    %c1 = arith.constant 1 : index
    %14 = vector.load %arg10[%c0_12, %c1] : memref<8x20xbf16, #tpu.memory_space<vmem>>, vector<8x16xbf16>
    %cst_13 = arith.constant dense<0.000000e+00> : vector<32x16xf32>
    %15 = tpu.matmul %13, %14, %cst_13 {dimension_numbers = #tpu.dot_dimension_numbers<[1], [0], [0], [1], [0, 0, 1, 1], [], []>} : vector<32x8xbf16>, vector<8x16xbf16>, vector<32x16xf32> -> vector<32x16xf32>
    %16 = arith.addf %12, %15 : vector<32x16xf32>
    %17 = vector.extract_strided_slice %7 {offsets = [0, 16], sizes = [32, 8], strides = [1, 1]} : vector<32x40xbf16> to vector<32x8xbf16>
    %c0_14 = arith.constant 0 : index
    %c2_15 = arith.constant 2 : index
    %18 = vector.load %arg10[%c0_14, %c2_15] : memref<8x20xbf16, #tpu.memory_space<vmem>>, vector<8x16xbf16>
    %cst_16 = arith.constant dense<0.000000e+00> : vector<32x16xf32>
    %19 = tpu.matmul %17, %18, %cst_16 {dimension_numbers = #tpu.dot_dimension_numbers<[1], [0], [0], [1], [0, 0, 1, 1], [], []>} : vector<32x8xbf16>, vector<8x16xbf16>, vector<32x16xf32> -> vector<32x16xf32>
    %20 = arith.addf %16, %19 : vector<32x16xf32>
    %21 = vector.extract_strided_slice %7 {offsets = [0, 24], sizes = [32, 8], strides = [1, 1]} : vector<32x40xbf16> to vector<32x8xbf16>
    %c0_17 = arith.constant 0 : index
    %c3 = arith.constant 3 : index
    %22 = vector.load %arg10[%c0_17, %c3] : memref<8x20xbf16, #tpu.memory_space<vmem>>, vector<8x16xbf16>
    %cst_18 = arith.constant dense<0.000000e+00> : vector<32x16xf32>
    %23 = tpu.matmul %21, %22, %cst_18 {dimension_numbers = #tpu.dot_dimension_numbers<[1], [0], [0], [1], [0, 0, 1, 1], [], []>} : vector<32x8xbf16>, vector<8x16xbf16>, vector<32x16xf32> -> vector<32x16xf32>
    %24 = arith.addf %20, %23 : vector<32x16xf32>
    %25 = vector.extract_strided_slice %7 {offsets = [0, 32], sizes = [32, 8], strides = [1, 1]} : vector<32x40xbf16> to vector<32x8xbf16>
    %c0_19 = arith.constant 0 : index
    %c4 = arith.constant 4 : index
    %26 = vector.load %arg10[%c0_19, %c4] : memref<8x20xbf16, #tpu.memory_space<vmem>>, vector<8x16xbf16>
    %cst_20 = arith.constant dense<0.000000e+00> : vector<32x16xf32>
    %27 = tpu.matmul %25, %26, %cst_20 {dimension_numbers = #tpu.dot_dimension_numbers<[1], [0], [0], [1], [0, 0, 1, 1], [], []>} : vector<32x8xbf16>, vector<8x16xbf16>, vector<32x16xf32> -> vector<32x16xf32>
    %28 = arith.addf %24, %27 : vector<32x16xf32>
    %c0_21 = arith.constant 0 : index
    %c0_22 = arith.constant 0 : index
    %29 = vector.load %arg4[%c0_21, %c0_22] : memref<32x1xf32, #tpu.memory_space<vmem>>, vector<32x1xf32>
    %30 = vector.broadcast %29 : vector<32x1xf32> to vector<32x16xf32>
    %31 = arith.addf %28, %30 : vector<32x16xf32>
    %cst_23 = arith.constant dense<0.000000e+00> : vector<32xf32>
    %32 = vector.multi_reduction <add>, %31, %cst_23 [1] : vector<32x16xf32> to vector<32xf32>
    %33 = vector.shape_cast %32 : vector<32xf32> to vector<32x1xf32>
    %cst_24 = arith.constant 1.600000e+01 : f32
    %34 = vector.broadcast %cst_24 : f32 to vector<32x1xf32>
    %35 = arith.divf %33, %34 : vector<32x1xf32>
    %36 = vector.broadcast %35 : vector<32x1xf32> to vector<32x16xf32>
    %37 = arith.subf %31, %36 : vector<32x16xf32>
    %38 = arith.mulf %37, %37 : vector<32x16xf32>
    %cst_25 = arith.constant dense<0.000000e+00> : vector<32xf32>
    %39 = vector.multi_reduction <add>, %38, %cst_25 [1] : vector<32x16xf32> to vector<32xf32>
    %40 = vector.shape_cast %39 : vector<32xf32> to vector<32x1xf32>
    %cst_26 = arith.constant 1.600000e+01 : f32
    %41 = vector.broadcast %cst_26 : f32 to vector<32x1xf32>
    %42 = arith.divf %40, %41 : vector<32x1xf32>
    %cst_27 = arith.constant 9.99999974E-6 : f32
    %43 = vector.broadcast %cst_27 : f32 to vector<32x1xf32>
    %44 = arith.addf %42, %43 : vector<32x1xf32>
    %45 = math.rsqrt %44 : vector<32x1xf32>
    %46 = vector.broadcast %45 : vector<32x1xf32> to vector<32x16xf32>
    %47 = arith.mulf %37, %46 : vector<32x16xf32>
    %48 = vector.extract_strided_slice %47 {offsets = [0, 0], sizes = [16, 16], strides = [1, 1]} : vector<32x16xf32> to vector<16x16xf32>
    %49 = vector.extract_strided_slice %47 {offsets = [16, 0], sizes = [16, 16], strides = [1, 1]} : vector<32x16xf32> to vector<16x16xf32>
    %cst_28 = arith.constant 0.000000e+00 : f32
    %50 = vector.broadcast %cst_28 : f32 to vector<16x16xf32>
    %51 = arith.subf %50, %49 : vector<16x16xf32>
    %52 = math.exp %51 : vector<16x16xf32>
    %cst_29 = arith.constant 1.000000e+00 : f32
    %53 = vector.broadcast %cst_29 : f32 to vector<16x16xf32>
    %54 = arith.addf %53, %52 : vector<16x16xf32>
    %55 = tpu.reciprocal %54 {approx = true} : vector<16x16xf32> -> vector<16x16xf32>
    %56 = arith.mulf %48, %55 : vector<16x16xf32>
    %c0_30 = arith.constant 0 : index
    %c0_31 = arith.constant 0 : index
    %57 = vector.load %arg5[%c0_30, %c0_31] : memref<16x8xbf16, #tpu.memory_space<vmem>>, vector<16x8xbf16>
    %c0_32 = arith.constant 0 : index
    %c0_33 = arith.constant 0 : index
    %58 = vector.load %arg6[%c0_32, %c0_33] : memref<16x1xf32, #tpu.memory_space<vmem>>, vector<16x1xf32>
    %c0_34 = arith.constant 0 : index
    %c0_35 = arith.constant 0 : index
    %c0_36 = arith.constant 0 : index
    %59 = vector.load %arg2[%c0_34, %c0_35, %c0_36] : memref<1x8x1xf32, #tpu.memory_space<vmem>>, vector<1x8x1xf32>
    %60 = vector.shape_cast %59 : vector<1x8x1xf32> to vector<8x1xf32>
    %61 = arith.truncf %60 : vector<8x1xf32> to vector<8x1xbf16>
    %cst_37 = arith.constant dense<0.000000e+00> : vector<16x1xf32>
    %62 = tpu.matmul %57, %61, %cst_37 {dimension_numbers = #tpu.dot_dimension_numbers<[1], [0], [0], [1], [0, 0, 1, 1], [], []>} : vector<16x8xbf16>, vector<8x1xbf16>, vector<16x1xf32> -> vector<16x1xf32>
    %63 = arith.addf %62, %58 : vector<16x1xf32>
    %cst_38 = arith.constant 0.000000e+00 : f32
    %64 = vector.broadcast %cst_38 : f32 to vector<16x1xf32>
    %65 = arith.maximumf %63, %64 : vector<16x1xf32>
    %66 = vector.broadcast %65 : vector<16x1xf32> to vector<16x16xf32>
    %67 = arith.addf %56, %66 : vector<16x16xf32>
    %cst_39 = arith.constant 0.000000e+00 : bf16
    %68 = vector.broadcast %cst_39 : bf16 to vector<16x1xbf16>
    %c0_40 = arith.constant 0 : index
    %c0_41 = arith.constant 0 : index
    %69 = vector.load %arg11[%c0_40, %c0_41] : memref<16x18xbf16, #tpu.memory_space<vmem>>, vector<16x1xbf16>
    tpu.vector_store %arg11[%c0_40, %c0_41], %68 {strides = array<i32>} : memref<16x18xbf16, #tpu.memory_space<vmem>>, vector<16x1xbf16>,
    %c0_42 = arith.constant 0 : index
    %c17 = arith.constant 17 : index
    %70 = vector.load %arg11[%c0_42, %c17] : memref<16x18xbf16, #tpu.memory_space<vmem>>, vector<16x1xbf16>
    tpu.vector_store %arg11[%c0_42, %c17], %68 {strides = array<i32>} : memref<16x18xbf16, #tpu.memory_space<vmem>>, vector<16x1xbf16>,
    %71 = arith.truncf %67 : vector<16x16xf32> to vector<16x16xbf16>
    %c0_43 = arith.constant 0 : index
    %c1_44 = arith.constant 1 : index
    %72 = vector.load %arg11[%c0_43, %c1_44] : memref<16x18xbf16, #tpu.memory_space<vmem>>, vector<16x16xbf16>
    tpu.vector_store %arg11[%c0_43, %c1_44], %71 {strides = array<i32>} : memref<16x18xbf16, #tpu.memory_space<vmem>>, vector<16x16xbf16>,
    %c0_45 = arith.constant 0 : index
    %c0_46 = arith.constant 0 : index
    %73 = vector.load %arg7[%c0_45, %c0_46] : memref<16x48xbf16, #tpu.memory_space<vmem>>, vector<16x48xbf16>
    %cst_47 = arith.constant 0.000000e+00 : f32
    %74 = vector.broadcast %cst_47 : f32 to vector<16x16xf32>
    %75 = vector.extract_strided_slice %73 {offsets = [0, 0], sizes = [16, 16], strides = [1, 1]} : vector<16x48xbf16> to vector<16x16xbf16>
    %c0_48 = arith.constant 0 : index
    %c0_49 = arith.constant 0 : index
    %76 = vector.load %arg11[%c0_48, %c0_49] : memref<16x18xbf16, #tpu.memory_space<vmem>>, vector<16x16xbf16>
    %cst_50 = arith.constant dense<0.000000e+00> : vector<16x16xf32>
    %77 = tpu.matmul %75, %76, %cst_50 {dimension_numbers = #tpu.dot_dimension_numbers<[1], [0], [0], [1], [0, 0, 1, 1], [], []>} : vector<16x16xbf16>, vector<16x16xbf16>, vector<16x16xf32> -> vector<16x16xf32>
    %78 = arith.addf %74, %77 : vector<16x16xf32>
    %79 = vector.extract_strided_slice %73 {offsets = [0, 16], sizes = [16, 16], strides = [1, 1]} : vector<16x48xbf16> to vector<16x16xbf16>
    %c0_51 = arith.constant 0 : index
    %c1_52 = arith.constant 1 : index
    %80 = vector.load %arg11[%c0_51, %c1_52] : memref<16x18xbf16, #tpu.memory_space<vmem>>, vector<16x16xbf16>
    %cst_53 = arith.constant dense<0.000000e+00> : vector<16x16xf32>
    %81 = tpu.matmul %79, %80, %cst_53 {dimension_numbers = #tpu.dot_dimension_numbers<[1], [0], [0], [1], [0, 0, 1, 1], [], []>} : vector<16x16xbf16>, vector<16x16xbf16>, vector<16x16xf32> -> vector<16x16xf32>
    %82 = arith.addf %78, %81 : vector<16x16xf32>
    %83 = vector.extract_strided_slice %73 {offsets = [0, 32], sizes = [16, 16], strides = [1, 1]} : vector<16x48xbf16> to vector<16x16xbf16>
    %c0_54 = arith.constant 0 : index
    %c2_55 = arith.constant 2 : index
    %84 = vector.load %arg11[%c0_54, %c2_55] : memref<16x18xbf16, #tpu.memory_space<vmem>>, vector<16x16xbf16>
    %cst_56 = arith.constant dense<0.000000e+00> : vector<16x16xf32>
    %85 = tpu.matmul %83, %84, %cst_56 {dimension_numbers = #tpu.dot_dimension_numbers<[1], [0], [0], [1], [0, 0, 1, 1], [], []>} : vector<16x16xbf16>, vector<16x16xbf16>, vector<16x16xf32> -> vector<16x16xf32>
    %86 = arith.addf %82, %85 : vector<16x16xf32>
    %c0_57 = arith.constant 0 : index
    %c0_58 = arith.constant 0 : index
    %87 = vector.load %arg8[%c0_57, %c0_58] : memref<16x1xf32, #tpu.memory_space<vmem>>, vector<16x1xf32>
    %88 = vector.broadcast %87 : vector<16x1xf32> to vector<16x16xf32>
    %89 = arith.addf %86, %88 : vector<16x16xf32>
    %c0_59 = arith.constant 0 : index
    %c0_60 = arith.constant 0 : index
    %c0_61 = arith.constant 0 : index
    %90 = vector.load %arg9[%c0_59, %c0_60, %c0_61] : memref<1x16x16xf32, #tpu.memory_space<vmem>>, vector<1x16x16xf32>
    %91 = vector.shape_cast %90 : vector<1x16x16xf32> to vector<16x16xf32>
    %92 = vector.shape_cast %89 : vector<16x16xf32> to vector<1x16x16xf32>
    tpu.vector_store %arg9[%c0_59, %c0_60, %c0_61], %92 {strides = array<i32>} : memref<1x16x16xf32, #tpu.memory_space<vmem>>, vector<1x16x16xf32>,
    return
  }
  func.func @transform_0(%arg0: i32) -> (i32, i32, i32) {
    %c0_i32 = arith.constant 0 : i32
    %c0_i32_0 = arith.constant 0 : i32
    %c0_i32_1 = arith.constant 0 : i32
    return %arg0, %c0_i32, %c0_i32_0 : i32, i32, i32
  }
  func.func @transform_1(%arg0: i32) -> (i32, i32, i32) {
    %c0_i32 = arith.constant 0 : i32
    %c0_i32_0 = arith.constant 0 : i32
    %c0_i32_1 = arith.constant 0 : i32
    return %arg0, %c0_i32, %c0_i32_0 : i32, i32, i32
  }
  func.func @transform_2(%arg0: i32) -> (i32, i32) {
    %c0_i32 = arith.constant 0 : i32
    %c0_i32_0 = arith.constant 0 : i32
    %c0_i32_1 = arith.constant 0 : i32
    return %c0_i32, %c0_i32_0 : i32, i32
  }
  func.func @transform_3(%arg0: i32) -> (i32, i32) {
    %c0_i32 = arith.constant 0 : i32
    %c0_i32_0 = arith.constant 0 : i32
    %c0_i32_1 = arith.constant 0 : i32
    return %c0_i32, %c0_i32_0 : i32, i32
  }
  func.func @transform_4(%arg0: i32) -> (i32, i32) {
    %c0_i32 = arith.constant 0 : i32
    %c0_i32_0 = arith.constant 0 : i32
    %c0_i32_1 = arith.constant 0 : i32
    return %c0_i32, %c0_i32_0 : i32, i32
  }
  func.func @transform_5(%arg0: i32) -> (i32, i32) {
    %c0_i32 = arith.constant 0 : i32
    %c0_i32_0 = arith.constant 0 : i32
    %c0_i32_1 = arith.constant 0 : i32
    return %c0_i32, %c0_i32_0 : i32, i32
  }
  func.func @transform_6(%arg0: i32) -> (i32, i32) {
    %c0_i32 = arith.constant 0 : i32
    %c0_i32_0 = arith.constant 0 : i32
    %c0_i32_1 = arith.constant 0 : i32
    return %c0_i32, %c0_i32_0 : i32, i32
  }
  func.func @transform_7(%arg0: i32) -> (i32, i32) {
    %c0_i32 = arith.constant 0 : i32
    %c0_i32_0 = arith.constant 0 : i32
    %c0_i32_1 = arith.constant 0 : i32
    return %c0_i32, %c0_i32_0 : i32, i32
  }
  func.func @transform_8(%arg0: i32) -> (i32, i32, i32) {
    %c0_i32 = arith.constant 0 : i32
    %c0_i32_0 = arith.constant 0 : i32
    %c0_i32_1 = arith.constant 0 : i32
    return %arg0, %c0_i32, %c0_i32_0 : i32, i32, i32
  }
}

module attributes {stable_mosaic.version = 11 : i64} {
  func.func @_output_stage_kernel(%arg0: i32, %arg1: memref<1x16x32xf32, #tpu.memory_space<vmem>>, %arg2: memref<16x80xbf16, #tpu.memory_space<vmem>>, %arg3: memref<16x1xf32, #tpu.memory_space<vmem>>, %arg4: memref<8x120xbf16, #tpu.memory_space<vmem>>, %arg5: memref<8x1xf32, #tpu.memory_space<vmem>>, %arg6: memref<1x8x32xf32, #tpu.memory_space<vmem>>, %arg7: memref<16x36xbf16, #tpu.memory_space<vmem>>, %arg8: memref<8x46xbf16, #tpu.memory_space<vmem>>) attributes {dimension_semantics = [#tpu.dimension_semantics<parallel>], iteration_bounds = array<i64: 2>, scalar_prefetch = 0 : i64, scratch_operands = 2 : i64, tpu.core_type = #tpu.core_type<tc>, window_params = [{transform_indices = @transform_0, window_bounds = array<i64: 1, 16, 32>}, {pipeline_mode = #tpu.pipeline_mode<synchronous>, transform_indices = @transform_1, window_bounds = array<i64: 16, 80>}, {pipeline_mode = #tpu.pipeline_mode<synchronous>, transform_indices = @transform_2, window_bounds = array<i64: 16, 1>}, {pipeline_mode = #tpu.pipeline_mode<synchronous>, transform_indices = @transform_3, window_bounds = array<i64: 8, 120>}, {pipeline_mode = #tpu.pipeline_mode<synchronous>, transform_indices = @transform_4, window_bounds = array<i64: 8, 1>}, {transform_indices = @transform_5, window_bounds = array<i64: 1, 8, 32>}]} {
    %c0 = arith.constant 0 : index
    %c0_0 = arith.constant 0 : index
    %c0_1 = arith.constant 0 : index
    %0 = vector.load %arg1[%c0, %c0_0, %c0_1] : memref<1x16x32xf32, #tpu.memory_space<vmem>>, vector<1x16x32xf32>
    %1 = vector.shape_cast %0 : vector<1x16x32xf32> to vector<16x32xf32>
    %cst = arith.constant 0.000000e+00 : bf16
    %2 = vector.broadcast %cst : bf16 to vector<16x2xbf16>
    %c0_2 = arith.constant 0 : index
    %c0_3 = arith.constant 0 : index
    %3 = vector.load %arg7[%c0_2, %c0_3] : memref<16x36xbf16, #tpu.memory_space<vmem>>, vector<16x2xbf16>
    tpu.vector_store %arg7[%c0_2, %c0_3], %2 {strides = array<i32>} : memref<16x36xbf16, #tpu.memory_space<vmem>>, vector<16x2xbf16>,
    %c0_4 = arith.constant 0 : index
    %c34 = arith.constant 34 : index
    %4 = vector.load %arg7[%c0_4, %c34] : memref<16x36xbf16, #tpu.memory_space<vmem>>, vector<16x2xbf16>
    tpu.vector_store %arg7[%c0_4, %c34], %2 {strides = array<i32>} : memref<16x36xbf16, #tpu.memory_space<vmem>>, vector<16x2xbf16>,
    %5 = arith.truncf %1 : vector<16x32xf32> to vector<16x32xbf16>
    %c0_5 = arith.constant 0 : index
    %c2 = arith.constant 2 : index
    %6 = vector.load %arg7[%c0_5, %c2] : memref<16x36xbf16, #tpu.memory_space<vmem>>, vector<16x32xbf16>
    tpu.vector_store %arg7[%c0_5, %c2], %5 {strides = array<i32>} : memref<16x36xbf16, #tpu.memory_space<vmem>>, vector<16x32xbf16>,
    %c0_6 = arith.constant 0 : index
    %c0_7 = arith.constant 0 : index
    %7 = vector.load %arg2[%c0_6, %c0_7] : memref<16x80xbf16, #tpu.memory_space<vmem>>, vector<16x80xbf16>
    %cst_8 = arith.constant 0.000000e+00 : f32
    %8 = vector.broadcast %cst_8 : f32 to vector<16x32xf32>
    %9 = vector.extract_strided_slice %7 {offsets = [0, 0], sizes = [16, 16], strides = [1, 1]} : vector<16x80xbf16> to vector<16x16xbf16>
    %c0_9 = arith.constant 0 : index
    %c0_10 = arith.constant 0 : index
    %10 = vector.load %arg7[%c0_9, %c0_10] : memref<16x36xbf16, #tpu.memory_space<vmem>>, vector<16x32xbf16>
    %cst_11 = arith.constant dense<0.000000e+00> : vector<16x32xf32>
    %11 = tpu.matmul %9, %10, %cst_11 {dimension_numbers = #tpu.dot_dimension_numbers<[1], [0], [0], [1], [0, 0, 1, 1], [], []>} : vector<16x16xbf16>, vector<16x32xbf16>, vector<16x32xf32> -> vector<16x32xf32>
    %12 = arith.addf %8, %11 : vector<16x32xf32>
    %13 = vector.extract_strided_slice %7 {offsets = [0, 16], sizes = [16, 16], strides = [1, 1]} : vector<16x80xbf16> to vector<16x16xbf16>
    %c0_12 = arith.constant 0 : index
    %c1 = arith.constant 1 : index
    %14 = vector.load %arg7[%c0_12, %c1] : memref<16x36xbf16, #tpu.memory_space<vmem>>, vector<16x32xbf16>
    %cst_13 = arith.constant dense<0.000000e+00> : vector<16x32xf32>
    %15 = tpu.matmul %13, %14, %cst_13 {dimension_numbers = #tpu.dot_dimension_numbers<[1], [0], [0], [1], [0, 0, 1, 1], [], []>} : vector<16x16xbf16>, vector<16x32xbf16>, vector<16x32xf32> -> vector<16x32xf32>
    %16 = arith.addf %12, %15 : vector<16x32xf32>
    %17 = vector.extract_strided_slice %7 {offsets = [0, 32], sizes = [16, 16], strides = [1, 1]} : vector<16x80xbf16> to vector<16x16xbf16>
    %c0_14 = arith.constant 0 : index
    %c2_15 = arith.constant 2 : index
    %18 = vector.load %arg7[%c0_14, %c2_15] : memref<16x36xbf16, #tpu.memory_space<vmem>>, vector<16x32xbf16>
    %cst_16 = arith.constant dense<0.000000e+00> : vector<16x32xf32>
    %19 = tpu.matmul %17, %18, %cst_16 {dimension_numbers = #tpu.dot_dimension_numbers<[1], [0], [0], [1], [0, 0, 1, 1], [], []>} : vector<16x16xbf16>, vector<16x32xbf16>, vector<16x32xf32> -> vector<16x32xf32>
    %20 = arith.addf %16, %19 : vector<16x32xf32>
    %21 = vector.extract_strided_slice %7 {offsets = [0, 48], sizes = [16, 16], strides = [1, 1]} : vector<16x80xbf16> to vector<16x16xbf16>
    %c0_17 = arith.constant 0 : index
    %c3 = arith.constant 3 : index
    %22 = vector.load %arg7[%c0_17, %c3] : memref<16x36xbf16, #tpu.memory_space<vmem>>, vector<16x32xbf16>
    %cst_18 = arith.constant dense<0.000000e+00> : vector<16x32xf32>
    %23 = tpu.matmul %21, %22, %cst_18 {dimension_numbers = #tpu.dot_dimension_numbers<[1], [0], [0], [1], [0, 0, 1, 1], [], []>} : vector<16x16xbf16>, vector<16x32xbf16>, vector<16x32xf32> -> vector<16x32xf32>
    %24 = arith.addf %20, %23 : vector<16x32xf32>
    %25 = vector.extract_strided_slice %7 {offsets = [0, 64], sizes = [16, 16], strides = [1, 1]} : vector<16x80xbf16> to vector<16x16xbf16>
    %c0_19 = arith.constant 0 : index
    %c4 = arith.constant 4 : index
    %26 = vector.load %arg7[%c0_19, %c4] : memref<16x36xbf16, #tpu.memory_space<vmem>>, vector<16x32xbf16>
    %cst_20 = arith.constant dense<0.000000e+00> : vector<16x32xf32>
    %27 = tpu.matmul %25, %26, %cst_20 {dimension_numbers = #tpu.dot_dimension_numbers<[1], [0], [0], [1], [0, 0, 1, 1], [], []>} : vector<16x16xbf16>, vector<16x32xbf16>, vector<16x32xf32> -> vector<16x32xf32>
    %28 = arith.addf %24, %27 : vector<16x32xf32>
    %c0_21 = arith.constant 0 : index
    %c0_22 = arith.constant 0 : index
    %29 = vector.load %arg3[%c0_21, %c0_22] : memref<16x1xf32, #tpu.memory_space<vmem>>, vector<16x1xf32>
    %30 = vector.broadcast %29 : vector<16x1xf32> to vector<16x32xf32>
    %31 = arith.addf %28, %30 : vector<16x32xf32>
    %cst_23 = arith.constant dense<0.000000e+00> : vector<16xf32>
    %32 = vector.multi_reduction <add>, %31, %cst_23 [1] : vector<16x32xf32> to vector<16xf32>
    %33 = vector.shape_cast %32 : vector<16xf32> to vector<16x1xf32>
    %cst_24 = arith.constant 3.200000e+01 : f32
    %34 = vector.broadcast %cst_24 : f32 to vector<16x1xf32>
    %35 = arith.divf %33, %34 : vector<16x1xf32>
    %36 = vector.broadcast %35 : vector<16x1xf32> to vector<16x32xf32>
    %37 = arith.subf %31, %36 : vector<16x32xf32>
    %38 = arith.mulf %37, %37 : vector<16x32xf32>
    %cst_25 = arith.constant dense<0.000000e+00> : vector<16xf32>
    %39 = vector.multi_reduction <add>, %38, %cst_25 [1] : vector<16x32xf32> to vector<16xf32>
    %40 = vector.shape_cast %39 : vector<16xf32> to vector<16x1xf32>
    %cst_26 = arith.constant 3.200000e+01 : f32
    %41 = vector.broadcast %cst_26 : f32 to vector<16x1xf32>
    %42 = arith.divf %40, %41 : vector<16x1xf32>
    %cst_27 = arith.constant 9.99999974E-6 : f32
    %43 = vector.broadcast %cst_27 : f32 to vector<16x1xf32>
    %44 = arith.addf %42, %43 : vector<16x1xf32>
    %45 = math.rsqrt %44 : vector<16x1xf32>
    %46 = vector.broadcast %45 : vector<16x1xf32> to vector<16x32xf32>
    %47 = arith.mulf %37, %46 : vector<16x32xf32>
    %48 = vector.extract_strided_slice %47 {offsets = [0, 0], sizes = [8, 32], strides = [1, 1]} : vector<16x32xf32> to vector<8x32xf32>
    %49 = vector.extract_strided_slice %47 {offsets = [8, 0], sizes = [8, 32], strides = [1, 1]} : vector<16x32xf32> to vector<8x32xf32>
    %cst_28 = arith.constant 0.000000e+00 : f32
    %50 = vector.broadcast %cst_28 : f32 to vector<8x32xf32>
    %51 = arith.subf %50, %49 : vector<8x32xf32>
    %52 = math.exp %51 : vector<8x32xf32>
    %cst_29 = arith.constant 1.000000e+00 : f32
    %53 = vector.broadcast %cst_29 : f32 to vector<8x32xf32>
    %54 = arith.addf %53, %52 : vector<8x32xf32>
    %55 = tpu.reciprocal %54 {approx = true} : vector<8x32xf32> -> vector<8x32xf32>
    %56 = arith.mulf %48, %55 : vector<8x32xf32>
    %cst_30 = arith.constant 0.000000e+00 : bf16
    %57 = vector.broadcast %cst_30 : bf16 to vector<8x7xbf16>
    %c0_31 = arith.constant 0 : index
    %c0_32 = arith.constant 0 : index
    %58 = vector.load %arg8[%c0_31, %c0_32] : memref<8x46xbf16, #tpu.memory_space<vmem>>, vector<8x7xbf16>
    tpu.vector_store %arg8[%c0_31, %c0_32], %57 {strides = array<i32>} : memref<8x46xbf16, #tpu.memory_space<vmem>>, vector<8x7xbf16>,
    %c0_33 = arith.constant 0 : index
    %c39 = arith.constant 39 : index
    %59 = vector.load %arg8[%c0_33, %c39] : memref<8x46xbf16, #tpu.memory_space<vmem>>, vector<8x7xbf16>
    tpu.vector_store %arg8[%c0_33, %c39], %57 {strides = array<i32>} : memref<8x46xbf16, #tpu.memory_space<vmem>>, vector<8x7xbf16>,
    %60 = arith.truncf %56 : vector<8x32xf32> to vector<8x32xbf16>
    %c0_34 = arith.constant 0 : index
    %c7 = arith.constant 7 : index
    %61 = vector.load %arg8[%c0_34, %c7] : memref<8x46xbf16, #tpu.memory_space<vmem>>, vector<8x32xbf16>
    tpu.vector_store %arg8[%c0_34, %c7], %60 {strides = array<i32>} : memref<8x46xbf16, #tpu.memory_space<vmem>>, vector<8x32xbf16>,
    %c0_35 = arith.constant 0 : index
    %c0_36 = arith.constant 0 : index
    %62 = vector.load %arg4[%c0_35, %c0_36] : memref<8x120xbf16, #tpu.memory_space<vmem>>, vector<8x120xbf16>
    %cst_37 = arith.constant 0.000000e+00 : f32
    %63 = vector.broadcast %cst_37 : f32 to vector<8x32xf32>
    %64 = vector.extract_strided_slice %62 {offsets = [0, 0], sizes = [8, 8], strides = [1, 1]} : vector<8x120xbf16> to vector<8x8xbf16>
    %c0_38 = arith.constant 0 : index
    %c0_39 = arith.constant 0 : index
    %65 = vector.load %arg8[%c0_38, %c0_39] : memref<8x46xbf16, #tpu.memory_space<vmem>>, vector<8x32xbf16>
    %cst_40 = arith.constant dense<0.000000e+00> : vector<8x32xf32>
    %66 = tpu.matmul %64, %65, %cst_40 {dimension_numbers = #tpu.dot_dimension_numbers<[1], [0], [0], [1], [0, 0, 1, 1], [], []>} : vector<8x8xbf16>, vector<8x32xbf16>, vector<8x32xf32> -> vector<8x32xf32>
    %67 = arith.addf %63, %66 : vector<8x32xf32>
    %68 = vector.extract_strided_slice %62 {offsets = [0, 8], sizes = [8, 8], strides = [1, 1]} : vector<8x120xbf16> to vector<8x8xbf16>
    %c0_41 = arith.constant 0 : index
    %c1_42 = arith.constant 1 : index
    %69 = vector.load %arg8[%c0_41, %c1_42] : memref<8x46xbf16, #tpu.memory_space<vmem>>, vector<8x32xbf16>
    %cst_43 = arith.constant dense<0.000000e+00> : vector<8x32xf32>
    %70 = tpu.matmul %68, %69, %cst_43 {dimension_numbers = #tpu.dot_dimension_numbers<[1], [0], [0], [1], [0, 0, 1, 1], [], []>} : vector<8x8xbf16>, vector<8x32xbf16>, vector<8x32xf32> -> vector<8x32xf32>
    %71 = arith.addf %67, %70 : vector<8x32xf32>
    %72 = vector.extract_strided_slice %62 {offsets = [0, 16], sizes = [8, 8], strides = [1, 1]} : vector<8x120xbf16> to vector<8x8xbf16>
    %c0_44 = arith.constant 0 : index
    %c2_45 = arith.constant 2 : index
    %73 = vector.load %arg8[%c0_44, %c2_45] : memref<8x46xbf16, #tpu.memory_space<vmem>>, vector<8x32xbf16>
    %cst_46 = arith.constant dense<0.000000e+00> : vector<8x32xf32>
    %74 = tpu.matmul %72, %73, %cst_46 {dimension_numbers = #tpu.dot_dimension_numbers<[1], [0], [0], [1], [0, 0, 1, 1], [], []>} : vector<8x8xbf16>, vector<8x32xbf16>, vector<8x32xf32> -> vector<8x32xf32>
    %75 = arith.addf %71, %74 : vector<8x32xf32>
    %76 = vector.extract_strided_slice %62 {offsets = [0, 24], sizes = [8, 8], strides = [1, 1]} : vector<8x120xbf16> to vector<8x8xbf16>
    %c0_47 = arith.constant 0 : index
    %c3_48 = arith.constant 3 : index
    %77 = vector.load %arg8[%c0_47, %c3_48] : memref<8x46xbf16, #tpu.memory_space<vmem>>, vector<8x32xbf16>
    %cst_49 = arith.constant dense<0.000000e+00> : vector<8x32xf32>
    %78 = tpu.matmul %76, %77, %cst_49 {dimension_numbers = #tpu.dot_dimension_numbers<[1], [0], [0], [1], [0, 0, 1, 1], [], []>} : vector<8x8xbf16>, vector<8x32xbf16>, vector<8x32xf32> -> vector<8x32xf32>
    %79 = arith.addf %75, %78 : vector<8x32xf32>
    %80 = vector.extract_strided_slice %62 {offsets = [0, 32], sizes = [8, 8], strides = [1, 1]} : vector<8x120xbf16> to vector<8x8xbf16>
    %c0_50 = arith.constant 0 : index
    %c4_51 = arith.constant 4 : index
    %81 = vector.load %arg8[%c0_50, %c4_51] : memref<8x46xbf16, #tpu.memory_space<vmem>>, vector<8x32xbf16>
    %cst_52 = arith.constant dense<0.000000e+00> : vector<8x32xf32>
    %82 = tpu.matmul %80, %81, %cst_52 {dimension_numbers = #tpu.dot_dimension_numbers<[1], [0], [0], [1], [0, 0, 1, 1], [], []>} : vector<8x8xbf16>, vector<8x32xbf16>, vector<8x32xf32> -> vector<8x32xf32>
    %83 = arith.addf %79, %82 : vector<8x32xf32>
    %84 = vector.extract_strided_slice %62 {offsets = [0, 40], sizes = [8, 8], strides = [1, 1]} : vector<8x120xbf16> to vector<8x8xbf16>
    %c0_53 = arith.constant 0 : index
    %c5 = arith.constant 5 : index
    %85 = vector.load %arg8[%c0_53, %c5] : memref<8x46xbf16, #tpu.memory_space<vmem>>, vector<8x32xbf16>
    %cst_54 = arith.constant dense<0.000000e+00> : vector<8x32xf32>
    %86 = tpu.matmul %84, %85, %cst_54 {dimension_numbers = #tpu.dot_dimension_numbers<[1], [0], [0], [1], [0, 0, 1, 1], [], []>} : vector<8x8xbf16>, vector<8x32xbf16>, vector<8x32xf32> -> vector<8x32xf32>
    %87 = arith.addf %83, %86 : vector<8x32xf32>
    %88 = vector.extract_strided_slice %62 {offsets = [0, 48], sizes = [8, 8], strides = [1, 1]} : vector<8x120xbf16> to vector<8x8xbf16>
    %c0_55 = arith.constant 0 : index
    %c6 = arith.constant 6 : index
    %89 = vector.load %arg8[%c0_55, %c6] : memref<8x46xbf16, #tpu.memory_space<vmem>>, vector<8x32xbf16>
    %cst_56 = arith.constant dense<0.000000e+00> : vector<8x32xf32>
    %90 = tpu.matmul %88, %89, %cst_56 {dimension_numbers = #tpu.dot_dimension_numbers<[1], [0], [0], [1], [0, 0, 1, 1], [], []>} : vector<8x8xbf16>, vector<8x32xbf16>, vector<8x32xf32> -> vector<8x32xf32>
    %91 = arith.addf %87, %90 : vector<8x32xf32>
    %92 = vector.extract_strided_slice %62 {offsets = [0, 56], sizes = [8, 8], strides = [1, 1]} : vector<8x120xbf16> to vector<8x8xbf16>
    %c0_57 = arith.constant 0 : index
    %c7_58 = arith.constant 7 : index
    %93 = vector.load %arg8[%c0_57, %c7_58] : memref<8x46xbf16, #tpu.memory_space<vmem>>, vector<8x32xbf16>
    %cst_59 = arith.constant dense<0.000000e+00> : vector<8x32xf32>
    %94 = tpu.matmul %92, %93, %cst_59 {dimension_numbers = #tpu.dot_dimension_numbers<[1], [0], [0], [1], [0, 0, 1, 1], [], []>} : vector<8x8xbf16>, vector<8x32xbf16>, vector<8x32xf32> -> vector<8x32xf32>
    %95 = arith.addf %91, %94 : vector<8x32xf32>
    %96 = vector.extract_strided_slice %62 {offsets = [0, 64], sizes = [8, 8], strides = [1, 1]} : vector<8x120xbf16> to vector<8x8xbf16>
    %c0_60 = arith.constant 0 : index
    %c8 = arith.constant 8 : index
    %97 = vector.load %arg8[%c0_60, %c8] : memref<8x46xbf16, #tpu.memory_space<vmem>>, vector<8x32xbf16>
    %cst_61 = arith.constant dense<0.000000e+00> : vector<8x32xf32>
    %98 = tpu.matmul %96, %97, %cst_61 {dimension_numbers = #tpu.dot_dimension_numbers<[1], [0], [0], [1], [0, 0, 1, 1], [], []>} : vector<8x8xbf16>, vector<8x32xbf16>, vector<8x32xf32> -> vector<8x32xf32>
    %99 = arith.addf %95, %98 : vector<8x32xf32>
    %100 = vector.extract_strided_slice %62 {offsets = [0, 72], sizes = [8, 8], strides = [1, 1]} : vector<8x120xbf16> to vector<8x8xbf16>
    %c0_62 = arith.constant 0 : index
    %c9 = arith.constant 9 : index
    %101 = vector.load %arg8[%c0_62, %c9] : memref<8x46xbf16, #tpu.memory_space<vmem>>, vector<8x32xbf16>
    %cst_63 = arith.constant dense<0.000000e+00> : vector<8x32xf32>
    %102 = tpu.matmul %100, %101, %cst_63 {dimension_numbers = #tpu.dot_dimension_numbers<[1], [0], [0], [1], [0, 0, 1, 1], [], []>} : vector<8x8xbf16>, vector<8x32xbf16>, vector<8x32xf32> -> vector<8x32xf32>
    %103 = arith.addf %99, %102 : vector<8x32xf32>
    %104 = vector.extract_strided_slice %62 {offsets = [0, 80], sizes = [8, 8], strides = [1, 1]} : vector<8x120xbf16> to vector<8x8xbf16>
    %c0_64 = arith.constant 0 : index
    %c10 = arith.constant 10 : index
    %105 = vector.load %arg8[%c0_64, %c10] : memref<8x46xbf16, #tpu.memory_space<vmem>>, vector<8x32xbf16>
    %cst_65 = arith.constant dense<0.000000e+00> : vector<8x32xf32>
    %106 = tpu.matmul %104, %105, %cst_65 {dimension_numbers = #tpu.dot_dimension_numbers<[1], [0], [0], [1], [0, 0, 1, 1], [], []>} : vector<8x8xbf16>, vector<8x32xbf16>, vector<8x32xf32> -> vector<8x32xf32>
    %107 = arith.addf %103, %106 : vector<8x32xf32>
    %108 = vector.extract_strided_slice %62 {offsets = [0, 88], sizes = [8, 8], strides = [1, 1]} : vector<8x120xbf16> to vector<8x8xbf16>
    %c0_66 = arith.constant 0 : index
    %c11 = arith.constant 11 : index
    %109 = vector.load %arg8[%c0_66, %c11] : memref<8x46xbf16, #tpu.memory_space<vmem>>, vector<8x32xbf16>
    %cst_67 = arith.constant dense<0.000000e+00> : vector<8x32xf32>
    %110 = tpu.matmul %108, %109, %cst_67 {dimension_numbers = #tpu.dot_dimension_numbers<[1], [0], [0], [1], [0, 0, 1, 1], [], []>} : vector<8x8xbf16>, vector<8x32xbf16>, vector<8x32xf32> -> vector<8x32xf32>
    %111 = arith.addf %107, %110 : vector<8x32xf32>
    %112 = vector.extract_strided_slice %62 {offsets = [0, 96], sizes = [8, 8], strides = [1, 1]} : vector<8x120xbf16> to vector<8x8xbf16>
    %c0_68 = arith.constant 0 : index
    %c12 = arith.constant 12 : index
    %113 = vector.load %arg8[%c0_68, %c12] : memref<8x46xbf16, #tpu.memory_space<vmem>>, vector<8x32xbf16>
    %cst_69 = arith.constant dense<0.000000e+00> : vector<8x32xf32>
    %114 = tpu.matmul %112, %113, %cst_69 {dimension_numbers = #tpu.dot_dimension_numbers<[1], [0], [0], [1], [0, 0, 1, 1], [], []>} : vector<8x8xbf16>, vector<8x32xbf16>, vector<8x32xf32> -> vector<8x32xf32>
    %115 = arith.addf %111, %114 : vector<8x32xf32>
    %116 = vector.extract_strided_slice %62 {offsets = [0, 104], sizes = [8, 8], strides = [1, 1]} : vector<8x120xbf16> to vector<8x8xbf16>
    %c0_70 = arith.constant 0 : index
    %c13 = arith.constant 13 : index
    %117 = vector.load %arg8[%c0_70, %c13] : memref<8x46xbf16, #tpu.memory_space<vmem>>, vector<8x32xbf16>
    %cst_71 = arith.constant dense<0.000000e+00> : vector<8x32xf32>
    %118 = tpu.matmul %116, %117, %cst_71 {dimension_numbers = #tpu.dot_dimension_numbers<[1], [0], [0], [1], [0, 0, 1, 1], [], []>} : vector<8x8xbf16>, vector<8x32xbf16>, vector<8x32xf32> -> vector<8x32xf32>
    %119 = arith.addf %115, %118 : vector<8x32xf32>
    %120 = vector.extract_strided_slice %62 {offsets = [0, 112], sizes = [8, 8], strides = [1, 1]} : vector<8x120xbf16> to vector<8x8xbf16>
    %c0_72 = arith.constant 0 : index
    %c14 = arith.constant 14 : index
    %121 = vector.load %arg8[%c0_72, %c14] : memref<8x46xbf16, #tpu.memory_space<vmem>>, vector<8x32xbf16>
    %cst_73 = arith.constant dense<0.000000e+00> : vector<8x32xf32>
    %122 = tpu.matmul %120, %121, %cst_73 {dimension_numbers = #tpu.dot_dimension_numbers<[1], [0], [0], [1], [0, 0, 1, 1], [], []>} : vector<8x8xbf16>, vector<8x32xbf16>, vector<8x32xf32> -> vector<8x32xf32>
    %123 = arith.addf %119, %122 : vector<8x32xf32>
    %c0_74 = arith.constant 0 : index
    %c0_75 = arith.constant 0 : index
    %124 = vector.load %arg5[%c0_74, %c0_75] : memref<8x1xf32, #tpu.memory_space<vmem>>, vector<8x1xf32>
    %125 = vector.broadcast %124 : vector<8x1xf32> to vector<8x32xf32>
    %126 = arith.addf %123, %125 : vector<8x32xf32>
    %c0_76 = arith.constant 0 : index
    %c0_77 = arith.constant 0 : index
    %c0_78 = arith.constant 0 : index
    %127 = vector.load %arg6[%c0_76, %c0_77, %c0_78] : memref<1x8x32xf32, #tpu.memory_space<vmem>>, vector<1x8x32xf32>
    %128 = vector.shape_cast %127 : vector<1x8x32xf32> to vector<8x32xf32>
    %129 = vector.shape_cast %126 : vector<8x32xf32> to vector<1x8x32xf32>
    tpu.vector_store %arg6[%c0_76, %c0_77, %c0_78], %129 {strides = array<i32>} : memref<1x8x32xf32, #tpu.memory_space<vmem>>, vector<1x8x32xf32>,
    return
  }
  func.func @transform_0(%arg0: i32) -> (i32, i32, i32) {
    %c0_i32 = arith.constant 0 : i32
    %c0_i32_0 = arith.constant 0 : i32
    %c0_i32_1 = arith.constant 0 : i32
    return %arg0, %c0_i32, %c0_i32_0 : i32, i32, i32
  }
  func.func @transform_1(%arg0: i32) -> (i32, i32) {
    %c0_i32 = arith.constant 0 : i32
    %c0_i32_0 = arith.constant 0 : i32
    %c0_i32_1 = arith.constant 0 : i32
    return %c0_i32, %c0_i32_0 : i32, i32
  }
  func.func @transform_2(%arg0: i32) -> (i32, i32) {
    %c0_i32 = arith.constant 0 : i32
    %c0_i32_0 = arith.constant 0 : i32
    %c0_i32_1 = arith.constant 0 : i32
    return %c0_i32, %c0_i32_0 : i32, i32
  }
  func.func @transform_3(%arg0: i32) -> (i32, i32) {
    %c0_i32 = arith.constant 0 : i32
    %c0_i32_0 = arith.constant 0 : i32
    %c0_i32_1 = arith.constant 0 : i32
    return %c0_i32, %c0_i32_0 : i32, i32
  }
  func.func @transform_4(%arg0: i32) -> (i32, i32) {
    %c0_i32 = arith.constant 0 : i32
    %c0_i32_0 = arith.constant 0 : i32
    %c0_i32_1 = arith.constant 0 : i32
    return %c0_i32, %c0_i32_0 : i32, i32
  }
  func.func @transform_5(%arg0: i32) -> (i32, i32, i32) {
    %c0_i32 = arith.constant 0 : i32
    %c0_i32_0 = arith.constant 0 : i32
    %c0_i32_1 = arith.constant 0 : i32
    return %arg0, %c0_i32, %c0_i32_0 : i32, i32, i32
  }
}

module attributes {stable_mosaic.version = 11 : i64} {
  func.func @_cgau_stack_kernel(%arg0: i32, %arg1: i32, %arg2: memref<1x16x32xf32, #tpu.memory_space<vmem>>, %arg3: memref<1x8x1xf32, #tpu.memory_space<vmem>>, %arg4: memref<1x32x80xbf16, #tpu.memory_space<vmem>>, %arg5: memref<1x32x1xf32, #tpu.memory_space<vmem>>, %arg6: memref<1x32x8xbf16, #tpu.memory_space<vmem>>, %arg7: memref<1x32x1xf32, #tpu.memory_space<vmem>>, %arg8: memref<1x32x16xbf16, #tpu.memory_space<vmem>>, %arg9: memref<1x32x1xf32, #tpu.memory_space<vmem>>, %arg10: memref<1x16x48xbf16, #tpu.memory_space<vmem>>, %arg11: memref<1x16x1xf32, #tpu.memory_space<vmem>>, %arg12: memref<1x16x32xf32, #tpu.memory_space<vmem>>, %arg13: memref<16x32xf32, #tpu.memory_space<vmem>>, %arg14: memref<32x32xf32, #tpu.memory_space<vmem>>, %arg15: memref<16x160xbf16, #tpu.memory_space<vmem>>, %arg16: memref<16x34xbf16, #tpu.memory_space<vmem>>) attributes {dimension_semantics = [#tpu.dimension_semantics<parallel>, #tpu.dimension_semantics<arbitrary>], iteration_bounds = array<i64: 2, 6>, scalar_prefetch = 0 : i64, scratch_operands = 4 : i64, tpu.core_type = #tpu.core_type<tc>, window_params = [{transform_indices = @transform_0, window_bounds = array<i64: 1, 16, 32>}, {transform_indices = @transform_1, window_bounds = array<i64: 1, 8, 1>}, {transform_indices = @transform_2, window_bounds = array<i64: 1, 32, 80>}, {transform_indices = @transform_3, window_bounds = array<i64: 1, 32, 1>}, {transform_indices = @transform_4, window_bounds = array<i64: 1, 32, 8>}, {transform_indices = @transform_5, window_bounds = array<i64: 1, 32, 1>}, {transform_indices = @transform_6, window_bounds = array<i64: 1, 32, 16>}, {transform_indices = @transform_7, window_bounds = array<i64: 1, 32, 1>}, {transform_indices = @transform_8, window_bounds = array<i64: 1, 16, 48>}, {transform_indices = @transform_9, window_bounds = array<i64: 1, 16, 1>}, {transform_indices = @transform_10, window_bounds = array<i64: 1, 16, 32>}]} {
    %c0_i32 = arith.constant 0 : i32
    %0 = arith.cmpi eq, %arg1, %c0_i32 : i32
    %1 = arith.extui %0 : i1 to i32
    %c0_i32_0 = arith.constant 0 : i32
    %2 = arith.cmpi ne, %1, %c0_i32_0 : i32
    scf.if %2 {
      %c0_107 = arith.constant 0 : index
      %c0_108 = arith.constant 0 : index
      %c0_109 = arith.constant 0 : index
      %190 = vector.load %arg2[%c0_107, %c0_108, %c0_109] : memref<1x16x32xf32, #tpu.memory_space<vmem>>, vector<1x16x32xf32>
      %191 = vector.shape_cast %190 : vector<1x16x32xf32> to vector<16x32xf32>
      %c0_110 = arith.constant 0 : index
      %c0_111 = arith.constant 0 : index
      %192 = vector.load %arg13[%c0_110, %c0_111] : memref<16x32xf32, #tpu.memory_space<vmem>>, vector<16x32xf32>
      tpu.vector_store %arg13[%c0_110, %c0_111], %191 {strides = array<i32>} : memref<16x32xf32, #tpu.memory_space<vmem>>, vector<16x32xf32>,
      %cst_112 = arith.constant 0.000000e+00 : f32
      %193 = vector.broadcast %cst_112 : f32 to vector<16x32xf32>
      %c0_113 = arith.constant 0 : index
      %c0_114 = arith.constant 0 : index
      %c0_115 = arith.constant 0 : index
      %194 = vector.load %arg12[%c0_113, %c0_114, %c0_115] : memref<1x16x32xf32, #tpu.memory_space<vmem>>, vector<1x16x32xf32>
      %195 = vector.shape_cast %194 : vector<1x16x32xf32> to vector<16x32xf32>
      %196 = vector.shape_cast %193 : vector<16x32xf32> to vector<1x16x32xf32>
      tpu.vector_store %arg12[%c0_113, %c0_114, %c0_115], %196 {strides = array<i32>} : memref<1x16x32xf32, #tpu.memory_space<vmem>>, vector<1x16x32xf32>,
      %cst_116 = arith.constant 0.000000e+00 : bf16
      %197 = vector.broadcast %cst_116 : bf16 to vector<16x64xbf16>
      %c0_117 = arith.constant 0 : index
      %c0_118 = arith.constant 0 : index
      %198 = vector.load %arg15[%c0_117, %c0_118] : memref<16x160xbf16, #tpu.memory_space<vmem>>, vector<16x64xbf16>
      tpu.vector_store %arg15[%c0_117, %c0_118], %197 {strides = array<i32>} : memref<16x160xbf16, #tpu.memory_space<vmem>>, vector<16x64xbf16>,
      %c0_119 = arith.constant 0 : index
      %c96 = arith.constant 96 : index
      %199 = vector.load %arg15[%c0_119, %c96] : memref<16x160xbf16, #tpu.memory_space<vmem>>, vector<16x64xbf16>
      tpu.vector_store %arg15[%c0_119, %c96], %197 {strides = array<i32>} : memref<16x160xbf16, #tpu.memory_space<vmem>>, vector<16x64xbf16>,
      %cst_120 = arith.constant 0.000000e+00 : bf16
      %200 = vector.broadcast %cst_120 : bf16 to vector<16x1xbf16>
      %c0_121 = arith.constant 0 : index
      %c0_122 = arith.constant 0 : index
      %201 = vector.load %arg16[%c0_121, %c0_122] : memref<16x34xbf16, #tpu.memory_space<vmem>>, vector<16x1xbf16>
      tpu.vector_store %arg16[%c0_121, %c0_122], %200 {strides = array<i32>} : memref<16x34xbf16, #tpu.memory_space<vmem>>, vector<16x1xbf16>,
      %c0_123 = arith.constant 0 : index
      %c33 = arith.constant 33 : index
      %202 = vector.load %arg16[%c0_123, %c33] : memref<16x34xbf16, #tpu.memory_space<vmem>>, vector<16x1xbf16>
      tpu.vector_store %arg16[%c0_123, %c33], %200 {strides = array<i32>} : memref<16x34xbf16, #tpu.memory_space<vmem>>, vector<16x1xbf16>,
    } else {
    }
    %c0 = arith.constant 0 : index
    %c0_1 = arith.constant 0 : index
    %3 = vector.load %arg13[%c0, %c0_1] : memref<16x32xf32, #tpu.memory_space<vmem>>, vector<16x32xf32>
    %4 = arith.truncf %3 : vector<16x32xf32> to vector<16x32xbf16>
    %c0_2 = arith.constant 0 : index
    %c64 = arith.constant 64 : index
    %5 = vector.load %arg15[%c0_2, %c64] : memref<16x160xbf16, #tpu.memory_space<vmem>>, vector<16x32xbf16>
    tpu.vector_store %arg15[%c0_2, %c64], %4 {strides = array<i32>} : memref<16x160xbf16, #tpu.memory_space<vmem>>, vector<16x32xbf16>,
    %c0_3 = arith.constant 0 : index
    %c0_4 = arith.constant 0 : index
    %c0_5 = arith.constant 0 : index
    %6 = vector.load %arg4[%c0_3, %c0_4, %c0_5] : memref<1x32x80xbf16, #tpu.memory_space<vmem>>, vector<1x32x80xbf16>
    %7 = vector.shape_cast %6 : vector<1x32x80xbf16> to vector<32x80xbf16>
    %c6_i32 = arith.constant 6 : i32
    %c0_i32_6 = arith.constant 0 : i32
    %8 = arith.cmpi eq, %c6_i32, %c0_i32_6 : i32
    %c1_i32 = arith.constant 1 : i32
    %9 = arith.select %8, %c1_i32, %c6_i32 : i32
    %10 = arith.remsi %arg1, %9 : i32
    %c0_i32_7 = arith.constant 0 : i32
    %11 = arith.cmpi ne, %10, %c0_i32_7 : i32
    %c0_i32_8 = arith.constant 0 : i32
    %12 = arith.cmpi slt, %10, %c0_i32_8 : i32
    %c0_i32_9 = arith.constant 0 : i32
    %13 = arith.cmpi slt, %9, %c0_i32_9 : i32
    %14 = arith.xori %12, %13 : i1
    %15 = arith.andi %14, %11 : i1
    %16 = arith.addi %10, %9 : i32
    %17 = arith.select %15, %16, %10 : i32
    %c0_i32_10 = arith.constant 0 : i32
    %18 = arith.cmpi eq, %17, %c0_i32_10 : i32
    %19 = arith.extui %18 : i1 to i32
    %c0_i32_11 = arith.constant 0 : i32
    %20 = arith.cmpi ne, %19, %c0_i32_11 : i32
    scf.if %20 {
      %cst_107 = arith.constant 0.000000e+00 : f32
      %190 = vector.broadcast %cst_107 : f32 to vector<32x32xf32>
      %191 = vector.extract_strided_slice %7 {offsets = [0, 0], sizes = [32, 16], strides = [1, 1]} : vector<32x80xbf16> to vector<32x16xbf16>
      %c0_108 = arith.constant 0 : index
      %c62 = arith.constant 62 : index
      %192 = vector.load %arg15[%c0_108, %c62] : memref<16x160xbf16, #tpu.memory_space<vmem>>, vector<16x32xbf16>
      %cst_109 = arith.constant dense<0.000000e+00> : vector<32x32xf32>
      %193 = tpu.matmul %191, %192, %cst_109 {dimension_numbers = #tpu.dot_dimension_numbers<[1], [0], [0], [1], [0, 0, 1, 1], [], []>} : vector<32x16xbf16>, vector<16x32xbf16>, vector<32x32xf32> -> vector<32x32xf32>
      %194 = arith.addf %190, %193 : vector<32x32xf32>
      %195 = vector.extract_strided_slice %7 {offsets = [0, 16], sizes = [32, 16], strides = [1, 1]} : vector<32x80xbf16> to vector<32x16xbf16>
      %c0_110 = arith.constant 0 : index
      %c63 = arith.constant 63 : index
      %196 = vector.load %arg15[%c0_110, %c63] : memref<16x160xbf16, #tpu.memory_space<vmem>>, vector<16x32xbf16>
      %cst_111 = arith.constant dense<0.000000e+00> : vector<32x32xf32>
      %197 = tpu.matmul %195, %196, %cst_111 {dimension_numbers = #tpu.dot_dimension_numbers<[1], [0], [0], [1], [0, 0, 1, 1], [], []>} : vector<32x16xbf16>, vector<16x32xbf16>, vector<32x32xf32> -> vector<32x32xf32>
      %198 = arith.addf %194, %197 : vector<32x32xf32>
      %199 = vector.extract_strided_slice %7 {offsets = [0, 32], sizes = [32, 16], strides = [1, 1]} : vector<32x80xbf16> to vector<32x16xbf16>
      %c0_112 = arith.constant 0 : index
      %c64_113 = arith.constant 64 : index
      %200 = vector.load %arg15[%c0_112, %c64_113] : memref<16x160xbf16, #tpu.memory_space<vmem>>, vector<16x32xbf16>
      %cst_114 = arith.constant dense<0.000000e+00> : vector<32x32xf32>
      %201 = tpu.matmul %199, %200, %cst_114 {dimension_numbers = #tpu.dot_dimension_numbers<[1], [0], [0], [1], [0, 0, 1, 1], [], []>} : vector<32x16xbf16>, vector<16x32xbf16>, vector<32x32xf32> -> vector<32x32xf32>
      %202 = arith.addf %198, %201 : vector<32x32xf32>
      %203 = vector.extract_strided_slice %7 {offsets = [0, 48], sizes = [32, 16], strides = [1, 1]} : vector<32x80xbf16> to vector<32x16xbf16>
      %c0_115 = arith.constant 0 : index
      %c65 = arith.constant 65 : index
      %204 = vector.load %arg15[%c0_115, %c65] : memref<16x160xbf16, #tpu.memory_space<vmem>>, vector<16x32xbf16>
      %cst_116 = arith.constant dense<0.000000e+00> : vector<32x32xf32>
      %205 = tpu.matmul %203, %204, %cst_116 {dimension_numbers = #tpu.dot_dimension_numbers<[1], [0], [0], [1], [0, 0, 1, 1], [], []>} : vector<32x16xbf16>, vector<16x32xbf16>, vector<32x32xf32> -> vector<32x32xf32>
      %206 = arith.addf %202, %205 : vector<32x32xf32>
      %207 = vector.extract_strided_slice %7 {offsets = [0, 64], sizes = [32, 16], strides = [1, 1]} : vector<32x80xbf16> to vector<32x16xbf16>
      %c0_117 = arith.constant 0 : index
      %c66 = arith.constant 66 : index
      %208 = vector.load %arg15[%c0_117, %c66] : memref<16x160xbf16, #tpu.memory_space<vmem>>, vector<16x32xbf16>
      %cst_118 = arith.constant dense<0.000000e+00> : vector<32x32xf32>
      %209 = tpu.matmul %207, %208, %cst_118 {dimension_numbers = #tpu.dot_dimension_numbers<[1], [0], [0], [1], [0, 0, 1, 1], [], []>} : vector<32x16xbf16>, vector<16x32xbf16>, vector<32x32xf32> -> vector<32x32xf32>
      %210 = arith.addf %206, %209 : vector<32x32xf32>
      %c0_119 = arith.constant 0 : index
      %c0_120 = arith.constant 0 : index
      %211 = vector.load %arg14[%c0_119, %c0_120] : memref<32x32xf32, #tpu.memory_space<vmem>>, vector<32x32xf32>
      tpu.vector_store %arg14[%c0_119, %c0_120], %210 {strides = array<i32>} : memref<32x32xf32, #tpu.memory_space<vmem>>, vector<32x32xf32>,
    } else {
    }
    %c6_i32_12 = arith.constant 6 : i32
    %c0_i32_13 = arith.constant 0 : i32
    %21 = arith.cmpi eq, %c6_i32_12, %c0_i32_13 : i32
    %c1_i32_14 = arith.constant 1 : i32
    %22 = arith.select %21, %c1_i32_14, %c6_i32_12 : i32
    %23 = arith.remsi %arg1, %22 : i32
    %c0_i32_15 = arith.constant 0 : i32
    %24 = arith.cmpi ne, %23, %c0_i32_15 : i32
    %c0_i32_16 = arith.constant 0 : i32
    %25 = arith.cmpi slt, %23, %c0_i32_16 : i32
    %c0_i32_17 = arith.constant 0 : i32
    %26 = arith.cmpi slt, %22, %c0_i32_17 : i32
    %27 = arith.xori %25, %26 : i1
    %28 = arith.andi %27, %24 : i1
    %29 = arith.addi %23, %22 : i32
    %30 = arith.select %28, %29, %23 : i32
    %c1_i32_18 = arith.constant 1 : i32
    %31 = arith.cmpi eq, %30, %c1_i32_18 : i32
    %32 = arith.extui %31 : i1 to i32
    %c0_i32_19 = arith.constant 0 : i32
    %33 = arith.cmpi ne, %32, %c0_i32_19 : i32
    scf.if %33 {
      %cst_107 = arith.constant 0.000000e+00 : f32
      %190 = vector.broadcast %cst_107 : f32 to vector<32x32xf32>
      %191 = vector.extract_strided_slice %7 {offsets = [0, 0], sizes = [32, 16], strides = [1, 1]} : vector<32x80xbf16> to vector<32x16xbf16>
      %c0_108 = arith.constant 0 : index
      %c60 = arith.constant 60 : index
      %192 = vector.load %arg15[%c0_108, %c60] : memref<16x160xbf16, #tpu.memory_space<vmem>>, vector<16x32xbf16>
      %cst_109 = arith.constant dense<0.000000e+00> : vector<32x32xf32>
      %193 = tpu.matmul %191, %192, %cst_109 {dimension_numbers = #tpu.dot_dimension_numbers<[1], [0], [0], [1], [0, 0, 1, 1], [], []>} : vector<32x16xbf16>, vector<16x32xbf16>, vector<32x32xf32> -> vector<32x32xf32>
      %194 = arith.addf %190, %193 : vector<32x32xf32>
      %195 = vector.extract_strided_slice %7 {offsets = [0, 16], sizes = [32, 16], strides = [1, 1]} : vector<32x80xbf16> to vector<32x16xbf16>
      %c0_110 = arith.constant 0 : index
      %c62 = arith.constant 62 : index
      %196 = vector.load %arg15[%c0_110, %c62] : memref<16x160xbf16, #tpu.memory_space<vmem>>, vector<16x32xbf16>
      %cst_111 = arith.constant dense<0.000000e+00> : vector<32x32xf32>
      %197 = tpu.matmul %195, %196, %cst_111 {dimension_numbers = #tpu.dot_dimension_numbers<[1], [0], [0], [1], [0, 0, 1, 1], [], []>} : vector<32x16xbf16>, vector<16x32xbf16>, vector<32x32xf32> -> vector<32x32xf32>
      %198 = arith.addf %194, %197 : vector<32x32xf32>
      %199 = vector.extract_strided_slice %7 {offsets = [0, 32], sizes = [32, 16], strides = [1, 1]} : vector<32x80xbf16> to vector<32x16xbf16>
      %c0_112 = arith.constant 0 : index
      %c64_113 = arith.constant 64 : index
      %200 = vector.load %arg15[%c0_112, %c64_113] : memref<16x160xbf16, #tpu.memory_space<vmem>>, vector<16x32xbf16>
      %cst_114 = arith.constant dense<0.000000e+00> : vector<32x32xf32>
      %201 = tpu.matmul %199, %200, %cst_114 {dimension_numbers = #tpu.dot_dimension_numbers<[1], [0], [0], [1], [0, 0, 1, 1], [], []>} : vector<32x16xbf16>, vector<16x32xbf16>, vector<32x32xf32> -> vector<32x32xf32>
      %202 = arith.addf %198, %201 : vector<32x32xf32>
      %203 = vector.extract_strided_slice %7 {offsets = [0, 48], sizes = [32, 16], strides = [1, 1]} : vector<32x80xbf16> to vector<32x16xbf16>
      %c0_115 = arith.constant 0 : index
      %c66 = arith.constant 66 : index
      %204 = vector.load %arg15[%c0_115, %c66] : memref<16x160xbf16, #tpu.memory_space<vmem>>, vector<16x32xbf16>
      %cst_116 = arith.constant dense<0.000000e+00> : vector<32x32xf32>
      %205 = tpu.matmul %203, %204, %cst_116 {dimension_numbers = #tpu.dot_dimension_numbers<[1], [0], [0], [1], [0, 0, 1, 1], [], []>} : vector<32x16xbf16>, vector<16x32xbf16>, vector<32x32xf32> -> vector<32x32xf32>
      %206 = arith.addf %202, %205 : vector<32x32xf32>
      %207 = vector.extract_strided_slice %7 {offsets = [0, 64], sizes = [32, 16], strides = [1, 1]} : vector<32x80xbf16> to vector<32x16xbf16>
      %c0_117 = arith.constant 0 : index
      %c68 = arith.constant 68 : index
      %208 = vector.load %arg15[%c0_117, %c68] : memref<16x160xbf16, #tpu.memory_space<vmem>>, vector<16x32xbf16>
      %cst_118 = arith.constant dense<0.000000e+00> : vector<32x32xf32>
      %209 = tpu.matmul %207, %208, %cst_118 {dimension_numbers = #tpu.dot_dimension_numbers<[1], [0], [0], [1], [0, 0, 1, 1], [], []>} : vector<32x16xbf16>, vector<16x32xbf16>, vector<32x32xf32> -> vector<32x32xf32>
      %210 = arith.addf %206, %209 : vector<32x32xf32>
      %c0_119 = arith.constant 0 : index
      %c0_120 = arith.constant 0 : index
      %211 = vector.load %arg14[%c0_119, %c0_120] : memref<32x32xf32, #tpu.memory_space<vmem>>, vector<32x32xf32>
      tpu.vector_store %arg14[%c0_119, %c0_120], %210 {strides = array<i32>} : memref<32x32xf32, #tpu.memory_space<vmem>>, vector<32x32xf32>,
    } else {
    }
    %c6_i32_20 = arith.constant 6 : i32
    %c0_i32_21 = arith.constant 0 : i32
    %34 = arith.cmpi eq, %c6_i32_20, %c0_i32_21 : i32
    %c1_i32_22 = arith.constant 1 : i32
    %35 = arith.select %34, %c1_i32_22, %c6_i32_20 : i32
    %36 = arith.remsi %arg1, %35 : i32
    %c0_i32_23 = arith.constant 0 : i32
    %37 = arith.cmpi ne, %36, %c0_i32_23 : i32
    %c0_i32_24 = arith.constant 0 : i32
    %38 = arith.cmpi slt, %36, %c0_i32_24 : i32
    %c0_i32_25 = arith.constant 0 : i32
    %39 = arith.cmpi slt, %35, %c0_i32_25 : i32
    %40 = arith.xori %38, %39 : i1
    %41 = arith.andi %40, %37 : i1
    %42 = arith.addi %36, %35 : i32
    %43 = arith.select %41, %42, %36 : i32
    %c2_i32 = arith.constant 2 : i32
    %44 = arith.cmpi eq, %43, %c2_i32 : i32
    %45 = arith.extui %44 : i1 to i32
    %c0_i32_26 = arith.constant 0 : i32
    %46 = arith.cmpi ne, %45, %c0_i32_26 : i32
    scf.if %46 {
      %cst_107 = arith.constant 0.000000e+00 : f32
      %190 = vector.broadcast %cst_107 : f32 to vector<32x32xf32>
      %191 = vector.extract_strided_slice %7 {offsets = [0, 0], sizes = [32, 16], strides = [1, 1]} : vector<32x80xbf16> to vector<32x16xbf16>
      %c0_108 = arith.constant 0 : index
      %c56 = arith.constant 56 : index
      %192 = vector.load %arg15[%c0_108, %c56] : memref<16x160xbf16, #tpu.memory_space<vmem>>, vector<16x32xbf16>
      %cst_109 = arith.constant dense<0.000000e+00> : vector<32x32xf32>
      %193 = tpu.matmul %191, %192, %cst_109 {dimension_numbers = #tpu.dot_dimension_numbers<[1], [0], [0], [1], [0, 0, 1, 1], [], []>} : vector<32x16xbf16>, vector<16x32xbf16>, vector<32x32xf32> -> vector<32x32xf32>
      %194 = arith.addf %190, %193 : vector<32x32xf32>
      %195 = vector.extract_strided_slice %7 {offsets = [0, 16], sizes = [32, 16], strides = [1, 1]} : vector<32x80xbf16> to vector<32x16xbf16>
      %c0_110 = arith.constant 0 : index
      %c60 = arith.constant 60 : index
      %196 = vector.load %arg15[%c0_110, %c60] : memref<16x160xbf16, #tpu.memory_space<vmem>>, vector<16x32xbf16>
      %cst_111 = arith.constant dense<0.000000e+00> : vector<32x32xf32>
      %197 = tpu.matmul %195, %196, %cst_111 {dimension_numbers = #tpu.dot_dimension_numbers<[1], [0], [0], [1], [0, 0, 1, 1], [], []>} : vector<32x16xbf16>, vector<16x32xbf16>, vector<32x32xf32> -> vector<32x32xf32>
      %198 = arith.addf %194, %197 : vector<32x32xf32>
      %199 = vector.extract_strided_slice %7 {offsets = [0, 32], sizes = [32, 16], strides = [1, 1]} : vector<32x80xbf16> to vector<32x16xbf16>
      %c0_112 = arith.constant 0 : index
      %c64_113 = arith.constant 64 : index
      %200 = vector.load %arg15[%c0_112, %c64_113] : memref<16x160xbf16, #tpu.memory_space<vmem>>, vector<16x32xbf16>
      %cst_114 = arith.constant dense<0.000000e+00> : vector<32x32xf32>
      %201 = tpu.matmul %199, %200, %cst_114 {dimension_numbers = #tpu.dot_dimension_numbers<[1], [0], [0], [1], [0, 0, 1, 1], [], []>} : vector<32x16xbf16>, vector<16x32xbf16>, vector<32x32xf32> -> vector<32x32xf32>
      %202 = arith.addf %198, %201 : vector<32x32xf32>
      %203 = vector.extract_strided_slice %7 {offsets = [0, 48], sizes = [32, 16], strides = [1, 1]} : vector<32x80xbf16> to vector<32x16xbf16>
      %c0_115 = arith.constant 0 : index
      %c68 = arith.constant 68 : index
      %204 = vector.load %arg15[%c0_115, %c68] : memref<16x160xbf16, #tpu.memory_space<vmem>>, vector<16x32xbf16>
      %cst_116 = arith.constant dense<0.000000e+00> : vector<32x32xf32>
      %205 = tpu.matmul %203, %204, %cst_116 {dimension_numbers = #tpu.dot_dimension_numbers<[1], [0], [0], [1], [0, 0, 1, 1], [], []>} : vector<32x16xbf16>, vector<16x32xbf16>, vector<32x32xf32> -> vector<32x32xf32>
      %206 = arith.addf %202, %205 : vector<32x32xf32>
      %207 = vector.extract_strided_slice %7 {offsets = [0, 64], sizes = [32, 16], strides = [1, 1]} : vector<32x80xbf16> to vector<32x16xbf16>
      %c0_117 = arith.constant 0 : index
      %c72 = arith.constant 72 : index
      %208 = vector.load %arg15[%c0_117, %c72] : memref<16x160xbf16, #tpu.memory_space<vmem>>, vector<16x32xbf16>
      %cst_118 = arith.constant dense<0.000000e+00> : vector<32x32xf32>
      %209 = tpu.matmul %207, %208, %cst_118 {dimension_numbers = #tpu.dot_dimension_numbers<[1], [0], [0], [1], [0, 0, 1, 1], [], []>} : vector<32x16xbf16>, vector<16x32xbf16>, vector<32x32xf32> -> vector<32x32xf32>
      %210 = arith.addf %206, %209 : vector<32x32xf32>
      %c0_119 = arith.constant 0 : index
      %c0_120 = arith.constant 0 : index
      %211 = vector.load %arg14[%c0_119, %c0_120] : memref<32x32xf32, #tpu.memory_space<vmem>>, vector<32x32xf32>
      tpu.vector_store %arg14[%c0_119, %c0_120], %210 {strides = array<i32>} : memref<32x32xf32, #tpu.memory_space<vmem>>, vector<32x32xf32>,
    } else {
    }
    %c6_i32_27 = arith.constant 6 : i32
    %c0_i32_28 = arith.constant 0 : i32
    %47 = arith.cmpi eq, %c6_i32_27, %c0_i32_28 : i32
    %c1_i32_29 = arith.constant 1 : i32
    %48 = arith.select %47, %c1_i32_29, %c6_i32_27 : i32
    %49 = arith.remsi %arg1, %48 : i32
    %c0_i32_30 = arith.constant 0 : i32
    %50 = arith.cmpi ne, %49, %c0_i32_30 : i32
    %c0_i32_31 = arith.constant 0 : i32
    %51 = arith.cmpi slt, %49, %c0_i32_31 : i32
    %c0_i32_32 = arith.constant 0 : i32
    %52 = arith.cmpi slt, %48, %c0_i32_32 : i32
    %53 = arith.xori %51, %52 : i1
    %54 = arith.andi %53, %50 : i1
    %55 = arith.addi %49, %48 : i32
    %56 = arith.select %54, %55, %49 : i32
    %c3_i32 = arith.constant 3 : i32
    %57 = arith.cmpi eq, %56, %c3_i32 : i32
    %58 = arith.extui %57 : i1 to i32
    %c0_i32_33 = arith.constant 0 : i32
    %59 = arith.cmpi ne, %58, %c0_i32_33 : i32
    scf.if %59 {
      %cst_107 = arith.constant 0.000000e+00 : f32
      %190 = vector.broadcast %cst_107 : f32 to vector<32x32xf32>
      %191 = vector.extract_strided_slice %7 {offsets = [0, 0], sizes = [32, 16], strides = [1, 1]} : vector<32x80xbf16> to vector<32x16xbf16>
      %c0_108 = arith.constant 0 : index
      %c48 = arith.constant 48 : index
      %192 = vector.load %arg15[%c0_108, %c48] : memref<16x160xbf16, #tpu.memory_space<vmem>>, vector<16x32xbf16>
      %cst_109 = arith.constant dense<0.000000e+00> : vector<32x32xf32>
      %193 = tpu.matmul %191, %192, %cst_109 {dimension_numbers = #tpu.dot_dimension_numbers<[1], [0], [0], [1], [0, 0, 1, 1], [], []>} : vector<32x16xbf16>, vector<16x32xbf16>, vector<32x32xf32> -> vector<32x32xf32>
      %194 = arith.addf %190, %193 : vector<32x32xf32>
      %195 = vector.extract_strided_slice %7 {offsets = [0, 16], sizes = [32, 16], strides = [1, 1]} : vector<32x80xbf16> to vector<32x16xbf16>
      %c0_110 = arith.constant 0 : index
      %c56 = arith.constant 56 : index
      %196 = vector.load %arg15[%c0_110, %c56] : memref<16x160xbf16, #tpu.memory_space<vmem>>, vector<16x32xbf16>
      %cst_111 = arith.constant dense<0.000000e+00> : vector<32x32xf32>
      %197 = tpu.matmul %195, %196, %cst_111 {dimension_numbers = #tpu.dot_dimension_numbers<[1], [0], [0], [1], [0, 0, 1, 1], [], []>} : vector<32x16xbf16>, vector<16x32xbf16>, vector<32x32xf32> -> vector<32x32xf32>
      %198 = arith.addf %194, %197 : vector<32x32xf32>
      %199 = vector.extract_strided_slice %7 {offsets = [0, 32], sizes = [32, 16], strides = [1, 1]} : vector<32x80xbf16> to vector<32x16xbf16>
      %c0_112 = arith.constant 0 : index
      %c64_113 = arith.constant 64 : index
      %200 = vector.load %arg15[%c0_112, %c64_113] : memref<16x160xbf16, #tpu.memory_space<vmem>>, vector<16x32xbf16>
      %cst_114 = arith.constant dense<0.000000e+00> : vector<32x32xf32>
      %201 = tpu.matmul %199, %200, %cst_114 {dimension_numbers = #tpu.dot_dimension_numbers<[1], [0], [0], [1], [0, 0, 1, 1], [], []>} : vector<32x16xbf16>, vector<16x32xbf16>, vector<32x32xf32> -> vector<32x32xf32>
      %202 = arith.addf %198, %201 : vector<32x32xf32>
      %203 = vector.extract_strided_slice %7 {offsets = [0, 48], sizes = [32, 16], strides = [1, 1]} : vector<32x80xbf16> to vector<32x16xbf16>
      %c0_115 = arith.constant 0 : index
      %c72 = arith.constant 72 : index
      %204 = vector.load %arg15[%c0_115, %c72] : memref<16x160xbf16, #tpu.memory_space<vmem>>, vector<16x32xbf16>
      %cst_116 = arith.constant dense<0.000000e+00> : vector<32x32xf32>
      %205 = tpu.matmul %203, %204, %cst_116 {dimension_numbers = #tpu.dot_dimension_numbers<[1], [0], [0], [1], [0, 0, 1, 1], [], []>} : vector<32x16xbf16>, vector<16x32xbf16>, vector<32x32xf32> -> vector<32x32xf32>
      %206 = arith.addf %202, %205 : vector<32x32xf32>
      %207 = vector.extract_strided_slice %7 {offsets = [0, 64], sizes = [32, 16], strides = [1, 1]} : vector<32x80xbf16> to vector<32x16xbf16>
      %c0_117 = arith.constant 0 : index
      %c80 = arith.constant 80 : index
      %208 = vector.load %arg15[%c0_117, %c80] : memref<16x160xbf16, #tpu.memory_space<vmem>>, vector<16x32xbf16>
      %cst_118 = arith.constant dense<0.000000e+00> : vector<32x32xf32>
      %209 = tpu.matmul %207, %208, %cst_118 {dimension_numbers = #tpu.dot_dimension_numbers<[1], [0], [0], [1], [0, 0, 1, 1], [], []>} : vector<32x16xbf16>, vector<16x32xbf16>, vector<32x32xf32> -> vector<32x32xf32>
      %210 = arith.addf %206, %209 : vector<32x32xf32>
      %c0_119 = arith.constant 0 : index
      %c0_120 = arith.constant 0 : index
      %211 = vector.load %arg14[%c0_119, %c0_120] : memref<32x32xf32, #tpu.memory_space<vmem>>, vector<32x32xf32>
      tpu.vector_store %arg14[%c0_119, %c0_120], %210 {strides = array<i32>} : memref<32x32xf32, #tpu.memory_space<vmem>>, vector<32x32xf32>,
    } else {
    }
    %c6_i32_34 = arith.constant 6 : i32
    %c0_i32_35 = arith.constant 0 : i32
    %60 = arith.cmpi eq, %c6_i32_34, %c0_i32_35 : i32
    %c1_i32_36 = arith.constant 1 : i32
    %61 = arith.select %60, %c1_i32_36, %c6_i32_34 : i32
    %62 = arith.remsi %arg1, %61 : i32
    %c0_i32_37 = arith.constant 0 : i32
    %63 = arith.cmpi ne, %62, %c0_i32_37 : i32
    %c0_i32_38 = arith.constant 0 : i32
    %64 = arith.cmpi slt, %62, %c0_i32_38 : i32
    %c0_i32_39 = arith.constant 0 : i32
    %65 = arith.cmpi slt, %61, %c0_i32_39 : i32
    %66 = arith.xori %64, %65 : i1
    %67 = arith.andi %66, %63 : i1
    %68 = arith.addi %62, %61 : i32
    %69 = arith.select %67, %68, %62 : i32
    %c4_i32 = arith.constant 4 : i32
    %70 = arith.cmpi eq, %69, %c4_i32 : i32
    %71 = arith.extui %70 : i1 to i32
    %c0_i32_40 = arith.constant 0 : i32
    %72 = arith.cmpi ne, %71, %c0_i32_40 : i32
    scf.if %72 {
      %cst_107 = arith.constant 0.000000e+00 : f32
      %190 = vector.broadcast %cst_107 : f32 to vector<32x32xf32>
      %191 = vector.extract_strided_slice %7 {offsets = [0, 0], sizes = [32, 16], strides = [1, 1]} : vector<32x80xbf16> to vector<32x16xbf16>
      %c0_108 = arith.constant 0 : index
      %c32 = arith.constant 32 : index
      %192 = vector.load %arg15[%c0_108, %c32] : memref<16x160xbf16, #tpu.memory_space<vmem>>, vector<16x32xbf16>
      %cst_109 = arith.constant dense<0.000000e+00> : vector<32x32xf32>
      %193 = tpu.matmul %191, %192, %cst_109 {dimension_numbers = #tpu.dot_dimension_numbers<[1], [0], [0], [1], [0, 0, 1, 1], [], []>} : vector<32x16xbf16>, vector<16x32xbf16>, vector<32x32xf32> -> vector<32x32xf32>
      %194 = arith.addf %190, %193 : vector<32x32xf32>
      %195 = vector.extract_strided_slice %7 {offsets = [0, 16], sizes = [32, 16], strides = [1, 1]} : vector<32x80xbf16> to vector<32x16xbf16>
      %c0_110 = arith.constant 0 : index
      %c48 = arith.constant 48 : index
      %196 = vector.load %arg15[%c0_110, %c48] : memref<16x160xbf16, #tpu.memory_space<vmem>>, vector<16x32xbf16>
      %cst_111 = arith.constant dense<0.000000e+00> : vector<32x32xf32>
      %197 = tpu.matmul %195, %196, %cst_111 {dimension_numbers = #tpu.dot_dimension_numbers<[1], [0], [0], [1], [0, 0, 1, 1], [], []>} : vector<32x16xbf16>, vector<16x32xbf16>, vector<32x32xf32> -> vector<32x32xf32>
      %198 = arith.addf %194, %197 : vector<32x32xf32>
      %199 = vector.extract_strided_slice %7 {offsets = [0, 32], sizes = [32, 16], strides = [1, 1]} : vector<32x80xbf16> to vector<32x16xbf16>
      %c0_112 = arith.constant 0 : index
      %c64_113 = arith.constant 64 : index
      %200 = vector.load %arg15[%c0_112, %c64_113] : memref<16x160xbf16, #tpu.memory_space<vmem>>, vector<16x32xbf16>
      %cst_114 = arith.constant dense<0.000000e+00> : vector<32x32xf32>
      %201 = tpu.matmul %199, %200, %cst_114 {dimension_numbers = #tpu.dot_dimension_numbers<[1], [0], [0], [1], [0, 0, 1, 1], [], []>} : vector<32x16xbf16>, vector<16x32xbf16>, vector<32x32xf32> -> vector<32x32xf32>
      %202 = arith.addf %198, %201 : vector<32x32xf32>
      %203 = vector.extract_strided_slice %7 {offsets = [0, 48], sizes = [32, 16], strides = [1, 1]} : vector<32x80xbf16> to vector<32x16xbf16>
      %c0_115 = arith.constant 0 : index
      %c80 = arith.constant 80 : index
      %204 = vector.load %arg15[%c0_115, %c80] : memref<16x160xbf16, #tpu.memory_space<vmem>>, vector<16x32xbf16>
      %cst_116 = arith.constant dense<0.000000e+00> : vector<32x32xf32>
      %205 = tpu.matmul %203, %204, %cst_116 {dimension_numbers = #tpu.dot_dimension_numbers<[1], [0], [0], [1], [0, 0, 1, 1], [], []>} : vector<32x16xbf16>, vector<16x32xbf16>, vector<32x32xf32> -> vector<32x32xf32>
      %206 = arith.addf %202, %205 : vector<32x32xf32>
      %207 = vector.extract_strided_slice %7 {offsets = [0, 64], sizes = [32, 16], strides = [1, 1]} : vector<32x80xbf16> to vector<32x16xbf16>
      %c0_117 = arith.constant 0 : index
      %c96 = arith.constant 96 : index
      %208 = vector.load %arg15[%c0_117, %c96] : memref<16x160xbf16, #tpu.memory_space<vmem>>, vector<16x32xbf16>
      %cst_118 = arith.constant dense<0.000000e+00> : vector<32x32xf32>
      %209 = tpu.matmul %207, %208, %cst_118 {dimension_numbers = #tpu.dot_dimension_numbers<[1], [0], [0], [1], [0, 0, 1, 1], [], []>} : vector<32x16xbf16>, vector<16x32xbf16>, vector<32x32xf32> -> vector<32x32xf32>
      %210 = arith.addf %206, %209 : vector<32x32xf32>
      %c0_119 = arith.constant 0 : index
      %c0_120 = arith.constant 0 : index
      %211 = vector.load %arg14[%c0_119, %c0_120] : memref<32x32xf32, #tpu.memory_space<vmem>>, vector<32x32xf32>
      tpu.vector_store %arg14[%c0_119, %c0_120], %210 {strides = array<i32>} : memref<32x32xf32, #tpu.memory_space<vmem>>, vector<32x32xf32>,
    } else {
    }
    %c6_i32_41 = arith.constant 6 : i32
    %c0_i32_42 = arith.constant 0 : i32
    %73 = arith.cmpi eq, %c6_i32_41, %c0_i32_42 : i32
    %c1_i32_43 = arith.constant 1 : i32
    %74 = arith.select %73, %c1_i32_43, %c6_i32_41 : i32
    %75 = arith.remsi %arg1, %74 : i32
    %c0_i32_44 = arith.constant 0 : i32
    %76 = arith.cmpi ne, %75, %c0_i32_44 : i32
    %c0_i32_45 = arith.constant 0 : i32
    %77 = arith.cmpi slt, %75, %c0_i32_45 : i32
    %c0_i32_46 = arith.constant 0 : i32
    %78 = arith.cmpi slt, %74, %c0_i32_46 : i32
    %79 = arith.xori %77, %78 : i1
    %80 = arith.andi %79, %76 : i1
    %81 = arith.addi %75, %74 : i32
    %82 = arith.select %80, %81, %75 : i32
    %c5_i32 = arith.constant 5 : i32
    %83 = arith.cmpi eq, %82, %c5_i32 : i32
    %84 = arith.extui %83 : i1 to i32
    %c0_i32_47 = arith.constant 0 : i32
    %85 = arith.cmpi ne, %84, %c0_i32_47 : i32
    scf.if %85 {
      %cst_107 = arith.constant 0.000000e+00 : f32
      %190 = vector.broadcast %cst_107 : f32 to vector<32x32xf32>
      %191 = vector.extract_strided_slice %7 {offsets = [0, 0], sizes = [32, 16], strides = [1, 1]} : vector<32x80xbf16> to vector<32x16xbf16>
      %c0_108 = arith.constant 0 : index
      %c0_109 = arith.constant 0 : index
      %192 = vector.load %arg15[%c0_108, %c0_109] : memref<16x160xbf16, #tpu.memory_space<vmem>>, vector<16x32xbf16>
      %cst_110 = arith.constant dense<0.000000e+00> : vector<32x32xf32>
      %193 = tpu.matmul %191, %192, %cst_110 {dimension_numbers = #tpu.dot_dimension_numbers<[1], [0], [0], [1], [0, 0, 1, 1], [], []>} : vector<32x16xbf16>, vector<16x32xbf16>, vector<32x32xf32> -> vector<32x32xf32>
      %194 = arith.addf %190, %193 : vector<32x32xf32>
      %195 = vector.extract_strided_slice %7 {offsets = [0, 16], sizes = [32, 16], strides = [1, 1]} : vector<32x80xbf16> to vector<32x16xbf16>
      %c0_111 = arith.constant 0 : index
      %c32 = arith.constant 32 : index
      %196 = vector.load %arg15[%c0_111, %c32] : memref<16x160xbf16, #tpu.memory_space<vmem>>, vector<16x32xbf16>
      %cst_112 = arith.constant dense<0.000000e+00> : vector<32x32xf32>
      %197 = tpu.matmul %195, %196, %cst_112 {dimension_numbers = #tpu.dot_dimension_numbers<[1], [0], [0], [1], [0, 0, 1, 1], [], []>} : vector<32x16xbf16>, vector<16x32xbf16>, vector<32x32xf32> -> vector<32x32xf32>
      %198 = arith.addf %194, %197 : vector<32x32xf32>
      %199 = vector.extract_strided_slice %7 {offsets = [0, 32], sizes = [32, 16], strides = [1, 1]} : vector<32x80xbf16> to vector<32x16xbf16>
      %c0_113 = arith.constant 0 : index
      %c64_114 = arith.constant 64 : index
      %200 = vector.load %arg15[%c0_113, %c64_114] : memref<16x160xbf16, #tpu.memory_space<vmem>>, vector<16x32xbf16>
      %cst_115 = arith.constant dense<0.000000e+00> : vector<32x32xf32>
      %201 = tpu.matmul %199, %200, %cst_115 {dimension_numbers = #tpu.dot_dimension_numbers<[1], [0], [0], [1], [0, 0, 1, 1], [], []>} : vector<32x16xbf16>, vector<16x32xbf16>, vector<32x32xf32> -> vector<32x32xf32>
      %202 = arith.addf %198, %201 : vector<32x32xf32>
      %203 = vector.extract_strided_slice %7 {offsets = [0, 48], sizes = [32, 16], strides = [1, 1]} : vector<32x80xbf16> to vector<32x16xbf16>
      %c0_116 = arith.constant 0 : index
      %c96 = arith.constant 96 : index
      %204 = vector.load %arg15[%c0_116, %c96] : memref<16x160xbf16, #tpu.memory_space<vmem>>, vector<16x32xbf16>
      %cst_117 = arith.constant dense<0.000000e+00> : vector<32x32xf32>
      %205 = tpu.matmul %203, %204, %cst_117 {dimension_numbers = #tpu.dot_dimension_numbers<[1], [0], [0], [1], [0, 0, 1, 1], [], []>} : vector<32x16xbf16>, vector<16x32xbf16>, vector<32x32xf32> -> vector<32x32xf32>
      %206 = arith.addf %202, %205 : vector<32x32xf32>
      %207 = vector.extract_strided_slice %7 {offsets = [0, 64], sizes = [32, 16], strides = [1, 1]} : vector<32x80xbf16> to vector<32x16xbf16>
      %c0_118 = arith.constant 0 : index
      %c128 = arith.constant 128 : index
      %208 = vector.load %arg15[%c0_118, %c128] : memref<16x160xbf16, #tpu.memory_space<vmem>>, vector<16x32xbf16>
      %cst_119 = arith.constant dense<0.000000e+00> : vector<32x32xf32>
      %209 = tpu.matmul %207, %208, %cst_119 {dimension_numbers = #tpu.dot_dimension_numbers<[1], [0], [0], [1], [0, 0, 1, 1], [], []>} : vector<32x16xbf16>, vector<16x32xbf16>, vector<32x32xf32> -> vector<32x32xf32>
      %210 = arith.addf %206, %209 : vector<32x32xf32>
      %c0_120 = arith.constant 0 : index
      %c0_121 = arith.constant 0 : index
      %211 = vector.load %arg14[%c0_120, %c0_121] : memref<32x32xf32, #tpu.memory_space<vmem>>, vector<32x32xf32>
      tpu.vector_store %arg14[%c0_120, %c0_121], %210 {strides = array<i32>} : memref<32x32xf32, #tpu.memory_space<vmem>>, vector<32x32xf32>,
    } else {
    }
    %c0_48 = arith.constant 0 : index
    %c0_49 = arith.constant 0 : index
    %86 = vector.load %arg14[%c0_48, %c0_49] : memref<32x32xf32, #tpu.memory_space<vmem>>, vector<32x32xf32>
    %c0_50 = arith.constant 0 : index
    %c0_51 = arith.constant 0 : index
    %c0_52 = arith.constant 0 : index
    %87 = vector.load %arg5[%c0_50, %c0_51, %c0_52] : memref<1x32x1xf32, #tpu.memory_space<vmem>>, vector<1x32x1xf32>
    %88 = vector.shape_cast %87 : vector<1x32x1xf32> to vector<32x1xf32>
    %89 = vector.broadcast %88 : vector<32x1xf32> to vector<32x32xf32>
    %90 = arith.addf %86, %89 : vector<32x32xf32>
    %cst = arith.constant dense<0.000000e+00> : vector<32xf32>
    %91 = vector.multi_reduction <add>, %90, %cst [1] : vector<32x32xf32> to vector<32xf32>
    %92 = vector.shape_cast %91 : vector<32xf32> to vector<32x1xf32>
    %cst_53 = arith.constant 3.200000e+01 : f32
    %93 = vector.broadcast %cst_53 : f32 to vector<32x1xf32>
    %94 = arith.divf %92, %93 : vector<32x1xf32>
    %95 = vector.broadcast %94 : vector<32x1xf32> to vector<32x32xf32>
    %96 = arith.subf %90, %95 : vector<32x32xf32>
    %97 = arith.mulf %96, %96 : vector<32x32xf32>
    %cst_54 = arith.constant dense<0.000000e+00> : vector<32xf32>
    %98 = vector.multi_reduction <add>, %97, %cst_54 [1] : vector<32x32xf32> to vector<32xf32>
    %99 = vector.shape_cast %98 : vector<32xf32> to vector<32x1xf32>
    %cst_55 = arith.constant 3.200000e+01 : f32
    %100 = vector.broadcast %cst_55 : f32 to vector<32x1xf32>
    %101 = arith.divf %99, %100 : vector<32x1xf32>
    %cst_56 = arith.constant 9.99999974E-6 : f32
    %102 = vector.broadcast %cst_56 : f32 to vector<32x1xf32>
    %103 = arith.addf %101, %102 : vector<32x1xf32>
    %104 = math.rsqrt %103 : vector<32x1xf32>
    %105 = vector.broadcast %104 : vector<32x1xf32> to vector<32x32xf32>
    %106 = arith.mulf %96, %105 : vector<32x32xf32>
    %c0_57 = arith.constant 0 : index
    %c0_58 = arith.constant 0 : index
    %c0_59 = arith.constant 0 : index
    %107 = vector.load %arg6[%c0_57, %c0_58, %c0_59] : memref<1x32x8xbf16, #tpu.memory_space<vmem>>, vector<1x32x8xbf16>
    %108 = vector.shape_cast %107 : vector<1x32x8xbf16> to vector<32x8xbf16>
    %c0_60 = arith.constant 0 : index
    %c0_61 = arith.constant 0 : index
    %c0_62 = arith.constant 0 : index
    %109 = vector.load %arg7[%c0_60, %c0_61, %c0_62] : memref<1x32x1xf32, #tpu.memory_space<vmem>>, vector<1x32x1xf32>
    %110 = vector.shape_cast %109 : vector<1x32x1xf32> to vector<32x1xf32>
    %c0_63 = arith.constant 0 : index
    %c0_64 = arith.constant 0 : index
    %c0_65 = arith.constant 0 : index
    %111 = vector.load %arg3[%c0_63, %c0_64, %c0_65] : memref<1x8x1xf32, #tpu.memory_space<vmem>>, vector<1x8x1xf32>
    %112 = vector.shape_cast %111 : vector<1x8x1xf32> to vector<8x1xf32>
    %113 = arith.truncf %112 : vector<8x1xf32> to vector<8x1xbf16>
    %cst_66 = arith.constant dense<0.000000e+00> : vector<32x1xf32>
    %114 = tpu.matmul %108, %113, %cst_66 {dimension_numbers = #tpu.dot_dimension_numbers<[1], [0], [0], [1], [0, 0, 1, 1], [], []>} : vector<32x8xbf16>, vector<8x1xbf16>, vector<32x1xf32> -> vector<32x1xf32>
    %115 = arith.addf %114, %110 : vector<32x1xf32>
    %cst_67 = arith.constant 0.000000e+00 : f32
    %116 = vector.broadcast %cst_67 : f32 to vector<32x1xf32>
    %117 = arith.maximumf %115, %116 : vector<32x1xf32>
    %118 = vector.broadcast %117 : vector<32x1xf32> to vector<32x32xf32>
    %119 = arith.addf %106, %118 : vector<32x32xf32>
    %120 = arith.truncf %119 : vector<32x32xf32> to vector<32x32xbf16>
    %c0_68 = arith.constant 0 : index
    %c0_69 = arith.constant 0 : index
    %c0_70 = arith.constant 0 : index
    %121 = vector.load %arg8[%c0_68, %c0_69, %c0_70] : memref<1x32x16xbf16, #tpu.memory_space<vmem>>, vector<1x32x16xbf16>
    %122 = vector.shape_cast %121 : vector<1x32x16xbf16> to vector<32x16xbf16>
    %c0_71 = arith.constant 0 : index
    %c0_72 = arith.constant 0 : index
    %c0_73 = arith.constant 0 : index
    %123 = vector.load %arg9[%c0_71, %c0_72, %c0_73] : memref<1x32x1xf32, #tpu.memory_space<vmem>>, vector<1x32x1xf32>
    %124 = vector.shape_cast %123 : vector<1x32x1xf32> to vector<32x1xf32>
    %125 = vector.extract_strided_slice %122 {offsets = [0, 0], sizes = [16, 16], strides = [1, 1]} : vector<32x16xbf16> to vector<16x16xbf16>
    %126 = vector.extract_strided_slice %120 {offsets = [0, 0], sizes = [16, 32], strides = [1, 1]} : vector<32x32xbf16> to vector<16x32xbf16>
    %cst_74 = arith.constant dense<0.000000e+00> : vector<16x32xf32>
    %127 = tpu.matmul %125, %126, %cst_74 {dimension_numbers = #tpu.dot_dimension_numbers<[1], [0], [0], [1], [0, 0, 1, 1], [], []>} : vector<16x16xbf16>, vector<16x32xbf16>, vector<16x32xf32> -> vector<16x32xf32>
    %128 = vector.extract_strided_slice %124 {offsets = [0, 0], sizes = [16, 1], strides = [1, 1]} : vector<32x1xf32> to vector<16x1xf32>
    %129 = vector.broadcast %128 : vector<16x1xf32> to vector<16x32xf32>
    %130 = arith.addf %127, %129 : vector<16x32xf32>
    %131 = vector.extract_strided_slice %122 {offsets = [16, 0], sizes = [16, 16], strides = [1, 1]} : vector<32x16xbf16> to vector<16x16xbf16>
    %132 = vector.extract_strided_slice %120 {offsets = [16, 0], sizes = [16, 32], strides = [1, 1]} : vector<32x32xbf16> to vector<16x32xbf16>
    %cst_75 = arith.constant dense<0.000000e+00> : vector<16x32xf32>
    %133 = tpu.matmul %131, %132, %cst_75 {dimension_numbers = #tpu.dot_dimension_numbers<[1], [0], [0], [1], [0, 0, 1, 1], [], []>} : vector<16x16xbf16>, vector<16x32xbf16>, vector<16x32xf32> -> vector<16x32xf32>
    %134 = vector.extract_strided_slice %124 {offsets = [16, 0], sizes = [16, 1], strides = [1, 1]} : vector<32x1xf32> to vector<16x1xf32>
    %135 = vector.broadcast %134 : vector<16x1xf32> to vector<16x32xf32>
    %136 = arith.addf %133, %135 : vector<16x32xf32>
    %137 = math.tanh %130 : vector<16x32xf32>
    %cst_76 = arith.constant 0.000000e+00 : f32
    %138 = vector.broadcast %cst_76 : f32 to vector<16x32xf32>
    %139 = arith.subf %138, %136 : vector<16x32xf32>
    %140 = math.exp %139 : vector<16x32xf32>
    %cst_77 = arith.constant 1.000000e+00 : f32
    %141 = vector.broadcast %cst_77 : f32 to vector<16x32xf32>
    %142 = arith.addf %141, %140 : vector<16x32xf32>
    %143 = tpu.reciprocal %142 {approx = true} : vector<16x32xf32> -> vector<16x32xf32>
    %144 = arith.mulf %137, %143 : vector<16x32xf32>
    %145 = arith.truncf %144 : vector<16x32xf32> to vector<16x32xbf16>
    %c0_78 = arith.constant 0 : index
    %c1 = arith.constant 1 : index
    %146 = vector.load %arg16[%c0_78, %c1] : memref<16x34xbf16, #tpu.memory_space<vmem>>, vector<16x32xbf16>
    tpu.vector_store %arg16[%c0_78, %c1], %145 {strides = array<i32>} : memref<16x34xbf16, #tpu.memory_space<vmem>>, vector<16x32xbf16>,
    %c0_79 = arith.constant 0 : index
    %c0_80 = arith.constant 0 : index
    %c0_81 = arith.constant 0 : index
    %147 = vector.load %arg10[%c0_79, %c0_80, %c0_81] : memref<1x16x48xbf16, #tpu.memory_space<vmem>>, vector<1x16x48xbf16>
    %148 = vector.shape_cast %147 : vector<1x16x48xbf16> to vector<16x48xbf16>
    %cst_82 = arith.constant 0.000000e+00 : f32
    %149 = vector.broadcast %cst_82 : f32 to vector<16x32xf32>
    %150 = vector.extract_strided_slice %148 {offsets = [0, 0], sizes = [16, 16], strides = [1, 1]} : vector<16x48xbf16> to vector<16x16xbf16>
    %c0_83 = arith.constant 0 : index
    %c0_84 = arith.constant 0 : index
    %151 = vector.load %arg16[%c0_83, %c0_84] : memref<16x34xbf16, #tpu.memory_space<vmem>>, vector<16x32xbf16>
    %cst_85 = arith.constant dense<0.000000e+00> : vector<16x32xf32>
    %152 = tpu.matmul %150, %151, %cst_85 {dimension_numbers = #tpu.dot_dimension_numbers<[1], [0], [0], [1], [0, 0, 1, 1], [], []>} : vector<16x16xbf16>, vector<16x32xbf16>, vector<16x32xf32> -> vector<16x32xf32>
    %153 = arith.addf %149, %152 : vector<16x32xf32>
    %154 = vector.extract_strided_slice %148 {offsets = [0, 16], sizes = [16, 16], strides = [1, 1]} : vector<16x48xbf16> to vector<16x16xbf16>
    %c0_86 = arith.constant 0 : index
    %c1_87 = arith.constant 1 : index
    %155 = vector.load %arg16[%c0_86, %c1_87] : memref<16x34xbf16, #tpu.memory_space<vmem>>, vector<16x32xbf16>
    %cst_88 = arith.constant dense<0.000000e+00> : vector<16x32xf32>
    %156 = tpu.matmul %154, %155, %cst_88 {dimension_numbers = #tpu.dot_dimension_numbers<[1], [0], [0], [1], [0, 0, 1, 1], [], []>} : vector<16x16xbf16>, vector<16x32xbf16>, vector<16x32xf32> -> vector<16x32xf32>
    %157 = arith.addf %153, %156 : vector<16x32xf32>
    %158 = vector.extract_strided_slice %148 {offsets = [0, 32], sizes = [16, 16], strides = [1, 1]} : vector<16x48xbf16> to vector<16x16xbf16>
    %c0_89 = arith.constant 0 : index
    %c2 = arith.constant 2 : index
    %159 = vector.load %arg16[%c0_89, %c2] : memref<16x34xbf16, #tpu.memory_space<vmem>>, vector<16x32xbf16>
    %cst_90 = arith.constant dense<0.000000e+00> : vector<16x32xf32>
    %160 = tpu.matmul %158, %159, %cst_90 {dimension_numbers = #tpu.dot_dimension_numbers<[1], [0], [0], [1], [0, 0, 1, 1], [], []>} : vector<16x16xbf16>, vector<16x32xbf16>, vector<16x32xf32> -> vector<16x32xf32>
    %161 = arith.addf %157, %160 : vector<16x32xf32>
    %c0_91 = arith.constant 0 : index
    %c0_92 = arith.constant 0 : index
    %c0_93 = arith.constant 0 : index
    %162 = vector.load %arg11[%c0_91, %c0_92, %c0_93] : memref<1x16x1xf32, #tpu.memory_space<vmem>>, vector<1x16x1xf32>
    %163 = vector.shape_cast %162 : vector<1x16x1xf32> to vector<16x1xf32>
    %164 = vector.broadcast %163 : vector<16x1xf32> to vector<16x32xf32>
    %165 = arith.addf %161, %164 : vector<16x32xf32>
    %cst_94 = arith.constant dense<0.000000e+00> : vector<16xf32>
    %166 = vector.multi_reduction <add>, %165, %cst_94 [1] : vector<16x32xf32> to vector<16xf32>
    %167 = vector.shape_cast %166 : vector<16xf32> to vector<16x1xf32>
    %cst_95 = arith.constant 3.200000e+01 : f32
    %168 = vector.broadcast %cst_95 : f32 to vector<16x1xf32>
    %169 = arith.divf %167, %168 : vector<16x1xf32>
    %170 = vector.broadcast %169 : vector<16x1xf32> to vector<16x32xf32>
    %171 = arith.subf %165, %170 : vector<16x32xf32>
    %172 = arith.mulf %171, %171 : vector<16x32xf32>
    %cst_96 = arith.constant dense<0.000000e+00> : vector<16xf32>
    %173 = vector.multi_reduction <add>, %172, %cst_96 [1] : vector<16x32xf32> to vector<16xf32>
    %174 = vector.shape_cast %173 : vector<16xf32> to vector<16x1xf32>
    %cst_97 = arith.constant 3.200000e+01 : f32
    %175 = vector.broadcast %cst_97 : f32 to vector<16x1xf32>
    %176 = arith.divf %174, %175 : vector<16x1xf32>
    %cst_98 = arith.constant 9.99999974E-6 : f32
    %177 = vector.broadcast %cst_98 : f32 to vector<16x1xf32>
    %178 = arith.addf %176, %177 : vector<16x1xf32>
    %179 = math.rsqrt %178 : vector<16x1xf32>
    %180 = vector.broadcast %179 : vector<16x1xf32> to vector<16x32xf32>
    %181 = arith.mulf %171, %180 : vector<16x32xf32>
    %182 = arith.addf %3, %181 : vector<16x32xf32>
    %c0_99 = arith.constant 0 : index
    %c0_100 = arith.constant 0 : index
    %183 = vector.load %arg13[%c0_99, %c0_100] : memref<16x32xf32, #tpu.memory_space<vmem>>, vector<16x32xf32>
    tpu.vector_store %arg13[%c0_99, %c0_100], %182 {strides = array<i32>} : memref<16x32xf32, #tpu.memory_space<vmem>>, vector<16x32xf32>,
    %c0_101 = arith.constant 0 : index
    %c0_102 = arith.constant 0 : index
    %c0_103 = arith.constant 0 : index
    %184 = vector.load %arg12[%c0_101, %c0_102, %c0_103] : memref<1x16x32xf32, #tpu.memory_space<vmem>>, vector<1x16x32xf32>
    %185 = vector.shape_cast %184 : vector<1x16x32xf32> to vector<16x32xf32>
    %186 = arith.addf %185, %181 : vector<16x32xf32>
    %c0_104 = arith.constant 0 : index
    %c0_105 = arith.constant 0 : index
    %c0_106 = arith.constant 0 : index
    %187 = vector.load %arg12[%c0_104, %c0_105, %c0_106] : memref<1x16x32xf32, #tpu.memory_space<vmem>>, vector<1x16x32xf32>
    %188 = vector.shape_cast %187 : vector<1x16x32xf32> to vector<16x32xf32>
    %189 = vector.shape_cast %186 : vector<16x32xf32> to vector<1x16x32xf32>
    tpu.vector_store %arg12[%c0_104, %c0_105, %c0_106], %189 {strides = array<i32>} : memref<1x16x32xf32, #tpu.memory_space<vmem>>, vector<1x16x32xf32>,
    return
  }
  func.func @transform_0(%arg0: i32, %arg1: i32) -> (i32, i32, i32) {
    %c0_i32 = arith.constant 0 : i32
    %c0_i32_0 = arith.constant 0 : i32
    %c0_i32_1 = arith.constant 0 : i32
    return %arg0, %c0_i32, %c0_i32_0 : i32, i32, i32
  }
  func.func @transform_1(%arg0: i32, %arg1: i32) -> (i32, i32, i32) {
    %c0_i32 = arith.constant 0 : i32
    %c0_i32_0 = arith.constant 0 : i32
    %c0_i32_1 = arith.constant 0 : i32
    return %arg0, %c0_i32, %c0_i32_0 : i32, i32, i32
  }
  func.func @transform_2(%arg0: i32, %arg1: i32) -> (i32, i32, i32) {
    %c0_i32 = arith.constant 0 : i32
    %c0_i32_0 = arith.constant 0 : i32
    %c0_i32_1 = arith.constant 0 : i32
    return %arg1, %c0_i32, %c0_i32_0 : i32, i32, i32
  }
  func.func @transform_3(%arg0: i32, %arg1: i32) -> (i32, i32, i32) {
    %c0_i32 = arith.constant 0 : i32
    %c0_i32_0 = arith.constant 0 : i32
    %c0_i32_1 = arith.constant 0 : i32
    return %arg1, %c0_i32, %c0_i32_0 : i32, i32, i32
  }
  func.func @transform_4(%arg0: i32, %arg1: i32) -> (i32, i32, i32) {
    %c0_i32 = arith.constant 0 : i32
    %c0_i32_0 = arith.constant 0 : i32
    %c0_i32_1 = arith.constant 0 : i32
    return %arg1, %c0_i32, %c0_i32_0 : i32, i32, i32
  }
  func.func @transform_5(%arg0: i32, %arg1: i32) -> (i32, i32, i32) {
    %c0_i32 = arith.constant 0 : i32
    %c0_i32_0 = arith.constant 0 : i32
    %c0_i32_1 = arith.constant 0 : i32
    return %arg1, %c0_i32, %c0_i32_0 : i32, i32, i32
  }
  func.func @transform_6(%arg0: i32, %arg1: i32) -> (i32, i32, i32) {
    %c0_i32 = arith.constant 0 : i32
    %c0_i32_0 = arith.constant 0 : i32
    %c0_i32_1 = arith.constant 0 : i32
    return %arg1, %c0_i32, %c0_i32_0 : i32, i32, i32
  }
  func.func @transform_7(%arg0: i32, %arg1: i32) -> (i32, i32, i32) {
    %c0_i32 = arith.constant 0 : i32
    %c0_i32_0 = arith.constant 0 : i32
    %c0_i32_1 = arith.constant 0 : i32
    return %arg1, %c0_i32, %c0_i32_0 : i32, i32, i32
  }
  func.func @transform_8(%arg0: i32, %arg1: i32) -> (i32, i32, i32) {
    %c0_i32 = arith.constant 0 : i32
    %c0_i32_0 = arith.constant 0 : i32
    %c0_i32_1 = arith.constant 0 : i32
    return %arg1, %c0_i32, %c0_i32_0 : i32, i32, i32
  }
  func.func @transform_9(%arg0: i32, %arg1: i32) -> (i32, i32, i32) {
    %c0_i32 = arith.constant 0 : i32
    %c0_i32_0 = arith.constant 0 : i32
    %c0_i32_1 = arith.constant 0 : i32
    return %arg1, %c0_i32, %c0_i32_0 : i32, i32, i32
  }
  func.func @transform_10(%arg0: i32, %arg1: i32) -> (i32, i32, i32) {
    %c0_i32 = arith.constant 0 : i32
    %c0_i32_0 = arith.constant 0 : i32
    %c0_i32_1 = arith.constant 0 : i32
    return %arg0, %c0_i32, %c0_i32_0 : i32, i32, i32
  }
}

</mosaic_0001>

<llo_original>
// kernel: _decoder_forward_impl.5
$region0: #{_decoder_forward_impl.5}
  #allocation0 [shape = 'u32[]', space=smem, size = 0x4, offset = 0x4, fixed_abs, tag = 'smem constant byte address 0x4 - core index']
  #allocation1 [shape = 'u32[72,128]{1,0:T(1,128)}', space=vmem, size = 0x9000, scoped, tag = 'internal scratch']
  #allocation2 [shape = 'bf16[24,20]{1,0:T(8,128)(2,1)}', space=vmem, size = 0x1800, scoped, tag = 'scratch operand']
  %s0 = inlined_call_operand.vmem [shape: f32[2,16,16], index: 0, kind: input, shape index: {}]
  %s1 = inlined_call_operand.vmem [shape: f32[2,8,1], index: 1, kind: input, shape index: {}]
  %s2 = inlined_call_operand.vmem [shape: bf16[32,96], index: 2, kind: input, shape index: {}]
  %s3 = inlined_call_operand.vmem [shape: bf16[32,96], index: 3, kind: input, shape index: {}]
  %s4 = inlined_call_operand.vmem [shape: f32[32,1], index: 4, kind: input, shape index: {}]
  %s5 = inlined_call_operand.vmem [shape: f32[2,16,16], index: 5, kind: output, shape index: {0}]
  %s6 = inlined_call_operand.vmem [shape: f32[2,16,16], index: 6, kind: output, shape index: {1}]
  %7 = xla_tuple %s5, %s6
  %s8 = sld [smem:[#allocation0]]
  $region61: #{_decoder_forward_impl.5} parent=0
    _
  %s10 = ssub.s32 1, %s8
  %s11 = scalar_select 0, %s10, %s8
  loop: start=0, step=1, limit=4
  $region2: #{_decoder_forward_impl.5} parent=0 // loop_pre_header
    _
  $region3: #{_decoder_forward_impl.5} parent=0 // loop_header
    %s13 = sphi 0, %s17
    %p14 = scmp.ge.s32.totalorder %s13, 4
    %s23 = sphi 0, %s25
    %s26 = sphi 0, %s23
    %s27 = sphi 0, %s26
    %s43 = sphi 0, %s27
    %s49 = sphi 0, %s51
    %s52 = sphi 0, %s49
    %s53 = sphi 0, %s52
    %s69 = sphi 0, %s53
    %s73 = sphi 0, %s73
    %s75 = sphi 0, %s73
    %s76 = sphi 0, %s75
    %s90 = sphi 0, %s76
    %s94 = sphi 0, %s94
    %s96 = sphi 0, %s94
    %s97 = sphi 0, %s96
    %s111 = sphi 0, %s97
    %s115 = sphi 0, %s115
    %s117 = sphi 0, %s115
    %s118 = sphi 0, %s117
    %s132 = sphi 0, %s118
    %s138 = sphi 0, %s140
    %s141 = sphi 0, %s138
    %s142 = sphi 0, %s141
    %s158 = sphi 0, %s142
    %s164 = sphi 0, %s166
    %s167 = sphi 0, %s164
    %s168 = sphi 0, %s167
    %s184 = sphi 0, %s168
  $region4: #{_decoder_forward_impl.5} parent=0 // loop_header_branch
    %16 = sbr.rel (%p14) target = $region8
  $region5: #{_decoder_forward_impl.5} parent=0 // loop_body
    %s18 = ssub.s32 %s13, 1
    %s19 = ssub.s32 %s13, 2
    %s20 = sadd.s32 %s13, 1
    %s21 = ssub.s32 %s13, %s20
    %p22 = scmp.eq.s32.totalorder %s21, 0
    %s24 = sadd.s32 %s23, 1
    %s25 = scalar_select %p22, %s23, %s24
    %p28 = pneg %p22
    %p29 = scmp.eq.s32.totalorder %s13, 1
    %p30 = por %p28, %p29
    %p31 = scmp.ne.s32.totalorder %s23, %s26
    %p32 = scmp.eq.s32.totalorder %s13, 0
    %p33 = por %p31, %p32
    %p34 = scmp.ne.s32.totalorder %s23, %s26
    %p35 = scmp.eq.s32.totalorder %s18, 1
    %p36 = por %p34, %p35
    %p37 = scmp.ne.s32.totalorder %s26, %s27
    %p38 = scmp.eq.s32.totalorder %s18, 0
    %p39 = por %p37, %p38
    %p40 = scmp.ne.s32.totalorder %s26, %s27
    %p41 = scmp.eq.s32.totalorder %s19, 1
    %p42 = por %p40, %p41
    %p44 = scmp.ne.s32.totalorder %s27, %s43
    %p45 = scmp.eq.s32.totalorder %s19, 0
    %p46 = por %p44, %p45
    %s47 = ssub.s32 %s13, %s20
    %p48 = scmp.eq.s32.totalorder %s47, 0
    %s50 = sadd.s32 %s49, 1
    %s51 = scalar_select %p48, %s49, %s50
    %p54 = pneg %p48
    %p55 = scmp.eq.s32.totalorder %s13, 1
    %p56 = por %p54, %p55
    %p57 = scmp.ne.s32.totalorder %s49, %s52
    %p58 = scmp.eq.s32.totalorder %s13, 0
    %p59 = por %p57, %p58
    %p60 = scmp.ne.s32.totalorder %s49, %s52
    %p61 = scmp.eq.s32.totalorder %s18, 1
    %p62 = por %p60, %p61
    %p63 = scmp.ne.s32.totalorder %s52, %s53
    %p64 = scmp.eq.s32.totalorder %s18, 0
    %p65 = por %p63, %p64
    %p66 = scmp.ne.s32.totalorder %s52, %s53
    %p67 = scmp.eq.s32.totalorder %s19, 1
    %p68 = por %p66, %p67
    %p70 = scmp.ne.s32.totalorder %s53, %s69
    %p71 = scmp.eq.s32.totalorder %s19, 0
    %p72 = por %p70, %p71
    %s74 = sadd.s32 %s73, 1
    %p77 = scmp.eq.s32.totalorder %s13, 1
    %p78 = scmp.ne.s32.totalorder %s73, %s75
    %p79 = scmp.eq.s32.totalorder %s13, 0
    %p80 = por %p78, %p79
    %p81 = scmp.ne.s32.totalorder %s73, %s75
    %p82 = scmp.eq.s32.totalorder %s18, 1
    %p83 = por %p81, %p82
    %p84 = scmp.ne.s32.totalorder %s75, %s76
    %p85 = scmp.eq.s32.totalorder %s18, 0
    %p86 = por %p84, %p85
    %p87 = scmp.ne.s32.totalorder %s75, %s76
    %p88 = scmp.eq.s32.totalorder %s19, 1
    %p89 = por %p87, %p88
    %p91 = scmp.ne.s32.totalorder %s76, %s90
    %p92 = scmp.eq.s32.totalorder %s19, 0
    %p93 = por %p91, %p92
    %s95 = sadd.s32 %s94, 1
    %p98 = scmp.eq.s32.totalorder %s13, 1
    %p99 = scmp.ne.s32.totalorder %s94, %s96
    %p100 = scmp.eq.s32.totalorder %s13, 0
    %p101 = por %p99, %p100
    %p102 = scmp.ne.s32.totalorder %s94, %s96
    %p103 = scmp.eq.s32.totalorder %s18, 1
    %p104 = por %p102, %p103
    %p105 = scmp.ne.s32.totalorder %s96, %s97
    %p106 = scmp.eq.s32.totalorder %s18, 0
    %p107 = por %p105, %p106
    %p108 = scmp.ne.s32.totalorder %s96, %s97
    %p109 = scmp.eq.s32.totalorder %s19, 1
    %p110 = por %p108, %p109
    %p112 = scmp.ne.s32.totalorder %s97, %s111
    %p113 = scmp.eq.s32.totalorder %s19, 0
    %p114 = por %p112, %p113
    %s116 = sadd.s32 %s115, 1
    %p119 = scmp.eq.s32.totalorder %s13, 1
    %p120 = scmp.ne.s32.totalorder %s115, %s117
    %p121 = scmp.eq.s32.totalorder %s13, 0
    %p122 = por %p120, %p121
    %p123 = scmp.ne.s32.totalorder %s115, %s117
    %p124 = scmp.eq.s32.totalorder %s18, 1
    %p125 = por %p123, %p124
    %p126 = scmp.ne.s32.totalorder %s117, %s118
    %p127 = scmp.eq.s32.totalorder %s18, 0
    %p128 = por %p126, %p127
    %p129 = scmp.ne.s32.totalorder %s117, %s118
    %p130 = scmp.eq.s32.totalorder %s19, 1
    %p131 = por %p129, %p130
    %p133 = scmp.ne.s32.totalorder %s118, %s132
    %p134 = scmp.eq.s32.totalorder %s19, 0
    %p135 = por %p133, %p134
    %s136 = ssub.s32 %s13, %s20
    %p137 = scmp.eq.s32.totalorder %s136, 0
    %s139 = sadd.s32 %s138, 1
    %s140 = scalar_select %p137, %s138, %s139
    %p143 = pneg %p137
    %p144 = scmp.eq.s32.totalorder %s13, 1
    %p145 = por %p143, %p144
    %p146 = scmp.ne.s32.totalorder %s138, %s141
    %p147 = scmp.eq.s32.totalorder %s13, 0
    %p148 = por %p146, %p147
    %p149 = scmp.ne.s32.totalorder %s138, %s141
    %p150 = scmp.eq.s32.totalorder %s18, 1
    %p151 = por %p149, %p150
    %p152 = scmp.ne.s32.totalorder %s141, %s142
    %p153 = scmp.eq.s32.totalorder %s18, 0
    %p154 = por %p152, %p153
    %p155 = scmp.ne.s32.totalorder %s141, %s142
    %p156 = scmp.eq.s32.totalorder %s19, 1
    %p157 = por %p155, %p156
    %p159 = scmp.ne.s32.totalorder %s142, %s158
    %p160 = scmp.eq.s32.totalorder %s19, 0
    %p161 = por %p159, %p160
    %s162 = ssub.s32 %s13, %s20
    %p163 = scmp.eq.s32.totalorder %s162, 0
    %s165 = sadd.s32 %s164, 1
    %s166 = scalar_select %p163, %s164, %s165
    %p169 = pneg %p163
    %p170 = scmp.eq.s32.totalorder %s13, 1
    %p171 = por %p169, %p170
    %p172 = scmp.ne.s32.totalorder %s164, %s167
    %p173 = scmp.eq.s32.totalorder %s13, 0
    %p174 = por %p172, %p173
    %p175 = scmp.ne.s32.totalorder %s164, %s167
    %p176 = scmp.eq.s32.totalorder %s18, 1
    %p177 = por %p175, %p176
    %p178 = scmp.ne.s32.totalorder %s167, %s168
    %p179 = scmp.eq.s32.totalorder %s18, 0
    %p180 = por %p178, %p179
    %p181 = scmp.ne.s32.totalorder %s167, %s168
    %p182 = scmp.eq.s32.totalorder %s19, 1
    %p183 = por %p181, %p182
    %p185 = scmp.ne.s32.totalorder %s168, %s184
    %p186 = scmp.eq.s32.totalorder %s19, 0
    %p187 = por %p185, %p186
    %p188 = scmp.le.s32.totalorder 1, %s13
    %p189 = scmp.lt.s32.totalorder %s13, 3
    %p190 = pnand %p188, %p189
    %p191 = pneg %p190
    // Predicated region
    $region9: #{_decoder_forward_impl.5} parent=5 // pred_check
      _
    $region10: #{_decoder_forward_impl.5} parent=5 // pred_check_branch
      %193 = sbr.rel (%p190) target = $region12
    $region11: #{_decoder_forward_impl.5} parent=5 // pred_region
      %s194 = ssub.s32 %s13, 1
      // Predicated region
      $region13: #{_decoder_forward_impl.5} parent=11 // pred_check
        %p195 = pneg %p86
      $region14: #{_decoder_forward_impl.5} parent=11 // pred_check_branch
        %197 = sbr.rel (%p195) target = $region16
      $region15: #{_decoder_forward_impl.5} parent=11 // pred_region
        _
      $region16: #{_decoder_forward_impl.5} parent=11 // pred_fallthru
        _
      // Predicated region
      $region17: #{_decoder_forward_impl.5} parent=11 // pred_check
        %p198 = pneg %p107
      $region18: #{_decoder_forward_impl.5} parent=11 // pred_check_branch
        %200 = sbr.rel (%p198) target = $region20
      $region19: #{_decoder_forward_impl.5} parent=11 // pred_region
        _
      $region20: #{_decoder_forward_impl.5} parent=11 // pred_fallthru
        _
      // Predicated region
      $region21: #{_decoder_forward_impl.5} parent=11 // pred_check
        %p201 = pneg %p128
      $region22: #{_decoder_forward_impl.5} parent=11 // pred_check_branch
        %203 = sbr.rel (%p201) target = $region24
      $region23: #{_decoder_forward_impl.5} parent=11 // pred_region
        _
      $region24: #{_decoder_forward_impl.5} parent=11 // pred_fallthru
        _
    $region12: #{_decoder_forward_impl.5} parent=5 // pred_fallthru
      _
    %p204 = scmp.lt.s32.totalorder %s13, 2
    // Predicated region
    $region25: #{_decoder_forward_impl.5} parent=5 // pred_check
      %p205 = pneg %p204
    $region26: #{_decoder_forward_impl.5} parent=5 // pred_check_branch
      %207 = sbr.rel (%p205) target = $region28
    $region27: #{_decoder_forward_impl.5} parent=5 // pred_region
      // Predicated region
      $region29: #{_decoder_forward_impl.5} parent=27 // pred_check
        %p208 = pneg %p33
      $region30: #{_decoder_forward_impl.5} parent=27 // pred_check_branch
        %210 = sbr.rel (%p208) target = $region32
      $region31: #{_decoder_forward_impl.5} parent=27 // pred_region
        %p211 = scmp.lt.s32.totalorder %s13, 1
        %s212 = scalar_select %p211, %s13, 1
        %s213 = smul.addr %s212, 2
        %s214 = smul.addr %s213, 8
        %s215 = scalar_lea.vmem %s0, %s214
      $region32: #{_decoder_forward_impl.5} parent=27 // pred_fallthru
        _
      // Predicated region
      $region33: #{_decoder_forward_impl.5} parent=27 // pred_check
        %p216 = pneg %p59
      $region34: #{_decoder_forward_impl.5} parent=27 // pred_check_branch
        %218 = sbr.rel (%p216) target = $region36
      $region35: #{_decoder_forward_impl.5} parent=27 // pred_region
        %p219 = scmp.lt.s32.totalorder %s13, 1
        %s220 = scalar_select %p219, %s13, 1
        %s221 = smul.addr %s220, 8
        %s222 = scalar_lea.vmem %s1, %s221
      $region36: #{_decoder_forward_impl.5} parent=27 // pred_fallthru
        _
    $region28: #{_decoder_forward_impl.5} parent=5 // pred_fallthru
      _
    %p223 = scmp.le.s32.totalorder 1, %s13
    %p224 = scmp.lt.s32.totalorder %s13, 3
    %p225 = pnand %p223, %p224
    %p226 = pneg %p225
    // Predicated region
    $region37: #{_decoder_forward_impl.5} parent=5 // pred_check
      _
    $region38: #{_decoder_forward_impl.5} parent=5 // pred_check_branch
      %228 = sbr.rel (%p225) target = $region40
    $region39: #{_decoder_forward_impl.5} parent=5 // pred_region
      %s229 = ssub.s32 %s13, 1
      %p230 = scmp.lt.s32.totalorder %s18, 1
      %s231 = scalar_select %p230, %s18, 1
      %s232 = smul.addr %s231, 2
      %s233 = smul.addr %s232, 8
      %s234 = scalar_lea.vmem %s0, %s233
      %p235 = pneg %p39
      %p236 = pneg %p36
      %p237 = scmp.lt.s32.totalorder %s18, 1
      %s238 = scalar_select %p237, %s18, 1
      %s239 = smul.addr %s238, 8
      %s240 = scalar_lea.vmem %s1, %s239
      %p241 = pneg %p65
      %p242 = pneg %p62
      %p243 = pneg %p86
      %p244 = pneg %p83
      %p245 = pneg %p107
      %p246 = pneg %p104
      %p247 = pneg %p128
      %p248 = pneg %p125
      %p249 = pneg %p154
      %p250 = pneg %p151
      %p251 = scmp.lt.s32.totalorder %s18, 1
      %s252 = scalar_select %p251, %s18, 1
      %s253 = smul.addr %s252, 2
      %s254 = smul.addr %s253, 8
      %s255 = scalar_lea.vmem %s5, %s254
      %p256 = pneg %p180
      %p257 = pneg %p177
      %p258 = scmp.lt.s32.totalorder %s18, 1
      %s259 = scalar_select %p258, %s18, 1
      %s260 = smul.addr %s259, 2
      %s261 = smul.addr %s260, 8
      %s262 = scalar_lea.vmem %s6, %s261
      %p263 = scmp.lt.s32.totalorder %s18, 1
      %s264 = scalar_select %p263, %s18, 1
      %s265 = smul.addr %s264, 2
      %s266 = smul.addr %s265, 8
      %s267 = scalar_lea.vmem %s0, %s266
      %p268 = scmp.lt.s32.totalorder %s18, 1
      %s269 = scalar_select %p268, %s18, 1
      %s270 = smul.addr %s269, 8
      %s271 = scalar_lea.vmem %s1, %s270
      %p272 = scmp.lt.s32.totalorder %s18, 1
      %s273 = scalar_select %p272, %s18, 1
      %s274 = smul.addr %s273, 2
      %s275 = smul.addr %s274, 8
      %s276 = scalar_lea.vmem %s5, %s275
      %p277 = scmp.lt.s32.totalorder %s18, 1
      %s278 = scalar_select %p277, %s18, 1
      %s279 = smul.addr %s278, 2
      %s280 = smul.addr %s279, 8
      %s281 = scalar_lea.vmem %s6, %s280
      %vm283 = vcmask 11264
      %284 = vst.msk [vmem:[#allocation2] sm:$0xf] %vm283, 0
      %285 = vst.msk [vmem:[#allocation2 + $0x4] sm:$0xf] %vm283, 0
      %286 = vst.msk [vmem:[#allocation2 + $0x8] sm:$0xf] %vm283, 0
      %vm287 = vcmask 158864
      %288 = vst.msk [vmem:[#allocation2] sm:$0xf] %vm287, 0
      %289 = vst.msk [vmem:[#allocation2 + $0x4] sm:$0xf] %vm287, 0
      %290 = vst.msk [vmem:[#allocation2 + $0x8] sm:$0xf] %vm287, 0
      %v291 = vld [vmem:[%s267] sm:$0xff]
      %v292 = vld [vmem:[%s267 + $0x8] sm:$0xff]
      %v293 = vpack.c.bf16 %v291, %v291
      %v294 = vpack.c.bf16 %v292, %v292
      %297 = vrot.lane.b32.xlu0 %v293, 2
      %v298 = vpop.permute.xlu0 %297
      %299 = vrot.lane.b32.xlu0 %v294, 2
      %v300 = vpop.permute.xlu0 %299
      %vm303 = vcmask 142352
      %304 = vst.msk [vmem:[#allocation2] sm:$0xf] %vm303, %v298
      %305 = vst.msk [vmem:[#allocation2 + $0x4] sm:$0xf] %vm303, %v300
      %v306 = vld [vmem:[%s271] sm:$0xff]
      %308 = vset.pattern.permute.xlu0 0
      %309 = vperm.xlu0 %308, %v306
      %v310 = vpop.permute.xlu0 %309
      %v312 = vpack.c.bf16 %v310, %v310
      %313 = vst.msk [vmem:[#allocation2 + $0x8] sm:$0xf] %vm303, %v312
      %v314 = vld [vmem:[%s4] sm:$0xff]
      %v315 = vld [vmem:[%s4 + $0x8] sm:$0xff]
      %v316 = vld [vmem:[%s4 + $0x10] sm:$0xff]
      %v317 = vld [vmem:[%s4 + $0x18] sm:$0xff]
      %v318 = vld [vmem:[%s2] sm:$0xf]
      %v319 = vld [vmem:[%s2 + $0x4] sm:$0xf]
      %v320 = vld [vmem:[%s2 + $0x8] sm:$0xf]
      %v321 = vld [vmem:[%s2 + $0xc] sm:$0xf]
      %v322 = vld [vmem:[#allocation2] sm:$0xf]
      %v323 = vld [vmem:[#allocation2 + $0x4] sm:$0xf]
      %v324 = vld [vmem:[#allocation2 + $0x8] sm:$0xf]
      %v329 = vunpack.c.l.b16 %v318
      %v330 = vunpack.c.l.b16 %v319
      %v331 = vunpack.c.l.b16 %v320
      %v332 = vunpack.c.l.b16 %v321
      %v333 = vpack.c.b16 %v330, %v329
      %v334 = vpack.c.b16 %v332, %v331
      %335 = vrot.lane.b32.xlu0 %v333, 104
      %v336 = vpop.permute.xlu0 %335
      %337 = vrot.lane.b32.xlu0 %v334, 104
      %v338 = vpop.permute.xlu0 %337
      %v342 = vunpack.c.l.b16 %v322
      %v343 = vunpack.c.l.b16 %v323
      %v344 = vunpack.c.l.b16 %v324
      %v345 = vpack.c.b16 %v343, %v342
      %v346 = vpack.c.b16 %v344, %v344
      %347 = vrot.lane.b32.xlu0 %v345, 127
      %v348 = vpop.permute.xlu0 %347
      %349 = vrot.lane.b32.xlu0 %v346, 127
      %v350 = vpop.permute.xlu0 %349
      %vm352 = vcmask 195584
      %v354 = vsel %vm352, %v336, 0
      %v357 = vsel %vm352, %v338, 0
      %vm359 = vcmask 1043456
      %v361 = vsel %vm359, %v350, 0
      %363 = vmatpush.bf16.msra.mxu0 0
      %364 = vmatpush.bf16.msra.mxu0 0
      %365 = vmatpush.bf16.msra.mxu0 0
      %366 = vmatpush.bf16.msra.mxu0 0
      %367 = vmatpush.bf16.msra.mxu0 0
      %368 = vmatpush.bf16.msra.mxu0 0
      %369 = vmatpush.bf16.msra.mxu0 %v361
      %370 = vmatpush.bf16.msra.mxu0 %v348
      %371 = vmatmul.bf16.gmra.mxu0 %v354
      %v372 = vpop.f32.mrf.mxu0
      %v373 = vadd.f32 0.0, %v372
      %v374 = vpop.f32.mrf.mxu0
      %v375 = vadd.f32 0.0, %v374
      %376 = vmatmul.bf16.gmra.mxu0 %v357
      %v377 = vpop.f32.mrf.mxu0
      %v378 = vadd.f32 0.0, %v377
      %v379 = vpop.f32.mrf.mxu0
      %v380 = vadd.f32 0.0, %v379
      %381 = vdwg.mxu0
      %v384 = vsel %vm352, %v333, 0
      %v387 = vsel %vm352, %v334, 0
      %v390 = vsel %vm359, %v346, 0
      %392 = vmatpush.bf16.msra.mxu0 0
      %393 = vmatpush.bf16.msra.mxu0 0
      %394 = vmatpush.bf16.msra.mxu0 0
      %395 = vmatpush.bf16.msra.mxu0 0
      %396 = vmatpush.bf16.msra.mxu0 0
      %397 = vmatpush.bf16.msra.mxu0 0
      %398 = vmatpush.bf16.msra.mxu0 %v390
      %399 = vmatpush.bf16.msra.mxu0 %v345
      %400 = vmatmul.bf16.gmra.mxu0 %v384
      %v401 = vpop.f32.mrf.mxu0
      %v402 = vadd.f32 %v373, %v401
      %v403 = vpop.f32.mrf.mxu0
      %v404 = vadd.f32 %v375, %v403
      %405 = vmatmul.bf16.gmra.mxu0 %v387
      %v406 = vpop.f32.mrf.mxu0
      %v407 = vadd.f32 %v378, %v406
      %v408 = vpop.f32.mrf.mxu0
      %v409 = vadd.f32 %v380, %v408
      %410 = vdwg.mxu0
      %411 = vrot.lane.b32.xlu0 %v333, 80
      %v412 = vpop.permute.xlu0 %411
      %413 = vrot.lane.b32.xlu0 %v334, 80
      %v414 = vpop.permute.xlu0 %413
      %415 = vrot.lane.b32.xlu0 %v345, 126
      %v416 = vpop.permute.xlu0 %415
      %417 = vrot.lane.b32.xlu0 %v346, 126
      %v418 = vpop.permute.xlu0 %417
      %v421 = vsel %vm352, %v412, 0
      %v424 = vsel %vm352, %v414, 0
      %v427 = vsel %vm359, %v418, 0
      %429 = vmatpush.bf16.msra.mxu0 0
      %430 = vmatpush.bf16.msra.mxu0 0
      %431 = vmatpush.bf16.msra.mxu0 0
      %432 = vmatpush.bf16.msra.mxu0 0
      %433 = vmatpush.bf16.msra.mxu0 0
      %434 = vmatpush.bf16.msra.mxu0 0
      %435 = vmatpush.bf16.msra.mxu0 %v427
      %436 = vmatpush.bf16.msra.mxu0 %v416
      %437 = vmatmul.bf16.gmra.mxu0 %v421
      %v438 = vpop.f32.mrf.mxu0
      %v439 = vadd.f32 0.0, %v438
      %v440 = vpop.f32.mrf.mxu0
      %v441 = vadd.f32 0.0, %v440
      %442 = vmatmul.bf16.gmra.mxu0 %v424
      %v443 = vpop.f32.mrf.mxu0
      %v444 = vadd.f32 0.0, %v443
      %v445 = vpop.f32.mrf.mxu0
      %v446 = vadd.f32 0.0, %v445
      %447 = vdwg.mxu0
      %v448 = vadd.f32 %v402, %v439
      %v449 = vadd.f32 %v404, %v441
      %v450 = vadd.f32 %v407, %v444
      %v451 = vadd.f32 %v409, %v446
      %452 = vrot.lane.b32.xlu0 %v333, 56
      %v453 = vpop.permute.xlu0 %452
      %454 = vrot.lane.b32.xlu0 %v334, 56
      %v455 = vpop.permute.xlu0 %454
      %456 = vrot.lane.b32.xlu0 %v345, 125
      %v457 = vpop.permute.xlu0 %456
      %458 = vrot.lane.b32.xlu0 %v346, 125
      %v459 = vpop.permute.xlu0 %458
      %v462 = vsel %vm352, %v453, 0
      %v465 = vsel %vm352, %v455, 0
      %v468 = vsel %vm359, %v459, 0
      %470 = vmatpush.bf16.msra.mxu0 0
      %471 = vmatpush.bf16.msra.mxu0 0
      %472 = vmatpush.bf16.msra.mxu0 0
      %473 = vmatpush.bf16.msra.mxu0 0
      %474 = vmatpush.bf16.msra.mxu0 0
      %475 = vmatpush.bf16.msra.mxu0 0
      %476 = vmatpush.bf16.msra.mxu0 %v468
      %477 = vmatpush.bf16.msra.mxu0 %v457
      %478 = vmatmul.bf16.gmra.mxu0 %v462
      %v479 = vpop.f32.mrf.mxu0
      %v480 = vadd.f32 0.0, %v479
      %v481 = vpop.f32.mrf.mxu0
      %v482 = vadd.f32 0.0, %v481
      %483 = vmatmul.bf16.gmra.mxu0 %v465
      %v484 = vpop.f32.mrf.mxu0
      %v485 = vadd.f32 0.0, %v484
      %v486 = vpop.f32.mrf.mxu0
      %v487 = vadd.f32 0.0, %v486
      %488 = vdwg.mxu0
      %v489 = vadd.f32 %v448, %v480
      %v490 = vadd.f32 %v449, %v482
      %v491 = vadd.f32 %v450, %v485
      %v492 = vadd.f32 %v451, %v487
      %494 = vset.pattern.permute.xlu0 0
      %495 = vperm.xlu0 %494, %v314
      %v496 = vpop.permute.xlu0 %495
      %499 = vset.pattern.permute.xlu0 0
      %500 = vperm.xlu0 %499, %v315
      %v501 = vpop.permute.xlu0 %500
      %504 = vset.pattern.permute.xlu0 0
      %505 = vperm.xlu0 %504, %v316
      %v506 = vpop.permute.xlu0 %505
      %509 = vset.pattern.permute.xlu0 0
      %510 = vperm.xlu0 %509, %v317
      %v511 = vpop.permute.xlu0 %510
      %v513 = vadd.f32 %v489, %v496
      %v514 = vadd.f32 %v490, %v501
      %v515 = vadd.f32 %v491, %v506
      %v516 = vadd.f32 %v492, %v511
      %v517 = vld [vmem:[%s3] sm:$0xf]
      %v518 = vld [vmem:[%s3 + $0x4] sm:$0xf]
      %v519 = vld [vmem:[%s3 + $0x8] sm:$0xf]
      %v520 = vld [vmem:[%s3 + $0xc] sm:$0xf]
      %v525 = vunpack.c.l.b16 %v517
      %v526 = vunpack.c.l.b16 %v518
      %v527 = vunpack.c.l.b16 %v519
      %v528 = vunpack.c.l.b16 %v520
      %v529 = vpack.c.b16 %v526, %v525
      %v530 = vpack.c.b16 %v528, %v527
      %531 = vrot.lane.b32.xlu0 %v529, 104
      %v532 = vpop.permute.xlu0 %531
      %533 = vrot.lane.b32.xlu0 %v530, 104
      %v534 = vpop.permute.xlu0 %533
      %v536 = vsel %vm352, %v532, 0
      %v539 = vsel %vm352, %v534, 0
      %541 = vmatpush.bf16.msra.mxu0 0
      %542 = vmatpush.bf16.msra.mxu0 0
      %543 = vmatpush.bf16.msra.mxu0 0
      %544 = vmatpush.bf16.msra.mxu0 0
      %545 = vmatpush.bf16.msra.mxu0 0
      %546 = vmatpush.bf16.msra.mxu0 0
      %547 = vmatpush.bf16.msra.mxu0 %v427
      %548 = vmatpush.bf16.msra.mxu0 %v416
      %549 = vmatmul.bf16.gmra.mxu0 %v536
      %v550 = vpop.f32.mrf.mxu0
      %v551 = vadd.f32 0.0, %v550
      %v552 = vpop.f32.mrf.mxu0
      %v553 = vadd.f32 0.0, %v552
      %554 = vmatmul.bf16.gmra.mxu0 %v539
      %v555 = vpop.f32.mrf.mxu0
      %v556 = vadd.f32 0.0, %v555
      %v557 = vpop.f32.mrf.mxu0
      %v558 = vadd.f32 0.0, %v557
      %559 = vdwg.mxu0
      %v561 = vsel %vm352, %v529, 0
      %v564 = vsel %vm352, %v530, 0
      %566 = vmatpush.bf16.msra.mxu0 0
      %567 = vmatpush.bf16.msra.mxu0 0
      %568 = vmatpush.bf16.msra.mxu0 0
      %569 = vmatpush.bf16.msra.mxu0 0
      %570 = vmatpush.bf16.msra.mxu0 0
      %571 = vmatpush.bf16.msra.mxu0 0
      %572 = vmatpush.bf16.msra.mxu0 %v361
      %573 = vmatpush.bf16.msra.mxu0 %v348
      %574 = vmatmul.bf16.gmra.mxu0 %v561
      %v575 = vpop.f32.mrf.mxu0
      %v576 = vadd.f32 %v551, %v575
      %v577 = vpop.f32.mrf.mxu0
      %v578 = vadd.f32 %v553, %v577
      %579 = vmatmul.bf16.gmra.mxu0 %v564
      %v580 = vpop.f32.mrf.mxu0
      %v581 = vadd.f32 %v556, %v580
      %v582 = vpop.f32.mrf.mxu0
      %v583 = vadd.f32 %v558, %v582
      %584 = vdwg.mxu0
      %585 = vrot.lane.b32.xlu0 %v529, 80
      %v586 = vpop.permute.xlu0 %585
      %587 = vrot.lane.b32.xlu0 %v530, 80
      %v588 = vpop.permute.xlu0 %587
      %v590 = vsel %vm352, %v586, 0
      %v593 = vsel %vm352, %v588, 0
      %595 = vmatpush.bf16.msra.mxu0 0
      %596 = vmatpush.bf16.msra.mxu0 0
      %597 = vmatpush.bf16.msra.mxu0 0
      %598 = vmatpush.bf16.msra.mxu0 0
      %599 = vmatpush.bf16.msra.mxu0 0
      %600 = vmatpush.bf16.msra.mxu0 0
      %601 = vmatpush.bf16.msra.mxu0 %v468
      %602 = vmatpush.bf16.msra.mxu0 %v457
      %603 = vmatmul.bf16.gmra.mxu0 %v590
      %v604 = vpop.f32.mrf.mxu0
      %v605 = vadd.f32 0.0, %v604
      %v606 = vpop.f32.mrf.mxu0
      %v607 = vadd.f32 0.0, %v606
      %608 = vmatmul.bf16.gmra.mxu0 %v593
      %v609 = vpop.f32.mrf.mxu0
      %v610 = vadd.f32 0.0, %v609
      %v611 = vpop.f32.mrf.mxu0
      %v612 = vadd.f32 0.0, %v611
      %613 = vdwg.mxu0
      %v614 = vadd.f32 %v576, %v605
      %v615 = vadd.f32 %v578, %v607
      %v616 = vadd.f32 %v581, %v610
      %v617 = vadd.f32 %v583, %v612
      %618 = vrot.lane.b32.xlu0 %v529, 56
      %v619 = vpop.permute.xlu0 %618
      %620 = vrot.lane.b32.xlu0 %v530, 56
      %v621 = vpop.permute.xlu0 %620
      %622 = vrot.lane.b32.xlu0 %v345, 124
      %v623 = vpop.permute.xlu0 %622
      %624 = vrot.lane.b32.xlu0 %v346, 124
      %v625 = vpop.permute.xlu0 %624
      %v628 = vsel %vm352, %v619, 0
      %v631 = vsel %vm352, %v621, 0
      %v634 = vsel %vm359, %v625, 0
      %636 = vmatpush.bf16.msra.mxu0 0
      %637 = vmatpush.bf16.msra.mxu0 0
      %638 = vmatpush.bf16.msra.mxu0 0
      %639 = vmatpush.bf16.msra.mxu0 0
      %640 = vmatpush.bf16.msra.mxu0 0
      %641 = vmatpush.bf16.msra.mxu0 0
      %642 = vmatpush.bf16.msra.mxu0 %v634
      %643 = vmatpush.bf16.msra.mxu0 %v623
      %644 = vmatmul.bf16.gmra.mxu0 %v628
      %v645 = vpop.f32.mrf.mxu0
      %v646 = vadd.f32 0.0, %v645
      %v647 = vpop.f32.mrf.mxu0
      %v648 = vadd.f32 0.0, %v647
      %649 = vmatmul.bf16.gmra.mxu0 %v631
      %v650 = vpop.f32.mrf.mxu0
      %v651 = vadd.f32 0.0, %v650
      %v652 = vpop.f32.mrf.mxu0
      %v653 = vadd.f32 0.0, %v652
      %654 = vdwg.mxu0
      %v655 = vadd.f32 %v614, %v646
      %v656 = vadd.f32 %v615, %v648
      %v657 = vadd.f32 %v616, %v651
      %v658 = vadd.f32 %v617, %v653
      %v659 = vadd.f32 %v655, %v496
      %v660 = vadd.f32 %v656, %v501
      %v661 = vadd.f32 %v657, %v506
      %v662 = vadd.f32 %v658, %v511
      %vm663 = vcmask 130048
      %v664 = vsel %vm663, %v513, 0.0
      %665 = vadd.xlane.f32.xlu0 %v664
      %v666 = vpop.xlane.xlu0 %665
      %v667 = vsel %vm663, %v514, 0.0
      %668 = vadd.xlane.f32.xlu0 %v667
      %v669 = vpop.xlane.xlu0 %668
      %v670 = vsel %vm663, %v515, 0.0
      %671 = vadd.xlane.f32.xlu0 %v670
      %v672 = vpop.xlane.xlu0 %671
      %v673 = vsel %vm663, %v516, 0.0
      %674 = vadd.xlane.f32.xlu0 %v673
      %v675 = vpop.xlane.xlu0 %674
      %v676 = vsel %vm663, %v659, 0.0
      %677 = vadd.xlane.f32.xlu0 %v676
      %v678 = vpop.xlane.xlu0 %677
      %v679 = vsel %vm663, %v660, 0.0
      %680 = vadd.xlane.f32.xlu0 %v679
      %v681 = vpop.xlane.xlu0 %680
      %v682 = vsel %vm663, %v661, 0.0
      %683 = vadd.xlane.f32.xlu0 %v682
      %v684 = vpop.xlane.xlu0 %683
      %v685 = vsel %vm663, %v662, 0.0
      %686 = vadd.xlane.f32.xlu0 %v685
      %v687 = vpop.xlane.xlu0 %686
      %v688 = vadd.f32 %v666, %v678
      %v689 = vadd.f32 %v669, %v681
      %v690 = vadd.f32 %v672, %v684
      %v691 = vadd.f32 %v675, %v687
      %v692 = vrcp.pop 32.0
      %v693 = vmul.f32 32.0, %v692
      %v694 = vsub.f32 1.0, %v693
      %v695 = vmul.f32 %v692, %v694
      %v696 = vadd.f32 %v692, %v695
      %vm697 = vweird.f32 %v692
      %v698 = vsel %vm697, %v692, %v696
      %v699 = vmul.f32 %v688, %v698
      %v700 = vmul.f32 %v689, %v698
      %v701 = vmul.f32 %v690, %v698
      %v702 = vmul.f32 %v691, %v698
      %v703 = vsub.f32 %v513, %v699
      %v704 = vsub.f32 %v514, %v700
      %v705 = vsub.f32 %v515, %v701
      %v706 = vsub.f32 %v516, %v702
      %v707 = vsub.f32 %v659, %v699
      %v708 = vsub.f32 %v660, %v700
      %v709 = vsub.f32 %v661, %v701
      %v710 = vsub.f32 %v662, %v702
      %v711 = vmul.f32 %v703, %v703
      %v712 = vmul.f32 %v704, %v704
      %v713 = vmul.f32 %v705, %v705
      %v714 = vmul.f32 %v706, %v706
      %v715 = vsel %vm663, %v711, 0.0
      %716 = vadd.xlane.f32.xlu0 %v715
      %v717 = vpop.xlane.xlu0 %716
      %v718 = vsel %vm663, %v712, 0.0
      %719 = vadd.xlane.f32.xlu0 %v718
      %v720 = vpop.xlane.xlu0 %719
      %v721 = vsel %vm663, %v713, 0.0
      %722 = vadd.xlane.f32.xlu0 %v721
      %v723 = vpop.xlane.xlu0 %722
      %v724 = vsel %vm663, %v714, 0.0
      %725 = vadd.xlane.f32.xlu0 %v724
      %v726 = vpop.xlane.xlu0 %725
      %v727 = vmul.f32 %v707, %v707
      %v728 = vmul.f32 %v708, %v708
      %v729 = vmul.f32 %v709, %v709
      %v730 = vmul.f32 %v710, %v710
      %v731 = vsel %vm663, %v727, 0.0
      %732 = vadd.xlane.f32.xlu0 %v731
      %v733 = vpop.xlane.xlu0 %732
      %v734 = vsel %vm663, %v728, 0.0
      %735 = vadd.xlane.f32.xlu0 %v734
      %v736 = vpop.xlane.xlu0 %735
      %v737 = vsel %vm663, %v729, 0.0
      %738 = vadd.xlane.f32.xlu0 %v737
      %v739 = vpop.xlane.xlu0 %738
      %v740 = vsel %vm663, %v730, 0.0
      %741 = vadd.xlane.f32.xlu0 %v740
      %v742 = vpop.xlane.xlu0 %741
      %v743 = vadd.f32 %v717, %v733
      %v744 = vadd.f32 %v720, %v736
      %v745 = vadd.f32 %v723, %v739
      %v746 = vadd.f32 %v726, %v742
      %v747 = vmul.f32 %v743, %v698
      %v748 = vmul.f32 %v744, %v698
      %v749 = vmul.f32 %v745, %v698
      %v750 = vmul.f32 %v746, %v698
      %v751 = vadd.f32 %v747, 1e-05
      %v752 = vadd.f32 %v748, 1e-05
      %v753 = vadd.f32 %v749, 1e-05
      %v754 = vadd.f32 %v750, 1e-05
      %v755 = vrsqrt.pop %v751
      %v756 = vmul.f32 %v755, %v751
      %v757 = vmul.f32 %v756, %v755
      %v758 = vmul.f32 0.5, %v757
      %v759 = vsub.f32 1.5, %v758
      %v760 = vmul.f32 %v755, %v759
      %vm761 = vweird.f32 %v751
      %vm762 = vweird.f32 %v755
      %vm763 = vmor %vm761, %vm762
      %v764 = vsel %vm763, %v755, %v760
      %v765 = vrsqrt.pop %v752
      %v766 = vmul.f32 %v765, %v752
      %v767 = vmul.f32 %v766, %v765
      %v768 = vmul.f32 0.5, %v767
      %v769 = vsub.f32 1.5, %v768
      %v770 = vmul.f32 %v765, %v769
      %vm771 = vweird.f32 %v752
      %vm772 = vweird.f32 %v765
      %vm773 = vmor %vm771, %vm772
      %v774 = vsel %vm773, %v765, %v770
      %v775 = vrsqrt.pop %v753
      %v776 = vmul.f32 %v775, %v753
      %v777 = vmul.f32 %v776, %v775
      %v778 = vmul.f32 0.5, %v777
      %v779 = vsub.f32 1.5, %v778
      %v780 = vmul.f32 %v775, %v779
      %vm781 = vweird.f32 %v753
      %vm782 = vweird.f32 %v775
      %vm783 = vmor %vm781, %vm782
      %v784 = vsel %vm783, %v775, %v780
      %v785 = vrsqrt.pop %v754
      %v786 = vmul.f32 %v785, %v754
      %v787 = vmul.f32 %v786, %v785
      %v788 = vmul.f32 0.5, %v787
      %v789 = vsub.f32 1.5, %v788
      %v790 = vmul.f32 %v785, %v789
      %vm791 = vweird.f32 %v754
      %vm792 = vweird.f32 %v785
      %vm793 = vmor %vm791, %vm792
      %v794 = vsel %vm793, %v785, %v790
      %v795 = vmul.f32 %v703, %v764
      %v796 = vmul.f32 %v704, %v774
      %v797 = vmul.f32 %v705, %v784
      %v798 = vmul.f32 %v706, %v794
      %v799 = vmul.f32 %v707, %v764
      %v800 = vmul.f32 %v708, %v774
      %v801 = vmul.f32 %v709, %v784
      %v802 = vmul.f32 %v710, %v794
      %v803 = vsub.f32 0.0, %v797
      %v804 = vsub.f32 0.0, %v798
      %v805 = vmul.f32 %v803, 1.442695
      %v806 = vpow.pop %v805
      %v807 = vmul.f32 %v804, 1.442695
      %v808 = vpow.pop %v807
      %v809 = vadd.f32 %v806, 1.0
      %v810 = vadd.f32 %v808, 1.0
      %v811 = vrcp.pop %v809
      %v812 = vrcp.pop %v810
      %v813 = vmul.f32 %v795, %v811
      %v814 = vmul.f32 %v796, %v812
      %815 = vst.msk [vmem:[%s276] sm:$0xff] %vm663, %v813
      %816 = vst.msk [vmem:[%s276 + $0x8] sm:$0xff] %vm663, %v814
      %v817 = vsub.f32 0.0, %v801
      %v818 = vsub.f32 0.0, %v802
      %v819 = vmul.f32 %v817, 1.442695
      %v820 = vpow.pop %v819
      %v821 = vmul.f32 %v818, 1.442695
      %v822 = vpow.pop %v821
      %v823 = vadd.f32 %v820, 1.0
      %v824 = vadd.f32 %v822, 1.0
      %v825 = vrcp.pop %v823
      %v826 = vrcp.pop %v824
      %v827 = vmul.f32 %v799, %v825
      %v828 = vmul.f32 %v800, %v826
      %829 = vst.msk [vmem:[%s281] sm:$0xff] %vm663, %v827
      %830 = vst.msk [vmem:[%s281 + $0x8] sm:$0xff] %vm663, %v828
      %p831 = scmp.lt.s32.totalorder %s18, 1
      %s832 = scalar_select %p831, %s18, 1
      %s833 = smul.addr %s832, 2
      %s834 = smul.addr %s833, 8
      %s835 = scalar_lea.vmem %s5, %s834
      %p836 = scmp.lt.s32.totalorder %s18, 1
      %s837 = scalar_select %p836, %s18, 1
      %s838 = smul.addr %s837, 2
      %s839 = smul.addr %s838, 8
      %s840 = scalar_lea.vmem %s6, %s839
      // Predicated region
      $region41: #{_decoder_forward_impl.5} parent=39 // pred_check
        %p841 = pneg %p151
      $region42: #{_decoder_forward_impl.5} parent=39 // pred_check_branch
        %843 = sbr.rel (%p841) target = $region44
      $region43: #{_decoder_forward_impl.5} parent=39 // pred_region
        _
      $region44: #{_decoder_forward_impl.5} parent=39 // pred_fallthru
        _
      // Predicated region
      $region45: #{_decoder_forward_impl.5} parent=39 // pred_check
        %p844 = pneg %p177
      $region46: #{_decoder_forward_impl.5} parent=39 // pred_check_branch
        %846 = sbr.rel (%p844) target = $region48
      $region47: #{_decoder_forward_impl.5} parent=39 // pred_region
        _
      $region48: #{_decoder_forward_impl.5} parent=39 // pred_fallthru
        _
    $region40: #{_decoder_forward_impl.5} parent=5 // pred_fallthru
      _
    %p847 = scmp.le.s32.totalorder 2, %s13
    // Predicated region
    $region49: #{_decoder_forward_impl.5} parent=5 // pred_check
      %p848 = pneg %p847
    $region50: #{_decoder_forward_impl.5} parent=5 // pred_check_branch
      %850 = sbr.rel (%p848) target = $region52
    $region51: #{_decoder_forward_impl.5} parent=5 // pred_region
      %s851 = ssub.s32 %s13, 2
      // Predicated region
      $region53: #{_decoder_forward_impl.5} parent=51 // pred_check
        %p852 = pneg %p157
      $region54: #{_decoder_forward_impl.5} parent=51 // pred_check_branch
        %854 = sbr.rel (%p852) target = $region56
      $region55: #{_decoder_forward_impl.5} parent=51 // pred_region
        %p855 = scmp.lt.s32.totalorder %s19, 1
        %s856 = scalar_select %p855, %s19, 1
        %s857 = smul.addr %s856, 2
        %s858 = smul.addr %s857, 8
        %s859 = scalar_lea.vmem %s5, %s858
      $region56: #{_decoder_forward_impl.5} parent=51 // pred_fallthru
        _
      // Predicated region
      $region57: #{_decoder_forward_impl.5} parent=51 // pred_check
        %p860 = pneg %p183
      $region58: #{_decoder_forward_impl.5} parent=51 // pred_check_branch
        %862 = sbr.rel (%p860) target = $region60
      $region59: #{_decoder_forward_impl.5} parent=51 // pred_region
        %p863 = scmp.lt.s32.totalorder %s19, 1
        %s864 = scalar_select %p863, %s19, 1
        %s865 = smul.addr %s864, 2
        %s866 = smul.addr %s865, 8
        %s867 = scalar_lea.vmem %s6, %s866
      $region60: #{_decoder_forward_impl.5} parent=51 // pred_fallthru
        _
    $region52: #{_decoder_forward_impl.5} parent=5 // pred_fallthru
      _
  $region6: #{_decoder_forward_impl.5} parent=0 // loop_footer
    %s17 = sadd.s32 1, %s13
  $region7: #{_decoder_forward_impl.5} parent=0 // loop_footer_branch
    %12 = sbr.rel target = $region3
  $region8: #{_decoder_forward_impl.5} parent=0 // loop_exit
    _

// kernel: _decoder_forward_impl.4
$region0: #{_decoder_forward_impl.4}
  #allocation0 [shape = 'u32[]', space=smem, size = 0x4, offset = 0x4, fixed_abs, tag = 'smem constant byte address 0x4 - core index']
  #allocation1 [shape = 'u32[72,128]{1,0:T(1,128)}', space=vmem, size = 0x9000, scoped, tag = 'internal scratch']
  #allocation2 [shape = 'bf16[8,20]{1,0:T(8,128)(2,1)}', space=vmem, size = 0x800, scoped, tag = 'scratch operand']
  #allocation3 [shape = 'bf16[16,18]{1,0:T(8,128)(2,1)}', space=vmem, size = 0x1000, scoped, tag = 'scratch operand']
  %s0 = inlined_call_operand.vmem [shape: f32[2,8,16], index: 0, kind: input, shape index: {}]
  %s1 = inlined_call_operand.vmem [shape: f32[2,8,1], index: 1, kind: input, shape index: {}]
  %s2 = inlined_call_operand.vmem [shape: bf16[32,40], index: 2, kind: input, shape index: {}]
  %s3 = inlined_call_operand.vmem [shape: f32[32,1], index: 3, kind: input, shape index: {}]
  %s4 = inlined_call_operand.vmem [shape: bf16[16,8], index: 4, kind: input, shape index: {}]
  %s5 = inlined_call_operand.vmem [shape: f32[16,1], index: 5, kind: input, shape index: {}]
  %s6 = inlined_call_operand.vmem [shape: bf16[16,48], index: 6, kind: input, shape index: {}]
  %s7 = inlined_call_operand.vmem [shape: f32[16,1], index: 7, kind: input, shape index: {}]
  %s8 = inlined_call_operand.vmem [shape: f32[2,16,16], index: 8, kind: output, shape index: {}]
  %s9 = sld [smem:[#allocation0]]
  $region65: #{_decoder_forward_impl.4} parent=0
    _
  %s11 = ssub.s32 1, %s9
  %s12 = scalar_select 0, %s11, %s9
  loop: start=0, step=1, limit=4
  $region2: #{_decoder_forward_impl.4} parent=0 // loop_pre_header
    _
  $region3: #{_decoder_forward_impl.4} parent=0 // loop_header
    %s14 = sphi 0, %s18
    %p15 = scmp.ge.s32.totalorder %s14, 4
    %s24 = sphi 0, %s26
    %s27 = sphi 0, %s24
    %s28 = sphi 0, %s27
    %s44 = sphi 0, %s28
    %s50 = sphi 0, %s52
    %s53 = sphi 0, %s50
    %s54 = sphi 0, %s53
    %s70 = sphi 0, %s54
    %s74 = sphi 0, %s74
    %s76 = sphi 0, %s74
    %s77 = sphi 0, %s76
    %s91 = sphi 0, %s77
    %s95 = sphi 0, %s95
    %s97 = sphi 0, %s95
    %s98 = sphi 0, %s97
    %s112 = sphi 0, %s98
    %s116 = sphi 0, %s116
    %s118 = sphi 0, %s116
    %s119 = sphi 0, %s118
    %s133 = sphi 0, %s119
    %s137 = sphi 0, %s137
    %s139 = sphi 0, %s137
    %s140 = sphi 0, %s139
    %s154 = sphi 0, %s140
    %s158 = sphi 0, %s158
    %s160 = sphi 0, %s158
    %s161 = sphi 0, %s160
    %s175 = sphi 0, %s161
    %s179 = sphi 0, %s179
    %s181 = sphi 0, %s179
    %s182 = sphi 0, %s181
    %s196 = sphi 0, %s182
    %s202 = sphi 0, %s204
    %s205 = sphi 0, %s202
    %s206 = sphi 0, %s205
    %s222 = sphi 0, %s206
  $region4: #{_decoder_forward_impl.4} parent=0 // loop_header_branch
    %17 = sbr.rel (%p15) target = $region8
  $region5: #{_decoder_forward_impl.4} parent=0 // loop_body
    %s19 = ssub.s32 %s14, 1
    %s20 = ssub.s32 %s14, 2
    %s21 = sadd.s32 %s14, 1
    %s22 = ssub.s32 %s14, %s21
    %p23 = scmp.eq.s32.totalorder %s22, 0
    %s25 = sadd.s32 %s24, 1
    %s26 = scalar_select %p23, %s24, %s25
    %p29 = pneg %p23
    %p30 = scmp.eq.s32.totalorder %s14, 1
    %p31 = por %p29, %p30
    %p32 = scmp.ne.s32.totalorder %s24, %s27
    %p33 = scmp.eq.s32.totalorder %s14, 0
    %p34 = por %p32, %p33
    %p35 = scmp.ne.s32.totalorder %s24, %s27
    %p36 = scmp.eq.s32.totalorder %s19, 1
    %p37 = por %p35, %p36
    %p38 = scmp.ne.s32.totalorder %s27, %s28
    %p39 = scmp.eq.s32.totalorder %s19, 0
    %p40 = por %p38, %p39
    %p41 = scmp.ne.s32.totalorder %s27, %s28
    %p42 = scmp.eq.s32.totalorder %s20, 1
    %p43 = por %p41, %p42
    %p45 = scmp.ne.s32.totalorder %s28, %s44
    %p46 = scmp.eq.s32.totalorder %s20, 0
    %p47 = por %p45, %p46
    %s48 = ssub.s32 %s14, %s21
    %p49 = scmp.eq.s32.totalorder %s48, 0
    %s51 = sadd.s32 %s50, 1
    %s52 = scalar_select %p49, %s50, %s51
    %p55 = pneg %p49
    %p56 = scmp.eq.s32.totalorder %s14, 1
    %p57 = por %p55, %p56
    %p58 = scmp.ne.s32.totalorder %s50, %s53
    %p59 = scmp.eq.s32.totalorder %s14, 0
    %p60 = por %p58, %p59
    %p61 = scmp.ne.s32.totalorder %s50, %s53
    %p62 = scmp.eq.s32.totalorder %s19, 1
    %p63 = por %p61, %p62
    %p64 = scmp.ne.s32.totalorder %s53, %s54
    %p65 = scmp.eq.s32.totalorder %s19, 0
    %p66 = por %p64, %p65
    %p67 = scmp.ne.s32.totalorder %s53, %s54
    %p68 = scmp.eq.s32.totalorder %s20, 1
    %p69 = por %p67, %p68
    %p71 = scmp.ne.s32.totalorder %s54, %s70
    %p72 = scmp.eq.s32.totalorder %s20, 0
    %p73 = por %p71, %p72
    %s75 = sadd.s32 %s74, 1
    %p78 = scmp.eq.s32.totalorder %s14, 1
    %p79 = scmp.ne.s32.totalorder %s74, %s76
    %p80 = scmp.eq.s32.totalorder %s14, 0
    %p81 = por %p79, %p80
    %p82 = scmp.ne.s32.totalorder %s74, %s76
    %p83 = scmp.eq.s32.totalorder %s19, 1
    %p84 = por %p82, %p83
    %p85 = scmp.ne.s32.totalorder %s76, %s77
    %p86 = scmp.eq.s32.totalorder %s19, 0
    %p87 = por %p85, %p86
    %p88 = scmp.ne.s32.totalorder %s76, %s77
    %p89 = scmp.eq.s32.totalorder %s20, 1
    %p90 = por %p88, %p89
    %p92 = scmp.ne.s32.totalorder %s77, %s91
    %p93 = scmp.eq.s32.totalorder %s20, 0
    %p94 = por %p92, %p93
    %s96 = sadd.s32 %s95, 1
    %p99 = scmp.eq.s32.totalorder %s14, 1
    %p100 = scmp.ne.s32.totalorder %s95, %s97
    %p101 = scmp.eq.s32.totalorder %s14, 0
    %p102 = por %p100, %p101
    %p103 = scmp.ne.s32.totalorder %s95, %s97
    %p104 = scmp.eq.s32.totalorder %s19, 1
    %p105 = por %p103, %p104
    %p106 = scmp.ne.s32.totalorder %s97, %s98
    %p107 = scmp.eq.s32.totalorder %s19, 0
    %p108 = por %p106, %p107
    %p109 = scmp.ne.s32.totalorder %s97, %s98
    %p110 = scmp.eq.s32.totalorder %s20, 1
    %p111 = por %p109, %p110
    %p113 = scmp.ne.s32.totalorder %s98, %s112
    %p114 = scmp.eq.s32.totalorder %s20, 0
    %p115 = por %p113, %p114
    %s117 = sadd.s32 %s116, 1
    %p120 = scmp.eq.s32.totalorder %s14, 1
    %p121 = scmp.ne.s32.totalorder %s116, %s118
    %p122 = scmp.eq.s32.totalorder %s14, 0
    %p123 = por %p121, %p122
    %p124 = scmp.ne.s32.totalorder %s116, %s118
    %p125 = scmp.eq.s32.totalorder %s19, 1
    %p126 = por %p124, %p125
    %p127 = scmp.ne.s32.totalorder %s118, %s119
    %p128 = scmp.eq.s32.totalorder %s19, 0
    %p129 = por %p127, %p128
    %p130 = scmp.ne.s32.totalorder %s118, %s119
    %p131 = scmp.eq.s32.totalorder %s20, 1
    %p132 = por %p130, %p131
    %p134 = scmp.ne.s32.totalorder %s119, %s133
    %p135 = scmp.eq.s32.totalorder %s20, 0
    %p136 = por %p134, %p135
    %s138 = sadd.s32 %s137, 1
    %p141 = scmp.eq.s32.totalorder %s14, 1
    %p142 = scmp.ne.s32.totalorder %s137, %s139
    %p143 = scmp.eq.s32.totalorder %s14, 0
    %p144 = por %p142, %p143
    %p145 = scmp.ne.s32.totalorder %s137, %s139
    %p146 = scmp.eq.s32.totalorder %s19, 1
    %p147 = por %p145, %p146
    %p148 = scmp.ne.s32.totalorder %s139, %s140
    %p149 = scmp.eq.s32.totalorder %s19, 0
    %p150 = por %p148, %p149
    %p151 = scmp.ne.s32.totalorder %s139, %s140
    %p152 = scmp.eq.s32.totalorder %s20, 1
    %p153 = por %p151, %p152
    %p155 = scmp.ne.s32.totalorder %s140, %s154
    %p156 = scmp.eq.s32.totalorder %s20, 0
    %p157 = por %p155, %p156
    %s159 = sadd.s32 %s158, 1
    %p162 = scmp.eq.s32.totalorder %s14, 1
    %p163 = scmp.ne.s32.totalorder %s158, %s160
    %p164 = scmp.eq.s32.totalorder %s14, 0
    %p165 = por %p163, %p164
    %p166 = scmp.ne.s32.totalorder %s158, %s160
    %p167 = scmp.eq.s32.totalorder %s19, 1
    %p168 = por %p166, %p167
    %p169 = scmp.ne.s32.totalorder %s160, %s161
    %p170 = scmp.eq.s32.totalorder %s19, 0
    %p171 = por %p169, %p170
    %p172 = scmp.ne.s32.totalorder %s160, %s161
    %p173 = scmp.eq.s32.totalorder %s20, 1
    %p174 = por %p172, %p173
    %p176 = scmp.ne.s32.totalorder %s161, %s175
    %p177 = scmp.eq.s32.totalorder %s20, 0
    %p178 = por %p176, %p177
    %s180 = sadd.s32 %s179, 1
    %p183 = scmp.eq.s32.totalorder %s14, 1
    %p184 = scmp.ne.s32.totalorder %s179, %s181
    %p185 = scmp.eq.s32.totalorder %s14, 0
    %p186 = por %p184, %p185
    %p187 = scmp.ne.s32.totalorder %s179, %s181
    %p188 = scmp.eq.s32.totalorder %s19, 1
    %p189 = por %p187, %p188
    %p190 = scmp.ne.s32.totalorder %s181, %s182
    %p191 = scmp.eq.s32.totalorder %s19, 0
    %p192 = por %p190, %p191
    %p193 = scmp.ne.s32.totalorder %s181, %s182
    %p194 = scmp.eq.s32.totalorder %s20, 1
    %p195 = por %p193, %p194
    %p197 = scmp.ne.s32.totalorder %s182, %s196
    %p198 = scmp.eq.s32.totalorder %s20, 0
    %p199 = por %p197, %p198
    %s200 = ssub.s32 %s14, %s21
    %p201 = scmp.eq.s32.totalorder %s200, 0
    %s203 = sadd.s32 %s202, 1
    %s204 = scalar_select %p201, %s202, %s203
    %p207 = pneg %p201
    %p208 = scmp.eq.s32.totalorder %s14, 1
    %p209 = por %p207, %p208
    %p210 = scmp.ne.s32.totalorder %s202, %s205
    %p211 = scmp.eq.s32.totalorder %s14, 0
    %p212 = por %p210, %p211
    %p213 = scmp.ne.s32.totalorder %s202, %s205
    %p214 = scmp.eq.s32.totalorder %s19, 1
    %p215 = por %p213, %p214
    %p216 = scmp.ne.s32.totalorder %s205, %s206
    %p217 = scmp.eq.s32.totalorder %s19, 0
    %p218 = por %p216, %p217
    %p219 = scmp.ne.s32.totalorder %s205, %s206
    %p220 = scmp.eq.s32.totalorder %s20, 1
    %p221 = por %p219, %p220
    %p223 = scmp.ne.s32.totalorder %s206, %s222
    %p224 = scmp.eq.s32.totalorder %s20, 0
    %p225 = por %p223, %p224
    %p226 = scmp.le.s32.totalorder 1, %s14
    %p227 = scmp.lt.s32.totalorder %s14, 3
    %p228 = pnand %p226, %p227
    %p229 = pneg %p228
    // Predicated region
    $region9: #{_decoder_forward_impl.4} parent=5 // pred_check
      _
    $region10: #{_decoder_forward_impl.4} parent=5 // pred_check_branch
      %231 = sbr.rel (%p228) target = $region12
    $region11: #{_decoder_forward_impl.4} parent=5 // pred_region
      %s232 = ssub.s32 %s14, 1
      // Predicated region
      $region13: #{_decoder_forward_impl.4} parent=11 // pred_check
        %p233 = pneg %p87
      $region14: #{_decoder_forward_impl.4} parent=11 // pred_check_branch
        %235 = sbr.rel (%p233) target = $region16
      $region15: #{_decoder_forward_impl.4} parent=11 // pred_region
        _
      $region16: #{_decoder_forward_impl.4} parent=11 // pred_fallthru
        _
      // Predicated region
      $region17: #{_decoder_forward_impl.4} parent=11 // pred_check
        %p236 = pneg %p108
      $region18: #{_decoder_forward_impl.4} parent=11 // pred_check_branch
        %238 = sbr.rel (%p236) target = $region20
      $region19: #{_decoder_forward_impl.4} parent=11 // pred_region
        _
      $region20: #{_decoder_forward_impl.4} parent=11 // pred_fallthru
        _
      // Predicated region
      $region21: #{_decoder_forward_impl.4} parent=11 // pred_check
        %p239 = pneg %p129
      $region22: #{_decoder_forward_impl.4} parent=11 // pred_check_branch
        %241 = sbr.rel (%p239) target = $region24
      $region23: #{_decoder_forward_impl.4} parent=11 // pred_region
        _
      $region24: #{_decoder_forward_impl.4} parent=11 // pred_fallthru
        _
      // Predicated region
      $region25: #{_decoder_forward_impl.4} parent=11 // pred_check
        %p242 = pneg %p150
      $region26: #{_decoder_forward_impl.4} parent=11 // pred_check_branch
        %244 = sbr.rel (%p242) target = $region28
      $region27: #{_decoder_forward_impl.4} parent=11 // pred_region
        _
      $region28: #{_decoder_forward_impl.4} parent=11 // pred_fallthru
        _
      // Predicated region
      $region29: #{_decoder_forward_impl.4} parent=11 // pred_check
        %p245 = pneg %p171
      $region30: #{_decoder_forward_impl.4} parent=11 // pred_check_branch
        %247 = sbr.rel (%p245) target = $region32
      $region31: #{_decoder_forward_impl.4} parent=11 // pred_region
        _
      $region32: #{_decoder_forward_impl.4} parent=11 // pred_fallthru
        _
      // Predicated region
      $region33: #{_decoder_forward_impl.4} parent=11 // pred_check
        %p248 = pneg %p192
      $region34: #{_decoder_forward_impl.4} parent=11 // pred_check_branch
        %250 = sbr.rel (%p248) target = $region36
      $region35: #{_decoder_forward_impl.4} parent=11 // pred_region
        _
      $region36: #{_decoder_forward_impl.4} parent=11 // pred_fallthru
        _
    $region12: #{_decoder_forward_impl.4} parent=5 // pred_fallthru
      _
    %p251 = scmp.lt.s32.totalorder %s14, 2
    // Predicated region
    $region37: #{_decoder_forward_impl.4} parent=5 // pred_check
      %p252 = pneg %p251
    $region38: #{_decoder_forward_impl.4} parent=5 // pred_check_branch
      %254 = sbr.rel (%p252) target = $region40
    $region39: #{_decoder_forward_impl.4} parent=5 // pred_region
      // Predicated region
      $region41: #{_decoder_forward_impl.4} parent=39 // pred_check
        %p255 = pneg %p34
      $region42: #{_decoder_forward_impl.4} parent=39 // pred_check_branch
        %257 = sbr.rel (%p255) target = $region44
      $region43: #{_decoder_forward_impl.4} parent=39 // pred_region
        %p258 = scmp.lt.s32.totalorder %s14, 1
        %s259 = scalar_select %p258, %s14, 1
        %s260 = smul.addr %s259, 8
        %s261 = scalar_lea.vmem %s0, %s260
      $region44: #{_decoder_forward_impl.4} parent=39 // pred_fallthru
        _
      // Predicated region
      $region45: #{_decoder_forward_impl.4} parent=39 // pred_check
        %p262 = pneg %p60
      $region46: #{_decoder_forward_impl.4} parent=39 // pred_check_branch
        %264 = sbr.rel (%p262) target = $region48
      $region47: #{_decoder_forward_impl.4} parent=39 // pred_region
        %p265 = scmp.lt.s32.totalorder %s14, 1
        %s266 = scalar_select %p265, %s14, 1
        %s267 = smul.addr %s266, 8
        %s268 = scalar_lea.vmem %s1, %s267
      $region48: #{_decoder_forward_impl.4} parent=39 // pred_fallthru
        _
    $region40: #{_decoder_forward_impl.4} parent=5 // pred_fallthru
      _
    %p269 = scmp.le.s32.totalorder 1, %s14
    %p270 = scmp.lt.s32.totalorder %s14, 3
    %p271 = pnand %p269, %p270
    %p272 = pneg %p271
    // Predicated region
    $region49: #{_decoder_forward_impl.4} parent=5 // pred_check
      _
    $region50: #{_decoder_forward_impl.4} parent=5 // pred_check_branch
      %274 = sbr.rel (%p271) target = $region52
    $region51: #{_decoder_forward_impl.4} parent=5 // pred_region
      %s275 = ssub.s32 %s14, 1
      %p276 = scmp.lt.s32.totalorder %s19, 1
      %s277 = scalar_select %p276, %s19, 1
      %s278 = smul.addr %s277, 8
      %s279 = scalar_lea.vmem %s0, %s278
      %p280 = pneg %p40
      %p281 = pneg %p37
      %p282 = scmp.lt.s32.totalorder %s19, 1
      %s283 = scalar_select %p282, %s19, 1
      %s284 = smul.addr %s283, 8
      %s285 = scalar_lea.vmem %s1, %s284
      %p286 = pneg %p66
      %p287 = pneg %p63
      %p288 = pneg %p87
      %p289 = pneg %p84
      %p290 = pneg %p108
      %p291 = pneg %p105
      %p292 = pneg %p129
      %p293 = pneg %p126
      %p294 = pneg %p150
      %p295 = pneg %p147
      %p296 = pneg %p171
      %p297 = pneg %p168
      %p298 = pneg %p192
      %p299 = pneg %p189
      %p300 = pneg %p218
      %p301 = pneg %p215
      %p302 = scmp.lt.s32.totalorder %s19, 1
      %s303 = scalar_select %p302, %s19, 1
      %s304 = smul.addr %s303, 2
      %s305 = smul.addr %s304, 8
      %s306 = scalar_lea.vmem %s8, %s305
      %p307 = scmp.lt.s32.totalorder %s19, 1
      %s308 = scalar_select %p307, %s19, 1
      %s309 = smul.addr %s308, 8
      %s310 = scalar_lea.vmem %s0, %s309
      %p311 = scmp.lt.s32.totalorder %s19, 1
      %s312 = scalar_select %p311, %s19, 1
      %s313 = smul.addr %s312, 8
      %s314 = scalar_lea.vmem %s1, %s313
      %p315 = scmp.lt.s32.totalorder %s19, 1
      %s316 = scalar_select %p315, %s19, 1
      %s317 = smul.addr %s316, 2
      %s318 = smul.addr %s317, 8
      %s319 = scalar_lea.vmem %s8, %s318
      %v321 = vld [vmem:[%s310] sm:$0xff]
      %vm322 = vcmask 11264
      %323 = vst.msk [vmem:[#allocation2] sm:$0xf] %vm322, 0
      %vm324 = vcmask 158864
      %325 = vst.msk [vmem:[#allocation2] sm:$0xf] %vm324, 0
      %v326 = vpack.c.bf16 %v321, %v321
      %328 = vrot.lane.b32.xlu0 %v326, 2
      %v329 = vpop.permute.xlu0 %328
      %vm331 = vcmask 142352
      %332 = vst.msk [vmem:[#allocation2] sm:$0xf] %vm331, %v329
      %v333 = vld [vmem:[%s2] sm:$0xf]
      %v334 = vld [vmem:[%s2 + $0x4] sm:$0xf]
      %v335 = vld [vmem:[%s2 + $0x8] sm:$0xf]
      %v336 = vld [vmem:[%s2 + $0xc] sm:$0xf]
      %v337 = vld [vmem:[#allocation2] sm:$0xf]
      %v342 = vunpack.c.l.b16 %v333
      %v343 = vunpack.c.l.b16 %v334
      %v344 = vunpack.c.l.b16 %v335
      %v345 = vunpack.c.l.b16 %v336
      %v346 = vpack.c.b16 %v343, %v342
      %v347 = vpack.c.b16 %v345, %v344
      %348 = vrot.lane.b32.xlu0 %v346, 120
      %v349 = vpop.permute.xlu0 %348
      %350 = vrot.lane.b32.xlu0 %v347, 120
      %v351 = vpop.permute.xlu0 %350
      %v353 = vunpack.c.l.b16 %v337
      %v354 = vpack.c.b16 %v353, %v353
      %355 = vrot.lane.b32.xlu0 %v354, 127
      %v356 = vpop.permute.xlu0 %355
      %vm357 = vcmask 64512
      %v359 = vsel %vm357, %v349, 0
      %v362 = vsel %vm357, %v351, 0
      %vm364 = vcmask 1043456
      %v366 = vsel %vm364, %v356, 0
      %368 = vmatpush.bf16.msra.mxu0 0
      %369 = vmatpush.bf16.msra.mxu0 0
      %370 = vmatpush.bf16.msra.mxu0 0
      %371 = vmatpush.bf16.msra.mxu0 0
      %372 = vmatpush.bf16.msra.mxu0 0
      %373 = vmatpush.bf16.msra.mxu0 0
      %374 = vmatpush.bf16.msra.mxu0 0
      %375 = vmatpush.bf16.msra.mxu0 %v366
      %376 = vmatmul.bf16.gmra.mxu0 %v359
      %v377 = vpop.f32.mrf.mxu0
      %v378 = vadd.f32 0.0, %v377
      %v379 = vpop.f32.mrf.mxu0
      %v380 = vadd.f32 0.0, %v379
      %381 = vmatmul.bf16.gmra.mxu0 %v362
      %v382 = vpop.f32.mrf.mxu0
      %v383 = vadd.f32 0.0, %v382
      %v384 = vpop.f32.mrf.mxu0
      %v385 = vadd.f32 0.0, %v384
      %386 = vdwg.mxu0
      %v388 = vsel %vm357, %v346, 0
      %v391 = vsel %vm357, %v347, 0
      %v394 = vsel %vm364, %v337, 0
      %396 = vmatpush.bf16.msra.mxu0 0
      %397 = vmatpush.bf16.msra.mxu0 0
      %398 = vmatpush.bf16.msra.mxu0 0
      %399 = vmatpush.bf16.msra.mxu0 0
      %400 = vmatpush.bf16.msra.mxu0 0
      %401 = vmatpush.bf16.msra.mxu0 0
      %402 = vmatpush.bf16.msra.mxu0 0
      %403 = vmatpush.bf16.msra.mxu0 %v394
      %404 = vmatmul.bf16.gmra.mxu0 %v388
      %v405 = vpop.f32.mrf.mxu0
      %v406 = vadd.f32 %v378, %v405
      %v407 = vpop.f32.mrf.mxu0
      %v408 = vadd.f32 %v380, %v407
      %409 = vmatmul.bf16.gmra.mxu0 %v391
      %v410 = vpop.f32.mrf.mxu0
      %v411 = vadd.f32 %v383, %v410
      %v412 = vpop.f32.mrf.mxu0
      %v413 = vadd.f32 %v385, %v412
      %414 = vdwg.mxu0
      %415 = vrot.lane.b32.xlu0 %v346, 112
      %v416 = vpop.permute.xlu0 %415
      %417 = vrot.lane.b32.xlu0 %v347, 112
      %v418 = vpop.permute.xlu0 %417
      %419 = vrot.lane.b32.xlu0 %v354, 126
      %v420 = vpop.permute.xlu0 %419
      %v422 = vsel %vm357, %v416, 0
      %v425 = vsel %vm357, %v418, 0
      %v428 = vsel %vm364, %v420, 0
      %430 = vmatpush.bf16.msra.mxu0 0
      %431 = vmatpush.bf16.msra.mxu0 0
      %432 = vmatpush.bf16.msra.mxu0 0
      %433 = vmatpush.bf16.msra.mxu0 0
      %434 = vmatpush.bf16.msra.mxu0 0
      %435 = vmatpush.bf16.msra.mxu0 0
      %436 = vmatpush.bf16.msra.mxu0 0
      %437 = vmatpush.bf16.msra.mxu0 %v428
      %438 = vmatmul.bf16.gmra.mxu0 %v422
      %v439 = vpop.f32.mrf.mxu0
      %v440 = vadd.f32 0.0, %v439
      %v441 = vpop.f32.mrf.mxu0
      %v442 = vadd.f32 0.0, %v441
      %443 = vmatmul.bf16.gmra.mxu0 %v425
      %v444 = vpop.f32.mrf.mxu0
      %v445 = vadd.f32 0.0, %v444
      %v446 = vpop.f32.mrf.mxu0
      %v447 = vadd.f32 0.0, %v446
      %448 = vdwg.mxu0
      %v449 = vadd.f32 %v406, %v440
      %v450 = vadd.f32 %v408, %v442
      %v451 = vadd.f32 %v411, %v445
      %v452 = vadd.f32 %v413, %v447
      %453 = vrot.lane.b32.xlu0 %v346, 104
      %v454 = vpop.permute.xlu0 %453
      %455 = vrot.lane.b32.xlu0 %v347, 104
      %v456 = vpop.permute.xlu0 %455
      %457 = vrot.lane.b32.xlu0 %v354, 125
      %v458 = vpop.permute.xlu0 %457
      %v460 = vsel %vm357, %v454, 0
      %v463 = vsel %vm357, %v456, 0
      %v466 = vsel %vm364, %v458, 0
      %468 = vmatpush.bf16.msra.mxu0 0
      %469 = vmatpush.bf16.msra.mxu0 0
      %470 = vmatpush.bf16.msra.mxu0 0
      %471 = vmatpush.bf16.msra.mxu0 0
      %472 = vmatpush.bf16.msra.mxu0 0
      %473 = vmatpush.bf16.msra.mxu0 0
      %474 = vmatpush.bf16.msra.mxu0 0
      %475 = vmatpush.bf16.msra.mxu0 %v466
      %476 = vmatmul.bf16.gmra.mxu0 %v460
      %v477 = vpop.f32.mrf.mxu0
      %v478 = vadd.f32 0.0, %v477
      %v479 = vpop.f32.mrf.mxu0
      %v480 = vadd.f32 0.0, %v479
      %481 = vmatmul.bf16.gmra.mxu0 %v463
      %v482 = vpop.f32.mrf.mxu0
      %v483 = vadd.f32 0.0, %v482
      %v484 = vpop.f32.mrf.mxu0
      %v485 = vadd.f32 0.0, %v484
      %486 = vdwg.mxu0
      %v487 = vadd.f32 %v449, %v478
      %v488 = vadd.f32 %v450, %v480
      %v489 = vadd.f32 %v451, %v483
      %v490 = vadd.f32 %v452, %v485
      %491 = vrot.lane.b32.xlu0 %v346, 96
      %v492 = vpop.permute.xlu0 %491
      %493 = vrot.lane.b32.xlu0 %v347, 96
      %v494 = vpop.permute.xlu0 %493
      %495 = vrot.lane.b32.xlu0 %v354, 124
      %v496 = vpop.permute.xlu0 %495
      %v498 = vsel %vm357, %v492, 0
      %v501 = vsel %vm357, %v494, 0
      %v504 = vsel %vm364, %v496, 0
      %506 = vmatpush.bf16.msra.mxu0 0
      %507 = vmatpush.bf16.msra.mxu0 0
      %508 = vmatpush.bf16.msra.mxu0 0
      %509 = vmatpush.bf16.msra.mxu0 0
      %510 = vmatpush.bf16.msra.mxu0 0
      %511 = vmatpush.bf16.msra.mxu0 0
      %512 = vmatpush.bf16.msra.mxu0 0
      %513 = vmatpush.bf16.msra.mxu0 %v504
      %514 = vmatmul.bf16.gmra.mxu0 %v498
      %v515 = vpop.f32.mrf.mxu0
      %v516 = vadd.f32 0.0, %v515
      %v517 = vpop.f32.mrf.mxu0
      %v518 = vadd.f32 0.0, %v517
      %519 = vmatmul.bf16.gmra.mxu0 %v501
      %v520 = vpop.f32.mrf.mxu0
      %v521 = vadd.f32 0.0, %v520
      %v522 = vpop.f32.mrf.mxu0
      %v523 = vadd.f32 0.0, %v522
      %524 = vdwg.mxu0
      %v525 = vadd.f32 %v487, %v516
      %v526 = vadd.f32 %v488, %v518
      %v527 = vadd.f32 %v489, %v521
      %v528 = vadd.f32 %v490, %v523
      %v529 = vld [vmem:[%s3] sm:$0xff]
      %v530 = vld [vmem:[%s3 + $0x8] sm:$0xff]
      %v531 = vld [vmem:[%s3 + $0x10] sm:$0xff]
      %v532 = vld [vmem:[%s3 + $0x18] sm:$0xff]
      %534 = vset.pattern.permute.xlu0 0
      %535 = vperm.xlu0 %534, %v529
      %v536 = vpop.permute.xlu0 %535
      %539 = vset.pattern.permute.xlu0 0
      %540 = vperm.xlu0 %539, %v530
      %v541 = vpop.permute.xlu0 %540
      %544 = vset.pattern.permute.xlu0 0
      %545 = vperm.xlu0 %544, %v531
      %v546 = vpop.permute.xlu0 %545
      %549 = vset.pattern.permute.xlu0 0
      %550 = vperm.xlu0 %549, %v532
      %v551 = vpop.permute.xlu0 %550
      %v553 = vadd.f32 %v525, %v536
      %v554 = vadd.f32 %v526, %v541
      %v555 = vadd.f32 %v527, %v546
      %v556 = vadd.f32 %v528, %v551
      %vm557 = vcmask 130048
      %v558 = vsel %vm557, %v553, 0.0
      %559 = vadd.xlane.f32.xlu0 %v558
      %v560 = vpop.xlane.xlu0 %559
      %v561 = vsel %vm557, %v554, 0.0
      %562 = vadd.xlane.f32.xlu0 %v561
      %v563 = vpop.xlane.xlu0 %562
      %v564 = vsel %vm557, %v555, 0.0
      %565 = vadd.xlane.f32.xlu0 %v564
      %v566 = vpop.xlane.xlu0 %565
      %v567 = vsel %vm557, %v556, 0.0
      %568 = vadd.xlane.f32.xlu0 %v567
      %v569 = vpop.xlane.xlu0 %568
      %v570 = vrcp.pop 16.0
      %v571 = vmul.f32 16.0, %v570
      %v572 = vsub.f32 1.0, %v571
      %v573 = vmul.f32 %v570, %v572
      %v574 = vadd.f32 %v570, %v573
      %vm575 = vweird.f32 %v570
      %v576 = vsel %vm575, %v570, %v574
      %v577 = vmul.f32 %v560, %v576
      %v578 = vmul.f32 %v563, %v576
      %v579 = vmul.f32 %v566, %v576
      %v580 = vmul.f32 %v569, %v576
      %v581 = vsub.f32 %v553, %v577
      %v582 = vsub.f32 %v554, %v578
      %v583 = vsub.f32 %v555, %v579
      %v584 = vsub.f32 %v556, %v580
      %v585 = vmul.f32 %v581, %v581
      %v586 = vmul.f32 %v582, %v582
      %v587 = vmul.f32 %v583, %v583
      %v588 = vmul.f32 %v584, %v584
      %v589 = vsel %vm557, %v585, 0.0
      %590 = vadd.xlane.f32.xlu0 %v589
      %v591 = vpop.xlane.xlu0 %590
      %v592 = vsel %vm557, %v586, 0.0
      %593 = vadd.xlane.f32.xlu0 %v592
      %v594 = vpop.xlane.xlu0 %593
      %v595 = vsel %vm557, %v587, 0.0
      %596 = vadd.xlane.f32.xlu0 %v595
      %v597 = vpop.xlane.xlu0 %596
      %v598 = vsel %vm557, %v588, 0.0
      %599 = vadd.xlane.f32.xlu0 %v598
      %v600 = vpop.xlane.xlu0 %599
      %v601 = vmul.f32 %v591, %v576
      %v602 = vmul.f32 %v594, %v576
      %v603 = vmul.f32 %v597, %v576
      %v604 = vmul.f32 %v600, %v576
      %v605 = vadd.f32 %v601, 1e-05
      %v606 = vadd.f32 %v602, 1e-05
      %v607 = vadd.f32 %v603, 1e-05
      %v608 = vadd.f32 %v604, 1e-05
      %v609 = vrsqrt.pop %v605
      %v610 = vmul.f32 %v609, %v605
      %v611 = vmul.f32 %v610, %v609
      %v612 = vmul.f32 0.5, %v611
      %v613 = vsub.f32 1.5, %v612
      %v614 = vmul.f32 %v609, %v613
      %vm615 = vweird.f32 %v605
      %vm616 = vweird.f32 %v609
      %vm617 = vmor %vm615, %vm616
      %v618 = vsel %vm617, %v609, %v614
      %v619 = vrsqrt.pop %v606
      %v620 = vmul.f32 %v619, %v606
      %v621 = vmul.f32 %v620, %v619
      %v622 = vmul.f32 0.5, %v621
      %v623 = vsub.f32 1.5, %v622
      %v624 = vmul.f32 %v619, %v623
      %vm625 = vweird.f32 %v606
      %vm626 = vweird.f32 %v619
      %vm627 = vmor %vm625, %vm626
      %v628 = vsel %vm627, %v619, %v624
      %v629 = vrsqrt.pop %v607
      %v630 = vmul.f32 %v629, %v607
      %v631 = vmul.f32 %v630, %v629
      %v632 = vmul.f32 0.5, %v631
      %v633 = vsub.f32 1.5, %v632
      %v634 = vmul.f32 %v629, %v633
      %vm635 = vweird.f32 %v607
      %vm636 = vweird.f32 %v629
      %vm637 = vmor %vm635, %vm636
      %v638 = vsel %vm637, %v629, %v634
      %v639 = vrsqrt.pop %v608
      %v640 = vmul.f32 %v639, %v608
      %v641 = vmul.f32 %v640, %v639
      %v642 = vmul.f32 0.5, %v641
      %v643 = vsub.f32 1.5, %v642
      %v644 = vmul.f32 %v639, %v643
      %vm645 = vweird.f32 %v608
      %vm646 = vweird.f32 %v639
      %vm647 = vmor %vm645, %vm646
      %v648 = vsel %vm647, %v639, %v644
      %v649 = vmul.f32 %v581, %v618
      %v650 = vmul.f32 %v582, %v628
      %v651 = vmul.f32 %v583, %v638
      %v652 = vmul.f32 %v584, %v648
      %v653 = vsub.f32 0.0, %v651
      %v654 = vsub.f32 0.0, %v652
      %v655 = vmul.f32 %v653, 1.442695
      %v656 = vpow.pop %v655
      %v657 = vmul.f32 %v654, 1.442695
      %v658 = vpow.pop %v657
      %v659 = vadd.f32 %v656, 1.0
      %v660 = vadd.f32 %v658, 1.0
      %v661 = vrcp.pop %v659
      %v662 = vrcp.pop %v660
      %v663 = vmul.f32 %v649, %v661
      %v664 = vmul.f32 %v650, %v662
      %v665 = vld [vmem:[%s4] sm:$0xf]
      %v666 = vld [vmem:[%s4 + $0x4] sm:$0xf]
      %v667 = vld [vmem:[%s5] sm:$0xff]
      %v668 = vld [vmem:[%s5 + $0x8] sm:$0xff]
      %v669 = vld [vmem:[%s314] sm:$0xff]
      %v670 = vpack.c.bf16 %v669, %v669
      %v673 = vunpack.c.l.b16 %v665
      %v674 = vunpack.c.l.b16 %v666
      %v675 = vpack.c.b16 %v674, %v673
      %v677 = vsel %vm357, %v675, 0
      %v680 = vsel %vm364, %v670, 0
      %682 = vmatpush.bf16.msra.mxu0 0
      %683 = vmatpush.bf16.msra.mxu0 0
      %684 = vmatpush.bf16.msra.mxu0 0
      %685 = vmatpush.bf16.msra.mxu0 0
      %686 = vmatpush.bf16.msra.mxu0 0
      %687 = vmatpush.bf16.msra.mxu0 0
      %688 = vmatpush.bf16.msra.mxu0 0
      %689 = vmatpush.bf16.msra.mxu0 %v680
      %690 = vmatmul.bf16.gmra.mxu0 %v677
      %v691 = vpop.f32.mrf.mxu0
      %v692 = vadd.f32 %v667, %v691
      %v693 = vpop.f32.mrf.mxu0
      %v694 = vadd.f32 %v668, %v693
      %695 = vdwg.mxu0
      %v696 = vmax.f32 %v692, 0.0
      %v697 = vmax.f32 %v694, 0.0
      %699 = vset.pattern.permute.xlu0 0
      %700 = vperm.xlu0 %699, %v696
      %v701 = vpop.permute.xlu0 %700
      %704 = vset.pattern.permute.xlu0 0
      %705 = vperm.xlu0 %704, %v697
      %v706 = vpop.permute.xlu0 %705
      %v708 = vadd.f32 %v663, %v701
      %v709 = vadd.f32 %v664, %v706
      %vm710 = vcmask 3072
      %711 = vst.msk [vmem:[#allocation3] sm:$0xf] %vm710, 0
      %712 = vst.msk [vmem:[#allocation3 + $0x4] sm:$0xf] %vm710, 0
      %vm713 = vcmask 142472
      %714 = vst.msk [vmem:[#allocation3] sm:$0xf] %vm713, 0
      %715 = vst.msk [vmem:[#allocation3 + $0x4] sm:$0xf] %vm713, 0
      %v716 = vpack.c.bf16 %v708, %v708
      %v717 = vpack.c.bf16 %v709, %v709
      %720 = vrot.lane.b32.xlu0 %v716, 1
      %v721 = vpop.permute.xlu0 %720
      %722 = vrot.lane.b32.xlu0 %v717, 1
      %v723 = vpop.permute.xlu0 %722
      %vm726 = vcmask 134152
      %727 = vst.msk [vmem:[#allocation3] sm:$0xf] %vm726, %v721
      %728 = vst.msk [vmem:[#allocation3 + $0x4] sm:$0xf] %vm726, %v723
      %v729 = vld [vmem:[%s6] sm:$0xf]
      %v730 = vld [vmem:[%s6 + $0x4] sm:$0xf]
      %v731 = vld [vmem:[#allocation3] sm:$0xf]
      %v732 = vld [vmem:[#allocation3 + $0x4] sm:$0xf]
      %v735 = vunpack.c.l.b16 %v729
      %v736 = vunpack.c.l.b16 %v730
      %v737 = vpack.c.b16 %v736, %v735
      %738 = vrot.lane.b32.xlu0 %v737, 112
      %v739 = vpop.permute.xlu0 %738
      %v742 = vunpack.c.l.b16 %v731
      %v743 = vunpack.c.l.b16 %v732
      %v744 = vpack.c.b16 %v743, %v742
      %745 = vrot.lane.b32.xlu0 %v744, 127
      %v746 = vpop.permute.xlu0 %745
      %v749 = vsel %vm557, %v739, 0
      %751 = vmatpush.bf16.msra.mxu0 0
      %752 = vmatpush.bf16.msra.mxu0 0
      %753 = vmatpush.bf16.msra.mxu0 0
      %754 = vmatpush.bf16.msra.mxu0 0
      %755 = vmatpush.bf16.msra.mxu0 0
      %756 = vmatpush.bf16.msra.mxu0 0
      %757 = vmatpush.bf16.msra.mxu0 0
      %758 = vmatpush.bf16.msra.mxu0 %v746
      %759 = vmatmul.bf16.gmra.mxu0 %v749
      %v760 = vpop.f32.mrf.mxu0
      %v761 = vadd.f32 0.0, %v760
      %v762 = vpop.f32.mrf.mxu0
      %v763 = vadd.f32 0.0, %v762
      %764 = vdwg.mxu0
      %v767 = vsel %vm557, %v737, 0
      %769 = vmatpush.bf16.msra.mxu0 0
      %770 = vmatpush.bf16.msra.mxu0 0
      %771 = vmatpush.bf16.msra.mxu0 0
      %772 = vmatpush.bf16.msra.mxu0 0
      %773 = vmatpush.bf16.msra.mxu0 0
      %774 = vmatpush.bf16.msra.mxu0 0
      %775 = vmatpush.bf16.msra.mxu0 0
      %776 = vmatpush.bf16.msra.mxu0 %v744
      %777 = vmatmul.bf16.gmra.mxu0 %v767
      %v778 = vpop.f32.mrf.mxu0
      %v779 = vadd.f32 %v761, %v778
      %v780 = vpop.f32.mrf.mxu0
      %v781 = vadd.f32 %v763, %v780
      %782 = vdwg.mxu0
      %783 = vrot.lane.b32.xlu0 %v737, 96
      %v784 = vpop.permute.xlu0 %783
      %785 = vrot.lane.b32.xlu0 %v744, 126
      %v786 = vpop.permute.xlu0 %785
      %v789 = vsel %vm557, %v784, 0
      %791 = vmatpush.bf16.msra.mxu0 0
      %792 = vmatpush.bf16.msra.mxu0 0
      %793 = vmatpush.bf16.msra.mxu0 0
      %794 = vmatpush.bf16.msra.mxu0 0
      %795 = vmatpush.bf16.msra.mxu0 0
      %796 = vmatpush.bf16.msra.mxu0 0
      %797 = vmatpush.bf16.msra.mxu0 0
      %798 = vmatpush.bf16.msra.mxu0 %v786
      %799 = vmatmul.bf16.gmra.mxu0 %v789
      %v800 = vpop.f32.mrf.mxu0
      %v801 = vadd.f32 0.0, %v800
      %v802 = vpop.f32.mrf.mxu0
      %v803 = vadd.f32 0.0, %v802
      %804 = vdwg.mxu0
      %v805 = vadd.f32 %v779, %v801
      %v806 = vadd.f32 %v781, %v803
      %v807 = vld [vmem:[%s7] sm:$0xff]
      %v808 = vld [vmem:[%s7 + $0x8] sm:$0xff]
      %810 = vset.pattern.permute.xlu0 0
      %811 = vperm.xlu0 %810, %v807
      %v812 = vpop.permute.xlu0 %811
      %815 = vset.pattern.permute.xlu0 0
      %816 = vperm.xlu0 %815, %v808
      %v817 = vpop.permute.xlu0 %816
      %v819 = vadd.f32 %v805, %v812
      %v820 = vadd.f32 %v806, %v817
      %821 = vst.msk [vmem:[%s319] sm:$0xff] %vm557, %v819
      %822 = vst.msk [vmem:[%s319 + $0x8] sm:$0xff] %vm557, %v820
      %p823 = scmp.lt.s32.totalorder %s19, 1
      %s824 = scalar_select %p823, %s19, 1
      %s825 = smul.addr %s824, 2
      %s826 = smul.addr %s825, 8
      %s827 = scalar_lea.vmem %s8, %s826
      // Predicated region
      $region53: #{_decoder_forward_impl.4} parent=51 // pred_check
        %p828 = pneg %p215
      $region54: #{_decoder_forward_impl.4} parent=51 // pred_check_branch
        %830 = sbr.rel (%p828) target = $region56
      $region55: #{_decoder_forward_impl.4} parent=51 // pred_region
        _
      $region56: #{_decoder_forward_impl.4} parent=51 // pred_fallthru
        _
    $region52: #{_decoder_forward_impl.4} parent=5 // pred_fallthru
      _
    %p831 = scmp.le.s32.totalorder 2, %s14
    // Predicated region
    $region57: #{_decoder_forward_impl.4} parent=5 // pred_check
      %p832 = pneg %p831
    $region58: #{_decoder_forward_impl.4} parent=5 // pred_check_branch
      %834 = sbr.rel (%p832) target = $region60
    $region59: #{_decoder_forward_impl.4} parent=5 // pred_region
      %s835 = ssub.s32 %s14, 2
      // Predicated region
      $region61: #{_decoder_forward_impl.4} parent=59 // pred_check
        %p836 = pneg %p221
      $region62: #{_decoder_forward_impl.4} parent=59 // pred_check_branch
        %838 = sbr.rel (%p836) target = $region64
      $region63: #{_decoder_forward_impl.4} parent=59 // pred_region
        %p839 = scmp.lt.s32.totalorder %s20, 1
        %s840 = scalar_select %p839, %s20, 1
        %s841 = smul.addr %s840, 2
        %s842 = smul.addr %s841, 8
        %s843 = scalar_lea.vmem %s8, %s842
      $region64: #{_decoder_forward_impl.4} parent=59 // pred_fallthru
        _
    $region60: #{_decoder_forward_impl.4} parent=5 // pred_fallthru
      _
  $region6: #{_decoder_forward_impl.4} parent=0 // loop_footer
    %s18 = sadd.s32 1, %s14
  $region7: #{_decoder_forward_impl.4} parent=0 // loop_footer_branch
    %13 = sbr.rel target = $region3
  $region8: #{_decoder_forward_impl.4} parent=0 // loop_exit
    _

// kernel: _decoder_forward_impl.7
$region0: #{_decoder_forward_impl.7}
  #allocation0 [shape = 'u32[]', space=smem, size = 0x4, offset = 0x4, fixed_abs, tag = 'smem constant byte address 0x4 - core index']
  #allocation1 [shape = 'u32[72,128]{1,0:T(1,128)}', space=vmem, size = 0x9000, scoped, tag = 'internal scratch']
  #allocation2 [shape = 'bf16[16,36]{1,0:T(8,128)(2,1)}', space=vmem, size = 0x1000, scoped, tag = 'scratch operand']
  #allocation3 [shape = 'bf16[8,46]{1,0:T(8,128)(2,1)}', space=vmem, size = 0x800, scoped, tag = 'scratch operand']
  %s0 = inlined_call_operand.vmem [shape: f32[2,16,32], index: 0, kind: input, shape index: {}]
  %s1 = inlined_call_operand.vmem [shape: bf16[16,80], index: 1, kind: input, shape index: {}]
  %s2 = inlined_call_operand.vmem [shape: f32[16,1], index: 2, kind: input, shape index: {}]
  %s3 = inlined_call_operand.vmem [shape: bf16[8,120], index: 3, kind: input, shape index: {}]
  %s4 = inlined_call_operand.vmem [shape: f32[8,1], index: 4, kind: input, shape index: {}]
  %s5 = inlined_call_operand.hbm [shape: f32[2,8,32], index: 5, kind: output, shape index: {}]
  %s6 = sld [smem:[#allocation0]]
  $region53: #{_decoder_forward_impl.7} parent=0
    _
  %s8 = ssub.s32 1, %s6
  %s9 = scalar_select 0, %s8, %s6
  $region1: #{_decoder_forward_impl.7} parent=0
    #allocation4 [shape = 'u8[8192]{0}', space=vmem, size = 0x2000, scoped, tag = 'output window, operand 0']
    #allocation5 [shape = 's32[2]{0}', space=sflag, size = 0x8, scoped, tag = 'scoped memory for _decoder_forward_impl.7']
    %10 = vsyncpa [#allocation5], 0
    %s11 = scalar_lea.sflag [#allocation5], 1
    %12 = vsyncpa %s11, 0
    loop: start=0, step=1, limit=4
    $region2: #{_decoder_forward_impl.7} parent=1 // loop_pre_header
      _
    $region3: #{_decoder_forward_impl.7} parent=1 // loop_header
      %s14 = sphi 0, %s18
      %p15 = scmp.ge.s32.totalorder %s14, 4
      %s24 = sphi 0, %s26
      %s27 = sphi 0, %s24
      %s28 = sphi 0, %s27
      %s44 = sphi 0, %s28
      %s48 = sphi 0, %s48
      %s50 = sphi 0, %s48
      %s51 = sphi 0, %s50
      %s65 = sphi 0, %s51
      %s69 = sphi 0, %s69
      %s71 = sphi 0, %s69
      %s72 = sphi 0, %s71
      %s86 = sphi 0, %s72
      %s90 = sphi 0, %s90
      %s92 = sphi 0, %s90
      %s93 = sphi 0, %s92
      %s107 = sphi 0, %s93
      %s111 = sphi 0, %s111
      %s113 = sphi 0, %s111
      %s114 = sphi 0, %s113
      %s128 = sphi 0, %s114
      %s134 = sphi 0, %s136
      %s137 = sphi 0, %s134
      %s138 = sphi 0, %s137
      %s154 = sphi 0, %s138
    $region4: #{_decoder_forward_impl.7} parent=1 // loop_header_branch
      %17 = sbr.rel (%p15) target = $region8
    $region5: #{_decoder_forward_impl.7} parent=1 // loop_body
      %s19 = ssub.s32 %s14, 1
      %s20 = ssub.s32 %s14, 2
      %s21 = sadd.s32 %s14, 1
      %s22 = ssub.s32 %s14, %s21
      %p23 = scmp.eq.s32.totalorder %s22, 0
      %s25 = sadd.s32 %s24, 1
      %s26 = scalar_select %p23, %s24, %s25
      %p29 = pneg %p23
      %p30 = scmp.eq.s32.totalorder %s14, 1
      %p31 = por %p29, %p30
      %p32 = scmp.ne.s32.totalorder %s24, %s27
      %p33 = scmp.eq.s32.totalorder %s14, 0
      %p34 = por %p32, %p33
      %p35 = scmp.ne.s32.totalorder %s24, %s27
      %p36 = scmp.eq.s32.totalorder %s19, 1
      %p37 = por %p35, %p36
      %p38 = scmp.ne.s32.totalorder %s27, %s28
      %p39 = scmp.eq.s32.totalorder %s19, 0
      %p40 = por %p38, %p39
      %p41 = scmp.ne.s32.totalorder %s27, %s28
      %p42 = scmp.eq.s32.totalorder %s20, 1
      %p43 = por %p41, %p42
      %p45 = scmp.ne.s32.totalorder %s28, %s44
      %p46 = scmp.eq.s32.totalorder %s20, 0
      %p47 = por %p45, %p46
      %s49 = sadd.s32 %s48, 1
      %p52 = scmp.eq.s32.totalorder %s14, 1
      %p53 = scmp.ne.s32.totalorder %s48, %s50
      %p54 = scmp.eq.s32.totalorder %s14, 0
      %p55 = por %p53, %p54
      %p56 = scmp.ne.s32.totalorder %s48, %s50
      %p57 = scmp.eq.s32.totalorder %s19, 1
      %p58 = por %p56, %p57
      %p59 = scmp.ne.s32.totalorder %s50, %s51
      %p60 = scmp.eq.s32.totalorder %s19, 0
      %p61 = por %p59, %p60
      %p62 = scmp.ne.s32.totalorder %s50, %s51
      %p63 = scmp.eq.s32.totalorder %s20, 1
      %p64 = por %p62, %p63
      %p66 = scmp.ne.s32.totalorder %s51, %s65
      %p67 = scmp.eq.s32.totalorder %s20, 0
      %p68 = por %p66, %p67
      %s70 = sadd.s32 %s69, 1
      %p73 = scmp.eq.s32.totalorder %s14, 1
      %p74 = scmp.ne.s32.totalorder %s69, %s71
      %p75 = scmp.eq.s32.totalorder %s14, 0
      %p76 = por %p74, %p75
      %p77 = scmp.ne.s32.totalorder %s69, %s71
      %p78 = scmp.eq.s32.totalorder %s19, 1
      %p79 = por %p77, %p78
      %p80 = scmp.ne.s32.totalorder %s71, %s72
      %p81 = scmp.eq.s32.totalorder %s19, 0
      %p82 = por %p80, %p81
      %p83 = scmp.ne.s32.totalorder %s71, %s72
      %p84 = scmp.eq.s32.totalorder %s20, 1
      %p85 = por %p83, %p84
      %p87 = scmp.ne.s32.totalorder %s72, %s86
      %p88 = scmp.eq.s32.totalorder %s20, 0
      %p89 = por %p87, %p88
      %s91 = sadd.s32 %s90, 1
      %p94 = scmp.eq.s32.totalorder %s14, 1
      %p95 = scmp.ne.s32.totalorder %s90, %s92
      %p96 = scmp.eq.s32.totalorder %s14, 0
      %p97 = por %p95, %p96
      %p98 = scmp.ne.s32.totalorder %s90, %s92
      %p99 = scmp.eq.s32.totalorder %s19, 1
      %p100 = por %p98, %p99
      %p101 = scmp.ne.s32.totalorder %s92, %s93
      %p102 = scmp.eq.s32.totalorder %s19, 0
      %p103 = por %p101, %p102
      %p104 = scmp.ne.s32.totalorder %s92, %s93
      %p105 = scmp.eq.s32.totalorder %s20, 1
      %p106 = por %p104, %p105
      %p108 = scmp.ne.s32.totalorder %s93, %s107
      %p109 = scmp.eq.s32.totalorder %s20, 0
      %p110 = por %p108, %p109
      %s112 = sadd.s32 %s111, 1
      %p115 = scmp.eq.s32.totalorder %s14, 1
      %p116 = scmp.ne.s32.totalorder %s111, %s113
      %p117 = scmp.eq.s32.totalorder %s14, 0
      %p118 = por %p116, %p117
      %p119 = scmp.ne.s32.totalorder %s111, %s113
      %p120 = scmp.eq.s32.totalorder %s19, 1
      %p121 = por %p119, %p120
      %p122 = scmp.ne.s32.totalorder %s113, %s114
      %p123 = scmp.eq.s32.totalorder %s19, 0
      %p124 = por %p122, %p123
      %p125 = scmp.ne.s32.totalorder %s113, %s114
      %p126 = scmp.eq.s32.totalorder %s20, 1
      %p127 = por %p125, %p126
      %p129 = scmp.ne.s32.totalorder %s114, %s128
      %p130 = scmp.eq.s32.totalorder %s20, 0
      %p131 = por %p129, %p130
      %s132 = ssub.s32 %s14, %s21
      %p133 = scmp.eq.s32.totalorder %s132, 0
      %s135 = sadd.s32 %s134, 1
      %s136 = scalar_select %p133, %s134, %s135
      %p139 = pneg %p133
      %p140 = scmp.eq.s32.totalorder %s14, 1
      %p141 = por %p139, %p140
      %p142 = scmp.ne.s32.totalorder %s134, %s137
      %p143 = scmp.eq.s32.totalorder %s14, 0
      %p144 = por %p142, %p143
      %p145 = scmp.ne.s32.totalorder %s134, %s137
      %p146 = scmp.eq.s32.totalorder %s19, 1
      %p147 = por %p145, %p146
      %p148 = scmp.ne.s32.totalorder %s137, %s138
      %p149 = scmp.eq.s32.totalorder %s19, 0
      %p150 = por %p148, %p149
      %p151 = scmp.ne.s32.totalorder %s137, %s138
      %p152 = scmp.eq.s32.totalorder %s20, 1
      %p153 = por %p151, %p152
      %p155 = scmp.ne.s32.totalorder %s138, %s154
      %p156 = scmp.eq.s32.totalorder %s20, 0
      %p157 = por %p155, %p156
      %p158 = scmp.le.s32.totalorder 1, %s14
      %p159 = scmp.lt.s32.totalorder %s14, 3
      %p160 = pnand %p158, %p159
      %p161 = pneg %p160
      // Predicated region
      $region9: #{_decoder_forward_impl.7} parent=5 // pred_check
        _
      $region10: #{_decoder_forward_impl.7} parent=5 // pred_check_branch
        %163 = sbr.rel (%p160) target = $region12
      $region11: #{_decoder_forward_impl.7} parent=5 // pred_region
        %s164 = ssub.s32 %s14, 1
        // Predicated region
        $region13: #{_decoder_forward_impl.7} parent=11 // pred_check
          %p165 = pneg %p61
        $region14: #{_decoder_forward_impl.7} parent=11 // pred_check_branch
          %167 = sbr.rel (%p165) target = $region16
        $region15: #{_decoder_forward_impl.7} parent=11 // pred_region
          _
        $region16: #{_decoder_forward_impl.7} parent=11 // pred_fallthru
          _
        // Predicated region
        $region17: #{_decoder_forward_impl.7} parent=11 // pred_check
          %p168 = pneg %p82
        $region18: #{_decoder_forward_impl.7} parent=11 // pred_check_branch
          %170 = sbr.rel (%p168) target = $region20
        $region19: #{_decoder_forward_impl.7} parent=11 // pred_region
          _
        $region20: #{_decoder_forward_impl.7} parent=11 // pred_fallthru
          _
        // Predicated region
        $region21: #{_decoder_forward_impl.7} parent=11 // pred_check
          %p171 = pneg %p103
        $region22: #{_decoder_forward_impl.7} parent=11 // pred_check_branch
          %173 = sbr.rel (%p171) target = $region24
        $region23: #{_decoder_forward_impl.7} parent=11 // pred_region
          _
        $region24: #{_decoder_forward_impl.7} parent=11 // pred_fallthru
          _
        // Predicated region
        $region25: #{_decoder_forward_impl.7} parent=11 // pred_check
          %p174 = pneg %p124
        $region26: #{_decoder_forward_impl.7} parent=11 // pred_check_branch
          %176 = sbr.rel (%p174) target = $region28
        $region27: #{_decoder_forward_impl.7} parent=11 // pred_region
          _
        $region28: #{_decoder_forward_impl.7} parent=11 // pred_fallthru
          _
      $region12: #{_decoder_forward_impl.7} parent=5 // pred_fallthru
        _
      %p177 = scmp.lt.s32.totalorder %s14, 2
      // Predicated region
      $region29: #{_decoder_forward_impl.7} parent=5 // pred_check
        %p178 = pneg %p177
      $region30: #{_decoder_forward_impl.7} parent=5 // pred_check_branch
        %180 = sbr.rel (%p178) target = $region32
      $region31: #{_decoder_forward_impl.7} parent=5 // pred_region
        // Predicated region
        $region33: #{_decoder_forward_impl.7} parent=31 // pred_check
          %p181 = pneg %p34
        $region34: #{_decoder_forward_impl.7} parent=31 // pred_check_branch
          %183 = sbr.rel (%p181) target = $region36
        $region35: #{_decoder_forward_impl.7} parent=31 // pred_region
          %p184 = scmp.lt.s32.totalorder %s14, 1
          %s185 = scalar_select %p184, %s14, 1
          %s186 = smul.addr %s185, 2
          %s187 = smul.addr %s186, 8
          %s188 = scalar_lea.vmem %s0, %s187
        $region36: #{_decoder_forward_impl.7} parent=31 // pred_fallthru
          _
      $region32: #{_decoder_forward_impl.7} parent=5 // pred_fallthru
        _
      %p189 = scmp.le.s32.totalorder 1, %s14
      %p190 = scmp.lt.s32.totalorder %s14, 3
      %p191 = pnand %p189, %p190
      %p192 = pneg %p191
      // Predicated region
      $region37: #{_decoder_forward_impl.7} parent=5 // pred_check
        _
      $region38: #{_decoder_forward_impl.7} parent=5 // pred_check_branch
        %194 = sbr.rel (%p191) target = $region40
      $region39: #{_decoder_forward_impl.7} parent=5 // pred_region
        %s195 = ssub.s32 %s14, 1
        %p196 = scmp.lt.s32.totalorder %s19, 1
        %s197 = scalar_select %p196, %s19, 1
        %s198 = smul.addr %s197, 2
        %s199 = smul.addr %s198, 8
        %s200 = scalar_lea.vmem %s0, %s199
        %p201 = pneg %p40
        %p202 = pneg %p37
        %p203 = pneg %p61
        %p204 = pneg %p58
        %p205 = pneg %p82
        %p206 = pneg %p79
        %p207 = pneg %p103
        %p208 = pneg %p100
        %p209 = pneg %p124
        %p210 = pneg %p121
        %p211 = pneg %p150
        %p212 = pneg %p147
        %s213 = sand.u32 %s137, 1
        %s214 = scalar_lea.sflag [#allocation5], %s213
        %s215 = sand.u32 %s137, 1
        %s216 = smul.addr %s215, 8
        %s217 = scalar_lea.vmem [#allocation4], %s216
        %p218 = scmp.lt.s32.totalorder %s19, 1
        %s219 = scalar_select %p218, %s19, 1
        %s220 = smul.addr %s219, 2
        %s221 = smul.addr %s220, 8
        %s222 = scalar_lea.vmem %s0, %s221
        %v224 = vld [vmem:[%s222] sm:$0xff]
        %v225 = vld [vmem:[%s222 + $0x8] sm:$0xff]
        %vm226 = vcmask 11264
        %227 = vst.msk [vmem:[#allocation2] sm:$0xf] %vm226, 0
        %228 = vst.msk [vmem:[#allocation2 + $0x4] sm:$0xf] %vm226, 0
        %vm229 = vcmask 290064
        %230 = vst.msk [vmem:[#allocation2] sm:$0xf] %vm229, 0
        %231 = vst.msk [vmem:[#allocation2 + $0x4] sm:$0xf] %vm229, 0
        %v232 = vpack.c.bf16 %v224, %v224
        %v233 = vpack.c.bf16 %v225, %v225
        %236 = vrot.lane.b32.xlu0 %v232, 2
        %v237 = vpop.permute.xlu0 %236
        %238 = vrot.lane.b32.xlu0 %v233, 2
        %v239 = vpop.permute.xlu0 %238
        %vm242 = vcmask 273424
        %243 = vst.msk [vmem:[#allocation2] sm:$0xf] %vm242, %v237
        %244 = vst.msk [vmem:[#allocation2 + $0x4] sm:$0xf] %vm242, %v239
        %v245 = vld [vmem:[%s1] sm:$0xf]
        %v246 = vld [vmem:[%s1 + $0x4] sm:$0xf]
        %v247 = vld [vmem:[#allocation2] sm:$0xf]
        %v248 = vld [vmem:[#allocation2 + $0x4] sm:$0xf]
        %v251 = vunpack.c.l.b16 %v245
        %v252 = vunpack.c.l.b16 %v246
        %v253 = vpack.c.b16 %v252, %v251
        %254 = vrot.lane.b32.xlu0 %v253, 112
        %v255 = vpop.permute.xlu0 %254
        %v258 = vunpack.c.l.b16 %v247
        %v259 = vunpack.c.l.b16 %v248
        %v260 = vpack.c.b16 %v259, %v258
        %261 = vrot.lane.b32.xlu0 %v260, 127
        %v262 = vpop.permute.xlu0 %261
        %vm264 = vcmask 130048
        %v266 = vsel %vm264, %v255, 0
        %268 = vmatpush.bf16.msra.mxu0 0
        %269 = vmatpush.bf16.msra.mxu0 0
        %270 = vmatpush.bf16.msra.mxu0 0
        %271 = vmatpush.bf16.msra.mxu0 0
        %272 = vmatpush.bf16.msra.mxu0 0
        %273 = vmatpush.bf16.msra.mxu0 0
        %274 = vmatpush.bf16.msra.mxu0 0
        %275 = vmatpush.bf16.msra.mxu0 %v262
        %276 = vmatmul.bf16.gmra.mxu0 %v266
        %v277 = vpop.f32.mrf.mxu0
        %v278 = vadd.f32 0.0, %v277
        %v279 = vpop.f32.mrf.mxu0
        %v280 = vadd.f32 0.0, %v279
        %281 = vdwg.mxu0
        %v284 = vsel %vm264, %v253, 0
        %286 = vmatpush.bf16.msra.mxu0 0
        %287 = vmatpush.bf16.msra.mxu0 0
        %288 = vmatpush.bf16.msra.mxu0 0
        %289 = vmatpush.bf16.msra.mxu0 0
        %290 = vmatpush.bf16.msra.mxu0 0
        %291 = vmatpush.bf16.msra.mxu0 0
        %292 = vmatpush.bf16.msra.mxu0 0
        %293 = vmatpush.bf16.msra.mxu0 %v260
        %294 = vmatmul.bf16.gmra.mxu0 %v284
        %v295 = vpop.f32.mrf.mxu0
        %v296 = vadd.f32 %v278, %v295
        %v297 = vpop.f32.mrf.mxu0
        %v298 = vadd.f32 %v280, %v297
        %299 = vdwg.mxu0
        %300 = vrot.lane.b32.xlu0 %v253, 96
        %v301 = vpop.permute.xlu0 %300
        %302 = vrot.lane.b32.xlu0 %v260, 126
        %v303 = vpop.permute.xlu0 %302
        %v306 = vsel %vm264, %v301, 0
        %308 = vmatpush.bf16.msra.mxu0 0
        %309 = vmatpush.bf16.msra.mxu0 0
        %310 = vmatpush.bf16.msra.mxu0 0
        %311 = vmatpush.bf16.msra.mxu0 0
        %312 = vmatpush.bf16.msra.mxu0 0
        %313 = vmatpush.bf16.msra.mxu0 0
        %314 = vmatpush.bf16.msra.mxu0 0
        %315 = vmatpush.bf16.msra.mxu0 %v303
        %316 = vmatmul.bf16.gmra.mxu0 %v306
        %v317 = vpop.f32.mrf.mxu0
        %v318 = vadd.f32 0.0, %v317
        %v319 = vpop.f32.mrf.mxu0
        %v320 = vadd.f32 0.0, %v319
        %321 = vdwg.mxu0
        %v322 = vadd.f32 %v296, %v318
        %v323 = vadd.f32 %v298, %v320
        %324 = vrot.lane.b32.xlu0 %v253, 80
        %v325 = vpop.permute.xlu0 %324
        %326 = vrot.lane.b32.xlu0 %v260, 125
        %v327 = vpop.permute.xlu0 %326
        %v330 = vsel %vm264, %v325, 0
        %332 = vmatpush.bf16.msra.mxu0 0
        %333 = vmatpush.bf16.msra.mxu0 0
        %334 = vmatpush.bf16.msra.mxu0 0
        %335 = vmatpush.bf16.msra.mxu0 0
        %336 = vmatpush.bf16.msra.mxu0 0
        %337 = vmatpush.bf16.msra.mxu0 0
        %338 = vmatpush.bf16.msra.mxu0 0
        %339 = vmatpush.bf16.msra.mxu0 %v327
        %340 = vmatmul.bf16.gmra.mxu0 %v330
        %v341 = vpop.f32.mrf.mxu0
        %v342 = vadd.f32 0.0, %v341
        %v343 = vpop.f32.mrf.mxu0
        %v344 = vadd.f32 0.0, %v343
        %345 = vdwg.mxu0
        %v346 = vadd.f32 %v322, %v342
        %v347 = vadd.f32 %v323, %v344
        %348 = vrot.lane.b32.xlu0 %v253, 64
        %v349 = vpop.permute.xlu0 %348
        %350 = vrot.lane.b32.xlu0 %v260, 124
        %v351 = vpop.permute.xlu0 %350
        %v354 = vsel %vm264, %v349, 0
        %356 = vmatpush.bf16.msra.mxu0 0
        %357 = vmatpush.bf16.msra.mxu0 0
        %358 = vmatpush.bf16.msra.mxu0 0
        %359 = vmatpush.bf16.msra.mxu0 0
        %360 = vmatpush.bf16.msra.mxu0 0
        %361 = vmatpush.bf16.msra.mxu0 0
        %362 = vmatpush.bf16.msra.mxu0 0
        %363 = vmatpush.bf16.msra.mxu0 %v351
        %364 = vmatmul.bf16.gmra.mxu0 %v354
        %v365 = vpop.f32.mrf.mxu0
        %v366 = vadd.f32 0.0, %v365
        %v367 = vpop.f32.mrf.mxu0
        %v368 = vadd.f32 0.0, %v367
        %369 = vdwg.mxu0
        %v370 = vadd.f32 %v346, %v366
        %v371 = vadd.f32 %v347, %v368
        %v372 = vld [vmem:[%s2] sm:$0xff]
        %v373 = vld [vmem:[%s2 + $0x8] sm:$0xff]
        %375 = vset.pattern.permute.xlu0 0
        %376 = vperm.xlu0 %375, %v372
        %v377 = vpop.permute.xlu0 %376
        %380 = vset.pattern.permute.xlu0 0
        %381 = vperm.xlu0 %380, %v373
        %v382 = vpop.permute.xlu0 %381
        %v384 = vadd.f32 %v370, %v377
        %v385 = vadd.f32 %v371, %v382
        %vm386 = vcmask 261120
        %v387 = vsel %vm386, %v384, 0.0
        %388 = vadd.xlane.f32.xlu0 %v387
        %v389 = vpop.xlane.xlu0 %388
        %v390 = vsel %vm386, %v385, 0.0
        %391 = vadd.xlane.f32.xlu0 %v390
        %v392 = vpop.xlane.xlu0 %391
        %v393 = vrcp.pop 32.0
        %v394 = vmul.f32 32.0, %v393
        %v395 = vsub.f32 1.0, %v394
        %v396 = vmul.f32 %v393, %v395
        %v397 = vadd.f32 %v393, %v396
        %vm398 = vweird.f32 %v393
        %v399 = vsel %vm398, %v393, %v397
        %v400 = vmul.f32 %v389, %v399
        %v401 = vmul.f32 %v392, %v399
        %v402 = vsub.f32 %v384, %v400
        %v403 = vsub.f32 %v385, %v401
        %v404 = vmul.f32 %v402, %v402
        %v405 = vmul.f32 %v403, %v403
        %v406 = vsel %vm386, %v404, 0.0
        %407 = vadd.xlane.f32.xlu0 %v406
        %v408 = vpop.xlane.xlu0 %407
        %v409 = vsel %vm386, %v405, 0.0
        %410 = vadd.xlane.f32.xlu0 %v409
        %v411 = vpop.xlane.xlu0 %410
        %v412 = vmul.f32 %v408, %v399
        %v413 = vmul.f32 %v411, %v399
        %v414 = vadd.f32 %v412, 1e-05
        %v415 = vadd.f32 %v413, 1e-05
        %v416 = vrsqrt.pop %v414
        %v417 = vmul.f32 %v416, %v414
        %v418 = vmul.f32 %v417, %v416
        %v419 = vmul.f32 0.5, %v418
        %v420 = vsub.f32 1.5, %v419
        %v421 = vmul.f32 %v416, %v420
        %vm422 = vweird.f32 %v414
        %vm423 = vweird.f32 %v416
        %vm424 = vmor %vm422, %vm423
        %v425 = vsel %vm424, %v416, %v421
        %v426 = vrsqrt.pop %v415
        %v427 = vmul.f32 %v426, %v415
        %v428 = vmul.f32 %v427, %v426
        %v429 = vmul.f32 0.5, %v428
        %v430 = vsub.f32 1.5, %v429
        %v431 = vmul.f32 %v426, %v430
        %vm432 = vweird.f32 %v415
        %vm433 = vweird.f32 %v426
        %vm434 = vmor %vm432, %vm433
        %v435 = vsel %vm434, %v426, %v431
        %v436 = vmul.f32 %v402, %v425
        %v437 = vmul.f32 %v403, %v435
        %v438 = vsub.f32 0.0, %v437
        %v439 = vmul.f32 %v438, 1.442695
        %v440 = vpow.pop %v439
        %v441 = vadd.f32 %v440, 1.0
        %v442 = vrcp.pop %v441
        %v443 = vmul.f32 %v436, %v442
        %vm444 = vcmask 52224
        %445 = vst.msk [vmem:[#allocation3] sm:$0xf] %vm444, 0
        %vm446 = vcmask 372024
        %447 = vst.msk [vmem:[#allocation3] sm:$0xf] %vm446, 0
        %v448 = vpack.c.bf16 %v443, %v443
        %450 = vrot.lane.b32.xlu0 %v448, 7
        %v451 = vpop.permute.xlu0 %450
        %vm453 = vcmask 314424
        %454 = vst.msk [vmem:[#allocation3] sm:$0xf] %vm453, %v451
        %v455 = vld [vmem:[%s3] sm:$0xf]
        %v456 = vld [vmem:[#allocation3] sm:$0xf]
        %v458 = vunpack.c.l.b16 %v455
        %v459 = vpack.c.b16 %v458, %v458
        %460 = vrot.lane.b32.xlu0 %v459, 120
        %v461 = vpop.permute.xlu0 %460
        %v463 = vunpack.c.l.b16 %v456
        %v464 = vpack.c.b16 %v463, %v463
        %465 = vrot.lane.b32.xlu0 %v464, 127
        %v466 = vpop.permute.xlu0 %465
        %vm467 = vcmask 64512
        %v469 = vsel %vm467, %v461, 0
        %vm471 = vcmask 1043456
        %v473 = vsel %vm471, %v466, 0
        %475 = vmatpush.bf16.msra.mxu0 0
        %476 = vmatpush.bf16.msra.mxu0 0
        %477 = vmatpush.bf16.msra.mxu0 0
        %478 = vmatpush.bf16.msra.mxu0 0
        %479 = vmatpush.bf16.msra.mxu0 0
        %480 = vmatpush.bf16.msra.mxu0 0
        %481 = vmatpush.bf16.msra.mxu0 0
        %482 = vmatpush.bf16.msra.mxu0 %v473
        %483 = vmatmul.bf16.gmra.mxu0 %v469
        %v484 = vpop.f32.mrf.mxu0
        %v485 = vadd.f32 0.0, %v484
        %v486 = vpop.f32.mrf.mxu0
        %487 = vdwg.mxu0
        %v489 = vsel %vm467, %v455, 0
        %v492 = vsel %vm471, %v456, 0
        %494 = vmatpush.bf16.msra.mxu0 0
        %495 = vmatpush.bf16.msra.mxu0 0
        %496 = vmatpush.bf16.msra.mxu0 0
        %497 = vmatpush.bf16.msra.mxu0 0
        %498 = vmatpush.bf16.msra.mxu0 0
        %499 = vmatpush.bf16.msra.mxu0 0
        %500 = vmatpush.bf16.msra.mxu0 0
        %501 = vmatpush.bf16.msra.mxu0 %v492
        %502 = vmatmul.bf16.gmra.mxu0 %v489
        %v503 = vpop.f32.mrf.mxu0
        %v504 = vadd.f32 %v485, %v503
        %v505 = vpop.f32.mrf.mxu0
        %506 = vdwg.mxu0
        %507 = vrot.lane.b32.xlu0 %v459, 112
        %v508 = vpop.permute.xlu0 %507
        %509 = vrot.lane.b32.xlu0 %v464, 126
        %v510 = vpop.permute.xlu0 %509
        %v512 = vsel %vm467, %v508, 0
        %v515 = vsel %vm471, %v510, 0
        %517 = vmatpush.bf16.msra.mxu0 0
        %518 = vmatpush.bf16.msra.mxu0 0
        %519 = vmatpush.bf16.msra.mxu0 0
        %520 = vmatpush.bf16.msra.mxu0 0
        %521 = vmatpush.bf16.msra.mxu0 0
        %522 = vmatpush.bf16.msra.mxu0 0
        %523 = vmatpush.bf16.msra.mxu0 0
        %524 = vmatpush.bf16.msra.mxu0 %v515
        %525 = vmatmul.bf16.gmra.mxu0 %v512
        %v526 = vpop.f32.mrf.mxu0
        %v527 = vadd.f32 0.0, %v526
        %v528 = vpop.f32.mrf.mxu0
        %529 = vdwg.mxu0
        %v530 = vadd.f32 %v504, %v527
        %531 = vrot.lane.b32.xlu0 %v459, 104
        %v532 = vpop.permute.xlu0 %531
        %533 = vrot.lane.b32.xlu0 %v464, 125
        %v534 = vpop.permute.xlu0 %533
        %v536 = vsel %vm467, %v532, 0
        %v539 = vsel %vm471, %v534, 0
        %541 = vmatpush.bf16.msra.mxu0 0
        %542 = vmatpush.bf16.msra.mxu0 0
        %543 = vmatpush.bf16.msra.mxu0 0
        %544 = vmatpush.bf16.msra.mxu0 0
        %545 = vmatpush.bf16.msra.mxu0 0
        %546 = vmatpush.bf16.msra.mxu0 0
        %547 = vmatpush.bf16.msra.mxu0 0
        %548 = vmatpush.bf16.msra.mxu0 %v539
        %549 = vmatmul.bf16.gmra.mxu0 %v536
        %v550 = vpop.f32.mrf.mxu0
        %v551 = vadd.f32 0.0, %v550
        %v552 = vpop.f32.mrf.mxu0
        %553 = vdwg.mxu0
        %v554 = vadd.f32 %v530, %v551
        %555 = vrot.lane.b32.xlu0 %v459, 96
        %v556 = vpop.permute.xlu0 %555
        %557 = vrot.lane.b32.xlu0 %v464, 124
        %v558 = vpop.permute.xlu0 %557
        %v560 = vsel %vm467, %v556, 0
        %v563 = vsel %vm471, %v558, 0
        %565 = vmatpush.bf16.msra.mxu0 0
        %566 = vmatpush.bf16.msra.mxu0 0
        %567 = vmatpush.bf16.msra.mxu0 0
        %568 = vmatpush.bf16.msra.mxu0 0
        %569 = vmatpush.bf16.msra.mxu0 0
        %570 = vmatpush.bf16.msra.mxu0 0
        %571 = vmatpush.bf16.msra.mxu0 0
        %572 = vmatpush.bf16.msra.mxu0 %v563
        %573 = vmatmul.bf16.gmra.mxu0 %v560
        %v574 = vpop.f32.mrf.mxu0
        %v575 = vadd.f32 0.0, %v574
        %v576 = vpop.f32.mrf.mxu0
        %577 = vdwg.mxu0
        %v578 = vadd.f32 %v554, %v575
        %579 = vrot.lane.b32.xlu0 %v459, 88
        %v580 = vpop.permute.xlu0 %579
        %581 = vrot.lane.b32.xlu0 %v464, 123
        %v582 = vpop.permute.xlu0 %581
        %v584 = vsel %vm467, %v580, 0
        %v587 = vsel %vm471, %v582, 0
        %589 = vmatpush.bf16.msra.mxu0 0
        %590 = vmatpush.bf16.msra.mxu0 0
        %591 = vmatpush.bf16.msra.mxu0 0
        %592 = vmatpush.bf16.msra.mxu0 0
        %593 = vmatpush.bf16.msra.mxu0 0
        %594 = vmatpush.bf16.msra.mxu0 0
        %595 = vmatpush.bf16.msra.mxu0 0
        %596 = vmatpush.bf16.msra.mxu0 %v587
        %597 = vmatmul.bf16.gmra.mxu0 %v584
        %v598 = vpop.f32.mrf.mxu0
        %v599 = vadd.f32 0.0, %v598
        %v600 = vpop.f32.mrf.mxu0
        %601 = vdwg.mxu0
        %v602 = vadd.f32 %v578, %v599
        %603 = vrot.lane.b32.xlu0 %v459, 80
        %v604 = vpop.permute.xlu0 %603
        %605 = vrot.lane.b32.xlu0 %v464, 122
        %v606 = vpop.permute.xlu0 %605
        %v608 = vsel %vm467, %v604, 0
        %v611 = vsel %vm471, %v606, 0
        %613 = vmatpush.bf16.msra.mxu0 0
        %614 = vmatpush.bf16.msra.mxu0 0
        %615 = vmatpush.bf16.msra.mxu0 0
        %616 = vmatpush.bf16.msra.mxu0 0
        %617 = vmatpush.bf16.msra.mxu0 0
        %618 = vmatpush.bf16.msra.mxu0 0
        %619 = vmatpush.bf16.msra.mxu0 0
        %620 = vmatpush.bf16.msra.mxu0 %v611
        %621 = vmatmul.bf16.gmra.mxu0 %v608
        %v622 = vpop.f32.mrf.mxu0
        %v623 = vadd.f32 0.0, %v622
        %v624 = vpop.f32.mrf.mxu0
        %625 = vdwg.mxu0
        %v626 = vadd.f32 %v602, %v623
        %627 = vrot.lane.b32.xlu0 %v459, 72
        %v628 = vpop.permute.xlu0 %627
        %629 = vrot.lane.b32.xlu0 %v464, 121
        %v630 = vpop.permute.xlu0 %629
        %v632 = vsel %vm467, %v628, 0
        %v635 = vsel %vm471, %v630, 0
        %637 = vmatpush.bf16.msra.mxu0 0
        %638 = vmatpush.bf16.msra.mxu0 0
        %639 = vmatpush.bf16.msra.mxu0 0
        %640 = vmatpush.bf16.msra.mxu0 0
        %641 = vmatpush.bf16.msra.mxu0 0
        %642 = vmatpush.bf16.msra.mxu0 0
        %643 = vmatpush.bf16.msra.mxu0 0
        %644 = vmatpush.bf16.msra.mxu0 %v635
        %645 = vmatmul.bf16.gmra.mxu0 %v632
        %v646 = vpop.f32.mrf.mxu0
        %v647 = vadd.f32 0.0, %v646
        %v648 = vpop.f32.mrf.mxu0
        %649 = vdwg.mxu0
        %v650 = vadd.f32 %v626, %v647
        %651 = vrot.lane.b32.xlu0 %v459, 64
        %v652 = vpop.permute.xlu0 %651
        %653 = vrot.lane.b32.xlu0 %v464, 120
        %v654 = vpop.permute.xlu0 %653
        %v656 = vsel %vm467, %v652, 0
        %v659 = vsel %vm471, %v654, 0
        %661 = vmatpush.bf16.msra.mxu0 0
        %662 = vmatpush.bf16.msra.mxu0 0
        %663 = vmatpush.bf16.msra.mxu0 0
        %664 = vmatpush.bf16.msra.mxu0 0
        %665 = vmatpush.bf16.msra.mxu0 0
        %666 = vmatpush.bf16.msra.mxu0 0
        %667 = vmatpush.bf16.msra.mxu0 0
        %668 = vmatpush.bf16.msra.mxu0 %v659
        %669 = vmatmul.bf16.gmra.mxu0 %v656
        %v670 = vpop.f32.mrf.mxu0
        %v671 = vadd.f32 0.0, %v670
        %v672 = vpop.f32.mrf.mxu0
        %673 = vdwg.mxu0
        %v674 = vadd.f32 %v650, %v671
        %675 = vrot.lane.b32.xlu0 %v459, 56
        %v676 = vpop.permute.xlu0 %675
        %677 = vrot.lane.b32.xlu0 %v464, 119
        %v678 = vpop.permute.xlu0 %677
        %v680 = vsel %vm467, %v676, 0
        %v683 = vsel %vm471, %v678, 0
        %685 = vmatpush.bf16.msra.mxu0 0
        %686 = vmatpush.bf16.msra.mxu0 0
        %687 = vmatpush.bf16.msra.mxu0 0
        %688 = vmatpush.bf16.msra.mxu0 0
        %689 = vmatpush.bf16.msra.mxu0 0
        %690 = vmatpush.bf16.msra.mxu0 0
        %691 = vmatpush.bf16.msra.mxu0 0
        %692 = vmatpush.bf16.msra.mxu0 %v683
        %693 = vmatmul.bf16.gmra.mxu0 %v680
        %v694 = vpop.f32.mrf.mxu0
        %v695 = vadd.f32 0.0, %v694
        %v696 = vpop.f32.mrf.mxu0
        %697 = vdwg.mxu0
        %v698 = vadd.f32 %v674, %v695
        %699 = vrot.lane.b32.xlu0 %v459, 48
        %v700 = vpop.permute.xlu0 %699
        %701 = vrot.lane.b32.xlu0 %v464, 118
        %v702 = vpop.permute.xlu0 %701
        %v704 = vsel %vm467, %v700, 0
        %v707 = vsel %vm471, %v702, 0
        %709 = vmatpush.bf16.msra.mxu0 0
        %710 = vmatpush.bf16.msra.mxu0 0
        %711 = vmatpush.bf16.msra.mxu0 0
        %712 = vmatpush.bf16.msra.mxu0 0
        %713 = vmatpush.bf16.msra.mxu0 0
        %714 = vmatpush.bf16.msra.mxu0 0
        %715 = vmatpush.bf16.msra.mxu0 0
        %716 = vmatpush.bf16.msra.mxu0 %v707
        %717 = vmatmul.bf16.gmra.mxu0 %v704
        %v718 = vpop.f32.mrf.mxu0
        %v719 = vadd.f32 0.0, %v718
        %v720 = vpop.f32.mrf.mxu0
        %721 = vdwg.mxu0
        %v722 = vadd.f32 %v698, %v719
        %723 = vrot.lane.b32.xlu0 %v459, 40
        %v724 = vpop.permute.xlu0 %723
        %725 = vrot.lane.b32.xlu0 %v464, 117
        %v726 = vpop.permute.xlu0 %725
        %v728 = vsel %vm467, %v724, 0
        %v731 = vsel %vm471, %v726, 0
        %733 = vmatpush.bf16.msra.mxu0 0
        %734 = vmatpush.bf16.msra.mxu0 0
        %735 = vmatpush.bf16.msra.mxu0 0
        %736 = vmatpush.bf16.msra.mxu0 0
        %737 = vmatpush.bf16.msra.mxu0 0
        %738 = vmatpush.bf16.msra.mxu0 0
        %739 = vmatpush.bf16.msra.mxu0 0
        %740 = vmatpush.bf16.msra.mxu0 %v731
        %741 = vmatmul.bf16.gmra.mxu0 %v728
        %v742 = vpop.f32.mrf.mxu0
        %v743 = vadd.f32 0.0, %v742
        %v744 = vpop.f32.mrf.mxu0
        %745 = vdwg.mxu0
        %v746 = vadd.f32 %v722, %v743
        %747 = vrot.lane.b32.xlu0 %v459, 32
        %v748 = vpop.permute.xlu0 %747
        %749 = vrot.lane.b32.xlu0 %v464, 116
        %v750 = vpop.permute.xlu0 %749
        %v752 = vsel %vm467, %v748, 0
        %v755 = vsel %vm471, %v750, 0
        %757 = vmatpush.bf16.msra.mxu0 0
        %758 = vmatpush.bf16.msra.mxu0 0
        %759 = vmatpush.bf16.msra.mxu0 0
        %760 = vmatpush.bf16.msra.mxu0 0
        %761 = vmatpush.bf16.msra.mxu0 0
        %762 = vmatpush.bf16.msra.mxu0 0
        %763 = vmatpush.bf16.msra.mxu0 0
        %764 = vmatpush.bf16.msra.mxu0 %v755
        %765 = vmatmul.bf16.gmra.mxu0 %v752
        %v766 = vpop.f32.mrf.mxu0
        %v767 = vadd.f32 0.0, %v766
        %v768 = vpop.f32.mrf.mxu0
        %769 = vdwg.mxu0
        %v770 = vadd.f32 %v746, %v767
        %771 = vrot.lane.b32.xlu0 %v459, 24
        %v772 = vpop.permute.xlu0 %771
        %773 = vrot.lane.b32.xlu0 %v464, 115
        %v774 = vpop.permute.xlu0 %773
        %v776 = vsel %vm467, %v772, 0
        %v779 = vsel %vm471, %v774, 0
        %781 = vmatpush.bf16.msra.mxu0 0
        %782 = vmatpush.bf16.msra.mxu0 0
        %783 = vmatpush.bf16.msra.mxu0 0
        %784 = vmatpush.bf16.msra.mxu0 0
        %785 = vmatpush.bf16.msra.mxu0 0
        %786 = vmatpush.bf16.msra.mxu0 0
        %787 = vmatpush.bf16.msra.mxu0 0
        %788 = vmatpush.bf16.msra.mxu0 %v779
        %789 = vmatmul.bf16.gmra.mxu0 %v776
        %v790 = vpop.f32.mrf.mxu0
        %v791 = vadd.f32 0.0, %v790
        %v792 = vpop.f32.mrf.mxu0
        %793 = vdwg.mxu0
        %v794 = vadd.f32 %v770, %v791
        %795 = vrot.lane.b32.xlu0 %v459, 16
        %v796 = vpop.permute.xlu0 %795
        %797 = vrot.lane.b32.xlu0 %v464, 114
        %v798 = vpop.permute.xlu0 %797
        %v800 = vsel %vm467, %v796, 0
        %v803 = vsel %vm471, %v798, 0
        %805 = vmatpush.bf16.msra.mxu0 0
        %806 = vmatpush.bf16.msra.mxu0 0
        %807 = vmatpush.bf16.msra.mxu0 0
        %808 = vmatpush.bf16.msra.mxu0 0
        %809 = vmatpush.bf16.msra.mxu0 0
        %810 = vmatpush.bf16.msra.mxu0 0
        %811 = vmatpush.bf16.msra.mxu0 0
        %812 = vmatpush.bf16.msra.mxu0 %v803
        %813 = vmatmul.bf16.gmra.mxu0 %v800
        %v814 = vpop.f32.mrf.mxu0
        %v815 = vadd.f32 0.0, %v814
        %v816 = vpop.f32.mrf.mxu0
        %817 = vdwg.mxu0
        %v818 = vadd.f32 %v794, %v815
        %v819 = vld [vmem:[%s4] sm:$0xff]
        %821 = vset.pattern.permute.xlu0 0
        %822 = vperm.xlu0 %821, %v819
        %v823 = vpop.permute.xlu0 %822
        %v825 = vadd.f32 %v818, %v823
        %826 = vst.msk [vmem:[%s217] sm:$0xff] %vm386, %v825
        %s827 = sand.u32 %s137, 1
        %s828 = scalar_lea.sflag [#allocation5], %s827
        %s829 = sand.u32 %s137, 1
        %s830 = smul.addr %s829, 8
        %s831 = scalar_lea.vmem [#allocation4], %s830
        // Predicated region
        $region41: #{_decoder_forward_impl.7} parent=39 // pred_check
          %p832 = pneg %p147
        $region42: #{_decoder_forward_impl.7} parent=39 // pred_check_branch
          %834 = sbr.rel (%p832) target = $region44
        $region43: #{_decoder_forward_impl.7} parent=39 // pred_region
          %836 = vsyncadd %s828, 0
          %s837 = smul.addr %s19, 8
          %s838 = scalar_lea.hbm %s5, %s837
          %s840 = sshll.u32 %s831, 4
          %s841 = int_to_ptr.vmem [resolvable:$true] %s840
          %s842 = sshll.u32 %s838, 4
          %s843 = int_to_ptr.hbm [resolvable:$true] %s842
          %845 = dma.vmem_to_hbm [thread:$0]  %s841, 128, %s843, %s828
        $region44: #{_decoder_forward_impl.7} parent=39 // pred_fallthru
          _
      $region40: #{_decoder_forward_impl.7} parent=5 // pred_fallthru
        _
      %p846 = scmp.le.s32.totalorder 2, %s14
      // Predicated region
      $region45: #{_decoder_forward_impl.7} parent=5 // pred_check
        %p847 = pneg %p846
      $region46: #{_decoder_forward_impl.7} parent=5 // pred_check_branch
        %849 = sbr.rel (%p847) target = $region48
      $region47: #{_decoder_forward_impl.7} parent=5 // pred_region
        %s850 = ssub.s32 %s14, 2
        // Predicated region
        $region49: #{_decoder_forward_impl.7} parent=47 // pred_check
          %p851 = pneg %p153
        $region50: #{_decoder_forward_impl.7} parent=47 // pred_check_branch
          %853 = sbr.rel (%p851) target = $region52
        $region51: #{_decoder_forward_impl.7} parent=47 // pred_region
          %s854 = sand.u32 %s138, 1
          %s855 = scalar_lea.sflag [#allocation5], %s854
          %s856 = sand.u32 %s138, 1
          %s857 = smul.addr %s856, 8
          %s858 = scalar_lea.vmem [#allocation4], %s857
          %860 = dma.done %s855, 128
        $region52: #{_decoder_forward_impl.7} parent=47 // pred_fallthru
          _
      $region48: #{_decoder_forward_impl.7} parent=5 // pred_fallthru
        _
    $region6: #{_decoder_forward_impl.7} parent=1 // loop_footer
      %s18 = sadd.s32 1, %s14
    $region7: #{_decoder_forward_impl.7} parent=1 // loop_footer_branch
      %13 = sbr.rel target = $region3
    $region8: #{_decoder_forward_impl.7} parent=1 // loop_exit
      _
    %861 = vsyncpa [#allocation5], 1
    %s862 = scalar_lea.sflag [#allocation5], 1
    %863 = vsyncpa %s862, 1

// kernel: _decoder_forward_impl.6
$region0: #{_decoder_forward_impl.6}
  #allocation0 [shape = 'u32[]', space=smem, size = 0x4, offset = 0x4, fixed_abs, tag = 'smem constant byte address 0x4 - core index']
  #allocation1 [shape = 'u32[72,128]{1,0:T(1,128)}', space=vmem, size = 0x9000, scoped, tag = 'internal scratch']
  #allocation2 [shape = 'f32[16,32]{1,0:T(8,128)}', space=vmem, size = 0x2000, scoped, tag = 'scratch operand']
  #allocation3 [shape = 'f32[32,32]{1,0:T(8,128)}', space=vmem, size = 0x4000, scoped, tag = 'scratch operand']
  #allocation4 [shape = 'bf16[16,160]{1,0:T(8,128)(2,1)}', space=vmem, size = 0x2000, scoped, tag = 'scratch operand']
  #allocation5 [shape = 'bf16[16,34]{1,0:T(8,128)(2,1)}', space=vmem, size = 0x1000, scoped, tag = 'scratch operand']
  %s0 = inlined_call_operand.vmem [shape: f32[2,16,32], index: 0, kind: input, shape index: {}]
  %s1 = inlined_call_operand.vmem [shape: f32[2,8,1], index: 1, kind: input, shape index: {}]
  %s2 = inlined_call_operand.vmem [shape: bf16[6,32,80], index: 2, kind: input, shape index: {}]
  %s3 = inlined_call_operand.vmem [shape: f32[6,32,1], index: 3, kind: input, shape index: {}]
  %s4 = inlined_call_operand.vmem [shape: bf16[6,32,8], index: 4, kind: input, shape index: {}]
  %s5 = inlined_call_operand.vmem [shape: f32[6,32,1], index: 5, kind: input, shape index: {}]
  %s6 = inlined_call_operand.vmem [shape: bf16[6,32,16], index: 6, kind: input, shape index: {}]
  %s7 = inlined_call_operand.vmem [shape: f32[6,32,1], index: 7, kind: input, shape index: {}]
  %s8 = inlined_call_operand.vmem [shape: bf16[6,16,48], index: 8, kind: input, shape index: {}]
  %s9 = inlined_call_operand.vmem [shape: f32[6,16,1], index: 9, kind: input, shape index: {}]
  %s10 = inlined_call_operand.vmem [shape: f32[2,16,32], index: 10, kind: output, shape index: {}]
  %s11 = sld [smem:[#allocation0]]
  $region101: #{_decoder_forward_impl.6} parent=0
    _
  %s13 = ssub.s32 1, %s11
  %s14 = scalar_select 0, %s13, %s11
  loop: start=0, step=1, limit=14
  $region2: #{_decoder_forward_impl.6} parent=0 // loop_pre_header
    _
  $region3: #{_decoder_forward_impl.6} parent=0 // loop_header
    %s16 = sphi 0, %s20
    %p17 = scmp.ge.s32.totalorder %s16, 14
    %s23 = sphi 0, %s35
    %s24 = sphi 0, %s31
    %s25 = sphi 0, %s23
    %s26 = sphi 0, %s24
    %s27 = sphi 0, %s25
    %s28 = sphi 0, %s26
    %s38 = sphi 0, %s40
    %s41 = sphi 0, %s38
    %s42 = sphi 0, %s41
    %s58 = sphi 0, %s42
    %s64 = sphi 0, %s66
    %s67 = sphi 0, %s64
    %s68 = sphi 0, %s67
    %s84 = sphi 0, %s68
    %s90 = sphi 0, %s92
    %s93 = sphi 0, %s90
    %s94 = sphi 0, %s93
    %s110 = sphi 0, %s94
    %s116 = sphi 0, %s118
    %s119 = sphi 0, %s116
    %s120 = sphi 0, %s119
    %s136 = sphi 0, %s120
    %s142 = sphi 0, %s144
    %s145 = sphi 0, %s142
    %s146 = sphi 0, %s145
    %s162 = sphi 0, %s146
    %s168 = sphi 0, %s170
    %s171 = sphi 0, %s168
    %s172 = sphi 0, %s171
    %s188 = sphi 0, %s172
    %s194 = sphi 0, %s196
    %s197 = sphi 0, %s194
    %s198 = sphi 0, %s197
    %s214 = sphi 0, %s198
    %s220 = sphi 0, %s222
    %s223 = sphi 0, %s220
    %s224 = sphi 0, %s223
    %s240 = sphi 0, %s224
    %s246 = sphi 0, %s248
    %s249 = sphi 0, %s246
    %s250 = sphi 0, %s249
    %s266 = sphi 0, %s250
    %s272 = sphi 0, %s274
    %s275 = sphi 0, %s272
    %s276 = sphi 0, %s275
    %s292 = sphi 0, %s276
    %s298 = sphi 0, %s300
    %s301 = sphi 0, %s298
    %s302 = sphi 0, %s301
    %s318 = sphi 0, %s302
  $region4: #{_decoder_forward_impl.6} parent=0 // loop_header_branch
    %19 = sbr.rel (%p17) target = $region8
  $region5: #{_decoder_forward_impl.6} parent=0 // loop_body
    %s21 = ssub.s32 %s16, 1
    %s22 = ssub.s32 %s16, 2
    %s29 = sadd.s32 1, %s24
    %p30 = scmp.ge.s32.totalorder %s29, 6
    %s31 = scalar_select %p30, 0, %s29
    %s32 = sadd.s32 1, %s23
    %s33 = scalar_select %p30, %s32, %s23
    %p34 = scmp.ge.s32.totalorder %s33, 2
    %s35 = scalar_select %p34, 0, %s33
    %s36 = ssub.s32 %s23, %s35
    %p37 = scmp.eq.s32.totalorder %s36, 0
    %s39 = sadd.s32 %s38, 1
    %s40 = scalar_select %p37, %s38, %s39
    %p43 = pneg %p37
    %p44 = scmp.eq.s32.totalorder %s16, 11
    %p45 = por %p43, %p44
    %p46 = scmp.ne.s32.totalorder %s38, %s41
    %p47 = scmp.eq.s32.totalorder %s16, 0
    %p48 = por %p46, %p47
    %p49 = scmp.ne.s32.totalorder %s38, %s41
    %p50 = scmp.eq.s32.totalorder %s21, 11
    %p51 = por %p49, %p50
    %p52 = scmp.ne.s32.totalorder %s41, %s42
    %p53 = scmp.eq.s32.totalorder %s21, 0
    %p54 = por %p52, %p53
    %p55 = scmp.ne.s32.totalorder %s41, %s42
    %p56 = scmp.eq.s32.totalorder %s22, 11
    %p57 = por %p55, %p56
    %p59 = scmp.ne.s32.totalorder %s42, %s58
    %p60 = scmp.eq.s32.totalorder %s22, 0
    %p61 = por %p59, %p60
    %s62 = ssub.s32 %s23, %s35
    %p63 = scmp.eq.s32.totalorder %s62, 0
    %s65 = sadd.s32 %s64, 1
    %s66 = scalar_select %p63, %s64, %s65
    %p69 = pneg %p63
    %p70 = scmp.eq.s32.totalorder %s16, 11
    %p71 = por %p69, %p70
    %p72 = scmp.ne.s32.totalorder %s64, %s67
    %p73 = scmp.eq.s32.totalorder %s16, 0
    %p74 = por %p72, %p73
    %p75 = scmp.ne.s32.totalorder %s64, %s67
    %p76 = scmp.eq.s32.totalorder %s21, 11
    %p77 = por %p75, %p76
    %p78 = scmp.ne.s32.totalorder %s67, %s68
    %p79 = scmp.eq.s32.totalorder %s21, 0
    %p80 = por %p78, %p79
    %p81 = scmp.ne.s32.totalorder %s67, %s68
    %p82 = scmp.eq.s32.totalorder %s22, 11
    %p83 = por %p81, %p82
    %p85 = scmp.ne.s32.totalorder %s68, %s84
    %p86 = scmp.eq.s32.totalorder %s22, 0
    %p87 = por %p85, %p86
    %s88 = ssub.s32 %s24, %s31
    %p89 = scmp.eq.s32.totalorder %s88, 0
    %s91 = sadd.s32 %s90, 1
    %s92 = scalar_select %p89, %s90, %s91
    %p95 = pneg %p89
    %p96 = scmp.eq.s32.totalorder %s16, 11
    %p97 = por %p95, %p96
    %p98 = scmp.ne.s32.totalorder %s90, %s93
    %p99 = scmp.eq.s32.totalorder %s16, 0
    %p100 = por %p98, %p99
    %p101 = scmp.ne.s32.totalorder %s90, %s93
    %p102 = scmp.eq.s32.totalorder %s21, 11
    %p103 = por %p101, %p102
    %p104 = scmp.ne.s32.totalorder %s93, %s94
    %p105 = scmp.eq.s32.totalorder %s21, 0
    %p106 = por %p104, %p105
    %p107 = scmp.ne.s32.totalorder %s93, %s94
    %p108 = scmp.eq.s32.totalorder %s22, 11
    %p109 = por %p107, %p108
    %p111 = scmp.ne.s32.totalorder %s94, %s110
    %p112 = scmp.eq.s32.totalorder %s22, 0
    %p113 = por %p111, %p112
    %s114 = ssub.s32 %s24, %s31
    %p115 = scmp.eq.s32.totalorder %s114, 0
    %s117 = sadd.s32 %s116, 1
    %s118 = scalar_select %p115, %s116, %s117
    %p121 = pneg %p115
    %p122 = scmp.eq.s32.totalorder %s16, 11
    %p123 = por %p121, %p122
    %p124 = scmp.ne.s32.totalorder %s116, %s119
    %p125 = scmp.eq.s32.totalorder %s16, 0
    %p126 = por %p124, %p125
    %p127 = scmp.ne.s32.totalorder %s116, %s119
    %p128 = scmp.eq.s32.totalorder %s21, 11
    %p129 = por %p127, %p128
    %p130 = scmp.ne.s32.totalorder %s119, %s120
    %p131 = scmp.eq.s32.totalorder %s21, 0
    %p132 = por %p130, %p131
    %p133 = scmp.ne.s32.totalorder %s119, %s120
    %p134 = scmp.eq.s32.totalorder %s22, 11
    %p135 = por %p133, %p134
    %p137 = scmp.ne.s32.totalorder %s120, %s136
    %p138 = scmp.eq.s32.totalorder %s22, 0
    %p139 = por %p137, %p138
    %s140 = ssub.s32 %s24, %s31
    %p141 = scmp.eq.s32.totalorder %s140, 0
    %s143 = sadd.s32 %s142, 1
    %s144 = scalar_select %p141, %s142, %s143
    %p147 = pneg %p141
    %p148 = scmp.eq.s32.totalorder %s16, 11
    %p149 = por %p147, %p148
    %p150 = scmp.ne.s32.totalorder %s142, %s145
    %p151 = scmp.eq.s32.totalorder %s16, 0
    %p152 = por %p150, %p151
    %p153 = scmp.ne.s32.totalorder %s142, %s145
    %p154 = scmp.eq.s32.totalorder %s21, 11
    %p155 = por %p153, %p154
    %p156 = scmp.ne.s32.totalorder %s145, %s146
    %p157 = scmp.eq.s32.totalorder %s21, 0
    %p158 = por %p156, %p157
    %p159 = scmp.ne.s32.totalorder %s145, %s146
    %p160 = scmp.eq.s32.totalorder %s22, 11
    %p161 = por %p159, %p160
    %p163 = scmp.ne.s32.totalorder %s146, %s162
    %p164 = scmp.eq.s32.totalorder %s22, 0
    %p165 = por %p163, %p164
    %s166 = ssub.s32 %s24, %s31
    %p167 = scmp.eq.s32.totalorder %s166, 0
    %s169 = sadd.s32 %s168, 1
    %s170 = scalar_select %p167, %s168, %s169
    %p173 = pneg %p167
    %p174 = scmp.eq.s32.totalorder %s16, 11
    %p175 = por %p173, %p174
    %p176 = scmp.ne.s32.totalorder %s168, %s171
    %p177 = scmp.eq.s32.totalorder %s16, 0
    %p178 = por %p176, %p177
    %p179 = scmp.ne.s32.totalorder %s168, %s171
    %p180 = scmp.eq.s32.totalorder %s21, 11
    %p181 = por %p179, %p180
    %p182 = scmp.ne.s32.totalorder %s171, %s172
    %p183 = scmp.eq.s32.totalorder %s21, 0
    %p184 = por %p182, %p183
    %p185 = scmp.ne.s32.totalorder %s171, %s172
    %p186 = scmp.eq.s32.totalorder %s22, 11
    %p187 = por %p185, %p186
    %p189 = scmp.ne.s32.totalorder %s172, %s188
    %p190 = scmp.eq.s32.totalorder %s22, 0
    %p191 = por %p189, %p190
    %s192 = ssub.s32 %s24, %s31
    %p193 = scmp.eq.s32.totalorder %s192, 0
    %s195 = sadd.s32 %s194, 1
    %s196 = scalar_select %p193, %s194, %s195
    %p199 = pneg %p193
    %p200 = scmp.eq.s32.totalorder %s16, 11
    %p201 = por %p199, %p200
    %p202 = scmp.ne.s32.totalorder %s194, %s197
    %p203 = scmp.eq.s32.totalorder %s16, 0
    %p204 = por %p202, %p203
    %p205 = scmp.ne.s32.totalorder %s194, %s197
    %p206 = scmp.eq.s32.totalorder %s21, 11
    %p207 = por %p205, %p206
    %p208 = scmp.ne.s32.totalorder %s197, %s198
    %p209 = scmp.eq.s32.totalorder %s21, 0
    %p210 = por %p208, %p209
    %p211 = scmp.ne.s32.totalorder %s197, %s198
    %p212 = scmp.eq.s32.totalorder %s22, 11
    %p213 = por %p211, %p212
    %p215 = scmp.ne.s32.totalorder %s198, %s214
    %p216 = scmp.eq.s32.totalorder %s22, 0
    %p217 = por %p215, %p216
    %s218 = ssub.s32 %s24, %s31
    %p219 = scmp.eq.s32.totalorder %s218, 0
    %s221 = sadd.s32 %s220, 1
    %s222 = scalar_select %p219, %s220, %s221
    %p225 = pneg %p219
    %p226 = scmp.eq.s32.totalorder %s16, 11
    %p227 = por %p225, %p226
    %p228 = scmp.ne.s32.totalorder %s220, %s223
    %p229 = scmp.eq.s32.totalorder %s16, 0
    %p230 = por %p228, %p229
    %p231 = scmp.ne.s32.totalorder %s220, %s223
    %p232 = scmp.eq.s32.totalorder %s21, 11
    %p233 = por %p231, %p232
    %p234 = scmp.ne.s32.totalorder %s223, %s224
    %p235 = scmp.eq.s32.totalorder %s21, 0
    %p236 = por %p234, %p235
    %p237 = scmp.ne.s32.totalorder %s223, %s224
    %p238 = scmp.eq.s32.totalorder %s22, 11
    %p239 = por %p237, %p238
    %p241 = scmp.ne.s32.totalorder %s224, %s240
    %p242 = scmp.eq.s32.totalorder %s22, 0
    %p243 = por %p241, %p242
    %s244 = ssub.s32 %s24, %s31
    %p245 = scmp.eq.s32.totalorder %s244, 0
    %s247 = sadd.s32 %s246, 1
    %s248 = scalar_select %p245, %s246, %s247
    %p251 = pneg %p245
    %p252 = scmp.eq.s32.totalorder %s16, 11
    %p253 = por %p251, %p252
    %p254 = scmp.ne.s32.totalorder %s246, %s249
    %p255 = scmp.eq.s32.totalorder %s16, 0
    %p256 = por %p254, %p255
    %p257 = scmp.ne.s32.totalorder %s246, %s249
    %p258 = scmp.eq.s32.totalorder %s21, 11
    %p259 = por %p257, %p258
    %p260 = scmp.ne.s32.totalorder %s249, %s250
    %p261 = scmp.eq.s32.totalorder %s21, 0
    %p262 = por %p260, %p261
    %p263 = scmp.ne.s32.totalorder %s249, %s250
    %p264 = scmp.eq.s32.totalorder %s22, 11
    %p265 = por %p263, %p264
    %p267 = scmp.ne.s32.totalorder %s250, %s266
    %p268 = scmp.eq.s32.totalorder %s22, 0
    %p269 = por %p267, %p268
    %s270 = ssub.s32 %s24, %s31
    %p271 = scmp.eq.s32.totalorder %s270, 0
    %s273 = sadd.s32 %s272, 1
    %s274 = scalar_select %p271, %s272, %s273
    %p277 = pneg %p271
    %p278 = scmp.eq.s32.totalorder %s16, 11
    %p279 = por %p277, %p278
    %p280 = scmp.ne.s32.totalorder %s272, %s275
    %p281 = scmp.eq.s32.totalorder %s16, 0
    %p282 = por %p280, %p281
    %p283 = scmp.ne.s32.totalorder %s272, %s275
    %p284 = scmp.eq.s32.totalorder %s21, 11
    %p285 = por %p283, %p284
    %p286 = scmp.ne.s32.totalorder %s275, %s276
    %p287 = scmp.eq.s32.totalorder %s21, 0
    %p288 = por %p286, %p287
    %p289 = scmp.ne.s32.totalorder %s275, %s276
    %p290 = scmp.eq.s32.totalorder %s22, 11
    %p291 = por %p289, %p290
    %p293 = scmp.ne.s32.totalorder %s276, %s292
    %p294 = scmp.eq.s32.totalorder %s22, 0
    %p295 = por %p293, %p294
    %s296 = ssub.s32 %s23, %s35
    %p297 = scmp.eq.s32.totalorder %s296, 0
    %s299 = sadd.s32 %s298, 1
    %s300 = scalar_select %p297, %s298, %s299
    %p303 = pneg %p297
    %p304 = scmp.eq.s32.totalorder %s16, 11
    %p305 = por %p303, %p304
    %p306 = scmp.ne.s32.totalorder %s298, %s301
    %p307 = scmp.eq.s32.totalorder %s16, 0
    %p308 = por %p306, %p307
    %p309 = scmp.ne.s32.totalorder %s298, %s301
    %p310 = scmp.eq.s32.totalorder %s21, 11
    %p311 = por %p309, %p310
    %p312 = scmp.ne.s32.totalorder %s301, %s302
    %p313 = scmp.eq.s32.totalorder %s21, 0
    %p314 = por %p312, %p313
    %p315 = scmp.ne.s32.totalorder %s301, %s302
    %p316 = scmp.eq.s32.totalorder %s22, 11
    %p317 = por %p315, %p316
    %p319 = scmp.ne.s32.totalorder %s302, %s318
    %p320 = scmp.eq.s32.totalorder %s22, 0
    %p321 = por %p319, %p320
    %p322 = scmp.le.s32.totalorder 1, %s16
    %p323 = scmp.lt.s32.totalorder %s16, 13
    %p324 = pnand %p322, %p323
    %p325 = pneg %p324
    // Predicated region
    $region9: #{_decoder_forward_impl.6} parent=5 // pred_check
      _
    $region10: #{_decoder_forward_impl.6} parent=5 // pred_check_branch
      %327 = sbr.rel (%p324) target = $region12
    $region11: #{_decoder_forward_impl.6} parent=5 // pred_region
      %s328 = ssub.s32 %s16, 1
    $region12: #{_decoder_forward_impl.6} parent=5 // pred_fallthru
      _
    %p329 = scmp.lt.s32.totalorder %s16, 12
    // Predicated region
    $region13: #{_decoder_forward_impl.6} parent=5 // pred_check
      %p330 = pneg %p329
    $region14: #{_decoder_forward_impl.6} parent=5 // pred_check_branch
      %332 = sbr.rel (%p330) target = $region16
    $region15: #{_decoder_forward_impl.6} parent=5 // pred_region
      // Predicated region
      $region17: #{_decoder_forward_impl.6} parent=15 // pred_check
        %p333 = pneg %p48
      $region18: #{_decoder_forward_impl.6} parent=15 // pred_check_branch
        %335 = sbr.rel (%p333) target = $region20
      $region19: #{_decoder_forward_impl.6} parent=15 // pred_region
        %p336 = scmp.lt.s32.totalorder %s23, 1
        %s337 = scalar_select %p336, %s23, 1
        %s338 = smul.addr %s337, 2
        %s339 = smul.addr %s338, 8
        %s340 = scalar_lea.vmem %s0, %s339
      $region20: #{_decoder_forward_impl.6} parent=15 // pred_fallthru
        _
      // Predicated region
      $region21: #{_decoder_forward_impl.6} parent=15 // pred_check
        %p341 = pneg %p74
      $region22: #{_decoder_forward_impl.6} parent=15 // pred_check_branch
        %343 = sbr.rel (%p341) target = $region24
      $region23: #{_decoder_forward_impl.6} parent=15 // pred_region
        %p344 = scmp.lt.s32.totalorder %s23, 1
        %s345 = scalar_select %p344, %s23, 1
        %s346 = smul.addr %s345, 8
        %s347 = scalar_lea.vmem %s1, %s346
      $region24: #{_decoder_forward_impl.6} parent=15 // pred_fallthru
        _
      // Predicated region
      $region25: #{_decoder_forward_impl.6} parent=15 // pred_check
        %p348 = pneg %p100
      $region26: #{_decoder_forward_impl.6} parent=15 // pred_check_branch
        %350 = sbr.rel (%p348) target = $region28
      $region27: #{_decoder_forward_impl.6} parent=15 // pred_region
        %p351 = scmp.lt.s32.totalorder %s24, 5
        %s352 = scalar_select %p351, %s24, 5
        %s353 = smul.addr %s352, 4
        %s354 = smul.addr %s353, 4
        %s355 = scalar_lea.vmem %s2, %s354
      $region28: #{_decoder_forward_impl.6} parent=15 // pred_fallthru
        _
      // Predicated region
      $region29: #{_decoder_forward_impl.6} parent=15 // pred_check
        %p356 = pneg %p126
      $region30: #{_decoder_forward_impl.6} parent=15 // pred_check_branch
        %358 = sbr.rel (%p356) target = $region32
      $region31: #{_decoder_forward_impl.6} parent=15 // pred_region
        %p359 = scmp.lt.s32.totalorder %s24, 5
        %s360 = scalar_select %p359, %s24, 5
        %s361 = smul.addr %s360, 4
        %s362 = smul.addr %s361, 8
        %s363 = scalar_lea.vmem %s3, %s362
      $region32: #{_decoder_forward_impl.6} parent=15 // pred_fallthru
        _
      // Predicated region
      $region33: #{_decoder_forward_impl.6} parent=15 // pred_check
        %p364 = pneg %p152
      $region34: #{_decoder_forward_impl.6} parent=15 // pred_check_branch
        %366 = sbr.rel (%p364) target = $region36
      $region35: #{_decoder_forward_impl.6} parent=15 // pred_region
        %p367 = scmp.lt.s32.totalorder %s24, 5
        %s368 = scalar_select %p367, %s24, 5
        %s369 = smul.addr %s368, 4
        %s370 = smul.addr %s369, 4
        %s371 = scalar_lea.vmem %s4, %s370
      $region36: #{_decoder_forward_impl.6} parent=15 // pred_fallthru
        _
      // Predicated region
      $region37: #{_decoder_forward_impl.6} parent=15 // pred_check
        %p372 = pneg %p178
      $region38: #{_decoder_forward_impl.6} parent=15 // pred_check_branch
        %374 = sbr.rel (%p372) target = $region40
      $region39: #{_decoder_forward_impl.6} parent=15 // pred_region
        %p375 = scmp.lt.s32.totalorder %s24, 5
        %s376 = scalar_select %p375, %s24, 5
        %s377 = smul.addr %s376, 4
        %s378 = smul.addr %s377, 8
        %s379 = scalar_lea.vmem %s5, %s378
      $region40: #{_decoder_forward_impl.6} parent=15 // pred_fallthru
        _
      // Predicated region
      $region41: #{_decoder_forward_impl.6} parent=15 // pred_check
        %p380 = pneg %p204
      $region42: #{_decoder_forward_impl.6} parent=15 // pred_check_branch
        %382 = sbr.rel (%p380) target = $region44
      $region43: #{_decoder_forward_impl.6} parent=15 // pred_region
        %p383 = scmp.lt.s32.totalorder %s24, 5
        %s384 = scalar_select %p383, %s24, 5
        %s385 = smul.addr %s384, 4
        %s386 = smul.addr %s385, 4
        %s387 = scalar_lea.vmem %s6, %s386
      $region44: #{_decoder_forward_impl.6} parent=15 // pred_fallthru
        _
      // Predicated region
      $region45: #{_decoder_forward_impl.6} parent=15 // pred_check
        %p388 = pneg %p230
      $region46: #{_decoder_forward_impl.6} parent=15 // pred_check_branch
        %390 = sbr.rel (%p388) target = $region48
      $region47: #{_decoder_forward_impl.6} parent=15 // pred_region
        %p391 = scmp.lt.s32.totalorder %s24, 5
        %s392 = scalar_select %p391, %s24, 5
        %s393 = smul.addr %s392, 4
        %s394 = smul.addr %s393, 8
        %s395 = scalar_lea.vmem %s7, %s394
      $region48: #{_decoder_forward_impl.6} parent=15 // pred_fallthru
        _
      // Predicated region
      $region49: #{_decoder_forward_impl.6} parent=15 // pred_check
        %p396 = pneg %p256
      $region50: #{_decoder_forward_impl.6} parent=15 // pred_check_branch
        %398 = sbr.rel (%p396) target = $region52
      $region51: #{_decoder_forward_impl.6} parent=15 // pred_region
        %p399 = scmp.lt.s32.totalorder %s24, 5
        %s400 = scalar_select %p399, %s24, 5
        %s401 = smul.addr %s400, 2
        %s402 = smul.addr %s401, 4
        %s403 = scalar_lea.vmem %s8, %s402
      $region52: #{_decoder_forward_impl.6} parent=15 // pred_fallthru
        _
      // Predicated region
      $region53: #{_decoder_forward_impl.6} parent=15 // pred_check
        %p404 = pneg %p282
      $region54: #{_decoder_forward_impl.6} parent=15 // pred_check_branch
        %406 = sbr.rel (%p404) target = $region56
      $region55: #{_decoder_forward_impl.6} parent=15 // pred_region
        %p407 = scmp.lt.s32.totalorder %s24, 5
        %s408 = scalar_select %p407, %s24, 5
        %s409 = smul.addr %s408, 2
        %s410 = smul.addr %s409, 8
        %s411 = scalar_lea.vmem %s9, %s410
      $region56: #{_decoder_forward_impl.6} parent=15 // pred_fallthru
        _
    $region16: #{_decoder_forward_impl.6} parent=5 // pred_fallthru
      _
    %p412 = scmp.le.s32.totalorder 1, %s16
    %p413 = scmp.lt.s32.totalorder %s16, 13
    %p414 = pnand %p412, %p413
    %p415 = pneg %p414
    // Predicated region
    $region57: #{_decoder_forward_impl.6} parent=5 // pred_check
      _
    $region58: #{_decoder_forward_impl.6} parent=5 // pred_check_branch
      %417 = sbr.rel (%p414) target = $region60
    $region59: #{_decoder_forward_impl.6} parent=5 // pred_region
      %s418 = ssub.s32 %s16, 1
      %p419 = scmp.lt.s32.totalorder %s25, 1
      %s420 = scalar_select %p419, %s25, 1
      %s421 = smul.addr %s420, 2
      %s422 = smul.addr %s421, 8
      %s423 = scalar_lea.vmem %s0, %s422
      %p424 = pneg %p54
      %p425 = pneg %p51
      %p426 = scmp.lt.s32.totalorder %s25, 1
      %s427 = scalar_select %p426, %s25, 1
      %s428 = smul.addr %s427, 8
      %s429 = scalar_lea.vmem %s1, %s428
      %p430 = pneg %p80
      %p431 = pneg %p77
      %p432 = scmp.lt.s32.totalorder %s26, 5
      %s433 = scalar_select %p432, %s26, 5
      %s434 = smul.addr %s433, 4
      %s435 = smul.addr %s434, 4
      %s436 = scalar_lea.vmem %s2, %s435
      %p437 = pneg %p106
      %p438 = pneg %p103
      %p439 = scmp.lt.s32.totalorder %s26, 5
      %s440 = scalar_select %p439, %s26, 5
      %s441 = smul.addr %s440, 4
      %s442 = smul.addr %s441, 8
      %s443 = scalar_lea.vmem %s3, %s442
      %p444 = pneg %p132
      %p445 = pneg %p129
      %p446 = scmp.lt.s32.totalorder %s26, 5
      %s447 = scalar_select %p446, %s26, 5
      %s448 = smul.addr %s447, 4
      %s449 = smul.addr %s448, 4
      %s450 = scalar_lea.vmem %s4, %s449
      %p451 = pneg %p158
      %p452 = pneg %p155
      %p453 = scmp.lt.s32.totalorder %s26, 5
      %s454 = scalar_select %p453, %s26, 5
      %s455 = smul.addr %s454, 4
      %s456 = smul.addr %s455, 8
      %s457 = scalar_lea.vmem %s5, %s456
      %p458 = pneg %p184
      %p459 = pneg %p181
      %p460 = scmp.lt.s32.totalorder %s26, 5
      %s461 = scalar_select %p460, %s26, 5
      %s462 = smul.addr %s461, 4
      %s463 = smul.addr %s462, 4
      %s464 = scalar_lea.vmem %s6, %s463
      %p465 = pneg %p210
      %p466 = pneg %p207
      %p467 = scmp.lt.s32.totalorder %s26, 5
      %s468 = scalar_select %p467, %s26, 5
      %s469 = smul.addr %s468, 4
      %s470 = smul.addr %s469, 8
      %s471 = scalar_lea.vmem %s7, %s470
      %p472 = pneg %p236
      %p473 = pneg %p233
      %p474 = scmp.lt.s32.totalorder %s26, 5
      %s475 = scalar_select %p474, %s26, 5
      %s476 = smul.addr %s475, 2
      %s477 = smul.addr %s476, 4
      %s478 = scalar_lea.vmem %s8, %s477
      %p479 = pneg %p262
      %p480 = pneg %p259
      %p481 = scmp.lt.s32.totalorder %s26, 5
      %s482 = scalar_select %p481, %s26, 5
      %s483 = smul.addr %s482, 2
      %s484 = smul.addr %s483, 8
      %s485 = scalar_lea.vmem %s9, %s484
      %p486 = pneg %p288
      %p487 = pneg %p285
      %p488 = pneg %p314
      %p489 = pneg %p311
      %p490 = scmp.lt.s32.totalorder %s25, 1
      %s491 = scalar_select %p490, %s25, 1
      %s492 = smul.addr %s491, 2
      %s493 = smul.addr %s492, 8
      %s494 = scalar_lea.vmem %s10, %s493
      %p495 = scmp.lt.s32.totalorder %s25, 1
      %s496 = scalar_select %p495, %s25, 1
      %s497 = smul.addr %s496, 2
      %s498 = smul.addr %s497, 8
      %s499 = scalar_lea.vmem %s0, %s498
      %p500 = scmp.lt.s32.totalorder %s25, 1
      %s501 = scalar_select %p500, %s25, 1
      %s502 = smul.addr %s501, 8
      %s503 = scalar_lea.vmem %s1, %s502
      %p504 = scmp.lt.s32.totalorder %s26, 5
      %s505 = scalar_select %p504, %s26, 5
      %s506 = smul.addr %s505, 4
      %s507 = smul.addr %s506, 4
      %s508 = scalar_lea.vmem %s2, %s507
      %p509 = scmp.lt.s32.totalorder %s26, 5
      %s510 = scalar_select %p509, %s26, 5
      %s511 = smul.addr %s510, 4
      %s512 = smul.addr %s511, 8
      %s513 = scalar_lea.vmem %s3, %s512
      %p514 = scmp.lt.s32.totalorder %s26, 5
      %s515 = scalar_select %p514, %s26, 5
      %s516 = smul.addr %s515, 4
      %s517 = smul.addr %s516, 4
      %s518 = scalar_lea.vmem %s4, %s517
      %p519 = scmp.lt.s32.totalorder %s26, 5
      %s520 = scalar_select %p519, %s26, 5
      %s521 = smul.addr %s520, 4
      %s522 = smul.addr %s521, 8
      %s523 = scalar_lea.vmem %s5, %s522
      %p524 = scmp.lt.s32.totalorder %s26, 5
      %s525 = scalar_select %p524, %s26, 5
      %s526 = smul.addr %s525, 4
      %s527 = smul.addr %s526, 4
      %s528 = scalar_lea.vmem %s6, %s527
      %p529 = scmp.lt.s32.totalorder %s26, 5
      %s530 = scalar_select %p529, %s26, 5
      %s531 = smul.addr %s530, 4
      %s532 = smul.addr %s531, 8
      %s533 = scalar_lea.vmem %s7, %s532
      %p534 = scmp.lt.s32.totalorder %s26, 5
      %s535 = scalar_select %p534, %s26, 5
      %s536 = smul.addr %s535, 2
      %s537 = smul.addr %s536, 4
      %s538 = scalar_lea.vmem %s8, %s537
      %p539 = scmp.lt.s32.totalorder %s26, 5
      %s540 = scalar_select %p539, %s26, 5
      %s541 = smul.addr %s540, 2
      %s542 = smul.addr %s541, 8
      %s543 = scalar_lea.vmem %s9, %s542
      %p544 = scmp.lt.s32.totalorder %s25, 1
      %s545 = scalar_select %p544, %s25, 1
      %s546 = smul.addr %s545, 2
      %s547 = smul.addr %s546, 8
      %s548 = scalar_lea.vmem %s10, %s547
      %p550 = scmp.eq.s32.totalorder %s26, 0
      // Predicated region
      $region61: #{_decoder_forward_impl.6} parent=59 // pred_check
        %p551 = pneg %p550
      $region62: #{_decoder_forward_impl.6} parent=59 // pred_check_branch
        %553 = sbr.rel (%p551) target = $region64
      $region63: #{_decoder_forward_impl.6} parent=59 // pred_region
        %v554 = vld [vmem:[%s499] sm:$0xff]
        %v555 = vld [vmem:[%s499 + $0x8] sm:$0xff]
        %vm556 = vcmask 261120
        %557 = vst.msk [vmem:[#allocation2] sm:$0xff] %vm556, %v554
        %558 = vst.msk [vmem:[#allocation2 + $0x8] sm:$0xff] %vm556, %v555
        %559 = vst.msk [vmem:[%s548] sm:$0xff] %vm556, 0.0
        %560 = vst.msk [vmem:[%s548 + $0x8] sm:$0xff] %vm556, 0.0
        %vm561 = vcmask 519168
        %562 = vst.msk [vmem:[#allocation4] sm:$0xf] %vm561, 0
        %563 = vst.msk [vmem:[#allocation4 + $0x8] sm:$0xf] %vm561, 0
        %vm564 = vcmask 1044224
        %vm565 = vcmask 261124
        %vm566 = vmor %vm565, %vm564
        %567 = vst.msk [vmem:[#allocation4] sm:$0xff] %vm566, 0
        %568 = vst.msk [vmem:[#allocation4 + $0x8] sm:$0xff] %vm566, 0
        %vm569 = vcmask 3072
        %570 = vst.msk [vmem:[#allocation5] sm:$0xf] %vm569, 0
        %571 = vst.msk [vmem:[#allocation5 + $0x4] sm:$0xf] %vm569, 0
        %vm572 = vcmask 273672
        %573 = vst.msk [vmem:[#allocation5] sm:$0xf] %vm572, 0
        %574 = vst.msk [vmem:[#allocation5 + $0x4] sm:$0xf] %vm572, 0
      $region64: #{_decoder_forward_impl.6} parent=59 // pred_fallthru
        _
      %v575 = vld [vmem:[#allocation2] sm:$0xff]
      %v576 = vld [vmem:[#allocation2 + $0x8] sm:$0xff]
      %v577 = vpack.c.bf16 %v575, %v575
      %v578 = vpack.c.bf16 %v576, %v576
      %581 = vrot.lane.b32.xlu0 %v577, 64
      %v582 = vpop.permute.xlu0 %581
      %583 = vrot.lane.b32.xlu0 %v578, 64
      %v584 = vpop.permute.xlu0 %583
      %vm587 = vcmask 781824
      %588 = vst.msk [vmem:[#allocation4] sm:$0xf] %vm587, %v582
      %589 = vst.msk [vmem:[#allocation4 + $0x8] sm:$0xf] %vm587, %v584
      %v590 = vld [vmem:[%s508] sm:$0xf]
      %v591 = vld [vmem:[%s508 + $0x4] sm:$0xf]
      %v592 = vld [vmem:[%s508 + $0x8] sm:$0xf]
      %v593 = vld [vmem:[%s508 + $0xc] sm:$0xf]
      %p594 = scmp.lt.s32.totalorder %s26, 0
      %s595 = ssub.s32 0, %s26
      %s596 = scalar_select %p594, %s595, %s26
      %s597 = sdiv.u32.pop %s596, 6
      %s598 = srem.u32.pop %s596, 6
      %s599 = ssub.s32 0, %s598
      %s600 = scalar_select %p594, %s599, %s598
      %p601 = scmp.ne.s32.totalorder %s600, 0
      %p602 = scmp.lt.s32.totalorder %s600, 0
      %p603 = pnand %p602, %p601
      %p604 = pneg %p603
      %s605 = sadd.s32 %s600, 6
      %s606 = scalar_select %p604, %s605, %s600
      %p607 = scmp.eq.s32.totalorder %s606, 0
      // Predicated region
      $region65: #{_decoder_forward_impl.6} parent=59 // pred_check
        %p608 = pneg %p607
      $region66: #{_decoder_forward_impl.6} parent=59 // pred_check_branch
        %610 = sbr.rel (%p608) target = $region68
      $region67: #{_decoder_forward_impl.6} parent=59 // pred_region
        %v611 = vld [vmem:[#allocation4] sm:$0xf]
        %v612 = vld [vmem:[#allocation4 + $0x8] sm:$0xf]
        %v617 = vunpack.c.l.b16 %v590
        %v618 = vunpack.c.l.b16 %v591
        %v619 = vunpack.c.l.b16 %v592
        %v620 = vunpack.c.l.b16 %v593
        %v621 = vpack.c.b16 %v618, %v617
        %v622 = vpack.c.b16 %v620, %v619
        %623 = vrot.lane.b32.xlu0 %v621, 112
        %v624 = vpop.permute.xlu0 %623
        %625 = vrot.lane.b32.xlu0 %v622, 112
        %v626 = vpop.permute.xlu0 %625
        %v629 = vunpack.c.l.b16 %v611
        %v630 = vunpack.c.l.b16 %v612
        %v631 = vpack.c.b16 %v630, %v629
        %632 = vrot.lane.b32.xlu0 %v631, 65
        %v633 = vpop.permute.xlu0 %632
        %vm635 = vcmask 130048
        %v637 = vsel %vm635, %v624, 0
        %v640 = vsel %vm635, %v626, 0
        %642 = vmatpush.bf16.msra.mxu0 0
        %643 = vmatpush.bf16.msra.mxu0 0
        %644 = vmatpush.bf16.msra.mxu0 0
        %645 = vmatpush.bf16.msra.mxu0 0
        %646 = vmatpush.bf16.msra.mxu0 0
        %647 = vmatpush.bf16.msra.mxu0 0
        %648 = vmatpush.bf16.msra.mxu0 0
        %649 = vmatpush.bf16.msra.mxu0 %v633
        %650 = vmatmul.bf16.gmra.mxu0 %v637
        %v651 = vpop.f32.mrf.mxu0
        %v652 = vadd.f32 0.0, %v651
        %v653 = vpop.f32.mrf.mxu0
        %v654 = vadd.f32 0.0, %v653
        %655 = vmatmul.bf16.gmra.mxu0 %v640
        %v656 = vpop.f32.mrf.mxu0
        %v657 = vadd.f32 0.0, %v656
        %v658 = vpop.f32.mrf.mxu0
        %v659 = vadd.f32 0.0, %v658
        %660 = vdwg.mxu0
        %661 = vrot.lane.b32.xlu0 %v631, 66
        %v662 = vpop.permute.xlu0 %661
        %v665 = vsel %vm635, %v621, 0
        %v668 = vsel %vm635, %v622, 0
        %670 = vmatpush.bf16.msra.mxu0 0
        %671 = vmatpush.bf16.msra.mxu0 0
        %672 = vmatpush.bf16.msra.mxu0 0
        %673 = vmatpush.bf16.msra.mxu0 0
        %674 = vmatpush.bf16.msra.mxu0 0
        %675 = vmatpush.bf16.msra.mxu0 0
        %676 = vmatpush.bf16.msra.mxu0 0
        %677 = vmatpush.bf16.msra.mxu0 %v662
        %678 = vmatmul.bf16.gmra.mxu0 %v665
        %v679 = vpop.f32.mrf.mxu0
        %v680 = vadd.f32 %v652, %v679
        %v681 = vpop.f32.mrf.mxu0
        %v682 = vadd.f32 %v654, %v681
        %683 = vmatmul.bf16.gmra.mxu0 %v668
        %v684 = vpop.f32.mrf.mxu0
        %v685 = vadd.f32 %v657, %v684
        %v686 = vpop.f32.mrf.mxu0
        %v687 = vadd.f32 %v659, %v686
        %688 = vdwg.mxu0
        %689 = vrot.lane.b32.xlu0 %v621, 96
        %v690 = vpop.permute.xlu0 %689
        %691 = vrot.lane.b32.xlu0 %v622, 96
        %v692 = vpop.permute.xlu0 %691
        %693 = vrot.lane.b32.xlu0 %v631, 64
        %v694 = vpop.permute.xlu0 %693
        %v697 = vsel %vm635, %v690, 0
        %v700 = vsel %vm635, %v692, 0
        %702 = vmatpush.bf16.msra.mxu0 0
        %703 = vmatpush.bf16.msra.mxu0 0
        %704 = vmatpush.bf16.msra.mxu0 0
        %705 = vmatpush.bf16.msra.mxu0 0
        %706 = vmatpush.bf16.msra.mxu0 0
        %707 = vmatpush.bf16.msra.mxu0 0
        %708 = vmatpush.bf16.msra.mxu0 0
        %709 = vmatpush.bf16.msra.mxu0 %v694
        %710 = vmatmul.bf16.gmra.mxu0 %v697
        %v711 = vpop.f32.mrf.mxu0
        %v712 = vadd.f32 0.0, %v711
        %v713 = vpop.f32.mrf.mxu0
        %v714 = vadd.f32 0.0, %v713
        %715 = vmatmul.bf16.gmra.mxu0 %v700
        %v716 = vpop.f32.mrf.mxu0
        %v717 = vadd.f32 0.0, %v716
        %v718 = vpop.f32.mrf.mxu0
        %v719 = vadd.f32 0.0, %v718
        %720 = vdwg.mxu0
        %v721 = vadd.f32 %v680, %v712
        %v722 = vadd.f32 %v682, %v714
        %v723 = vadd.f32 %v685, %v717
        %v724 = vadd.f32 %v687, %v719
        %725 = vrot.lane.b32.xlu0 %v621, 80
        %v726 = vpop.permute.xlu0 %725
        %727 = vrot.lane.b32.xlu0 %v622, 80
        %v728 = vpop.permute.xlu0 %727
        %729 = vrot.lane.b32.xlu0 %v631, 63
        %v730 = vpop.permute.xlu0 %729
        %v733 = vsel %vm635, %v726, 0
        %v736 = vsel %vm635, %v728, 0
        %738 = vmatpush.bf16.msra.mxu0 0
        %739 = vmatpush.bf16.msra.mxu0 0
        %740 = vmatpush.bf16.msra.mxu0 0
        %741 = vmatpush.bf16.msra.mxu0 0
        %742 = vmatpush.bf16.msra.mxu0 0
        %743 = vmatpush.bf16.msra.mxu0 0
        %744 = vmatpush.bf16.msra.mxu0 0
        %745 = vmatpush.bf16.msra.mxu0 %v730
        %746 = vmatmul.bf16.gmra.mxu0 %v733
        %v747 = vpop.f32.mrf.mxu0
        %v748 = vadd.f32 0.0, %v747
        %v749 = vpop.f32.mrf.mxu0
        %v750 = vadd.f32 0.0, %v749
        %751 = vmatmul.bf16.gmra.mxu0 %v736
        %v752 = vpop.f32.mrf.mxu0
        %v753 = vadd.f32 0.0, %v752
        %v754 = vpop.f32.mrf.mxu0
        %v755 = vadd.f32 0.0, %v754
        %756 = vdwg.mxu0
        %v757 = vadd.f32 %v721, %v748
        %v758 = vadd.f32 %v722, %v750
        %v759 = vadd.f32 %v723, %v753
        %v760 = vadd.f32 %v724, %v755
        %761 = vrot.lane.b32.xlu0 %v621, 64
        %v762 = vpop.permute.xlu0 %761
        %763 = vrot.lane.b32.xlu0 %v622, 64
        %v764 = vpop.permute.xlu0 %763
        %765 = vrot.lane.b32.xlu0 %v631, 62
        %v766 = vpop.permute.xlu0 %765
        %v769 = vsel %vm635, %v762, 0
        %v772 = vsel %vm635, %v764, 0
        %774 = vmatpush.bf16.msra.mxu0 0
        %775 = vmatpush.bf16.msra.mxu0 0
        %776 = vmatpush.bf16.msra.mxu0 0
        %777 = vmatpush.bf16.msra.mxu0 0
        %778 = vmatpush.bf16.msra.mxu0 0
        %779 = vmatpush.bf16.msra.mxu0 0
        %780 = vmatpush.bf16.msra.mxu0 0
        %781 = vmatpush.bf16.msra.mxu0 %v766
        %782 = vmatmul.bf16.gmra.mxu0 %v769
        %v783 = vpop.f32.mrf.mxu0
        %v784 = vadd.f32 0.0, %v783
        %v785 = vpop.f32.mrf.mxu0
        %v786 = vadd.f32 0.0, %v785
        %787 = vmatmul.bf16.gmra.mxu0 %v772
        %v788 = vpop.f32.mrf.mxu0
        %v789 = vadd.f32 0.0, %v788
        %v790 = vpop.f32.mrf.mxu0
        %v791 = vadd.f32 0.0, %v790
        %792 = vdwg.mxu0
        %v793 = vadd.f32 %v757, %v784
        %v794 = vadd.f32 %v758, %v786
        %v795 = vadd.f32 %v759, %v789
        %v796 = vadd.f32 %v760, %v791
        %vm797 = vcmask 261120
        %798 = vst.msk [vmem:[#allocation3] sm:$0xff] %vm797, %v793
        %799 = vst.msk [vmem:[#allocation3 + $0x8] sm:$0xff] %vm797, %v794
        %800 = vst.msk [vmem:[#allocation3 + $0x10] sm:$0xff] %vm797, %v795
        %801 = vst.msk [vmem:[#allocation3 + $0x18] sm:$0xff] %vm797, %v796
      $region68: #{_decoder_forward_impl.6} parent=59 // pred_fallthru
        _
      %p802 = scmp.eq.s32.totalorder %s606, 1
      // Predicated region
      $region69: #{_decoder_forward_impl.6} parent=59 // pred_check
        %p803 = pneg %p802
      $region70: #{_decoder_forward_impl.6} parent=59 // pred_check_branch
        %805 = sbr.rel (%p803) target = $region72
      $region71: #{_decoder_forward_impl.6} parent=59 // pred_region
        %v806 = vld [vmem:[#allocation4] sm:$0xf]
        %v807 = vld [vmem:[#allocation4 + $0x8] sm:$0xf]
        %v812 = vunpack.c.l.b16 %v590
        %v813 = vunpack.c.l.b16 %v591
        %v814 = vunpack.c.l.b16 %v592
        %v815 = vunpack.c.l.b16 %v593
        %v816 = vpack.c.b16 %v813, %v812
        %v817 = vpack.c.b16 %v815, %v814
        %818 = vrot.lane.b32.xlu0 %v816, 112
        %v819 = vpop.permute.xlu0 %818
        %820 = vrot.lane.b32.xlu0 %v817, 112
        %v821 = vpop.permute.xlu0 %820
        %v824 = vunpack.c.l.b16 %v806
        %v825 = vunpack.c.l.b16 %v807
        %v826 = vpack.c.b16 %v825, %v824
        %827 = vrot.lane.b32.xlu0 %v826, 66
        %v828 = vpop.permute.xlu0 %827
        %vm830 = vcmask 130048
        %v832 = vsel %vm830, %v819, 0
        %v835 = vsel %vm830, %v821, 0
        %837 = vmatpush.bf16.msra.mxu0 0
        %838 = vmatpush.bf16.msra.mxu0 0
        %839 = vmatpush.bf16.msra.mxu0 0
        %840 = vmatpush.bf16.msra.mxu0 0
        %841 = vmatpush.bf16.msra.mxu0 0
        %842 = vmatpush.bf16.msra.mxu0 0
        %843 = vmatpush.bf16.msra.mxu0 0
        %844 = vmatpush.bf16.msra.mxu0 %v828
        %845 = vmatmul.bf16.gmra.mxu0 %v832
        %v846 = vpop.f32.mrf.mxu0
        %v847 = vadd.f32 0.0, %v846
        %v848 = vpop.f32.mrf.mxu0
        %v849 = vadd.f32 0.0, %v848
        %850 = vmatmul.bf16.gmra.mxu0 %v835
        %v851 = vpop.f32.mrf.mxu0
        %v852 = vadd.f32 0.0, %v851
        %v853 = vpop.f32.mrf.mxu0
        %v854 = vadd.f32 0.0, %v853
        %855 = vdwg.mxu0
        %856 = vrot.lane.b32.xlu0 %v826, 68
        %v857 = vpop.permute.xlu0 %856
        %v860 = vsel %vm830, %v816, 0
        %v863 = vsel %vm830, %v817, 0
        %865 = vmatpush.bf16.msra.mxu0 0
        %866 = vmatpush.bf16.msra.mxu0 0
        %867 = vmatpush.bf16.msra.mxu0 0
        %868 = vmatpush.bf16.msra.mxu0 0
        %869 = vmatpush.bf16.msra.mxu0 0
        %870 = vmatpush.bf16.msra.mxu0 0
        %871 = vmatpush.bf16.msra.mxu0 0
        %872 = vmatpush.bf16.msra.mxu0 %v857
        %873 = vmatmul.bf16.gmra.mxu0 %v860
        %v874 = vpop.f32.mrf.mxu0
        %v875 = vadd.f32 %v847, %v874
        %v876 = vpop.f32.mrf.mxu0
        %v877 = vadd.f32 %v849, %v876
        %878 = vmatmul.bf16.gmra.mxu0 %v863
        %v879 = vpop.f32.mrf.mxu0
        %v880 = vadd.f32 %v852, %v879
        %v881 = vpop.f32.mrf.mxu0
        %v882 = vadd.f32 %v854, %v881
        %883 = vdwg.mxu0
        %884 = vrot.lane.b32.xlu0 %v816, 96
        %v885 = vpop.permute.xlu0 %884
        %886 = vrot.lane.b32.xlu0 %v817, 96
        %v887 = vpop.permute.xlu0 %886
        %888 = vrot.lane.b32.xlu0 %v826, 64
        %v889 = vpop.permute.xlu0 %888
        %v892 = vsel %vm830, %v885, 0
        %v895 = vsel %vm830, %v887, 0
        %897 = vmatpush.bf16.msra.mxu0 0
        %898 = vmatpush.bf16.msra.mxu0 0
        %899 = vmatpush.bf16.msra.mxu0 0
        %900 = vmatpush.bf16.msra.mxu0 0
        %901 = vmatpush.bf16.msra.mxu0 0
        %902 = vmatpush.bf16.msra.mxu0 0
        %903 = vmatpush.bf16.msra.mxu0 0
        %904 = vmatpush.bf16.msra.mxu0 %v889
        %905 = vmatmul.bf16.gmra.mxu0 %v892
        %v906 = vpop.f32.mrf.mxu0
        %v907 = vadd.f32 0.0, %v906
        %v908 = vpop.f32.mrf.mxu0
        %v909 = vadd.f32 0.0, %v908
        %910 = vmatmul.bf16.gmra.mxu0 %v895
        %v911 = vpop.f32.mrf.mxu0
        %v912 = vadd.f32 0.0, %v911
        %v913 = vpop.f32.mrf.mxu0
        %v914 = vadd.f32 0.0, %v913
        %915 = vdwg.mxu0
        %v916 = vadd.f32 %v875, %v907
        %v917 = vadd.f32 %v877, %v909
        %v918 = vadd.f32 %v880, %v912
        %v919 = vadd.f32 %v882, %v914
        %920 = vrot.lane.b32.xlu0 %v816, 80
        %v921 = vpop.permute.xlu0 %920
        %922 = vrot.lane.b32.xlu0 %v817, 80
        %v923 = vpop.permute.xlu0 %922
        %924 = vrot.lane.b32.xlu0 %v826, 62
        %v925 = vpop.permute.xlu0 %924
        %v928 = vsel %vm830, %v921, 0
        %v931 = vsel %vm830, %v923, 0
        %933 = vmatpush.bf16.msra.mxu0 0
        %934 = vmatpush.bf16.msra.mxu0 0
        %935 = vmatpush.bf16.msra.mxu0 0
        %936 = vmatpush.bf16.msra.mxu0 0
        %937 = vmatpush.bf16.msra.mxu0 0
        %938 = vmatpush.bf16.msra.mxu0 0
        %939 = vmatpush.bf16.msra.mxu0 0
        %940 = vmatpush.bf16.msra.mxu0 %v925
        %941 = vmatmul.bf16.gmra.mxu0 %v928
        %v942 = vpop.f32.mrf.mxu0
        %v943 = vadd.f32 0.0, %v942
        %v944 = vpop.f32.mrf.mxu0
        %v945 = vadd.f32 0.0, %v944
        %946 = vmatmul.bf16.gmra.mxu0 %v931
        %v947 = vpop.f32.mrf.mxu0
        %v948 = vadd.f32 0.0, %v947
        %v949 = vpop.f32.mrf.mxu0
        %v950 = vadd.f32 0.0, %v949
        %951 = vdwg.mxu0
        %v952 = vadd.f32 %v916, %v943
        %v953 = vadd.f32 %v917, %v945
        %v954 = vadd.f32 %v918, %v948
        %v955 = vadd.f32 %v919, %v950
        %956 = vrot.lane.b32.xlu0 %v816, 64
        %v957 = vpop.permute.xlu0 %956
        %958 = vrot.lane.b32.xlu0 %v817, 64
        %v959 = vpop.permute.xlu0 %958
        %960 = vrot.lane.b32.xlu0 %v826, 60
        %v961 = vpop.permute.xlu0 %960
        %v964 = vsel %vm830, %v957, 0
        %v967 = vsel %vm830, %v959, 0
        %969 = vmatpush.bf16.msra.mxu0 0
        %970 = vmatpush.bf16.msra.mxu0 0
        %971 = vmatpush.bf16.msra.mxu0 0
        %972 = vmatpush.bf16.msra.mxu0 0
        %973 = vmatpush.bf16.msra.mxu0 0
        %974 = vmatpush.bf16.msra.mxu0 0
        %975 = vmatpush.bf16.msra.mxu0 0
        %976 = vmatpush.bf16.msra.mxu0 %v961
        %977 = vmatmul.bf16.gmra.mxu0 %v964
        %v978 = vpop.f32.mrf.mxu0
        %v979 = vadd.f32 0.0, %v978
        %v980 = vpop.f32.mrf.mxu0
        %v981 = vadd.f32 0.0, %v980
        %982 = vmatmul.bf16.gmra.mxu0 %v967
        %v983 = vpop.f32.mrf.mxu0
        %v984 = vadd.f32 0.0, %v983
        %v985 = vpop.f32.mrf.mxu0
        %v986 = vadd.f32 0.0, %v985
        %987 = vdwg.mxu0
        %v988 = vadd.f32 %v952, %v979
        %v989 = vadd.f32 %v953, %v981
        %v990 = vadd.f32 %v954, %v984
        %v991 = vadd.f32 %v955, %v986
        %vm992 = vcmask 261120
        %993 = vst.msk [vmem:[#allocation3] sm:$0xff] %vm992, %v988
        %994 = vst.msk [vmem:[#allocation3 + $0x8] sm:$0xff] %vm992, %v989
        %995 = vst.msk [vmem:[#allocation3 + $0x10] sm:$0xff] %vm992, %v990
        %996 = vst.msk [vmem:[#allocation3 + $0x18] sm:$0xff] %vm992, %v991
      $region72: #{_decoder_forward_impl.6} parent=59 // pred_fallthru
        _
      %p997 = scmp.eq.s32.totalorder %s606, 2
      // Predicated region
      $region73: #{_decoder_forward_impl.6} parent=59 // pred_check
        %p998 = pneg %p997
      $region74: #{_decoder_forward_impl.6} parent=59 // pred_check_branch
        %1000 = sbr.rel (%p998) target = $region76
      $region75: #{_decoder_forward_impl.6} parent=59 // pred_region
        %v1001 = vld [vmem:[#allocation4] sm:$0xf]
        %v1002 = vld [vmem:[#allocation4 + $0x8] sm:$0xf]
        %v1007 = vunpack.c.l.b16 %v590
        %v1008 = vunpack.c.l.b16 %v591
        %v1009 = vunpack.c.l.b16 %v592
        %v1010 = vunpack.c.l.b16 %v593
        %v1011 = vpack.c.b16 %v1008, %v1007
        %v1012 = vpack.c.b16 %v1010, %v1009
        %1013 = vrot.lane.b32.xlu0 %v1011, 112
        %v1014 = vpop.permute.xlu0 %1013
        %1015 = vrot.lane.b32.xlu0 %v1012, 112
        %v1016 = vpop.permute.xlu0 %1015
        %v1019 = vunpack.c.l.b16 %v1001
        %v1020 = vunpack.c.l.b16 %v1002
        %v1021 = vpack.c.b16 %v1020, %v1019
        %1022 = vrot.lane.b32.xlu0 %v1021, 68
        %v1023 = vpop.permute.xlu0 %1022
        %vm1025 = vcmask 130048
        %v1027 = vsel %vm1025, %v1014, 0
        %v1030 = vsel %vm1025, %v1016, 0
        %1032 = vmatpush.bf16.msra.mxu0 0
        %1033 = vmatpush.bf16.msra.mxu0 0
        %1034 = vmatpush.bf16.msra.mxu0 0
        %1035 = vmatpush.bf16.msra.mxu0 0
        %1036 = vmatpush.bf16.msra.mxu0 0
        %1037 = vmatpush.bf16.msra.mxu0 0
        %1038 = vmatpush.bf16.msra.mxu0 0
        %1039 = vmatpush.bf16.msra.mxu0 %v1023
        %1040 = vmatmul.bf16.gmra.mxu0 %v1027
        %v1041 = vpop.f32.mrf.mxu0
        %v1042 = vadd.f32 0.0, %v1041
        %v1043 = vpop.f32.mrf.mxu0
        %v1044 = vadd.f32 0.0, %v1043
        %1045 = vmatmul.bf16.gmra.mxu0 %v1030
        %v1046 = vpop.f32.mrf.mxu0
        %v1047 = vadd.f32 0.0, %v1046
        %v1048 = vpop.f32.mrf.mxu0
        %v1049 = vadd.f32 0.0, %v1048
        %1050 = vdwg.mxu0
        %1051 = vrot.lane.b32.xlu0 %v1021, 72
        %v1052 = vpop.permute.xlu0 %1051
        %v1055 = vsel %vm1025, %v1011, 0
        %v1058 = vsel %vm1025, %v1012, 0
        %1060 = vmatpush.bf16.msra.mxu0 0
        %1061 = vmatpush.bf16.msra.mxu0 0
        %1062 = vmatpush.bf16.msra.mxu0 0
        %1063 = vmatpush.bf16.msra.mxu0 0
        %1064 = vmatpush.bf16.msra.mxu0 0
        %1065 = vmatpush.bf16.msra.mxu0 0
        %1066 = vmatpush.bf16.msra.mxu0 0
        %1067 = vmatpush.bf16.msra.mxu0 %v1052
        %1068 = vmatmul.bf16.gmra.mxu0 %v1055
        %v1069 = vpop.f32.mrf.mxu0
        %v1070 = vadd.f32 %v1042, %v1069
        %v1071 = vpop.f32.mrf.mxu0
        %v1072 = vadd.f32 %v1044, %v1071
        %1073 = vmatmul.bf16.gmra.mxu0 %v1058
        %v1074 = vpop.f32.mrf.mxu0
        %v1075 = vadd.f32 %v1047, %v1074
        %v1076 = vpop.f32.mrf.mxu0
        %v1077 = vadd.f32 %v1049, %v1076
        %1078 = vdwg.mxu0
        %1079 = vrot.lane.b32.xlu0 %v1011, 96
        %v1080 = vpop.permute.xlu0 %1079
        %1081 = vrot.lane.b32.xlu0 %v1012, 96
        %v1082 = vpop.permute.xlu0 %1081
        %1083 = vrot.lane.b32.xlu0 %v1021, 64
        %v1084 = vpop.permute.xlu0 %1083
        %v1087 = vsel %vm1025, %v1080, 0
        %v1090 = vsel %vm1025, %v1082, 0
        %1092 = vmatpush.bf16.msra.mxu0 0
        %1093 = vmatpush.bf16.msra.mxu0 0
        %1094 = vmatpush.bf16.msra.mxu0 0
        %1095 = vmatpush.bf16.msra.mxu0 0
        %1096 = vmatpush.bf16.msra.mxu0 0
        %1097 = vmatpush.bf16.msra.mxu0 0
        %1098 = vmatpush.bf16.msra.mxu0 0
        %1099 = vmatpush.bf16.msra.mxu0 %v1084
        %1100 = vmatmul.bf16.gmra.mxu0 %v1087
        %v1101 = vpop.f32.mrf.mxu0
        %v1102 = vadd.f32 0.0, %v1101
        %v1103 = vpop.f32.mrf.mxu0
        %v1104 = vadd.f32 0.0, %v1103
        %1105 = vmatmul.bf16.gmra.mxu0 %v1090
        %v1106 = vpop.f32.mrf.mxu0
        %v1107 = vadd.f32 0.0, %v1106
        %v1108 = vpop.f32.mrf.mxu0
        %v1109 = vadd.f32 0.0, %v1108
        %1110 = vdwg.mxu0
        %v1111 = vadd.f32 %v1070, %v1102
        %v1112 = vadd.f32 %v1072, %v1104
        %v1113 = vadd.f32 %v1075, %v1107
        %v1114 = vadd.f32 %v1077, %v1109
        %1115 = vrot.lane.b32.xlu0 %v1011, 80
        %v1116 = vpop.permute.xlu0 %1115
        %1117 = vrot.lane.b32.xlu0 %v1012, 80
        %v1118 = vpop.permute.xlu0 %1117
        %1119 = vrot.lane.b32.xlu0 %v1021, 60
        %v1120 = vpop.permute.xlu0 %1119
        %v1123 = vsel %vm1025, %v1116, 0
        %v1126 = vsel %vm1025, %v1118, 0
        %1128 = vmatpush.bf16.msra.mxu0 0
        %1129 = vmatpush.bf16.msra.mxu0 0
        %1130 = vmatpush.bf16.msra.mxu0 0
        %1131 = vmatpush.bf16.msra.mxu0 0
        %1132 = vmatpush.bf16.msra.mxu0 0
        %1133 = vmatpush.bf16.msra.mxu0 0
        %1134 = vmatpush.bf16.msra.mxu0 0
        %1135 = vmatpush.bf16.msra.mxu0 %v1120
        %1136 = vmatmul.bf16.gmra.mxu0 %v1123
        %v1137 = vpop.f32.mrf.mxu0
        %v1138 = vadd.f32 0.0, %v1137
        %v1139 = vpop.f32.mrf.mxu0
        %v1140 = vadd.f32 0.0, %v1139
        %1141 = vmatmul.bf16.gmra.mxu0 %v1126
        %v1142 = vpop.f32.mrf.mxu0
        %v1143 = vadd.f32 0.0, %v1142
        %v1144 = vpop.f32.mrf.mxu0
        %v1145 = vadd.f32 0.0, %v1144
        %1146 = vdwg.mxu0
        %v1147 = vadd.f32 %v1111, %v1138
        %v1148 = vadd.f32 %v1112, %v1140
        %v1149 = vadd.f32 %v1113, %v1143
        %v1150 = vadd.f32 %v1114, %v1145
        %1151 = vrot.lane.b32.xlu0 %v1011, 64
        %v1152 = vpop.permute.xlu0 %1151
        %1153 = vrot.lane.b32.xlu0 %v1012, 64
        %v1154 = vpop.permute.xlu0 %1153
        %1155 = vrot.lane.b32.xlu0 %v1021, 56
        %v1156 = vpop.permute.xlu0 %1155
        %v1159 = vsel %vm1025, %v1152, 0
        %v1162 = vsel %vm1025, %v1154, 0
        %1164 = vmatpush.bf16.msra.mxu0 0
        %1165 = vmatpush.bf16.msra.mxu0 0
        %1166 = vmatpush.bf16.msra.mxu0 0
        %1167 = vmatpush.bf16.msra.mxu0 0
        %1168 = vmatpush.bf16.msra.mxu0 0
        %1169 = vmatpush.bf16.msra.mxu0 0
        %1170 = vmatpush.bf16.msra.mxu0 0
        %1171 = vmatpush.bf16.msra.mxu0 %v1156
        %1172 = vmatmul.bf16.gmra.mxu0 %v1159
        %v1173 = vpop.f32.mrf.mxu0
        %v1174 = vadd.f32 0.0, %v1173
        %v1175 = vpop.f32.mrf.mxu0
        %v1176 = vadd.f32 0.0, %v1175
        %1177 = vmatmul.bf16.gmra.mxu0 %v1162
        %v1178 = vpop.f32.mrf.mxu0
        %v1179 = vadd.f32 0.0, %v1178
        %v1180 = vpop.f32.mrf.mxu0
        %v1181 = vadd.f32 0.0, %v1180
        %1182 = vdwg.mxu0
        %v1183 = vadd.f32 %v1147, %v1174
        %v1184 = vadd.f32 %v1148, %v1176
        %v1185 = vadd.f32 %v1149, %v1179
        %v1186 = vadd.f32 %v1150, %v1181
        %vm1187 = vcmask 261120
        %1188 = vst.msk [vmem:[#allocation3] sm:$0xff] %vm1187, %v1183
        %1189 = vst.msk [vmem:[#allocation3 + $0x8] sm:$0xff] %vm1187, %v1184
        %1190 = vst.msk [vmem:[#allocation3 + $0x10] sm:$0xff] %vm1187, %v1185
        %1191 = vst.msk [vmem:[#allocation3 + $0x18] sm:$0xff] %vm1187, %v1186
      $region76: #{_decoder_forward_impl.6} parent=59 // pred_fallthru
        _
      %p1192 = scmp.eq.s32.totalorder %s606, 3
      // Predicated region
      $region77: #{_decoder_forward_impl.6} parent=59 // pred_check
        %p1193 = pneg %p1192
      $region78: #{_decoder_forward_impl.6} parent=59 // pred_check_branch
        %1195 = sbr.rel (%p1193) target = $region80
      $region79: #{_decoder_forward_impl.6} parent=59 // pred_region
        %v1196 = vld [vmem:[#allocation4] sm:$0xf]
        %v1197 = vld [vmem:[#allocation4 + $0x8] sm:$0xf]
        %v1202 = vunpack.c.l.b16 %v590
        %v1203 = vunpack.c.l.b16 %v591
        %v1204 = vunpack.c.l.b16 %v592
        %v1205 = vunpack.c.l.b16 %v593
        %v1206 = vpack.c.b16 %v1203, %v1202
        %v1207 = vpack.c.b16 %v1205, %v1204
        %1208 = vrot.lane.b32.xlu0 %v1206, 112
        %v1209 = vpop.permute.xlu0 %1208
        %1210 = vrot.lane.b32.xlu0 %v1207, 112
        %v1211 = vpop.permute.xlu0 %1210
        %v1214 = vunpack.c.l.b16 %v1196
        %v1215 = vunpack.c.l.b16 %v1197
        %v1216 = vpack.c.b16 %v1215, %v1214
        %1217 = vrot.lane.b32.xlu0 %v1216, 72
        %v1218 = vpop.permute.xlu0 %1217
        %vm1220 = vcmask 130048
        %v1222 = vsel %vm1220, %v1209, 0
        %v1225 = vsel %vm1220, %v1211, 0
        %1227 = vmatpush.bf16.msra.mxu0 0
        %1228 = vmatpush.bf16.msra.mxu0 0
        %1229 = vmatpush.bf16.msra.mxu0 0
        %1230 = vmatpush.bf16.msra.mxu0 0
        %1231 = vmatpush.bf16.msra.mxu0 0
        %1232 = vmatpush.bf16.msra.mxu0 0
        %1233 = vmatpush.bf16.msra.mxu0 0
        %1234 = vmatpush.bf16.msra.mxu0 %v1218
        %1235 = vmatmul.bf16.gmra.mxu0 %v1222
        %v1236 = vpop.f32.mrf.mxu0
        %v1237 = vadd.f32 0.0, %v1236
        %v1238 = vpop.f32.mrf.mxu0
        %v1239 = vadd.f32 0.0, %v1238
        %1240 = vmatmul.bf16.gmra.mxu0 %v1225
        %v1241 = vpop.f32.mrf.mxu0
        %v1242 = vadd.f32 0.0, %v1241
        %v1243 = vpop.f32.mrf.mxu0
        %v1244 = vadd.f32 0.0, %v1243
        %1245 = vdwg.mxu0
        %1246 = vrot.lane.b32.xlu0 %v1216, 80
        %v1247 = vpop.permute.xlu0 %1246
        %v1250 = vsel %vm1220, %v1206, 0
        %v1253 = vsel %vm1220, %v1207, 0
        %1255 = vmatpush.bf16.msra.mxu0 0
        %1256 = vmatpush.bf16.msra.mxu0 0
        %1257 = vmatpush.bf16.msra.mxu0 0
        %1258 = vmatpush.bf16.msra.mxu0 0
        %1259 = vmatpush.bf16.msra.mxu0 0
        %1260 = vmatpush.bf16.msra.mxu0 0
        %1261 = vmatpush.bf16.msra.mxu0 0
        %1262 = vmatpush.bf16.msra.mxu0 %v1247
        %1263 = vmatmul.bf16.gmra.mxu0 %v1250
        %v1264 = vpop.f32.mrf.mxu0
        %v1265 = vadd.f32 %v1237, %v1264
        %v1266 = vpop.f32.mrf.mxu0
        %v1267 = vadd.f32 %v1239, %v1266
        %1268 = vmatmul.bf16.gmra.mxu0 %v1253
        %v1269 = vpop.f32.mrf.mxu0
        %v1270 = vadd.f32 %v1242, %v1269
        %v1271 = vpop.f32.mrf.mxu0
        %v1272 = vadd.f32 %v1244, %v1271
        %1273 = vdwg.mxu0
        %1274 = vrot.lane.b32.xlu0 %v1206, 96
        %v1275 = vpop.permute.xlu0 %1274
        %1276 = vrot.lane.b32.xlu0 %v1207, 96
        %v1277 = vpop.permute.xlu0 %1276
        %1278 = vrot.lane.b32.xlu0 %v1216, 64
        %v1279 = vpop.permute.xlu0 %1278
        %v1282 = vsel %vm1220, %v1275, 0
        %v1285 = vsel %vm1220, %v1277, 0
        %1287 = vmatpush.bf16.msra.mxu0 0
        %1288 = vmatpush.bf16.msra.mxu0 0
        %1289 = vmatpush.bf16.msra.mxu0 0
        %1290 = vmatpush.bf16.msra.mxu0 0
        %1291 = vmatpush.bf16.msra.mxu0 0
        %1292 = vmatpush.bf16.msra.mxu0 0
        %1293 = vmatpush.bf16.msra.mxu0 0
        %1294 = vmatpush.bf16.msra.mxu0 %v1279
        %1295 = vmatmul.bf16.gmra.mxu0 %v1282
        %v1296 = vpop.f32.mrf.mxu0
        %v1297 = vadd.f32 0.0, %v1296
        %v1298 = vpop.f32.mrf.mxu0
        %v1299 = vadd.f32 0.0, %v1298
        %1300 = vmatmul.bf16.gmra.mxu0 %v1285
        %v1301 = vpop.f32.mrf.mxu0
        %v1302 = vadd.f32 0.0, %v1301
        %v1303 = vpop.f32.mrf.mxu0
        %v1304 = vadd.f32 0.0, %v1303
        %1305 = vdwg.mxu0
        %v1306 = vadd.f32 %v1265, %v1297
        %v1307 = vadd.f32 %v1267, %v1299
        %v1308 = vadd.f32 %v1270, %v1302
        %v1309 = vadd.f32 %v1272, %v1304
        %1310 = vrot.lane.b32.xlu0 %v1206, 80
        %v1311 = vpop.permute.xlu0 %1310
        %1312 = vrot.lane.b32.xlu0 %v1207, 80
        %v1313 = vpop.permute.xlu0 %1312
        %1314 = vrot.lane.b32.xlu0 %v1216, 56
        %v1315 = vpop.permute.xlu0 %1314
        %v1318 = vsel %vm1220, %v1311, 0
        %v1321 = vsel %vm1220, %v1313, 0
        %1323 = vmatpush.bf16.msra.mxu0 0
        %1324 = vmatpush.bf16.msra.mxu0 0
        %1325 = vmatpush.bf16.msra.mxu0 0
        %1326 = vmatpush.bf16.msra.mxu0 0
        %1327 = vmatpush.bf16.msra.mxu0 0
        %1328 = vmatpush.bf16.msra.mxu0 0
        %1329 = vmatpush.bf16.msra.mxu0 0
        %1330 = vmatpush.bf16.msra.mxu0 %v1315
        %1331 = vmatmul.bf16.gmra.mxu0 %v1318
        %v1332 = vpop.f32.mrf.mxu0
        %v1333 = vadd.f32 0.0, %v1332
        %v1334 = vpop.f32.mrf.mxu0
        %v1335 = vadd.f32 0.0, %v1334
        %1336 = vmatmul.bf16.gmra.mxu0 %v1321
        %v1337 = vpop.f32.mrf.mxu0
        %v1338 = vadd.f32 0.0, %v1337
        %v1339 = vpop.f32.mrf.mxu0
        %v1340 = vadd.f32 0.0, %v1339
        %1341 = vdwg.mxu0
        %v1342 = vadd.f32 %v1306, %v1333
        %v1343 = vadd.f32 %v1307, %v1335
        %v1344 = vadd.f32 %v1308, %v1338
        %v1345 = vadd.f32 %v1309, %v1340
        %1346 = vrot.lane.b32.xlu0 %v1206, 64
        %v1347 = vpop.permute.xlu0 %1346
        %1348 = vrot.lane.b32.xlu0 %v1207, 64
        %v1349 = vpop.permute.xlu0 %1348
        %1350 = vrot.lane.b32.xlu0 %v1216, 48
        %v1351 = vpop.permute.xlu0 %1350
        %v1354 = vsel %vm1220, %v1347, 0
        %v1357 = vsel %vm1220, %v1349, 0
        %1359 = vmatpush.bf16.msra.mxu0 0
        %1360 = vmatpush.bf16.msra.mxu0 0
        %1361 = vmatpush.bf16.msra.mxu0 0
        %1362 = vmatpush.bf16.msra.mxu0 0
        %1363 = vmatpush.bf16.msra.mxu0 0
        %1364 = vmatpush.bf16.msra.mxu0 0
        %1365 = vmatpush.bf16.msra.mxu0 0
        %1366 = vmatpush.bf16.msra.mxu0 %v1351
        %1367 = vmatmul.bf16.gmra.mxu0 %v1354
        %v1368 = vpop.f32.mrf.mxu0
        %v1369 = vadd.f32 0.0, %v1368
        %v1370 = vpop.f32.mrf.mxu0
        %v1371 = vadd.f32 0.0, %v1370
        %1372 = vmatmul.bf16.gmra.mxu0 %v1357
        %v1373 = vpop.f32.mrf.mxu0
        %v1374 = vadd.f32 0.0, %v1373
        %v1375 = vpop.f32.mrf.mxu0
        %v1376 = vadd.f32 0.0, %v1375
        %1377 = vdwg.mxu0
        %v1378 = vadd.f32 %v1342, %v1369
        %v1379 = vadd.f32 %v1343, %v1371
        %v1380 = vadd.f32 %v1344, %v1374
        %v1381 = vadd.f32 %v1345, %v1376
        %vm1382 = vcmask 261120
        %1383 = vst.msk [vmem:[#allocation3] sm:$0xff] %vm1382, %v1378
        %1384 = vst.msk [vmem:[#allocation3 + $0x8] sm:$0xff] %vm1382, %v1379
        %1385 = vst.msk [vmem:[#allocation3 + $0x10] sm:$0xff] %vm1382, %v1380
        %1386 = vst.msk [vmem:[#allocation3 + $0x18] sm:$0xff] %vm1382, %v1381
      $region80: #{_decoder_forward_impl.6} parent=59 // pred_fallthru
        _
      %p1387 = scmp.eq.s32.totalorder %s606, 4
      // Predicated region
      $region81: #{_decoder_forward_impl.6} parent=59 // pred_check
        %p1388 = pneg %p1387
      $region82: #{_decoder_forward_impl.6} parent=59 // pred_check_branch
        %1390 = sbr.rel (%p1388) target = $region84
      $region83: #{_decoder_forward_impl.6} parent=59 // pred_region
        %v1391 = vld [vmem:[#allocation4] sm:$0xf]
        %v1392 = vld [vmem:[#allocation4 + $0x8] sm:$0xf]
        %v1397 = vunpack.c.l.b16 %v590
        %v1398 = vunpack.c.l.b16 %v591
        %v1399 = vunpack.c.l.b16 %v592
        %v1400 = vunpack.c.l.b16 %v593
        %v1401 = vpack.c.b16 %v1398, %v1397
        %v1402 = vpack.c.b16 %v1400, %v1399
        %1403 = vrot.lane.b32.xlu0 %v1401, 112
        %v1404 = vpop.permute.xlu0 %1403
        %1405 = vrot.lane.b32.xlu0 %v1402, 112
        %v1406 = vpop.permute.xlu0 %1405
        %v1409 = vunpack.c.l.b16 %v1391
        %v1410 = vunpack.c.l.b16 %v1392
        %v1411 = vpack.c.b16 %v1410, %v1409
        %1412 = vrot.lane.b32.xlu0 %v1411, 80
        %v1413 = vpop.permute.xlu0 %1412
        %vm1415 = vcmask 130048
        %v1417 = vsel %vm1415, %v1404, 0
        %v1420 = vsel %vm1415, %v1406, 0
        %1422 = vmatpush.bf16.msra.mxu0 0
        %1423 = vmatpush.bf16.msra.mxu0 0
        %1424 = vmatpush.bf16.msra.mxu0 0
        %1425 = vmatpush.bf16.msra.mxu0 0
        %1426 = vmatpush.bf16.msra.mxu0 0
        %1427 = vmatpush.bf16.msra.mxu0 0
        %1428 = vmatpush.bf16.msra.mxu0 0
        %1429 = vmatpush.bf16.msra.mxu0 %v1413
        %1430 = vmatmul.bf16.gmra.mxu0 %v1417
        %v1431 = vpop.f32.mrf.mxu0
        %v1432 = vadd.f32 0.0, %v1431
        %v1433 = vpop.f32.mrf.mxu0
        %v1434 = vadd.f32 0.0, %v1433
        %1435 = vmatmul.bf16.gmra.mxu0 %v1420
        %v1436 = vpop.f32.mrf.mxu0
        %v1437 = vadd.f32 0.0, %v1436
        %v1438 = vpop.f32.mrf.mxu0
        %v1439 = vadd.f32 0.0, %v1438
        %1440 = vdwg.mxu0
        %1441 = vrot.lane.b32.xlu0 %v1411, 96
        %v1442 = vpop.permute.xlu0 %1441
        %v1445 = vsel %vm1415, %v1401, 0
        %v1448 = vsel %vm1415, %v1402, 0
        %1450 = vmatpush.bf16.msra.mxu0 0
        %1451 = vmatpush.bf16.msra.mxu0 0
        %1452 = vmatpush.bf16.msra.mxu0 0
        %1453 = vmatpush.bf16.msra.mxu0 0
        %1454 = vmatpush.bf16.msra.mxu0 0
        %1455 = vmatpush.bf16.msra.mxu0 0
        %1456 = vmatpush.bf16.msra.mxu0 0
        %1457 = vmatpush.bf16.msra.mxu0 %v1442
        %1458 = vmatmul.bf16.gmra.mxu0 %v1445
        %v1459 = vpop.f32.mrf.mxu0
        %v1460 = vadd.f32 %v1432, %v1459
        %v1461 = vpop.f32.mrf.mxu0
        %v1462 = vadd.f32 %v1434, %v1461
        %1463 = vmatmul.bf16.gmra.mxu0 %v1448
        %v1464 = vpop.f32.mrf.mxu0
        %v1465 = vadd.f32 %v1437, %v1464
        %v1466 = vpop.f32.mrf.mxu0
        %v1467 = vadd.f32 %v1439, %v1466
        %1468 = vdwg.mxu0
        %1469 = vrot.lane.b32.xlu0 %v1401, 96
        %v1470 = vpop.permute.xlu0 %1469
        %1471 = vrot.lane.b32.xlu0 %v1402, 96
        %v1472 = vpop.permute.xlu0 %1471
        %1473 = vrot.lane.b32.xlu0 %v1411, 64
        %v1474 = vpop.permute.xlu0 %1473
        %v1477 = vsel %vm1415, %v1470, 0
        %v1480 = vsel %vm1415, %v1472, 0
        %1482 = vmatpush.bf16.msra.mxu0 0
        %1483 = vmatpush.bf16.msra.mxu0 0
        %1484 = vmatpush.bf16.msra.mxu0 0
        %1485 = vmatpush.bf16.msra.mxu0 0
        %1486 = vmatpush.bf16.msra.mxu0 0
        %1487 = vmatpush.bf16.msra.mxu0 0
        %1488 = vmatpush.bf16.msra.mxu0 0
        %1489 = vmatpush.bf16.msra.mxu0 %v1474
        %1490 = vmatmul.bf16.gmra.mxu0 %v1477
        %v1491 = vpop.f32.mrf.mxu0
        %v1492 = vadd.f32 0.0, %v1491
        %v1493 = vpop.f32.mrf.mxu0
        %v1494 = vadd.f32 0.0, %v1493
        %1495 = vmatmul.bf16.gmra.mxu0 %v1480
        %v1496 = vpop.f32.mrf.mxu0
        %v1497 = vadd.f32 0.0, %v1496
        %v1498 = vpop.f32.mrf.mxu0
        %v1499 = vadd.f32 0.0, %v1498
        %1500 = vdwg.mxu0
        %v1501 = vadd.f32 %v1460, %v1492
        %v1502 = vadd.f32 %v1462, %v1494
        %v1503 = vadd.f32 %v1465, %v1497
        %v1504 = vadd.f32 %v1467, %v1499
        %1505 = vrot.lane.b32.xlu0 %v1401, 80
        %v1506 = vpop.permute.xlu0 %1505
        %1507 = vrot.lane.b32.xlu0 %v1402, 80
        %v1508 = vpop.permute.xlu0 %1507
        %1509 = vrot.lane.b32.xlu0 %v1411, 48
        %v1510 = vpop.permute.xlu0 %1509
        %v1513 = vsel %vm1415, %v1506, 0
        %v1516 = vsel %vm1415, %v1508, 0
        %1518 = vmatpush.bf16.msra.mxu0 0
        %1519 = vmatpush.bf16.msra.mxu0 0
        %1520 = vmatpush.bf16.msra.mxu0 0
        %1521 = vmatpush.bf16.msra.mxu0 0
        %1522 = vmatpush.bf16.msra.mxu0 0
        %1523 = vmatpush.bf16.msra.mxu0 0
        %1524 = vmatpush.bf16.msra.mxu0 0
        %1525 = vmatpush.bf16.msra.mxu0 %v1510
        %1526 = vmatmul.bf16.gmra.mxu0 %v1513
        %v1527 = vpop.f32.mrf.mxu0
        %v1528 = vadd.f32 0.0, %v1527
        %v1529 = vpop.f32.mrf.mxu0
        %v1530 = vadd.f32 0.0, %v1529
        %1531 = vmatmul.bf16.gmra.mxu0 %v1516
        %v1532 = vpop.f32.mrf.mxu0
        %v1533 = vadd.f32 0.0, %v1532
        %v1534 = vpop.f32.mrf.mxu0
        %v1535 = vadd.f32 0.0, %v1534
        %1536 = vdwg.mxu0
        %v1537 = vadd.f32 %v1501, %v1528
        %v1538 = vadd.f32 %v1502, %v1530
        %v1539 = vadd.f32 %v1503, %v1533
        %v1540 = vadd.f32 %v1504, %v1535
        %1541 = vrot.lane.b32.xlu0 %v1401, 64
        %v1542 = vpop.permute.xlu0 %1541
        %1543 = vrot.lane.b32.xlu0 %v1402, 64
        %v1544 = vpop.permute.xlu0 %1543
        %1545 = vrot.lane.b32.xlu0 %v1411, 32
        %v1546 = vpop.permute.xlu0 %1545
        %v1549 = vsel %vm1415, %v1542, 0
        %v1552 = vsel %vm1415, %v1544, 0
        %1554 = vmatpush.bf16.msra.mxu0 0
        %1555 = vmatpush.bf16.msra.mxu0 0
        %1556 = vmatpush.bf16.msra.mxu0 0
        %1557 = vmatpush.bf16.msra.mxu0 0
        %1558 = vmatpush.bf16.msra.mxu0 0
        %1559 = vmatpush.bf16.msra.mxu0 0
        %1560 = vmatpush.bf16.msra.mxu0 0
        %1561 = vmatpush.bf16.msra.mxu0 %v1546
        %1562 = vmatmul.bf16.gmra.mxu0 %v1549
        %v1563 = vpop.f32.mrf.mxu0
        %v1564 = vadd.f32 0.0, %v1563
        %v1565 = vpop.f32.mrf.mxu0
        %v1566 = vadd.f32 0.0, %v1565
        %1567 = vmatmul.bf16.gmra.mxu0 %v1552
        %v1568 = vpop.f32.mrf.mxu0
        %v1569 = vadd.f32 0.0, %v1568
        %v1570 = vpop.f32.mrf.mxu0
        %v1571 = vadd.f32 0.0, %v1570
        %1572 = vdwg.mxu0
        %v1573 = vadd.f32 %v1537, %v1564
        %v1574 = vadd.f32 %v1538, %v1566
        %v1575 = vadd.f32 %v1539, %v1569
        %v1576 = vadd.f32 %v1540, %v1571
        %vm1577 = vcmask 261120
        %1578 = vst.msk [vmem:[#allocation3] sm:$0xff] %vm1577, %v1573
        %1579 = vst.msk [vmem:[#allocation3 + $0x8] sm:$0xff] %vm1577, %v1574
        %1580 = vst.msk [vmem:[#allocation3 + $0x10] sm:$0xff] %vm1577, %v1575
        %1581 = vst.msk [vmem:[#allocation3 + $0x18] sm:$0xff] %vm1577, %v1576
      $region84: #{_decoder_forward_impl.6} parent=59 // pred_fallthru
        _
      %p1582 = scmp.eq.s32.totalorder %s606, 5
      // Predicated region
      $region85: #{_decoder_forward_impl.6} parent=59 // pred_check
        %p1583 = pneg %p1582
      $region86: #{_decoder_forward_impl.6} parent=59 // pred_check_branch
        %1585 = sbr.rel (%p1583) target = $region88
      $region87: #{_decoder_forward_impl.6} parent=59 // pred_region
        %v1586 = vld [vmem:[#allocation4] sm:$0xf]
        %v1587 = vld [vmem:[#allocation4 + $0x8] sm:$0xf]
        %v1592 = vunpack.c.l.b16 %v590
        %v1593 = vunpack.c.l.b16 %v591
        %v1594 = vunpack.c.l.b16 %v592
        %v1595 = vunpack.c.l.b16 %v593
        %v1596 = vpack.c.b16 %v1593, %v1592
        %v1597 = vpack.c.b16 %v1595, %v1594
        %1598 = vrot.lane.b32.xlu0 %v1596, 112
        %v1599 = vpop.permute.xlu0 %1598
        %1600 = vrot.lane.b32.xlu0 %v1597, 112
        %v1601 = vpop.permute.xlu0 %1600
        %v1604 = vunpack.c.l.b16 %v1586
        %v1605 = vunpack.c.l.b16 %v1587
        %v1606 = vpack.c.b16 %v1605, %v1604
        %1607 = vrot.lane.b32.xlu0 %v1606, 96
        %v1608 = vpop.permute.xlu0 %1607
        %vm1610 = vcmask 130048
        %v1612 = vsel %vm1610, %v1599, 0
        %v1615 = vsel %vm1610, %v1601, 0
        %1617 = vmatpush.bf16.msra.mxu0 0
        %1618 = vmatpush.bf16.msra.mxu0 0
        %1619 = vmatpush.bf16.msra.mxu0 0
        %1620 = vmatpush.bf16.msra.mxu0 0
        %1621 = vmatpush.bf16.msra.mxu0 0
        %1622 = vmatpush.bf16.msra.mxu0 0
        %1623 = vmatpush.bf16.msra.mxu0 0
        %1624 = vmatpush.bf16.msra.mxu0 %v1608
        %1625 = vmatmul.bf16.gmra.mxu0 %v1612
        %v1626 = vpop.f32.mrf.mxu0
        %v1627 = vadd.f32 0.0, %v1626
        %v1628 = vpop.f32.mrf.mxu0
        %v1629 = vadd.f32 0.0, %v1628
        %1630 = vmatmul.bf16.gmra.mxu0 %v1615
        %v1631 = vpop.f32.mrf.mxu0
        %v1632 = vadd.f32 0.0, %v1631
        %v1633 = vpop.f32.mrf.mxu0
        %v1634 = vadd.f32 0.0, %v1633
        %1635 = vdwg.mxu0
        %v1638 = vsel %vm1610, %v1596, 0
        %v1641 = vsel %vm1610, %v1597, 0
        %1643 = vmatpush.bf16.msra.mxu0 0
        %1644 = vmatpush.bf16.msra.mxu0 0
        %1645 = vmatpush.bf16.msra.mxu0 0
        %1646 = vmatpush.bf16.msra.mxu0 0
        %1647 = vmatpush.bf16.msra.mxu0 0
        %1648 = vmatpush.bf16.msra.mxu0 0
        %1649 = vmatpush.bf16.msra.mxu0 0
        %1650 = vmatpush.bf16.msra.mxu0 %v1606
        %1651 = vmatmul.bf16.gmra.mxu0 %v1638
        %v1652 = vpop.f32.mrf.mxu0
        %v1653 = vadd.f32 %v1627, %v1652
        %v1654 = vpop.f32.mrf.mxu0
        %v1655 = vadd.f32 %v1629, %v1654
        %1656 = vmatmul.bf16.gmra.mxu0 %v1641
        %v1657 = vpop.f32.mrf.mxu0
        %v1658 = vadd.f32 %v1632, %v1657
        %v1659 = vpop.f32.mrf.mxu0
        %v1660 = vadd.f32 %v1634, %v1659
        %1661 = vdwg.mxu0
        %1662 = vrot.lane.b32.xlu0 %v1596, 96
        %v1663 = vpop.permute.xlu0 %1662
        %1664 = vrot.lane.b32.xlu0 %v1597, 96
        %v1665 = vpop.permute.xlu0 %1664
        %1666 = vrot.lane.b32.xlu0 %v1606, 64
        %v1667 = vpop.permute.xlu0 %1666
        %v1670 = vsel %vm1610, %v1663, 0
        %v1673 = vsel %vm1610, %v1665, 0
        %1675 = vmatpush.bf16.msra.mxu0 0
        %1676 = vmatpush.bf16.msra.mxu0 0
        %1677 = vmatpush.bf16.msra.mxu0 0
        %1678 = vmatpush.bf16.msra.mxu0 0
        %1679 = vmatpush.bf16.msra.mxu0 0
        %1680 = vmatpush.bf16.msra.mxu0 0
        %1681 = vmatpush.bf16.msra.mxu0 0
        %1682 = vmatpush.bf16.msra.mxu0 %v1667
        %1683 = vmatmul.bf16.gmra.mxu0 %v1670
        %v1684 = vpop.f32.mrf.mxu0
        %v1685 = vadd.f32 0.0, %v1684
        %v1686 = vpop.f32.mrf.mxu0
        %v1687 = vadd.f32 0.0, %v1686
        %1688 = vmatmul.bf16.gmra.mxu0 %v1673
        %v1689 = vpop.f32.mrf.mxu0
        %v1690 = vadd.f32 0.0, %v1689
        %v1691 = vpop.f32.mrf.mxu0
        %v1692 = vadd.f32 0.0, %v1691
        %1693 = vdwg.mxu0
        %v1694 = vadd.f32 %v1653, %v1685
        %v1695 = vadd.f32 %v1655, %v1687
        %v1696 = vadd.f32 %v1658, %v1690
        %v1697 = vadd.f32 %v1660, %v1692
        %1698 = vrot.lane.b32.xlu0 %v1596, 80
        %v1699 = vpop.permute.xlu0 %1698
        %1700 = vrot.lane.b32.xlu0 %v1597, 80
        %v1701 = vpop.permute.xlu0 %1700
        %1702 = vrot.lane.b32.xlu0 %v1606, 32
        %v1703 = vpop.permute.xlu0 %1702
        %v1706 = vsel %vm1610, %v1699, 0
        %v1709 = vsel %vm1610, %v1701, 0
        %1711 = vmatpush.bf16.msra.mxu0 0
        %1712 = vmatpush.bf16.msra.mxu0 0
        %1713 = vmatpush.bf16.msra.mxu0 0
        %1714 = vmatpush.bf16.msra.mxu0 0
        %1715 = vmatpush.bf16.msra.mxu0 0
        %1716 = vmatpush.bf16.msra.mxu0 0
        %1717 = vmatpush.bf16.msra.mxu0 0
        %1718 = vmatpush.bf16.msra.mxu0 %v1703
        %1719 = vmatmul.bf16.gmra.mxu0 %v1706
        %v1720 = vpop.f32.mrf.mxu0
        %v1721 = vadd.f32 0.0, %v1720
        %v1722 = vpop.f32.mrf.mxu0
        %v1723 = vadd.f32 0.0, %v1722
        %1724 = vmatmul.bf16.gmra.mxu0 %v1709
        %v1725 = vpop.f32.mrf.mxu0
        %v1726 = vadd.f32 0.0, %v1725
        %v1727 = vpop.f32.mrf.mxu0
        %v1728 = vadd.f32 0.0, %v1727
        %1729 = vdwg.mxu0
        %v1730 = vadd.f32 %v1694, %v1721
        %v1731 = vadd.f32 %v1695, %v1723
        %v1732 = vadd.f32 %v1696, %v1726
        %v1733 = vadd.f32 %v1697, %v1728
        %v1734 = vld [vmem:[#allocation4 + $0x4] sm:$0xf]
        %v1735 = vld [vmem:[#allocation4 + $0xc] sm:$0xf]
        %1736 = vrot.lane.b32.xlu0 %v1596, 64
        %v1737 = vpop.permute.xlu0 %1736
        %1738 = vrot.lane.b32.xlu0 %v1597, 64
        %v1739 = vpop.permute.xlu0 %1738
        %v1742 = vunpack.c.l.b16 %v1734
        %v1743 = vunpack.c.l.b16 %v1735
        %v1744 = vpack.c.b16 %v1743, %v1742
        %v1747 = vsel %vm1610, %v1737, 0
        %v1750 = vsel %vm1610, %v1739, 0
        %1752 = vmatpush.bf16.msra.mxu0 0
        %1753 = vmatpush.bf16.msra.mxu0 0
        %1754 = vmatpush.bf16.msra.mxu0 0
        %1755 = vmatpush.bf16.msra.mxu0 0
        %1756 = vmatpush.bf16.msra.mxu0 0
        %1757 = vmatpush.bf16.msra.mxu0 0
        %1758 = vmatpush.bf16.msra.mxu0 0
        %1759 = vmatpush.bf16.msra.mxu0 %v1744
        %1760 = vmatmul.bf16.gmra.mxu0 %v1747
        %v1761 = vpop.f32.mrf.mxu0
        %v1762 = vadd.f32 0.0, %v1761
        %v1763 = vpop.f32.mrf.mxu0
        %v1764 = vadd.f32 0.0, %v1763
        %1765 = vmatmul.bf16.gmra.mxu0 %v1750
        %v1766 = vpop.f32.mrf.mxu0
        %v1767 = vadd.f32 0.0, %v1766
        %v1768 = vpop.f32.mrf.mxu0
        %v1769 = vadd.f32 0.0, %v1768
        %1770 = vdwg.mxu0
        %v1771 = vadd.f32 %v1730, %v1762
        %v1772 = vadd.f32 %v1731, %v1764
        %v1773 = vadd.f32 %v1732, %v1767
        %v1774 = vadd.f32 %v1733, %v1769
        %vm1775 = vcmask 261120
        %1776 = vst.msk [vmem:[#allocation3] sm:$0xff] %vm1775, %v1771
        %1777 = vst.msk [vmem:[#allocation3 + $0x8] sm:$0xff] %vm1775, %v1772
        %1778 = vst.msk [vmem:[#allocation3 + $0x10] sm:$0xff] %vm1775, %v1773
        %1779 = vst.msk [vmem:[#allocation3 + $0x18] sm:$0xff] %vm1775, %v1774
      $region88: #{_decoder_forward_impl.6} parent=59 // pred_fallthru
        _
      %v1780 = vld [vmem:[#allocation3] sm:$0xff]
      %v1781 = vld [vmem:[#allocation3 + $0x8] sm:$0xff]
      %v1782 = vld [vmem:[#allocation3 + $0x10] sm:$0xff]
      %v1783 = vld [vmem:[#allocation3 + $0x18] sm:$0xff]
      %v1784 = vld [vmem:[%s513] sm:$0xff]
      %v1785 = vld [vmem:[%s513 + $0x8] sm:$0xff]
      %v1786 = vld [vmem:[%s513 + $0x10] sm:$0xff]
      %v1787 = vld [vmem:[%s513 + $0x18] sm:$0xff]
      %1789 = vset.pattern.permute.xlu0 0
      %1790 = vperm.xlu0 %1789, %v1784
      %v1791 = vpop.permute.xlu0 %1790
      %1794 = vset.pattern.permute.xlu0 0
      %1795 = vperm.xlu0 %1794, %v1785
      %v1796 = vpop.permute.xlu0 %1795
      %1799 = vset.pattern.permute.xlu0 0
      %1800 = vperm.xlu0 %1799, %v1786
      %v1801 = vpop.permute.xlu0 %1800
      %1804 = vset.pattern.permute.xlu0 0
      %1805 = vperm.xlu0 %1804, %v1787
      %v1806 = vpop.permute.xlu0 %1805
      %v1808 = vadd.f32 %v1780, %v1791
      %v1809 = vadd.f32 %v1781, %v1796
      %v1810 = vadd.f32 %v1782, %v1801
      %v1811 = vadd.f32 %v1783, %v1806
      %vm1812 = vcmask 261120
      %v1813 = vsel %vm1812, %v1808, 0.0
      %1814 = vadd.xlane.f32.xlu0 %v1813
      %v1815 = vpop.xlane.xlu0 %1814
      %v1816 = vsel %vm1812, %v1809, 0.0
      %1817 = vadd.xlane.f32.xlu0 %v1816
      %v1818 = vpop.xlane.xlu0 %1817
      %v1819 = vsel %vm1812, %v1810, 0.0
      %1820 = vadd.xlane.f32.xlu0 %v1819
      %v1821 = vpop.xlane.xlu0 %1820
      %v1822 = vsel %vm1812, %v1811, 0.0
      %1823 = vadd.xlane.f32.xlu0 %v1822
      %v1824 = vpop.xlane.xlu0 %1823
      %v1825 = vrcp.pop 32.0
      %v1826 = vmul.f32 32.0, %v1825
      %v1827 = vsub.f32 1.0, %v1826
      %v1828 = vmul.f32 %v1825, %v1827
      %v1829 = vadd.f32 %v1825, %v1828
      %vm1830 = vweird.f32 %v1825
      %v1831 = vsel %vm1830, %v1825, %v1829
      %v1832 = vmul.f32 %v1815, %v1831
      %v1833 = vmul.f32 %v1818, %v1831
      %v1834 = vmul.f32 %v1821, %v1831
      %v1835 = vmul.f32 %v1824, %v1831
      %v1836 = vsub.f32 %v1808, %v1832
      %v1837 = vsub.f32 %v1809, %v1833
      %v1838 = vsub.f32 %v1810, %v1834
      %v1839 = vsub.f32 %v1811, %v1835
      %v1840 = vmul.f32 %v1836, %v1836
      %v1841 = vmul.f32 %v1837, %v1837
      %v1842 = vmul.f32 %v1838, %v1838
      %v1843 = vmul.f32 %v1839, %v1839
      %v1844 = vsel %vm1812, %v1840, 0.0
      %1845 = vadd.xlane.f32.xlu0 %v1844
      %v1846 = vpop.xlane.xlu0 %1845
      %v1847 = vsel %vm1812, %v1841, 0.0
      %1848 = vadd.xlane.f32.xlu0 %v1847
      %v1849 = vpop.xlane.xlu0 %1848
      %v1850 = vsel %vm1812, %v1842, 0.0
      %1851 = vadd.xlane.f32.xlu0 %v1850
      %v1852 = vpop.xlane.xlu0 %1851
      %v1853 = vsel %vm1812, %v1843, 0.0
      %1854 = vadd.xlane.f32.xlu0 %v1853
      %v1855 = vpop.xlane.xlu0 %1854
      %v1856 = vmul.f32 %v1846, %v1831
      %v1857 = vmul.f32 %v1849, %v1831
      %v1858 = vmul.f32 %v1852, %v1831
      %v1859 = vmul.f32 %v1855, %v1831
      %v1860 = vadd.f32 %v1856, 1e-05
      %v1861 = vadd.f32 %v1857, 1e-05
      %v1862 = vadd.f32 %v1858, 1e-05
      %v1863 = vadd.f32 %v1859, 1e-05
      %v1864 = vrsqrt.pop %v1860
      %v1865 = vmul.f32 %v1864, %v1860
      %v1866 = vmul.f32 %v1865, %v1864
      %v1867 = vmul.f32 0.5, %v1866
      %v1868 = vsub.f32 1.5, %v1867
      %v1869 = vmul.f32 %v1864, %v1868
      %vm1870 = vweird.f32 %v1860
      %vm1871 = vweird.f32 %v1864
      %vm1872 = vmor %vm1870, %vm1871
      %v1873 = vsel %vm1872, %v1864, %v1869
      %v1874 = vrsqrt.pop %v1861
      %v1875 = vmul.f32 %v1874, %v1861
      %v1876 = vmul.f32 %v1875, %v1874
      %v1877 = vmul.f32 0.5, %v1876
      %v1878 = vsub.f32 1.5, %v1877
      %v1879 = vmul.f32 %v1874, %v1878
      %vm1880 = vweird.f32 %v1861
      %vm1881 = vweird.f32 %v1874
      %vm1882 = vmor %vm1880, %vm1881
      %v1883 = vsel %vm1882, %v1874, %v1879
      %v1884 = vrsqrt.pop %v1862
      %v1885 = vmul.f32 %v1884, %v1862
      %v1886 = vmul.f32 %v1885, %v1884
      %v1887 = vmul.f32 0.5, %v1886
      %v1888 = vsub.f32 1.5, %v1887
      %v1889 = vmul.f32 %v1884, %v1888
      %vm1890 = vweird.f32 %v1862
      %vm1891 = vweird.f32 %v1884
      %vm1892 = vmor %vm1890, %vm1891
      %v1893 = vsel %vm1892, %v1884, %v1889
      %v1894 = vrsqrt.pop %v1863
      %v1895 = vmul.f32 %v1894, %v1863
      %v1896 = vmul.f32 %v1895, %v1894
      %v1897 = vmul.f32 0.5, %v1896
      %v1898 = vsub.f32 1.5, %v1897
      %v1899 = vmul.f32 %v1894, %v1898
      %vm1900 = vweird.f32 %v1863
      %vm1901 = vweird.f32 %v1894
      %vm1902 = vmor %vm1900, %vm1901
      %v1903 = vsel %vm1902, %v1894, %v1899
      %v1904 = vmul.f32 %v1836, %v1873
      %v1905 = vmul.f32 %v1837, %v1883
      %v1906 = vmul.f32 %v1838, %v1893
      %v1907 = vmul.f32 %v1839, %v1903
      %v1908 = vld [vmem:[%s518] sm:$0xf]
      %v1909 = vld [vmem:[%s518 + $0x4] sm:$0xf]
      %v1910 = vld [vmem:[%s518 + $0x8] sm:$0xf]
      %v1911 = vld [vmem:[%s518 + $0xc] sm:$0xf]
      %v1912 = vld [vmem:[%s523] sm:$0xff]
      %v1913 = vld [vmem:[%s523 + $0x8] sm:$0xff]
      %v1914 = vld [vmem:[%s523 + $0x10] sm:$0xff]
      %v1915 = vld [vmem:[%s523 + $0x18] sm:$0xff]
      %v1916 = vld [vmem:[%s503] sm:$0xff]
      %v1917 = vpack.c.bf16 %v1916, %v1916
      %v1922 = vunpack.c.l.b16 %v1908
      %v1923 = vunpack.c.l.b16 %v1909
      %v1924 = vunpack.c.l.b16 %v1910
      %v1925 = vunpack.c.l.b16 %v1911
      %v1926 = vpack.c.b16 %v1923, %v1922
      %v1927 = vpack.c.b16 %v1925, %v1924
      %vm1928 = vcmask 64512
      %v1930 = vsel %vm1928, %v1926, 0
      %v1933 = vsel %vm1928, %v1927, 0
      %vm1935 = vcmask 1043456
      %v1937 = vsel %vm1935, %v1917, 0
      %1939 = vmatpush.bf16.msra.mxu0 0
      %1940 = vmatpush.bf16.msra.mxu0 0
      %1941 = vmatpush.bf16.msra.mxu0 0
      %1942 = vmatpush.bf16.msra.mxu0 0
      %1943 = vmatpush.bf16.msra.mxu0 0
      %1944 = vmatpush.bf16.msra.mxu0 0
      %1945 = vmatpush.bf16.msra.mxu0 0
      %1946 = vmatpush.bf16.msra.mxu0 %v1937
      %1947 = vmatmul.bf16.gmra.mxu0 %v1930
      %v1948 = vpop.f32.mrf.mxu0
      %v1949 = vadd.f32 %v1912, %v1948
      %v1950 = vpop.f32.mrf.mxu0
      %v1951 = vadd.f32 %v1913, %v1950
      %1952 = vmatmul.bf16.gmra.mxu0 %v1933
      %v1953 = vpop.f32.mrf.mxu0
      %v1954 = vadd.f32 %v1914, %v1953
      %v1955 = vpop.f32.mrf.mxu0
      %v1956 = vadd.f32 %v1915, %v1955
      %1957 = vdwg.mxu0
      %v1958 = vmax.f32 %v1949, 0.0
      %v1959 = vmax.f32 %v1951, 0.0
      %v1960 = vmax.f32 %v1954, 0.0
      %v1961 = vmax.f32 %v1956, 0.0
      %1963 = vset.pattern.permute.xlu0 0
      %1964 = vperm.xlu0 %1963, %v1958
      %v1965 = vpop.permute.xlu0 %1964
      %1968 = vset.pattern.permute.xlu0 0
      %1969 = vperm.xlu0 %1968, %v1959
      %v1970 = vpop.permute.xlu0 %1969
      %1973 = vset.pattern.permute.xlu0 0
      %1974 = vperm.xlu0 %1973, %v1960
      %v1975 = vpop.permute.xlu0 %1974
      %1978 = vset.pattern.permute.xlu0 0
      %1979 = vperm.xlu0 %1978, %v1961
      %v1980 = vpop.permute.xlu0 %1979
      %v1982 = vadd.f32 %v1904, %v1965
      %v1983 = vadd.f32 %v1905, %v1970
      %v1984 = vadd.f32 %v1906, %v1975
      %v1985 = vadd.f32 %v1907, %v1980
      %v1986 = vpack.c.bf16 %v1982, %v1982
      %v1987 = vpack.c.bf16 %v1983, %v1983
      %v1988 = vpack.c.bf16 %v1984, %v1984
      %v1989 = vpack.c.bf16 %v1985, %v1985
      %v1990 = vld [vmem:[%s528] sm:$0xf]
      %v1991 = vld [vmem:[%s528 + $0x4] sm:$0xf]
      %v1992 = vld [vmem:[%s528 + $0x8] sm:$0xf]
      %v1993 = vld [vmem:[%s528 + $0xc] sm:$0xf]
      %v1994 = vld [vmem:[%s533] sm:$0xff]
      %v1995 = vld [vmem:[%s533 + $0x8] sm:$0xff]
      %v1996 = vld [vmem:[%s533 + $0x10] sm:$0xff]
      %v1997 = vld [vmem:[%s533 + $0x18] sm:$0xff]
      %1999 = vset.pattern.permute.xlu0 0
      %2000 = vperm.xlu0 %1999, %v1994
      %v2001 = vpop.permute.xlu0 %2000
      %2004 = vset.pattern.permute.xlu0 0
      %2005 = vperm.xlu0 %2004, %v1995
      %v2006 = vpop.permute.xlu0 %2005
      %v2010 = vunpack.c.l.b16 %v1990
      %v2011 = vunpack.c.l.b16 %v1991
      %v2012 = vpack.c.b16 %v2011, %v2010
      %v2015 = vunpack.c.l.b16 %v1986
      %v2016 = vunpack.c.l.b16 %v1987
      %v2017 = vpack.c.b16 %v2016, %v2015
      %vm2019 = vcmask 130048
      %v2021 = vsel %vm2019, %v2012, 0
      %2023 = vmatpush.bf16.msra.mxu0 0
      %2024 = vmatpush.bf16.msra.mxu0 0
      %2025 = vmatpush.bf16.msra.mxu0 0
      %2026 = vmatpush.bf16.msra.mxu0 0
      %2027 = vmatpush.bf16.msra.mxu0 0
      %2028 = vmatpush.bf16.msra.mxu0 0
      %2029 = vmatpush.bf16.msra.mxu0 0
      %2030 = vmatpush.bf16.msra.mxu0 %v2017
      %2031 = vmatmul.bf16.gmra.mxu0 %v2021
      %v2032 = vpop.f32.mrf.mxu0
      %v2033 = vadd.f32 %v2001, %v2032
      %v2034 = vpop.f32.mrf.mxu0
      %v2035 = vadd.f32 %v2006, %v2034
      %2036 = vdwg.mxu0
      %2038 = vset.pattern.permute.xlu0 0
      %2039 = vperm.xlu0 %2038, %v1996
      %v2040 = vpop.permute.xlu0 %2039
      %2043 = vset.pattern.permute.xlu0 0
      %2044 = vperm.xlu0 %2043, %v1997
      %v2045 = vpop.permute.xlu0 %2044
      %v2049 = vunpack.c.l.b16 %v1992
      %v2050 = vunpack.c.l.b16 %v1993
      %v2051 = vpack.c.b16 %v2050, %v2049
      %v2054 = vunpack.c.l.b16 %v1988
      %v2055 = vunpack.c.l.b16 %v1989
      %v2056 = vpack.c.b16 %v2055, %v2054
      %v2059 = vsel %vm2019, %v2051, 0
      %2061 = vmatpush.bf16.msra.mxu0 0
      %2062 = vmatpush.bf16.msra.mxu0 0
      %2063 = vmatpush.bf16.msra.mxu0 0
      %2064 = vmatpush.bf16.msra.mxu0 0
      %2065 = vmatpush.bf16.msra.mxu0 0
      %2066 = vmatpush.bf16.msra.mxu0 0
      %2067 = vmatpush.bf16.msra.mxu0 0
      %2068 = vmatpush.bf16.msra.mxu0 %v2056
      %2069 = vmatmul.bf16.gmra.mxu0 %v2059
      %v2070 = vpop.f32.mrf.mxu0
      %v2071 = vadd.f32 %v2040, %v2070
      %v2072 = vpop.f32.mrf.mxu0
      %v2073 = vadd.f32 %v2045, %v2072
      %2074 = vdwg.mxu0
      %v2075 = vtanh.pop %v2033
      %v2076 = vtanh.pop %v2035
      %v2077 = vsub.f32 0.0, %v2071
      %v2078 = vsub.f32 0.0, %v2073
      %v2079 = vmul.f32 %v2077, 1.442695
      %v2080 = vpow.pop %v2079
      %v2081 = vmul.f32 %v2078, 1.442695
      %v2082 = vpow.pop %v2081
      %v2083 = vadd.f32 %v2080, 1.0
      %v2084 = vadd.f32 %v2082, 1.0
      %v2085 = vrcp.pop %v2083
      %v2086 = vrcp.pop %v2084
      %v2087 = vmul.f32 %v2075, %v2085
      %v2088 = vmul.f32 %v2076, %v2086
      %v2089 = vpack.c.bf16 %v2087, %v2087
      %v2090 = vpack.c.bf16 %v2088, %v2088
      %2093 = vrot.lane.b32.xlu0 %v2089, 1
      %v2094 = vpop.permute.xlu0 %2093
      %2095 = vrot.lane.b32.xlu0 %v2090, 1
      %v2096 = vpop.permute.xlu0 %2095
      %vm2099 = vcmask 265224
      %2100 = vst.msk [vmem:[#allocation5] sm:$0xf] %vm2099, %v2094
      %2101 = vst.msk [vmem:[#allocation5 + $0x4] sm:$0xf] %vm2099, %v2096
      %v2102 = vld [vmem:[%s538] sm:$0xf]
      %v2103 = vld [vmem:[%s538 + $0x4] sm:$0xf]
      %v2104 = vld [vmem:[#allocation5] sm:$0xf]
      %v2105 = vld [vmem:[#allocation5 + $0x4] sm:$0xf]
      %v2108 = vunpack.c.l.b16 %v2102
      %v2109 = vunpack.c.l.b16 %v2103
      %v2110 = vpack.c.b16 %v2109, %v2108
      %2111 = vrot.lane.b32.xlu0 %v2110, 112
      %v2112 = vpop.permute.xlu0 %2111
      %v2115 = vunpack.c.l.b16 %v2104
      %v2116 = vunpack.c.l.b16 %v2105
      %v2117 = vpack.c.b16 %v2116, %v2115
      %2118 = vrot.lane.b32.xlu0 %v2117, 127
      %v2119 = vpop.permute.xlu0 %2118
      %v2122 = vsel %vm2019, %v2112, 0
      %2124 = vmatpush.bf16.msra.mxu0 0
      %2125 = vmatpush.bf16.msra.mxu0 0
      %2126 = vmatpush.bf16.msra.mxu0 0
      %2127 = vmatpush.bf16.msra.mxu0 0
      %2128 = vmatpush.bf16.msra.mxu0 0
      %2129 = vmatpush.bf16.msra.mxu0 0
      %2130 = vmatpush.bf16.msra.mxu0 0
      %2131 = vmatpush.bf16.msra.mxu0 %v2119
      %2132 = vmatmul.bf16.gmra.mxu0 %v2122
      %v2133 = vpop.f32.mrf.mxu0
      %v2134 = vadd.f32 0.0, %v2133
      %v2135 = vpop.f32.mrf.mxu0
      %v2136 = vadd.f32 0.0, %v2135
      %2137 = vdwg.mxu0
      %v2140 = vsel %vm2019, %v2110, 0
      %2142 = vmatpush.bf16.msra.mxu0 0
      %2143 = vmatpush.bf16.msra.mxu0 0
      %2144 = vmatpush.bf16.msra.mxu0 0
      %2145 = vmatpush.bf16.msra.mxu0 0
      %2146 = vmatpush.bf16.msra.mxu0 0
      %2147 = vmatpush.bf16.msra.mxu0 0
      %2148 = vmatpush.bf16.msra.mxu0 0
      %2149 = vmatpush.bf16.msra.mxu0 %v2117
      %2150 = vmatmul.bf16.gmra.mxu0 %v2140
      %v2151 = vpop.f32.mrf.mxu0
      %v2152 = vadd.f32 %v2134, %v2151
      %v2153 = vpop.f32.mrf.mxu0
      %v2154 = vadd.f32 %v2136, %v2153
      %2155 = vdwg.mxu0
      %2156 = vrot.lane.b32.xlu0 %v2110, 96
      %v2157 = vpop.permute.xlu0 %2156
      %2158 = vrot.lane.b32.xlu0 %v2117, 126
      %v2159 = vpop.permute.xlu0 %2158
      %v2162 = vsel %vm2019, %v2157, 0
      %2164 = vmatpush.bf16.msra.mxu0 0
      %2165 = vmatpush.bf16.msra.mxu0 0
      %2166 = vmatpush.bf16.msra.mxu0 0
      %2167 = vmatpush.bf16.msra.mxu0 0
      %2168 = vmatpush.bf16.msra.mxu0 0
      %2169 = vmatpush.bf16.msra.mxu0 0
      %2170 = vmatpush.bf16.msra.mxu0 0
      %2171 = vmatpush.bf16.msra.mxu0 %v2159
      %2172 = vmatmul.bf16.gmra.mxu0 %v2162
      %v2173 = vpop.f32.mrf.mxu0
      %v2174 = vadd.f32 0.0, %v2173
      %v2175 = vpop.f32.mrf.mxu0
      %v2176 = vadd.f32 0.0, %v2175
      %2177 = vdwg.mxu0
      %v2178 = vadd.f32 %v2152, %v2174
      %v2179 = vadd.f32 %v2154, %v2176
      %v2180 = vld [vmem:[%s543] sm:$0xff]
      %v2181 = vld [vmem:[%s543 + $0x8] sm:$0xff]
      %2183 = vset.pattern.permute.xlu0 0
      %2184 = vperm.xlu0 %2183, %v2180
      %v2185 = vpop.permute.xlu0 %2184
      %2188 = vset.pattern.permute.xlu0 0
      %2189 = vperm.xlu0 %2188, %v2181
      %v2190 = vpop.permute.xlu0 %2189
      %v2192 = vadd.f32 %v2178, %v2185
      %v2193 = vadd.f32 %v2179, %v2190
      %v2194 = vsel %vm1812, %v2192, 0.0
      %2195 = vadd.xlane.f32.xlu0 %v2194
      %v2196 = vpop.xlane.xlu0 %2195
      %v2197 = vsel %vm1812, %v2193, 0.0
      %2198 = vadd.xlane.f32.xlu0 %v2197
      %v2199 = vpop.xlane.xlu0 %2198
      %v2200 = vmul.f32 %v2196, %v1831
      %v2201 = vmul.f32 %v2199, %v1831
      %v2202 = vsub.f32 %v2192, %v2200
      %v2203 = vsub.f32 %v2193, %v2201
      %v2204 = vmul.f32 %v2202, %v2202
      %v2205 = vmul.f32 %v2203, %v2203
      %v2206 = vsel %vm1812, %v2204, 0.0
      %2207 = vadd.xlane.f32.xlu0 %v2206
      %v2208 = vpop.xlane.xlu0 %2207
      %v2209 = vsel %vm1812, %v2205, 0.0
      %2210 = vadd.xlane.f32.xlu0 %v2209
      %v2211 = vpop.xlane.xlu0 %2210
      %v2212 = vmul.f32 %v2208, %v1831
      %v2213 = vmul.f32 %v2211, %v1831
      %v2214 = vadd.f32 %v2212, 1e-05
      %v2215 = vadd.f32 %v2213, 1e-05
      %v2216 = vrsqrt.pop %v2214
      %v2217 = vmul.f32 %v2216, %v2214
      %v2218 = vmul.f32 %v2217, %v2216
      %v2219 = vmul.f32 0.5, %v2218
      %v2220 = vsub.f32 1.5, %v2219
      %v2221 = vmul.f32 %v2216, %v2220
      %vm2222 = vweird.f32 %v2214
      %vm2223 = vweird.f32 %v2216
      %vm2224 = vmor %vm2222, %vm2223
      %v2225 = vsel %vm2224, %v2216, %v2221
      %v2226 = vrsqrt.pop %v2215
      %v2227 = vmul.f32 %v2226, %v2215
      %v2228 = vmul.f32 %v2227, %v2226
      %v2229 = vmul.f32 0.5, %v2228
      %v2230 = vsub.f32 1.5, %v2229
      %v2231 = vmul.f32 %v2226, %v2230
      %vm2232 = vweird.f32 %v2215
      %vm2233 = vweird.f32 %v2226
      %vm2234 = vmor %vm2232, %vm2233
      %v2235 = vsel %vm2234, %v2226, %v2231
      %v2236 = vmul.f32 %v2202, %v2225
      %v2237 = vmul.f32 %v2203, %v2235
      %v2238 = vadd.f32 %v575, %v2236
      %v2239 = vadd.f32 %v576, %v2237
      %2240 = vst.msk [vmem:[#allocation2] sm:$0xff] %vm1812, %v2238
      %2241 = vst.msk [vmem:[#allocation2 + $0x8] sm:$0xff] %vm1812, %v2239
      %v2242 = vld [vmem:[%s548] sm:$0xff]
      %v2243 = vld [vmem:[%s548 + $0x8] sm:$0xff]
      %v2244 = vadd.f32 %v2242, %v2236
      %v2245 = vadd.f32 %v2243, %v2237
      %2246 = vst.msk [vmem:[%s548] sm:$0xff] %vm1812, %v2244
      %2247 = vst.msk [vmem:[%s548 + $0x8] sm:$0xff] %vm1812, %v2245
      %p2248 = scmp.lt.s32.totalorder %s25, 1
      %s2249 = scalar_select %p2248, %s25, 1
      %s2250 = smul.addr %s2249, 2
      %s2251 = smul.addr %s2250, 8
      %s2252 = scalar_lea.vmem %s10, %s2251
      // Predicated region
      $region89: #{_decoder_forward_impl.6} parent=59 // pred_check
        %p2253 = pneg %p311
      $region90: #{_decoder_forward_impl.6} parent=59 // pred_check_branch
        %2255 = sbr.rel (%p2253) target = $region92
      $region91: #{_decoder_forward_impl.6} parent=59 // pred_region
        _
      $region92: #{_decoder_forward_impl.6} parent=59 // pred_fallthru
        _
    $region60: #{_decoder_forward_impl.6} parent=5 // pred_fallthru
      _
    %p2256 = scmp.le.s32.totalorder 2, %s16
    // Predicated region
    $region93: #{_decoder_forward_impl.6} parent=5 // pred_check
      %p2257 = pneg %p2256
    $region94: #{_decoder_forward_impl.6} parent=5 // pred_check_branch
      %2259 = sbr.rel (%p2257) target = $region96
    $region95: #{_decoder_forward_impl.6} parent=5 // pred_region
      %s2260 = ssub.s32 %s16, 2
      // Predicated region
      $region97: #{_decoder_forward_impl.6} parent=95 // pred_check
        %p2261 = pneg %p317
      $region98: #{_decoder_forward_impl.6} parent=95 // pred_check_branch
        %2263 = sbr.rel (%p2261) target = $region100
      $region99: #{_decoder_forward_impl.6} parent=95 // pred_region
        %p2264 = scmp.lt.s32.totalorder %s27, 1
        %s2265 = scalar_select %p2264, %s27, 1
        %s2266 = smul.addr %s2265, 2
        %s2267 = smul.addr %s2266, 8
        %s2268 = scalar_lea.vmem %s10, %s2267
      $region100: #{_decoder_forward_impl.6} parent=95 // pred_fallthru
        _
    $region96: #{_decoder_forward_impl.6} parent=5 // pred_fallthru
      _
  $region6: #{_decoder_forward_impl.6} parent=0 // loop_footer
    %s20 = sadd.s32 1, %s16
  $region7: #{_decoder_forward_impl.6} parent=0 // loop_footer_branch
    %15 = sbr.rel target = $region3
  $region8: #{_decoder_forward_impl.6} parent=0 // loop_exit
    _

</llo_original>
